<compile_context>
chip_gen: v7x
topology: tpu7x:2x2x1
jax: 0.10.0
libtpu: 0.0.40
codegen_flags: <defaults>
</compile_context>

<pallas_src>
import functools

import jax
import jax.numpy as jnp
from jax.experimental import pallas as pl
from jax.experimental.pallas import tpu as pltpu


PAD = 8  # per-frame H-halo rows (8-row aligned so every f32 scratch store is aligned)


# ----------------------------------------------------------------------------
# Parameter transform (tiny, host/XLA side): express a 3x3 "same" conv as
# 3 banded matmuls over the flattened (W, C) lane axis, one matrix per vertical
# tap ky.  Zero padding along W is encoded in the band structure; zero padding
# along H is handled by halo rows of the in-kernel scratch buffer.
#   M_ky[w_in*Cin + ci, w_out*Cout + co] = w[ky, kx, ci, co]  with
#   w_in = w_out + kx - 1 (entries with w_in outside [0, W) are absent).
# ----------------------------------------------------------------------------
def _band_matrices(w, width):
    kh, kw, cin, cout = w.shape
    mats = []
    for ky in range(kh):
        m = jnp.zeros((width * cin, width * cout), jnp.float32)
        for kx in range(kw):
            shift = jnp.eye(width, k=-(kx - 1), dtype=jnp.float32)
            m = m + jnp.einsum("ab,cd->acbd", shift, w[ky, kx]).reshape(
                width * cin, width * cout)
        mats.append(m)
    return jnp.stack(mats)  # (3, width*cin, width*cout)


# ----------------------------------------------------------------------------
# Fully fused forward kernel (single invocation, no grid).
# ----------------------------------------------------------------------------
def _encoder_kernel(x_ref, menc_ref, m1_ref, m2_ref, m3_ref, cb_ref,
                    wa_ref, wb_ref, gb_ref, wsh_ref, wth_ref, hb_ref,
                    out_ref, pad_buf, xt_buf, xs_buf):
    b_n, t_n = x_ref.shape[0], x_ref.shape[1]
    h_n = x_ref.shape[2] - 2          # input frames carry a 1-row H halo
    wco = pad_buf.shape[-1]
    bt = b_n * t_n
    rows = bt * h_n                   # matmul M dimension (= B*T*H = 128 here)

    def conv3(tap, m_ref):
        # 3x3 "same" conv as 3 banded matmuls over the flattened (W*C) lane
        # axis, one (rows, K) x (K, wco) bf16 MXU matmul per vertical tap ky.
        k_dim = m_ref.shape[1]
        acc = None
        for ky in range(3):
            lhs = tap(ky).reshape(rows, k_dim).astype(jnp.bfloat16)
            p = jnp.dot(lhs, m_ref[ky], preferred_element_type=jnp.float32)
            acc = p if acc is None else acc + p
        return acc                    # (rows, wco) f32

    # --- one-time zeroing of only the halo regions that are read, never written
    zer_h = jnp.zeros((b_n, t_n + 2, PAD, wco), pad_buf.dtype)
    pad_buf[:, :, 0:PAD, :] = zer_h                              # top H-halo rows
    pad_buf[:, :, PAD + h_n:PAD + h_n + PAD, :] = zer_h          # bottom H-halo rows
    zer_f = jnp.zeros((b_n, 1, h_n, wco), pad_buf.dtype)
    pad_buf[:, 0:1, PAD:PAD + h_n, :] = zer_f                    # leading T-halo frame
    pad_buf[:, t_n + 1:t_n + 2, PAD:PAD + h_n, :] = zer_f        # trailing T-halo frame

    # ---- image_encoder: 3x3 same conv (Cin -> Co) + bias + ReLU ------------
    x_st = conv3(lambda ky: x_ref[:, :, ky:ky + h_n, :], menc_ref)
    x_st = jnp.maximum(x_st + cb_ref[0:1, :], 0.0)
    x_st4 = x_st.reshape(b_n, t_n, h_n, wco)
    pad_buf[:, 1:t_n + 1, PAD:PAD + h_n, :] = x_st4.astype(pad_buf.dtype)

    # ---- temporal module: depthwise gated conv (k=3, zero pad) over T ------
    # Interleaved accumulation keeps at most ~3 (B,T,H,wco) f32 values live.
    a = x_st4 * wa_ref[1] + gb_ref[0]
    g = x_st4 * wb_ref[1] + gb_ref[1]
    t_prev = pad_buf[:, 0:t_n, PAD:PAD + h_n, :]
    a = a + t_prev * wa_ref[0]
    g = g + t_prev * wb_ref[0]
    t_next = pad_buf[:, 2:t_n + 2, PAD:PAD + h_n, :]
    a = a + t_next * wa_ref[2]
    g = g + t_next * wb_ref[2]
    # sigmoid as exp + approximate reciprocal: both land on the EUP slot.
    x_t = jnp.tanh(a) * pl.reciprocal(1.0 + jnp.exp(-g), approx=True)
    xt_buf[...] = x_t.reshape(bt, h_n, wco).astype(xt_buf.dtype)

    def pad_tap(ky):
        return pad_buf[:, 1:t_n + 1, PAD - 1 + ky:PAD - 1 + ky + h_n, :]

    # ---- conv1 + residual(x_st); residual re-read from VMEM -----------------
    x1 = conv3(pad_tap, m1_ref) + cb_ref[1:2, :]
    x1 = x1 + pad_buf[:, 1:t_n + 1, PAD:PAD + h_n, :].reshape(rows, wco)
    pad_buf[:, 1:t_n + 1, PAD:PAD + h_n, :] = (
        x1.reshape(b_n, t_n, h_n, wco).astype(pad_buf.dtype))

    # ---- conv2 + residual(x_t); residual re-read from VMEM ------------------
    x2 = conv3(pad_tap, m2_ref) + cb_ref[2:3, :]
    x2 = x2 + xt_buf[...].reshape(rows, wco)
    pad_buf[:, 1:t_n + 1, PAD:PAD + h_n, :] = (
        x2.reshape(b_n, t_n, h_n, wco).astype(pad_buf.dtype))

    # ---- conv3 ---------------------------------------------------------------
    x_s = conv3(pad_tap, m3_ref) + cb_ref[3:4, :]
    xs_buf[...] = x_s.reshape(bt, h_n, wco).astype(xs_buf.dtype)

    # ---- fused linear heads: Y = [x_s @ Ws | x_t @ Wt] + b -------------------
    # Per-H-row weight chunks (wco, 2*o) contracted against the VMEM-resident
    # x_s / x_t rows; the HBM-facing store is one lane-dense (B*T, 4*o) tile.
    o2 = wsh_ref.shape[-1]
    acc_s = jnp.zeros((bt, o2), jnp.float32)
    acc_t = jnp.zeros((bt, o2), jnp.float32)
    for hh in range(h_n):
        xs_h = xs_buf[:, hh:hh + 1, :].reshape(bt, wco).astype(jnp.bfloat16)
        xt_h = xt_buf[:, hh:hh + 1, :].reshape(bt, wco).astype(jnp.bfloat16)
        acc_s = acc_s + jnp.dot(xs_h, wsh_ref[hh],
                                preferred_element_type=jnp.float32)
        acc_t = acc_t + jnp.dot(xt_h, wth_ref[hh],
                                preferred_element_type=jnp.float32)
    out_ref[...] = jnp.concatenate([acc_s, acc_t], axis=-1) + hb_ref[0:1, :]


# ----------------------------------------------------------------------------
# Full RevisedStEncoder forward.
# ----------------------------------------------------------------------------
def revised_st_encoder(x, params, *, image_out_channel, image_out_size, output_size):
    b, t, c, h, w = x.shape
    ho, wo = image_out_size
    assert (ho, wo) == (h, w), "stride-1 same-padding image encoder"
    assert h % 8 == 0, "H must be a multiple of 8 for aligned scratch stores"
    co = image_out_channel
    wci = wo * c
    wco = wo * co
    assert wco % 128 == 0, "W * image_out_channel must be a multiple of 128"
    wci_p = ((wci + 127) // 128) * 128      # pad the input lane axis to 128

    # Input layout: NCHW -> NHWC, flatten (W, C) into the lane axis, pad H by 1
    # (conv halo) and the lane axis up to 128 (unmasked DMA / loads, full K).
    frames = jnp.transpose(x, (0, 1, 3, 4, 2)).reshape(b, t, h, wci)
    frames = jnp.pad(frames, ((0, 0), (0, 0), (1, 1), (0, wci_p - wci)))

    # ---- tiny parameter transforms (banded conv matrices, tiled biases) -----
    menc = jnp.pad(_band_matrices(params["enc_w"], wo),
                   ((0, 0), (0, wci_p - wci), (0, 0))).astype(jnp.bfloat16)
    m1 = _band_matrices(params["c1_w"], wo).astype(jnp.bfloat16)
    m2 = _band_matrices(params["c2_w"], wo).astype(jnp.bfloat16)
    m3 = _band_matrices(params["c3_w"], wo).astype(jnp.bfloat16)
    cb = jnp.stack([jnp.tile(params["enc_b"], wo), jnp.tile(params["c1_b"], wo),
                    jnp.tile(params["c2_b"], wo), jnp.tile(params["c3_b"], wo)])
    wa = params["tg_wa"].reshape(3, ho, wco)
    wb = params["tg_wb"].reshape(3, ho, wco)
    gb = jnp.stack([params["tg_ba"].reshape(ho, wco),
                    params["tg_bb"].reshape(ho, wco)])

    # Per-H-row head weights: [mu | sigma] merged -> (H, wco, 2*o) per stream.
    wsh = jnp.concatenate([params["smu_w"], params["ssig_w"]], axis=1)
    wth = jnp.concatenate([params["tmu_w"], params["tsig_w"]], axis=1)
    wsh = wsh.reshape(ho, wco, 2 * output_size).astype(jnp.bfloat16)
    wth = wth.reshape(ho, wco, 2 * output_size).astype(jnp.bfloat16)
    hb = jnp.concatenate([params["smu_b"], params["ssig_b"],
                          params["tmu_b"], params["tsig_b"]]
                         ).reshape(1, 4 * output_size)

    out = pl.pallas_call(
        _encoder_kernel,
        out_shape=jax.ShapeDtypeStruct((b * t, 4 * output_size), jnp.float32),
        scratch_shapes=[
            pltpu.VMEM((b, t + 2, h + 2 * PAD, wco), jnp.float32),  # shared halo buf
            pltpu.VMEM((b * t, h, wco), jnp.float32),               # x_t (gate output)
            pltpu.VMEM((b * t, h, wco), jnp.float32),               # x_s (conv3 output)
        ],
    )(frames, menc, m1, m2, m3, cb, wa, wb, gb, wsh, wth, hb)

    o = output_size
    out = out.reshape(b, t, 4 * o)
    return (out[..., 0:o], out[..., o:2 * o],
            out[..., 2 * o:3 * o], out[..., 3 * o:4 * o])


# ----------------------------------------------------------------------------
# Pure-JAX reference (for a loose numerical sanity check; f32 everywhere).
# ----------------------------------------------------------------------------
def _conv3x3_ref(x, w, b):
    y = jax.lax.conv_general_dilated(
        x, w, window_strides=(1, 1), padding="SAME",
        dimension_numbers=("NHWC", "HWIO", "NHWC"))
    return y + b


def _temporal_ref(x, wa, wb, ba, bb):
    t = x.shape[1]
    xp = jnp.pad(x, ((0, 0), (1, 1), (0, 0)))
    a = sum(xp[:, k:k + t, :] * wa[k] for k in range(3)) + ba
    g = sum(xp[:, k:k + t, :] * wb[k] for k in range(3)) + bb
    return jnp.tanh(a) * jax.nn.sigmoid(g)


def revised_st_encoder_ref(x, params, *, image_out_channel, image_out_size, output_size):
    b, t, c, h, w = x.shape
    ho, wo = image_out_size
    d = ho * wo * image_out_channel
    frames = jnp.transpose(x.reshape(b * t, c, h, w), (0, 2, 3, 1))
    x_st = jax.nn.relu(_conv3x3_ref(frames, params["enc_w"], params["enc_b"]))
    x_t = _temporal_ref(x_st.reshape(b, t, d), params["tg_wa"], params["tg_wb"],
                        params["tg_ba"], params["tg_bb"])
    x_t_img = x_t.reshape(b * t, ho, wo, image_out_channel)
    x1 = _conv3x3_ref(x_st, params["c1_w"], params["c1_b"]) + x_st
    x2 = _conv3x3_ref(x1, params["c2_w"], params["c2_b"]) + x_t_img
    x_s = _conv3x3_ref(x2, params["c3_w"], params["c3_b"])
    xs_f = x_s.reshape(b * t, d)
    xt_f = x_t.reshape(b * t, d)

    def lin(v, wn, bn):
        return (v @ params[wn] + params[bn]).reshape(b, t, output_size)

    return (lin(xs_f, "smu_w", "smu_b"), lin(xs_f, "ssig_w", "ssig_b"),
            lin(xt_f, "tmu_w", "tmu_b"), lin(xt_f, "tsig_w", "tsig_b"))


def init_params(key, n_channels, image_out_channel, ho, wo, output_size):
    d = ho * wo * image_out_channel
    ks = jax.random.split(key, 20)
    s = 0.1
    p = {}
    p["enc_w"] = jax.random.normal(ks[0], (3, 3, n_channels, image_out_channel), jnp.float32) * s
    p["enc_b"] = jax.random.normal(ks[1], (image_out_channel,), jnp.float32) * s
    for i, name in enumerate(["c1", "c2", "c3"]):
        p[f"{name}_w"] = jax.random.normal(
            ks[2 + 2 * i], (3, 3, image_out_channel, image_out_channel), jnp.float32) * s
        p[f"{name}_b"] = jax.random.normal(ks[3 + 2 * i], (image_out_channel,), jnp.float32) * s
    p["tg_wa"] = jax.random.normal(ks[8], (3, d), jnp.float32) * s
    p["tg_wb"] = jax.random.normal(ks[9], (3, d), jnp.float32) * s
    p["tg_ba"] = jax.random.normal(ks[10], (d,), jnp.float32) * s
    p["tg_bb"] = jax.random.normal(ks[11], (d,), jnp.float32) * s
    for i, name in enumerate(["smu", "ssig", "tmu", "tsig"]):
        p[f"{name}_w"] = jax.random.normal(ks[12 + i], (d, output_size), jnp.float32) * (s / 10.0)
        p[f"{name}_b"] = jax.random.normal(ks[16 + i], (output_size,), jnp.float32) * s
    return p


if __name__ == "__main__":
    # Small shapes consistent with the module's forward.
    B, T, C, H, W = 2, 4, 4, 16, 16
    IMG_OUT_CH = 8
    IMG_OUT_SIZE = (H, W)          # same-padding stride-1 image encoder
    OUTPUT_SIZE = 32               # 4*output_size = 128 -> lane-dense fused head output

    key = jax.random.PRNGKey(0)
    kx, kp = jax.random.split(key)
    x = jax.random.normal(kx, (B, T, C, H, W), jnp.float32)
    params = init_params(kp, C, IMG_OUT_CH, *IMG_OUT_SIZE, OUTPUT_SIZE)

    kwargs = dict(image_out_channel=IMG_OUT_CH, image_out_size=IMG_OUT_SIZE,
                  output_size=OUTPUT_SIZE)
    fwd = jax.jit(functools.partial(revised_st_encoder, **kwargs))
    ref = jax.jit(functools.partial(revised_st_encoder_ref, **kwargs))

    outs = jax.block_until_ready(fwd(x, params))
    ref_outs = jax.block_until_ready(ref(x, params))

    assert len(outs) == 4
    max_err = 0.0
    for o_arr, r_arr in zip(outs, ref_outs):
        assert o_arr.shape == (B, T, OUTPUT_SIZE), o_arr.shape
        assert o_arr.dtype == jnp.float32
        max_err = max(max_err, float(jnp.max(jnp.abs(o_arr - r_arr))))
    # bf16 matmul operands with f32 accumulation -> loose tolerance.
    assert max_err < 5e-2, f"numerical mismatch vs reference: {max_err}"
    print("KERNEL_OK")
</pallas_src>

<mosaic_0001>
module attributes {stable_mosaic.version = 11 : i64} {
  func.func @_encoder_kernel(%arg0: memref<2x4x18x128xf32, #tpu.memory_space<vmem>>, %arg1: memref<3x128x128xbf16, #tpu.memory_space<vmem>>, %arg2: memref<3x128x128xbf16, #tpu.memory_space<vmem>>, %arg3: memref<3x128x128xbf16, #tpu.memory_space<vmem>>, %arg4: memref<3x128x128xbf16, #tpu.memory_space<vmem>>, %arg5: memref<4x128xf32, #tpu.memory_space<vmem>>, %arg6: memref<3x16x128xf32, #tpu.memory_space<vmem>>, %arg7: memref<3x16x128xf32, #tpu.memory_space<vmem>>, %arg8: memref<2x16x128xf32, #tpu.memory_space<vmem>>, %arg9: memref<16x128x64xbf16, #tpu.memory_space<vmem>>, %arg10: memref<16x128x64xbf16, #tpu.memory_space<vmem>>, %arg11: memref<1x128xf32, #tpu.memory_space<vmem>>, %arg12: memref<8x128xf32, #tpu.memory_space<vmem>>, %arg13: memref<2x6x32x128xf32, #tpu.memory_space<vmem>>, %arg14: memref<8x16x128xf32, #tpu.memory_space<vmem>>, %arg15: memref<8x16x128xf32, #tpu.memory_space<vmem>>) attributes {dimension_semantics = [], scalar_prefetch = 0 : i64, scratch_operands = 3 : i64, tpu.core_type = #tpu.core_type<tc>} {
    %cst = arith.constant 0.000000e+00 : f32
    %0 = vector.broadcast %cst : f32 to vector<2x6x8x128xf32>
    %c0 = arith.constant 0 : index
    %c0_0 = arith.constant 0 : index
    %c0_1 = arith.constant 0 : index
    %c0_2 = arith.constant 0 : index
    %1 = vector.load %arg13[%c0, %c0_0, %c0_1, %c0_2] : memref<2x6x32x128xf32, #tpu.memory_space<vmem>>, vector<2x6x8x128xf32>
    tpu.vector_store %arg13[%c0, %c0_0, %c0_1, %c0_2], %0 {strides = array<i32>} : memref<2x6x32x128xf32, #tpu.memory_space<vmem>>, vector<2x6x8x128xf32>,
    %c0_3 = arith.constant 0 : index
    %c0_4 = arith.constant 0 : index
    %c24 = arith.constant 24 : index
    %c0_5 = arith.constant 0 : index
    %2 = vector.load %arg13[%c0_3, %c0_4, %c24, %c0_5] : memref<2x6x32x128xf32, #tpu.memory_space<vmem>>, vector<2x6x8x128xf32>
    tpu.vector_store %arg13[%c0_3, %c0_4, %c24, %c0_5], %0 {strides = array<i32>} : memref<2x6x32x128xf32, #tpu.memory_space<vmem>>, vector<2x6x8x128xf32>,
    %cst_6 = arith.constant 0.000000e+00 : f32
    %3 = vector.broadcast %cst_6 : f32 to vector<2x1x16x128xf32>
    %c0_7 = arith.constant 0 : index
    %c0_8 = arith.constant 0 : index
    %c8 = arith.constant 8 : index
    %c0_9 = arith.constant 0 : index
    %4 = vector.load %arg13[%c0_7, %c0_8, %c8, %c0_9] : memref<2x6x32x128xf32, #tpu.memory_space<vmem>>, vector<2x1x16x128xf32>
    tpu.vector_store %arg13[%c0_7, %c0_8, %c8, %c0_9], %3 {strides = array<i32>} : memref<2x6x32x128xf32, #tpu.memory_space<vmem>>, vector<2x1x16x128xf32>,
    %c0_10 = arith.constant 0 : index
    %c5 = arith.constant 5 : index
    %c8_11 = arith.constant 8 : index
    %c0_12 = arith.constant 0 : index
    %5 = vector.load %arg13[%c0_10, %c5, %c8_11, %c0_12] : memref<2x6x32x128xf32, #tpu.memory_space<vmem>>, vector<2x1x16x128xf32>
    tpu.vector_store %arg13[%c0_10, %c5, %c8_11, %c0_12], %3 {strides = array<i32>} : memref<2x6x32x128xf32, #tpu.memory_space<vmem>>, vector<2x1x16x128xf32>,
    %c0_13 = arith.constant 0 : index
    %c0_14 = arith.constant 0 : index
    %c0_15 = arith.constant 0 : index
    %c0_16 = arith.constant 0 : index
    %6 = vector.load %arg0[%c0_13, %c0_14, %c0_15, %c0_16] : memref<2x4x18x128xf32, #tpu.memory_space<vmem>>, vector<2x4x16x128xf32>
    %7 = vector.shape_cast %6 : vector<2x4x16x128xf32> to vector<128x128xf32>
    %8 = arith.truncf %7 : vector<128x128xf32> to vector<128x128xbf16>
    %c0_17 = arith.constant 0 : index
    %c0_18 = arith.constant 0 : index
    %c0_19 = arith.constant 0 : index
    %9 = vector.load %arg1[%c0_17, %c0_18, %c0_19] : memref<3x128x128xbf16, #tpu.memory_space<vmem>>, vector<1x128x128xbf16>
    %10 = vector.shape_cast %9 : vector<1x128x128xbf16> to vector<128x128xbf16>
    %cst_20 = arith.constant dense<0.000000e+00> : vector<128x128xf32>
    %11 = tpu.matmul %8, %10, %cst_20 {dimension_numbers = #tpu.dot_dimension_numbers<[1], [0], [0], [1], [0, 0, 1, 1], [], []>} : vector<128x128xbf16>, vector<128x128xbf16>, vector<128x128xf32> -> vector<128x128xf32>
    %c0_21 = arith.constant 0 : index
    %c0_22 = arith.constant 0 : index
    %c1 = arith.constant 1 : index
    %c0_23 = arith.constant 0 : index
    %12 = vector.load %arg0[%c0_21, %c0_22, %c1, %c0_23] : memref<2x4x18x128xf32, #tpu.memory_space<vmem>>, vector<2x4x16x128xf32>
    %13 = vector.shape_cast %12 : vector<2x4x16x128xf32> to vector<128x128xf32>
    %14 = arith.truncf %13 : vector<128x128xf32> to vector<128x128xbf16>
    %c1_24 = arith.constant 1 : index
    %c0_25 = arith.constant 0 : index
    %c0_26 = arith.constant 0 : index
    %15 = vector.load %arg1[%c1_24, %c0_25, %c0_26] : memref<3x128x128xbf16, #tpu.memory_space<vmem>>, vector<1x128x128xbf16>
    %16 = vector.shape_cast %15 : vector<1x128x128xbf16> to vector<128x128xbf16>
    %cst_27 = arith.constant dense<0.000000e+00> : vector<128x128xf32>
    %17 = tpu.matmul %14, %16, %cst_27 {dimension_numbers = #tpu.dot_dimension_numbers<[1], [0], [0], [1], [0, 0, 1, 1], [], []>} : vector<128x128xbf16>, vector<128x128xbf16>, vector<128x128xf32> -> vector<128x128xf32>
    %18 = arith.addf %11, %17 : vector<128x128xf32>
    %c0_28 = arith.constant 0 : index
    %c0_29 = arith.constant 0 : index
    %c2 = arith.constant 2 : index
    %c0_30 = arith.constant 0 : index
    %19 = vector.load %arg0[%c0_28, %c0_29, %c2, %c0_30] : memref<2x4x18x128xf32, #tpu.memory_space<vmem>>, vector<2x4x16x128xf32>
    %20 = vector.shape_cast %19 : vector<2x4x16x128xf32> to vector<128x128xf32>
    %21 = arith.truncf %20 : vector<128x128xf32> to vector<128x128xbf16>
    %c2_31 = arith.constant 2 : index
    %c0_32 = arith.constant 0 : index
    %c0_33 = arith.constant 0 : index
    %22 = vector.load %arg1[%c2_31, %c0_32, %c0_33] : memref<3x128x128xbf16, #tpu.memory_space<vmem>>, vector<1x128x128xbf16>
    %23 = vector.shape_cast %22 : vector<1x128x128xbf16> to vector<128x128xbf16>
    %cst_34 = arith.constant dense<0.000000e+00> : vector<128x128xf32>
    %24 = tpu.matmul %21, %23, %cst_34 {dimension_numbers = #tpu.dot_dimension_numbers<[1], [0], [0], [1], [0, 0, 1, 1], [], []>} : vector<128x128xbf16>, vector<128x128xbf16>, vector<128x128xf32> -> vector<128x128xf32>
    %25 = arith.addf %18, %24 : vector<128x128xf32>
    %c0_35 = arith.constant 0 : index
    %c0_36 = arith.constant 0 : index
    %26 = vector.load %arg5[%c0_35, %c0_36] : memref<4x128xf32, #tpu.memory_space<vmem>>, vector<1x128xf32>
    %27 = vector.broadcast %26 : vector<1x128xf32> to vector<128x128xf32>
    %28 = arith.addf %25, %27 : vector<128x128xf32>
    %cst_37 = arith.constant 0.000000e+00 : f32
    %29 = vector.broadcast %cst_37 : f32 to vector<128x128xf32>
    %30 = arith.maximumf %28, %29 : vector<128x128xf32>
    %31 = vector.shape_cast %30 : vector<128x128xf32> to vector<2x4x16x128xf32>
    %c0_38 = arith.constant 0 : index
    %c1_39 = arith.constant 1 : index
    %c8_40 = arith.constant 8 : index
    %c0_41 = arith.constant 0 : index
    %32 = vector.load %arg13[%c0_38, %c1_39, %c8_40, %c0_41] : memref<2x6x32x128xf32, #tpu.memory_space<vmem>>, vector<2x4x16x128xf32>
    tpu.vector_store %arg13[%c0_38, %c1_39, %c8_40, %c0_41], %31 {strides = array<i32>} : memref<2x6x32x128xf32, #tpu.memory_space<vmem>>, vector<2x4x16x128xf32>,
    %c1_42 = arith.constant 1 : index
    %c0_43 = arith.constant 0 : index
    %c0_44 = arith.constant 0 : index
    %33 = vector.load %arg6[%c1_42, %c0_43, %c0_44] : memref<3x16x128xf32, #tpu.memory_space<vmem>>, vector<1x16x128xf32>
    %34 = vector.shape_cast %33 : vector<1x16x128xf32> to vector<16x128xf32>
    %35 = vector.shape_cast %34 : vector<16x128xf32> to vector<1x1x16x128xf32>
    %36 = vector.broadcast %35 : vector<1x1x16x128xf32> to vector<2x4x16x128xf32>
    %37 = arith.mulf %31, %36 : vector<2x4x16x128xf32>
    %c0_45 = arith.constant 0 : index
    %c0_46 = arith.constant 0 : index
    %c0_47 = arith.constant 0 : index
    %38 = vector.load %arg8[%c0_45, %c0_46, %c0_47] : memref<2x16x128xf32, #tpu.memory_space<vmem>>, vector<1x16x128xf32>
    %39 = vector.shape_cast %38 : vector<1x16x128xf32> to vector<16x128xf32>
    %40 = vector.shape_cast %39 : vector<16x128xf32> to vector<1x1x16x128xf32>
    %41 = vector.broadcast %40 : vector<1x1x16x128xf32> to vector<2x4x16x128xf32>
    %42 = arith.addf %37, %41 : vector<2x4x16x128xf32>
    %c1_48 = arith.constant 1 : index
    %c0_49 = arith.constant 0 : index
    %c0_50 = arith.constant 0 : index
    %43 = vector.load %arg7[%c1_48, %c0_49, %c0_50] : memref<3x16x128xf32, #tpu.memory_space<vmem>>, vector<1x16x128xf32>
    %44 = vector.shape_cast %43 : vector<1x16x128xf32> to vector<16x128xf32>
    %45 = vector.shape_cast %44 : vector<16x128xf32> to vector<1x1x16x128xf32>
    %46 = vector.broadcast %45 : vector<1x1x16x128xf32> to vector<2x4x16x128xf32>
    %47 = arith.mulf %31, %46 : vector<2x4x16x128xf32>
    %c1_51 = arith.constant 1 : index
    %c0_52 = arith.constant 0 : index
    %c0_53 = arith.constant 0 : index
    %48 = vector.load %arg8[%c1_51, %c0_52, %c0_53] : memref<2x16x128xf32, #tpu.memory_space<vmem>>, vector<1x16x128xf32>
    %49 = vector.shape_cast %48 : vector<1x16x128xf32> to vector<16x128xf32>
    %50 = vector.shape_cast %49 : vector<16x128xf32> to vector<1x1x16x128xf32>
    %51 = vector.broadcast %50 : vector<1x1x16x128xf32> to vector<2x4x16x128xf32>
    %52 = arith.addf %47, %51 : vector<2x4x16x128xf32>
    %c0_54 = arith.constant 0 : index
    %c0_55 = arith.constant 0 : index
    %c8_56 = arith.constant 8 : index
    %c0_57 = arith.constant 0 : index
    %53 = vector.load %arg13[%c0_54, %c0_55, %c8_56, %c0_57] : memref<2x6x32x128xf32, #tpu.memory_space<vmem>>, vector<2x4x16x128xf32>
    %c0_58 = arith.constant 0 : index
    %c0_59 = arith.constant 0 : index
    %c0_60 = arith.constant 0 : index
    %54 = vector.load %arg6[%c0_58, %c0_59, %c0_60] : memref<3x16x128xf32, #tpu.memory_space<vmem>>, vector<1x16x128xf32>
    %55 = vector.shape_cast %54 : vector<1x16x128xf32> to vector<16x128xf32>
    %56 = vector.shape_cast %55 : vector<16x128xf32> to vector<1x1x16x128xf32>
    %57 = vector.broadcast %56 : vector<1x1x16x128xf32> to vector<2x4x16x128xf32>
    %58 = arith.mulf %53, %57 : vector<2x4x16x128xf32>
    %59 = arith.addf %42, %58 : vector<2x4x16x128xf32>
    %c0_61 = arith.constant 0 : index
    %c0_62 = arith.constant 0 : index
    %c0_63 = arith.constant 0 : index
    %60 = vector.load %arg7[%c0_61, %c0_62, %c0_63] : memref<3x16x128xf32, #tpu.memory_space<vmem>>, vector<1x16x128xf32>
    %61 = vector.shape_cast %60 : vector<1x16x128xf32> to vector<16x128xf32>
    %62 = vector.shape_cast %61 : vector<16x128xf32> to vector<1x1x16x128xf32>
    %63 = vector.broadcast %62 : vector<1x1x16x128xf32> to vector<2x4x16x128xf32>
    %64 = arith.mulf %53, %63 : vector<2x4x16x128xf32>
    %65 = arith.addf %52, %64 : vector<2x4x16x128xf32>
    %c0_64 = arith.constant 0 : index
    %c2_65 = arith.constant 2 : index
    %c8_66 = arith.constant 8 : index
    %c0_67 = arith.constant 0 : index
    %66 = vector.load %arg13[%c0_64, %c2_65, %c8_66, %c0_67] : memref<2x6x32x128xf32, #tpu.memory_space<vmem>>, vector<2x4x16x128xf32>
    %c2_68 = arith.constant 2 : index
    %c0_69 = arith.constant 0 : index
    %c0_70 = arith.constant 0 : index
    %67 = vector.load %arg6[%c2_68, %c0_69, %c0_70] : memref<3x16x128xf32, #tpu.memory_space<vmem>>, vector<1x16x128xf32>
    %68 = vector.shape_cast %67 : vector<1x16x128xf32> to vector<16x128xf32>
    %69 = vector.shape_cast %68 : vector<16x128xf32> to vector<1x1x16x128xf32>
    %70 = vector.broadcast %69 : vector<1x1x16x128xf32> to vector<2x4x16x128xf32>
    %71 = arith.mulf %66, %70 : vector<2x4x16x128xf32>
    %72 = arith.addf %59, %71 : vector<2x4x16x128xf32>
    %c2_71 = arith.constant 2 : index
    %c0_72 = arith.constant 0 : index
    %c0_73 = arith.constant 0 : index
    %73 = vector.load %arg7[%c2_71, %c0_72, %c0_73] : memref<3x16x128xf32, #tpu.memory_space<vmem>>, vector<1x16x128xf32>
    %74 = vector.shape_cast %73 : vector<1x16x128xf32> to vector<16x128xf32>
    %75 = vector.shape_cast %74 : vector<16x128xf32> to vector<1x1x16x128xf32>
    %76 = vector.broadcast %75 : vector<1x1x16x128xf32> to vector<2x4x16x128xf32>
    %77 = arith.mulf %66, %76 : vector<2x4x16x128xf32>
    %78 = arith.addf %65, %77 : vector<2x4x16x128xf32>
    %79 = math.tanh %72 : vector<2x4x16x128xf32>
    %cst_74 = arith.constant 0.000000e+00 : f32
    %80 = vector.broadcast %cst_74 : f32 to vector<2x4x16x128xf32>
    %81 = arith.subf %80, %78 : vector<2x4x16x128xf32>
    %82 = math.exp %81 : vector<2x4x16x128xf32>
    %cst_75 = arith.constant 1.000000e+00 : f32
    %83 = vector.broadcast %cst_75 : f32 to vector<2x4x16x128xf32>
    %84 = arith.addf %83, %82 : vector<2x4x16x128xf32>
    %85 = tpu.reciprocal %84 {approx = true} : vector<2x4x16x128xf32> -> vector<2x4x16x128xf32>
    %86 = arith.mulf %79, %85 : vector<2x4x16x128xf32>
    %87 = vector.shape_cast %86 : vector<2x4x16x128xf32> to vector<8x16x128xf32>
    %c0_76 = arith.constant 0 : index
    %c0_77 = arith.constant 0 : index
    %c0_78 = arith.constant 0 : index
    %88 = vector.load %arg14[%c0_76, %c0_77, %c0_78] : memref<8x16x128xf32, #tpu.memory_space<vmem>>, vector<8x16x128xf32>
    tpu.vector_store %arg14[%c0_76, %c0_77, %c0_78], %87 {strides = array<i32>} : memref<8x16x128xf32, #tpu.memory_space<vmem>>, vector<8x16x128xf32>,
    %c0_79 = arith.constant 0 : index
    %c1_80 = arith.constant 1 : index
    %c7 = arith.constant 7 : index
    %c0_81 = arith.constant 0 : index
    %89 = vector.load %arg13[%c0_79, %c1_80, %c7, %c0_81] : memref<2x6x32x128xf32, #tpu.memory_space<vmem>>, vector<2x4x16x128xf32>
    %90 = vector.shape_cast %89 : vector<2x4x16x128xf32> to vector<128x128xf32>
    %91 = arith.truncf %90 : vector<128x128xf32> to vector<128x128xbf16>
    %c0_82 = arith.constant 0 : index
    %c0_83 = arith.constant 0 : index
    %c0_84 = arith.constant 0 : index
    %92 = vector.load %arg2[%c0_82, %c0_83, %c0_84] : memref<3x128x128xbf16, #tpu.memory_space<vmem>>, vector<1x128x128xbf16>
    %93 = vector.shape_cast %92 : vector<1x128x128xbf16> to vector<128x128xbf16>
    %cst_85 = arith.constant dense<0.000000e+00> : vector<128x128xf32>
    %94 = tpu.matmul %91, %93, %cst_85 {dimension_numbers = #tpu.dot_dimension_numbers<[1], [0], [0], [1], [0, 0, 1, 1], [], []>} : vector<128x128xbf16>, vector<128x128xbf16>, vector<128x128xf32> -> vector<128x128xf32>
    %c0_86 = arith.constant 0 : index
    %c1_87 = arith.constant 1 : index
    %c8_88 = arith.constant 8 : index
    %c0_89 = arith.constant 0 : index
    %95 = vector.load %arg13[%c0_86, %c1_87, %c8_88, %c0_89] : memref<2x6x32x128xf32, #tpu.memory_space<vmem>>, vector<2x4x16x128xf32>
    %96 = vector.shape_cast %95 : vector<2x4x16x128xf32> to vector<128x128xf32>
    %97 = arith.truncf %96 : vector<128x128xf32> to vector<128x128xbf16>
    %c1_90 = arith.constant 1 : index
    %c0_91 = arith.constant 0 : index
    %c0_92 = arith.constant 0 : index
    %98 = vector.load %arg2[%c1_90, %c0_91, %c0_92] : memref<3x128x128xbf16, #tpu.memory_space<vmem>>, vector<1x128x128xbf16>
    %99 = vector.shape_cast %98 : vector<1x128x128xbf16> to vector<128x128xbf16>
    %cst_93 = arith.constant dense<0.000000e+00> : vector<128x128xf32>
    %100 = tpu.matmul %97, %99, %cst_93 {dimension_numbers = #tpu.dot_dimension_numbers<[1], [0], [0], [1], [0, 0, 1, 1], [], []>} : vector<128x128xbf16>, vector<128x128xbf16>, vector<128x128xf32> -> vector<128x128xf32>
    %101 = arith.addf %94, %100 : vector<128x128xf32>
    %c0_94 = arith.constant 0 : index
    %c1_95 = arith.constant 1 : index
    %c9 = arith.constant 9 : index
    %c0_96 = arith.constant 0 : index
    %102 = vector.load %arg13[%c0_94, %c1_95, %c9, %c0_96] : memref<2x6x32x128xf32, #tpu.memory_space<vmem>>, vector<2x4x16x128xf32>
    %103 = vector.shape_cast %102 : vector<2x4x16x128xf32> to vector<128x128xf32>
    %104 = arith.truncf %103 : vector<128x128xf32> to vector<128x128xbf16>
    %c2_97 = arith.constant 2 : index
    %c0_98 = arith.constant 0 : index
    %c0_99 = arith.constant 0 : index
    %105 = vector.load %arg2[%c2_97, %c0_98, %c0_99] : memref<3x128x128xbf16, #tpu.memory_space<vmem>>, vector<1x128x128xbf16>
    %106 = vector.shape_cast %105 : vector<1x128x128xbf16> to vector<128x128xbf16>
    %cst_100 = arith.constant dense<0.000000e+00> : vector<128x128xf32>
    %107 = tpu.matmul %104, %106, %cst_100 {dimension_numbers = #tpu.dot_dimension_numbers<[1], [0], [0], [1], [0, 0, 1, 1], [], []>} : vector<128x128xbf16>, vector<128x128xbf16>, vector<128x128xf32> -> vector<128x128xf32>
    %108 = arith.addf %101, %107 : vector<128x128xf32>
    %c1_101 = arith.constant 1 : index
    %c0_102 = arith.constant 0 : index
    %109 = vector.load %arg5[%c1_101, %c0_102] : memref<4x128xf32, #tpu.memory_space<vmem>>, vector<1x128xf32>
    %110 = vector.broadcast %109 : vector<1x128xf32> to vector<128x128xf32>
    %111 = arith.addf %108, %110 : vector<128x128xf32>
    %c0_103 = arith.constant 0 : index
    %c1_104 = arith.constant 1 : index
    %c8_105 = arith.constant 8 : index
    %c0_106 = arith.constant 0 : index
    %112 = vector.load %arg13[%c0_103, %c1_104, %c8_105, %c0_106] : memref<2x6x32x128xf32, #tpu.memory_space<vmem>>, vector<2x4x16x128xf32>
    %113 = vector.shape_cast %112 : vector<2x4x16x128xf32> to vector<128x128xf32>
    %114 = arith.addf %111, %113 : vector<128x128xf32>
    %115 = vector.shape_cast %114 : vector<128x128xf32> to vector<2x4x16x128xf32>
    %c0_107 = arith.constant 0 : index
    %c1_108 = arith.constant 1 : index
    %c8_109 = arith.constant 8 : index
    %c0_110 = arith.constant 0 : index
    %116 = vector.load %arg13[%c0_107, %c1_108, %c8_109, %c0_110] : memref<2x6x32x128xf32, #tpu.memory_space<vmem>>, vector<2x4x16x128xf32>
    tpu.vector_store %arg13[%c0_107, %c1_108, %c8_109, %c0_110], %115 {strides = array<i32>} : memref<2x6x32x128xf32, #tpu.memory_space<vmem>>, vector<2x4x16x128xf32>,
    %c0_111 = arith.constant 0 : index
    %c1_112 = arith.constant 1 : index
    %c7_113 = arith.constant 7 : index
    %c0_114 = arith.constant 0 : index
    %117 = vector.load %arg13[%c0_111, %c1_112, %c7_113, %c0_114] : memref<2x6x32x128xf32, #tpu.memory_space<vmem>>, vector<2x4x16x128xf32>
    %118 = vector.shape_cast %117 : vector<2x4x16x128xf32> to vector<128x128xf32>
    %119 = arith.truncf %118 : vector<128x128xf32> to vector<128x128xbf16>
    %c0_115 = arith.constant 0 : index
    %c0_116 = arith.constant 0 : index
    %c0_117 = arith.constant 0 : index
    %120 = vector.load %arg3[%c0_115, %c0_116, %c0_117] : memref<3x128x128xbf16, #tpu.memory_space<vmem>>, vector<1x128x128xbf16>
    %121 = vector.shape_cast %120 : vector<1x128x128xbf16> to vector<128x128xbf16>
    %cst_118 = arith.constant dense<0.000000e+00> : vector<128x128xf32>
    %122 = tpu.matmul %119, %121, %cst_118 {dimension_numbers = #tpu.dot_dimension_numbers<[1], [0], [0], [1], [0, 0, 1, 1], [], []>} : vector<128x128xbf16>, vector<128x128xbf16>, vector<128x128xf32> -> vector<128x128xf32>
    %c0_119 = arith.constant 0 : index
    %c1_120 = arith.constant 1 : index
    %c8_121 = arith.constant 8 : index
    %c0_122 = arith.constant 0 : index
    %123 = vector.load %arg13[%c0_119, %c1_120, %c8_121, %c0_122] : memref<2x6x32x128xf32, #tpu.memory_space<vmem>>, vector<2x4x16x128xf32>
    %124 = vector.shape_cast %123 : vector<2x4x16x128xf32> to vector<128x128xf32>
    %125 = arith.truncf %124 : vector<128x128xf32> to vector<128x128xbf16>
    %c1_123 = arith.constant 1 : index
    %c0_124 = arith.constant 0 : index
    %c0_125 = arith.constant 0 : index
    %126 = vector.load %arg3[%c1_123, %c0_124, %c0_125] : memref<3x128x128xbf16, #tpu.memory_space<vmem>>, vector<1x128x128xbf16>
    %127 = vector.shape_cast %126 : vector<1x128x128xbf16> to vector<128x128xbf16>
    %cst_126 = arith.constant dense<0.000000e+00> : vector<128x128xf32>
    %128 = tpu.matmul %125, %127, %cst_126 {dimension_numbers = #tpu.dot_dimension_numbers<[1], [0], [0], [1], [0, 0, 1, 1], [], []>} : vector<128x128xbf16>, vector<128x128xbf16>, vector<128x128xf32> -> vector<128x128xf32>
    %129 = arith.addf %122, %128 : vector<128x128xf32>
    %c0_127 = arith.constant 0 : index
    %c1_128 = arith.constant 1 : index
    %c9_129 = arith.constant 9 : index
    %c0_130 = arith.constant 0 : index
    %130 = vector.load %arg13[%c0_127, %c1_128, %c9_129, %c0_130] : memref<2x6x32x128xf32, #tpu.memory_space<vmem>>, vector<2x4x16x128xf32>
    %131 = vector.shape_cast %130 : vector<2x4x16x128xf32> to vector<128x128xf32>
    %132 = arith.truncf %131 : vector<128x128xf32> to vector<128x128xbf16>
    %c2_131 = arith.constant 2 : index
    %c0_132 = arith.constant 0 : index
    %c0_133 = arith.constant 0 : index
    %133 = vector.load %arg3[%c2_131, %c0_132, %c0_133] : memref<3x128x128xbf16, #tpu.memory_space<vmem>>, vector<1x128x128xbf16>
    %134 = vector.shape_cast %133 : vector<1x128x128xbf16> to vector<128x128xbf16>
    %cst_134 = arith.constant dense<0.000000e+00> : vector<128x128xf32>
    %135 = tpu.matmul %132, %134, %cst_134 {dimension_numbers = #tpu.dot_dimension_numbers<[1], [0], [0], [1], [0, 0, 1, 1], [], []>} : vector<128x128xbf16>, vector<128x128xbf16>, vector<128x128xf32> -> vector<128x128xf32>
    %136 = arith.addf %129, %135 : vector<128x128xf32>
    %c2_135 = arith.constant 2 : index
    %c0_136 = arith.constant 0 : index
    %137 = vector.load %arg5[%c2_135, %c0_136] : memref<4x128xf32, #tpu.memory_space<vmem>>, vector<1x128xf32>
    %138 = vector.broadcast %137 : vector<1x128xf32> to vector<128x128xf32>
    %139 = arith.addf %136, %138 : vector<128x128xf32>
    %c0_137 = arith.constant 0 : index
    %c0_138 = arith.constant 0 : index
    %c0_139 = arith.constant 0 : index
    %140 = vector.load %arg14[%c0_137, %c0_138, %c0_139] : memref<8x16x128xf32, #tpu.memory_space<vmem>>, vector<8x16x128xf32>
    %141 = vector.shape_cast %140 : vector<8x16x128xf32> to vector<128x128xf32>
    %142 = arith.addf %139, %141 : vector<128x128xf32>
    %143 = vector.shape_cast %142 : vector<128x128xf32> to vector<2x4x16x128xf32>
    %c0_140 = arith.constant 0 : index
    %c1_141 = arith.constant 1 : index
    %c8_142 = arith.constant 8 : index
    %c0_143 = arith.constant 0 : index
    %144 = vector.load %arg13[%c0_140, %c1_141, %c8_142, %c0_143] : memref<2x6x32x128xf32, #tpu.memory_space<vmem>>, vector<2x4x16x128xf32>
    tpu.vector_store %arg13[%c0_140, %c1_141, %c8_142, %c0_143], %143 {strides = array<i32>} : memref<2x6x32x128xf32, #tpu.memory_space<vmem>>, vector<2x4x16x128xf32>,
    %c0_144 = arith.constant 0 : index
    %c1_145 = arith.constant 1 : index
    %c7_146 = arith.constant 7 : index
    %c0_147 = arith.constant 0 : index
    %145 = vector.load %arg13[%c0_144, %c1_145, %c7_146, %c0_147] : memref<2x6x32x128xf32, #tpu.memory_space<vmem>>, vector<2x4x16x128xf32>
    %146 = vector.shape_cast %145 : vector<2x4x16x128xf32> to vector<128x128xf32>
    %147 = arith.truncf %146 : vector<128x128xf32> to vector<128x128xbf16>
    %c0_148 = arith.constant 0 : index
    %c0_149 = arith.constant 0 : index
    %c0_150 = arith.constant 0 : index
    %148 = vector.load %arg4[%c0_148, %c0_149, %c0_150] : memref<3x128x128xbf16, #tpu.memory_space<vmem>>, vector<1x128x128xbf16>
    %149 = vector.shape_cast %148 : vector<1x128x128xbf16> to vector<128x128xbf16>
    %cst_151 = arith.constant dense<0.000000e+00> : vector<128x128xf32>
    %150 = tpu.matmul %147, %149, %cst_151 {dimension_numbers = #tpu.dot_dimension_numbers<[1], [0], [0], [1], [0, 0, 1, 1], [], []>} : vector<128x128xbf16>, vector<128x128xbf16>, vector<128x128xf32> -> vector<128x128xf32>
    %c0_152 = arith.constant 0 : index
    %c1_153 = arith.constant 1 : index
    %c8_154 = arith.constant 8 : index
    %c0_155 = arith.constant 0 : index
    %151 = vector.load %arg13[%c0_152, %c1_153, %c8_154, %c0_155] : memref<2x6x32x128xf32, #tpu.memory_space<vmem>>, vector<2x4x16x128xf32>
    %152 = vector.shape_cast %151 : vector<2x4x16x128xf32> to vector<128x128xf32>
    %153 = arith.truncf %152 : vector<128x128xf32> to vector<128x128xbf16>
    %c1_156 = arith.constant 1 : index
    %c0_157 = arith.constant 0 : index
    %c0_158 = arith.constant 0 : index
    %154 = vector.load %arg4[%c1_156, %c0_157, %c0_158] : memref<3x128x128xbf16, #tpu.memory_space<vmem>>, vector<1x128x128xbf16>
    %155 = vector.shape_cast %154 : vector<1x128x128xbf16> to vector<128x128xbf16>
    %cst_159 = arith.constant dense<0.000000e+00> : vector<128x128xf32>
    %156 = tpu.matmul %153, %155, %cst_159 {dimension_numbers = #tpu.dot_dimension_numbers<[1], [0], [0], [1], [0, 0, 1, 1], [], []>} : vector<128x128xbf16>, vector<128x128xbf16>, vector<128x128xf32> -> vector<128x128xf32>
    %157 = arith.addf %150, %156 : vector<128x128xf32>
    %c0_160 = arith.constant 0 : index
    %c1_161 = arith.constant 1 : index
    %c9_162 = arith.constant 9 : index
    %c0_163 = arith.constant 0 : index
    %158 = vector.load %arg13[%c0_160, %c1_161, %c9_162, %c0_163] : memref<2x6x32x128xf32, #tpu.memory_space<vmem>>, vector<2x4x16x128xf32>
    %159 = vector.shape_cast %158 : vector<2x4x16x128xf32> to vector<128x128xf32>
    %160 = arith.truncf %159 : vector<128x128xf32> to vector<128x128xbf16>
    %c2_164 = arith.constant 2 : index
    %c0_165 = arith.constant 0 : index
    %c0_166 = arith.constant 0 : index
    %161 = vector.load %arg4[%c2_164, %c0_165, %c0_166] : memref<3x128x128xbf16, #tpu.memory_space<vmem>>, vector<1x128x128xbf16>
    %162 = vector.shape_cast %161 : vector<1x128x128xbf16> to vector<128x128xbf16>
    %cst_167 = arith.constant dense<0.000000e+00> : vector<128x128xf32>
    %163 = tpu.matmul %160, %162, %cst_167 {dimension_numbers = #tpu.dot_dimension_numbers<[1], [0], [0], [1], [0, 0, 1, 1], [], []>} : vector<128x128xbf16>, vector<128x128xbf16>, vector<128x128xf32> -> vector<128x128xf32>
    %164 = arith.addf %157, %163 : vector<128x128xf32>
    %c3 = arith.constant 3 : index
    %c0_168 = arith.constant 0 : index
    %165 = vector.load %arg5[%c3, %c0_168] : memref<4x128xf32, #tpu.memory_space<vmem>>, vector<1x128xf32>
    %166 = vector.broadcast %165 : vector<1x128xf32> to vector<128x128xf32>
    %167 = arith.addf %164, %166 : vector<128x128xf32>
    %168 = vector.shape_cast %167 : vector<128x128xf32> to vector<8x16x128xf32>
    %c0_169 = arith.constant 0 : index
    %c0_170 = arith.constant 0 : index
    %c0_171 = arith.constant 0 : index
    %169 = vector.load %arg15[%c0_169, %c0_170, %c0_171] : memref<8x16x128xf32, #tpu.memory_space<vmem>>, vector<8x16x128xf32>
    tpu.vector_store %arg15[%c0_169, %c0_170, %c0_171], %168 {strides = array<i32>} : memref<8x16x128xf32, #tpu.memory_space<vmem>>, vector<8x16x128xf32>,
    %cst_172 = arith.constant 0.000000e+00 : f32
    %170 = vector.broadcast %cst_172 : f32 to vector<8x64xf32>
    %cst_173 = arith.constant 0.000000e+00 : f32
    %171 = vector.broadcast %cst_173 : f32 to vector<8x64xf32>
    %c0_174 = arith.constant 0 : index
    %c0_175 = arith.constant 0 : index
    %c0_176 = arith.constant 0 : index
    %172 = vector.load %arg15[%c0_174, %c0_175, %c0_176] : memref<8x16x128xf32, #tpu.memory_space<vmem>>, vector<8x1x128xf32>
    %173 = vector.shape_cast %172 : vector<8x1x128xf32> to vector<8x128xf32>
    %174 = arith.truncf %173 : vector<8x128xf32> to vector<8x128xbf16>
    %c0_177 = arith.constant 0 : index
    %c0_178 = arith.constant 0 : index
    %c0_179 = arith.constant 0 : index
    %175 = vector.load %arg14[%c0_177, %c0_178, %c0_179] : memref<8x16x128xf32, #tpu.memory_space<vmem>>, vector<8x1x128xf32>
    %176 = vector.shape_cast %175 : vector<8x1x128xf32> to vector<8x128xf32>
    %177 = arith.truncf %176 : vector<8x128xf32> to vector<8x128xbf16>
    %c0_180 = arith.constant 0 : index
    %c0_181 = arith.constant 0 : index
    %c0_182 = arith.constant 0 : index
    %178 = vector.load %arg9[%c0_180, %c0_181, %c0_182] : memref<16x128x64xbf16, #tpu.memory_space<vmem>>, vector<1x128x64xbf16>
    %179 = vector.shape_cast %178 : vector<1x128x64xbf16> to vector<128x64xbf16>
    %cst_183 = arith.constant dense<0.000000e+00> : vector<8x64xf32>
    %180 = tpu.matmul %174, %179, %cst_183 {dimension_numbers = #tpu.dot_dimension_numbers<[1], [0], [0], [1], [0, 0, 1, 1], [], []>} : vector<8x128xbf16>, vector<128x64xbf16>, vector<8x64xf32> -> vector<8x64xf32>
    %181 = arith.addf %170, %180 : vector<8x64xf32>
    %c0_184 = arith.constant 0 : index
    %c0_185 = arith.constant 0 : index
    %c0_186 = arith.constant 0 : index
    %182 = vector.load %arg10[%c0_184, %c0_185, %c0_186] : memref<16x128x64xbf16, #tpu.memory_space<vmem>>, vector<1x128x64xbf16>
    %183 = vector.shape_cast %182 : vector<1x128x64xbf16> to vector<128x64xbf16>
    %cst_187 = arith.constant dense<0.000000e+00> : vector<8x64xf32>
    %184 = tpu.matmul %177, %183, %cst_187 {dimension_numbers = #tpu.dot_dimension_numbers<[1], [0], [0], [1], [0, 0, 1, 1], [], []>} : vector<8x128xbf16>, vector<128x64xbf16>, vector<8x64xf32> -> vector<8x64xf32>
    %185 = arith.addf %171, %184 : vector<8x64xf32>
    %c0_188 = arith.constant 0 : index
    %c1_189 = arith.constant 1 : index
    %c0_190 = arith.constant 0 : index
    %186 = vector.load %arg15[%c0_188, %c1_189, %c0_190] : memref<8x16x128xf32, #tpu.memory_space<vmem>>, vector<8x1x128xf32>
    %187 = vector.shape_cast %186 : vector<8x1x128xf32> to vector<8x128xf32>
    %188 = arith.truncf %187 : vector<8x128xf32> to vector<8x128xbf16>
    %c0_191 = arith.constant 0 : index
    %c1_192 = arith.constant 1 : index
    %c0_193 = arith.constant 0 : index
    %189 = vector.load %arg14[%c0_191, %c1_192, %c0_193] : memref<8x16x128xf32, #tpu.memory_space<vmem>>, vector<8x1x128xf32>
    %190 = vector.shape_cast %189 : vector<8x1x128xf32> to vector<8x128xf32>
    %191 = arith.truncf %190 : vector<8x128xf32> to vector<8x128xbf16>
    %c1_194 = arith.constant 1 : index
    %c0_195 = arith.constant 0 : index
    %c0_196 = arith.constant 0 : index
    %192 = vector.load %arg9[%c1_194, %c0_195, %c0_196] : memref<16x128x64xbf16, #tpu.memory_space<vmem>>, vector<1x128x64xbf16>
    %193 = vector.shape_cast %192 : vector<1x128x64xbf16> to vector<128x64xbf16>
    %cst_197 = arith.constant dense<0.000000e+00> : vector<8x64xf32>
    %194 = tpu.matmul %188, %193, %cst_197 {dimension_numbers = #tpu.dot_dimension_numbers<[1], [0], [0], [1], [0, 0, 1, 1], [], []>} : vector<8x128xbf16>, vector<128x64xbf16>, vector<8x64xf32> -> vector<8x64xf32>
    %195 = arith.addf %181, %194 : vector<8x64xf32>
    %c1_198 = arith.constant 1 : index
    %c0_199 = arith.constant 0 : index
    %c0_200 = arith.constant 0 : index
    %196 = vector.load %arg10[%c1_198, %c0_199, %c0_200] : memref<16x128x64xbf16, #tpu.memory_space<vmem>>, vector<1x128x64xbf16>
    %197 = vector.shape_cast %196 : vector<1x128x64xbf16> to vector<128x64xbf16>
    %cst_201 = arith.constant dense<0.000000e+00> : vector<8x64xf32>
    %198 = tpu.matmul %191, %197, %cst_201 {dimension_numbers = #tpu.dot_dimension_numbers<[1], [0], [0], [1], [0, 0, 1, 1], [], []>} : vector<8x128xbf16>, vector<128x64xbf16>, vector<8x64xf32> -> vector<8x64xf32>
    %199 = arith.addf %185, %198 : vector<8x64xf32>
    %c0_202 = arith.constant 0 : index
    %c2_203 = arith.constant 2 : index
    %c0_204 = arith.constant 0 : index
    %200 = vector.load %arg15[%c0_202, %c2_203, %c0_204] : memref<8x16x128xf32, #tpu.memory_space<vmem>>, vector<8x1x128xf32>
    %201 = vector.shape_cast %200 : vector<8x1x128xf32> to vector<8x128xf32>
    %202 = arith.truncf %201 : vector<8x128xf32> to vector<8x128xbf16>
    %c0_205 = arith.constant 0 : index
    %c2_206 = arith.constant 2 : index
    %c0_207 = arith.constant 0 : index
    %203 = vector.load %arg14[%c0_205, %c2_206, %c0_207] : memref<8x16x128xf32, #tpu.memory_space<vmem>>, vector<8x1x128xf32>
    %204 = vector.shape_cast %203 : vector<8x1x128xf32> to vector<8x128xf32>
    %205 = arith.truncf %204 : vector<8x128xf32> to vector<8x128xbf16>
    %c2_208 = arith.constant 2 : index
    %c0_209 = arith.constant 0 : index
    %c0_210 = arith.constant 0 : index
    %206 = vector.load %arg9[%c2_208, %c0_209, %c0_210] : memref<16x128x64xbf16, #tpu.memory_space<vmem>>, vector<1x128x64xbf16>
    %207 = vector.shape_cast %206 : vector<1x128x64xbf16> to vector<128x64xbf16>
    %cst_211 = arith.constant dense<0.000000e+00> : vector<8x64xf32>
    %208 = tpu.matmul %202, %207, %cst_211 {dimension_numbers = #tpu.dot_dimension_numbers<[1], [0], [0], [1], [0, 0, 1, 1], [], []>} : vector<8x128xbf16>, vector<128x64xbf16>, vector<8x64xf32> -> vector<8x64xf32>
    %209 = arith.addf %195, %208 : vector<8x64xf32>
    %c2_212 = arith.constant 2 : index
    %c0_213 = arith.constant 0 : index
    %c0_214 = arith.constant 0 : index
    %210 = vector.load %arg10[%c2_212, %c0_213, %c0_214] : memref<16x128x64xbf16, #tpu.memory_space<vmem>>, vector<1x128x64xbf16>
    %211 = vector.shape_cast %210 : vector<1x128x64xbf16> to vector<128x64xbf16>
    %cst_215 = arith.constant dense<0.000000e+00> : vector<8x64xf32>
    %212 = tpu.matmul %205, %211, %cst_215 {dimension_numbers = #tpu.dot_dimension_numbers<[1], [0], [0], [1], [0, 0, 1, 1], [], []>} : vector<8x128xbf16>, vector<128x64xbf16>, vector<8x64xf32> -> vector<8x64xf32>
    %213 = arith.addf %199, %212 : vector<8x64xf32>
    %c0_216 = arith.constant 0 : index
    %c3_217 = arith.constant 3 : index
    %c0_218 = arith.constant 0 : index
    %214 = vector.load %arg15[%c0_216, %c3_217, %c0_218] : memref<8x16x128xf32, #tpu.memory_space<vmem>>, vector<8x1x128xf32>
    %215 = vector.shape_cast %214 : vector<8x1x128xf32> to vector<8x128xf32>
    %216 = arith.truncf %215 : vector<8x128xf32> to vector<8x128xbf16>
    %c0_219 = arith.constant 0 : index
    %c3_220 = arith.constant 3 : index
    %c0_221 = arith.constant 0 : index
    %217 = vector.load %arg14[%c0_219, %c3_220, %c0_221] : memref<8x16x128xf32, #tpu.memory_space<vmem>>, vector<8x1x128xf32>
    %218 = vector.shape_cast %217 : vector<8x1x128xf32> to vector<8x128xf32>
    %219 = arith.truncf %218 : vector<8x128xf32> to vector<8x128xbf16>
    %c3_222 = arith.constant 3 : index
    %c0_223 = arith.constant 0 : index
    %c0_224 = arith.constant 0 : index
    %220 = vector.load %arg9[%c3_222, %c0_223, %c0_224] : memref<16x128x64xbf16, #tpu.memory_space<vmem>>, vector<1x128x64xbf16>
    %221 = vector.shape_cast %220 : vector<1x128x64xbf16> to vector<128x64xbf16>
    %cst_225 = arith.constant dense<0.000000e+00> : vector<8x64xf32>
    %222 = tpu.matmul %216, %221, %cst_225 {dimension_numbers = #tpu.dot_dimension_numbers<[1], [0], [0], [1], [0, 0, 1, 1], [], []>} : vector<8x128xbf16>, vector<128x64xbf16>, vector<8x64xf32> -> vector<8x64xf32>
    %223 = arith.addf %209, %222 : vector<8x64xf32>
    %c3_226 = arith.constant 3 : index
    %c0_227 = arith.constant 0 : index
    %c0_228 = arith.constant 0 : index
    %224 = vector.load %arg10[%c3_226, %c0_227, %c0_228] : memref<16x128x64xbf16, #tpu.memory_space<vmem>>, vector<1x128x64xbf16>
    %225 = vector.shape_cast %224 : vector<1x128x64xbf16> to vector<128x64xbf16>
    %cst_229 = arith.constant dense<0.000000e+00> : vector<8x64xf32>
    %226 = tpu.matmul %219, %225, %cst_229 {dimension_numbers = #tpu.dot_dimension_numbers<[1], [0], [0], [1], [0, 0, 1, 1], [], []>} : vector<8x128xbf16>, vector<128x64xbf16>, vector<8x64xf32> -> vector<8x64xf32>
    %227 = arith.addf %213, %226 : vector<8x64xf32>
    %c0_230 = arith.constant 0 : index
    %c4 = arith.constant 4 : index
    %c0_231 = arith.constant 0 : index
    %228 = vector.load %arg15[%c0_230, %c4, %c0_231] : memref<8x16x128xf32, #tpu.memory_space<vmem>>, vector<8x1x128xf32>
    %229 = vector.shape_cast %228 : vector<8x1x128xf32> to vector<8x128xf32>
    %230 = arith.truncf %229 : vector<8x128xf32> to vector<8x128xbf16>
    %c0_232 = arith.constant 0 : index
    %c4_233 = arith.constant 4 : index
    %c0_234 = arith.constant 0 : index
    %231 = vector.load %arg14[%c0_232, %c4_233, %c0_234] : memref<8x16x128xf32, #tpu.memory_space<vmem>>, vector<8x1x128xf32>
    %232 = vector.shape_cast %231 : vector<8x1x128xf32> to vector<8x128xf32>
    %233 = arith.truncf %232 : vector<8x128xf32> to vector<8x128xbf16>
    %c4_235 = arith.constant 4 : index
    %c0_236 = arith.constant 0 : index
    %c0_237 = arith.constant 0 : index
    %234 = vector.load %arg9[%c4_235, %c0_236, %c0_237] : memref<16x128x64xbf16, #tpu.memory_space<vmem>>, vector<1x128x64xbf16>
    %235 = vector.shape_cast %234 : vector<1x128x64xbf16> to vector<128x64xbf16>
    %cst_238 = arith.constant dense<0.000000e+00> : vector<8x64xf32>
    %236 = tpu.matmul %230, %235, %cst_238 {dimension_numbers = #tpu.dot_dimension_numbers<[1], [0], [0], [1], [0, 0, 1, 1], [], []>} : vector<8x128xbf16>, vector<128x64xbf16>, vector<8x64xf32> -> vector<8x64xf32>
    %237 = arith.addf %223, %236 : vector<8x64xf32>
    %c4_239 = arith.constant 4 : index
    %c0_240 = arith.constant 0 : index
    %c0_241 = arith.constant 0 : index
    %238 = vector.load %arg10[%c4_239, %c0_240, %c0_241] : memref<16x128x64xbf16, #tpu.memory_space<vmem>>, vector<1x128x64xbf16>
    %239 = vector.shape_cast %238 : vector<1x128x64xbf16> to vector<128x64xbf16>
    %cst_242 = arith.constant dense<0.000000e+00> : vector<8x64xf32>
    %240 = tpu.matmul %233, %239, %cst_242 {dimension_numbers = #tpu.dot_dimension_numbers<[1], [0], [0], [1], [0, 0, 1, 1], [], []>} : vector<8x128xbf16>, vector<128x64xbf16>, vector<8x64xf32> -> vector<8x64xf32>
    %241 = arith.addf %227, %240 : vector<8x64xf32>
    %c0_243 = arith.constant 0 : index
    %c5_244 = arith.constant 5 : index
    %c0_245 = arith.constant 0 : index
    %242 = vector.load %arg15[%c0_243, %c5_244, %c0_245] : memref<8x16x128xf32, #tpu.memory_space<vmem>>, vector<8x1x128xf32>
    %243 = vector.shape_cast %242 : vector<8x1x128xf32> to vector<8x128xf32>
    %244 = arith.truncf %243 : vector<8x128xf32> to vector<8x128xbf16>
    %c0_246 = arith.constant 0 : index
    %c5_247 = arith.constant 5 : index
    %c0_248 = arith.constant 0 : index
    %245 = vector.load %arg14[%c0_246, %c5_247, %c0_248] : memref<8x16x128xf32, #tpu.memory_space<vmem>>, vector<8x1x128xf32>
    %246 = vector.shape_cast %245 : vector<8x1x128xf32> to vector<8x128xf32>
    %247 = arith.truncf %246 : vector<8x128xf32> to vector<8x128xbf16>
    %c5_249 = arith.constant 5 : index
    %c0_250 = arith.constant 0 : index
    %c0_251 = arith.constant 0 : index
    %248 = vector.load %arg9[%c5_249, %c0_250, %c0_251] : memref<16x128x64xbf16, #tpu.memory_space<vmem>>, vector<1x128x64xbf16>
    %249 = vector.shape_cast %248 : vector<1x128x64xbf16> to vector<128x64xbf16>
    %cst_252 = arith.constant dense<0.000000e+00> : vector<8x64xf32>
    %250 = tpu.matmul %244, %249, %cst_252 {dimension_numbers = #tpu.dot_dimension_numbers<[1], [0], [0], [1], [0, 0, 1, 1], [], []>} : vector<8x128xbf16>, vector<128x64xbf16>, vector<8x64xf32> -> vector<8x64xf32>
    %251 = arith.addf %237, %250 : vector<8x64xf32>
    %c5_253 = arith.constant 5 : index
    %c0_254 = arith.constant 0 : index
    %c0_255 = arith.constant 0 : index
    %252 = vector.load %arg10[%c5_253, %c0_254, %c0_255] : memref<16x128x64xbf16, #tpu.memory_space<vmem>>, vector<1x128x64xbf16>
    %253 = vector.shape_cast %252 : vector<1x128x64xbf16> to vector<128x64xbf16>
    %cst_256 = arith.constant dense<0.000000e+00> : vector<8x64xf32>
    %254 = tpu.matmul %247, %253, %cst_256 {dimension_numbers = #tpu.dot_dimension_numbers<[1], [0], [0], [1], [0, 0, 1, 1], [], []>} : vector<8x128xbf16>, vector<128x64xbf16>, vector<8x64xf32> -> vector<8x64xf32>
    %255 = arith.addf %241, %254 : vector<8x64xf32>
    %c0_257 = arith.constant 0 : index
    %c6 = arith.constant 6 : index
    %c0_258 = arith.constant 0 : index
    %256 = vector.load %arg15[%c0_257, %c6, %c0_258] : memref<8x16x128xf32, #tpu.memory_space<vmem>>, vector<8x1x128xf32>
    %257 = vector.shape_cast %256 : vector<8x1x128xf32> to vector<8x128xf32>
    %258 = arith.truncf %257 : vector<8x128xf32> to vector<8x128xbf16>
    %c0_259 = arith.constant 0 : index
    %c6_260 = arith.constant 6 : index
    %c0_261 = arith.constant 0 : index
    %259 = vector.load %arg14[%c0_259, %c6_260, %c0_261] : memref<8x16x128xf32, #tpu.memory_space<vmem>>, vector<8x1x128xf32>
    %260 = vector.shape_cast %259 : vector<8x1x128xf32> to vector<8x128xf32>
    %261 = arith.truncf %260 : vector<8x128xf32> to vector<8x128xbf16>
    %c6_262 = arith.constant 6 : index
    %c0_263 = arith.constant 0 : index
    %c0_264 = arith.constant 0 : index
    %262 = vector.load %arg9[%c6_262, %c0_263, %c0_264] : memref<16x128x64xbf16, #tpu.memory_space<vmem>>, vector<1x128x64xbf16>
    %263 = vector.shape_cast %262 : vector<1x128x64xbf16> to vector<128x64xbf16>
    %cst_265 = arith.constant dense<0.000000e+00> : vector<8x64xf32>
    %264 = tpu.matmul %258, %263, %cst_265 {dimension_numbers = #tpu.dot_dimension_numbers<[1], [0], [0], [1], [0, 0, 1, 1], [], []>} : vector<8x128xbf16>, vector<128x64xbf16>, vector<8x64xf32> -> vector<8x64xf32>
    %265 = arith.addf %251, %264 : vector<8x64xf32>
    %c6_266 = arith.constant 6 : index
    %c0_267 = arith.constant 0 : index
    %c0_268 = arith.constant 0 : index
    %266 = vector.load %arg10[%c6_266, %c0_267, %c0_268] : memref<16x128x64xbf16, #tpu.memory_space<vmem>>, vector<1x128x64xbf16>
    %267 = vector.shape_cast %266 : vector<1x128x64xbf16> to vector<128x64xbf16>
    %cst_269 = arith.constant dense<0.000000e+00> : vector<8x64xf32>
    %268 = tpu.matmul %261, %267, %cst_269 {dimension_numbers = #tpu.dot_dimension_numbers<[1], [0], [0], [1], [0, 0, 1, 1], [], []>} : vector<8x128xbf16>, vector<128x64xbf16>, vector<8x64xf32> -> vector<8x64xf32>
    %269 = arith.addf %255, %268 : vector<8x64xf32>
    %c0_270 = arith.constant 0 : index
    %c7_271 = arith.constant 7 : index
    %c0_272 = arith.constant 0 : index
    %270 = vector.load %arg15[%c0_270, %c7_271, %c0_272] : memref<8x16x128xf32, #tpu.memory_space<vmem>>, vector<8x1x128xf32>
    %271 = vector.shape_cast %270 : vector<8x1x128xf32> to vector<8x128xf32>
    %272 = arith.truncf %271 : vector<8x128xf32> to vector<8x128xbf16>
    %c0_273 = arith.constant 0 : index
    %c7_274 = arith.constant 7 : index
    %c0_275 = arith.constant 0 : index
    %273 = vector.load %arg14[%c0_273, %c7_274, %c0_275] : memref<8x16x128xf32, #tpu.memory_space<vmem>>, vector<8x1x128xf32>
    %274 = vector.shape_cast %273 : vector<8x1x128xf32> to vector<8x128xf32>
    %275 = arith.truncf %274 : vector<8x128xf32> to vector<8x128xbf16>
    %c7_276 = arith.constant 7 : index
    %c0_277 = arith.constant 0 : index
    %c0_278 = arith.constant 0 : index
    %276 = vector.load %arg9[%c7_276, %c0_277, %c0_278] : memref<16x128x64xbf16, #tpu.memory_space<vmem>>, vector<1x128x64xbf16>
    %277 = vector.shape_cast %276 : vector<1x128x64xbf16> to vector<128x64xbf16>
    %cst_279 = arith.constant dense<0.000000e+00> : vector<8x64xf32>
    %278 = tpu.matmul %272, %277, %cst_279 {dimension_numbers = #tpu.dot_dimension_numbers<[1], [0], [0], [1], [0, 0, 1, 1], [], []>} : vector<8x128xbf16>, vector<128x64xbf16>, vector<8x64xf32> -> vector<8x64xf32>
    %279 = arith.addf %265, %278 : vector<8x64xf32>
    %c7_280 = arith.constant 7 : index
    %c0_281 = arith.constant 0 : index
    %c0_282 = arith.constant 0 : index
    %280 = vector.load %arg10[%c7_280, %c0_281, %c0_282] : memref<16x128x64xbf16, #tpu.memory_space<vmem>>, vector<1x128x64xbf16>
    %281 = vector.shape_cast %280 : vector<1x128x64xbf16> to vector<128x64xbf16>
    %cst_283 = arith.constant dense<0.000000e+00> : vector<8x64xf32>
    %282 = tpu.matmul %275, %281, %cst_283 {dimension_numbers = #tpu.dot_dimension_numbers<[1], [0], [0], [1], [0, 0, 1, 1], [], []>} : vector<8x128xbf16>, vector<128x64xbf16>, vector<8x64xf32> -> vector<8x64xf32>
    %283 = arith.addf %269, %282 : vector<8x64xf32>
    %c0_284 = arith.constant 0 : index
    %c8_285 = arith.constant 8 : index
    %c0_286 = arith.constant 0 : index
    %284 = vector.load %arg15[%c0_284, %c8_285, %c0_286] : memref<8x16x128xf32, #tpu.memory_space<vmem>>, vector<8x1x128xf32>
    %285 = vector.shape_cast %284 : vector<8x1x128xf32> to vector<8x128xf32>
    %286 = arith.truncf %285 : vector<8x128xf32> to vector<8x128xbf16>
    %c0_287 = arith.constant 0 : index
    %c8_288 = arith.constant 8 : index
    %c0_289 = arith.constant 0 : index
    %287 = vector.load %arg14[%c0_287, %c8_288, %c0_289] : memref<8x16x128xf32, #tpu.memory_space<vmem>>, vector<8x1x128xf32>
    %288 = vector.shape_cast %287 : vector<8x1x128xf32> to vector<8x128xf32>
    %289 = arith.truncf %288 : vector<8x128xf32> to vector<8x128xbf16>
    %c8_290 = arith.constant 8 : index
    %c0_291 = arith.constant 0 : index
    %c0_292 = arith.constant 0 : index
    %290 = vector.load %arg9[%c8_290, %c0_291, %c0_292] : memref<16x128x64xbf16, #tpu.memory_space<vmem>>, vector<1x128x64xbf16>
    %291 = vector.shape_cast %290 : vector<1x128x64xbf16> to vector<128x64xbf16>
    %cst_293 = arith.constant dense<0.000000e+00> : vector<8x64xf32>
    %292 = tpu.matmul %286, %291, %cst_293 {dimension_numbers = #tpu.dot_dimension_numbers<[1], [0], [0], [1], [0, 0, 1, 1], [], []>} : vector<8x128xbf16>, vector<128x64xbf16>, vector<8x64xf32> -> vector<8x64xf32>
    %293 = arith.addf %279, %292 : vector<8x64xf32>
    %c8_294 = arith.constant 8 : index
    %c0_295 = arith.constant 0 : index
    %c0_296 = arith.constant 0 : index
    %294 = vector.load %arg10[%c8_294, %c0_295, %c0_296] : memref<16x128x64xbf16, #tpu.memory_space<vmem>>, vector<1x128x64xbf16>
    %295 = vector.shape_cast %294 : vector<1x128x64xbf16> to vector<128x64xbf16>
    %cst_297 = arith.constant dense<0.000000e+00> : vector<8x64xf32>
    %296 = tpu.matmul %289, %295, %cst_297 {dimension_numbers = #tpu.dot_dimension_numbers<[1], [0], [0], [1], [0, 0, 1, 1], [], []>} : vector<8x128xbf16>, vector<128x64xbf16>, vector<8x64xf32> -> vector<8x64xf32>
    %297 = arith.addf %283, %296 : vector<8x64xf32>
    %c0_298 = arith.constant 0 : index
    %c9_299 = arith.constant 9 : index
    %c0_300 = arith.constant 0 : index
    %298 = vector.load %arg15[%c0_298, %c9_299, %c0_300] : memref<8x16x128xf32, #tpu.memory_space<vmem>>, vector<8x1x128xf32>
    %299 = vector.shape_cast %298 : vector<8x1x128xf32> to vector<8x128xf32>
    %300 = arith.truncf %299 : vector<8x128xf32> to vector<8x128xbf16>
    %c0_301 = arith.constant 0 : index
    %c9_302 = arith.constant 9 : index
    %c0_303 = arith.constant 0 : index
    %301 = vector.load %arg14[%c0_301, %c9_302, %c0_303] : memref<8x16x128xf32, #tpu.memory_space<vmem>>, vector<8x1x128xf32>
    %302 = vector.shape_cast %301 : vector<8x1x128xf32> to vector<8x128xf32>
    %303 = arith.truncf %302 : vector<8x128xf32> to vector<8x128xbf16>
    %c9_304 = arith.constant 9 : index
    %c0_305 = arith.constant 0 : index
    %c0_306 = arith.constant 0 : index
    %304 = vector.load %arg9[%c9_304, %c0_305, %c0_306] : memref<16x128x64xbf16, #tpu.memory_space<vmem>>, vector<1x128x64xbf16>
    %305 = vector.shape_cast %304 : vector<1x128x64xbf16> to vector<128x64xbf16>
    %cst_307 = arith.constant dense<0.000000e+00> : vector<8x64xf32>
    %306 = tpu.matmul %300, %305, %cst_307 {dimension_numbers = #tpu.dot_dimension_numbers<[1], [0], [0], [1], [0, 0, 1, 1], [], []>} : vector<8x128xbf16>, vector<128x64xbf16>, vector<8x64xf32> -> vector<8x64xf32>
    %307 = arith.addf %293, %306 : vector<8x64xf32>
    %c9_308 = arith.constant 9 : index
    %c0_309 = arith.constant 0 : index
    %c0_310 = arith.constant 0 : index
    %308 = vector.load %arg10[%c9_308, %c0_309, %c0_310] : memref<16x128x64xbf16, #tpu.memory_space<vmem>>, vector<1x128x64xbf16>
    %309 = vector.shape_cast %308 : vector<1x128x64xbf16> to vector<128x64xbf16>
    %cst_311 = arith.constant dense<0.000000e+00> : vector<8x64xf32>
    %310 = tpu.matmul %303, %309, %cst_311 {dimension_numbers = #tpu.dot_dimension_numbers<[1], [0], [0], [1], [0, 0, 1, 1], [], []>} : vector<8x128xbf16>, vector<128x64xbf16>, vector<8x64xf32> -> vector<8x64xf32>
    %311 = arith.addf %297, %310 : vector<8x64xf32>
    %c0_312 = arith.constant 0 : index
    %c10 = arith.constant 10 : index
    %c0_313 = arith.constant 0 : index
    %312 = vector.load %arg15[%c0_312, %c10, %c0_313] : memref<8x16x128xf32, #tpu.memory_space<vmem>>, vector<8x1x128xf32>
    %313 = vector.shape_cast %312 : vector<8x1x128xf32> to vector<8x128xf32>
    %314 = arith.truncf %313 : vector<8x128xf32> to vector<8x128xbf16>
    %c0_314 = arith.constant 0 : index
    %c10_315 = arith.constant 10 : index
    %c0_316 = arith.constant 0 : index
    %315 = vector.load %arg14[%c0_314, %c10_315, %c0_316] : memref<8x16x128xf32, #tpu.memory_space<vmem>>, vector<8x1x128xf32>
    %316 = vector.shape_cast %315 : vector<8x1x128xf32> to vector<8x128xf32>
    %317 = arith.truncf %316 : vector<8x128xf32> to vector<8x128xbf16>
    %c10_317 = arith.constant 10 : index
    %c0_318 = arith.constant 0 : index
    %c0_319 = arith.constant 0 : index
    %318 = vector.load %arg9[%c10_317, %c0_318, %c0_319] : memref<16x128x64xbf16, #tpu.memory_space<vmem>>, vector<1x128x64xbf16>
    %319 = vector.shape_cast %318 : vector<1x128x64xbf16> to vector<128x64xbf16>
    %cst_320 = arith.constant dense<0.000000e+00> : vector<8x64xf32>
    %320 = tpu.matmul %314, %319, %cst_320 {dimension_numbers = #tpu.dot_dimension_numbers<[1], [0], [0], [1], [0, 0, 1, 1], [], []>} : vector<8x128xbf16>, vector<128x64xbf16>, vector<8x64xf32> -> vector<8x64xf32>
    %321 = arith.addf %307, %320 : vector<8x64xf32>
    %c10_321 = arith.constant 10 : index
    %c0_322 = arith.constant 0 : index
    %c0_323 = arith.constant 0 : index
    %322 = vector.load %arg10[%c10_321, %c0_322, %c0_323] : memref<16x128x64xbf16, #tpu.memory_space<vmem>>, vector<1x128x64xbf16>
    %323 = vector.shape_cast %322 : vector<1x128x64xbf16> to vector<128x64xbf16>
    %cst_324 = arith.constant dense<0.000000e+00> : vector<8x64xf32>
    %324 = tpu.matmul %317, %323, %cst_324 {dimension_numbers = #tpu.dot_dimension_numbers<[1], [0], [0], [1], [0, 0, 1, 1], [], []>} : vector<8x128xbf16>, vector<128x64xbf16>, vector<8x64xf32> -> vector<8x64xf32>
    %325 = arith.addf %311, %324 : vector<8x64xf32>
    %c0_325 = arith.constant 0 : index
    %c11 = arith.constant 11 : index
    %c0_326 = arith.constant 0 : index
    %326 = vector.load %arg15[%c0_325, %c11, %c0_326] : memref<8x16x128xf32, #tpu.memory_space<vmem>>, vector<8x1x128xf32>
    %327 = vector.shape_cast %326 : vector<8x1x128xf32> to vector<8x128xf32>
    %328 = arith.truncf %327 : vector<8x128xf32> to vector<8x128xbf16>
    %c0_327 = arith.constant 0 : index
    %c11_328 = arith.constant 11 : index
    %c0_329 = arith.constant 0 : index
    %329 = vector.load %arg14[%c0_327, %c11_328, %c0_329] : memref<8x16x128xf32, #tpu.memory_space<vmem>>, vector<8x1x128xf32>
    %330 = vector.shape_cast %329 : vector<8x1x128xf32> to vector<8x128xf32>
    %331 = arith.truncf %330 : vector<8x128xf32> to vector<8x128xbf16>
    %c11_330 = arith.constant 11 : index
    %c0_331 = arith.constant 0 : index
    %c0_332 = arith.constant 0 : index
    %332 = vector.load %arg9[%c11_330, %c0_331, %c0_332] : memref<16x128x64xbf16, #tpu.memory_space<vmem>>, vector<1x128x64xbf16>
    %333 = vector.shape_cast %332 : vector<1x128x64xbf16> to vector<128x64xbf16>
    %cst_333 = arith.constant dense<0.000000e+00> : vector<8x64xf32>
    %334 = tpu.matmul %328, %333, %cst_333 {dimension_numbers = #tpu.dot_dimension_numbers<[1], [0], [0], [1], [0, 0, 1, 1], [], []>} : vector<8x128xbf16>, vector<128x64xbf16>, vector<8x64xf32> -> vector<8x64xf32>
    %335 = arith.addf %321, %334 : vector<8x64xf32>
    %c11_334 = arith.constant 11 : index
    %c0_335 = arith.constant 0 : index
    %c0_336 = arith.constant 0 : index
    %336 = vector.load %arg10[%c11_334, %c0_335, %c0_336] : memref<16x128x64xbf16, #tpu.memory_space<vmem>>, vector<1x128x64xbf16>
    %337 = vector.shape_cast %336 : vector<1x128x64xbf16> to vector<128x64xbf16>
    %cst_337 = arith.constant dense<0.000000e+00> : vector<8x64xf32>
    %338 = tpu.matmul %331, %337, %cst_337 {dimension_numbers = #tpu.dot_dimension_numbers<[1], [0], [0], [1], [0, 0, 1, 1], [], []>} : vector<8x128xbf16>, vector<128x64xbf16>, vector<8x64xf32> -> vector<8x64xf32>
    %339 = arith.addf %325, %338 : vector<8x64xf32>
    %c0_338 = arith.constant 0 : index
    %c12 = arith.constant 12 : index
    %c0_339 = arith.constant 0 : index
    %340 = vector.load %arg15[%c0_338, %c12, %c0_339] : memref<8x16x128xf32, #tpu.memory_space<vmem>>, vector<8x1x128xf32>
    %341 = vector.shape_cast %340 : vector<8x1x128xf32> to vector<8x128xf32>
    %342 = arith.truncf %341 : vector<8x128xf32> to vector<8x128xbf16>
    %c0_340 = arith.constant 0 : index
    %c12_341 = arith.constant 12 : index
    %c0_342 = arith.constant 0 : index
    %343 = vector.load %arg14[%c0_340, %c12_341, %c0_342] : memref<8x16x128xf32, #tpu.memory_space<vmem>>, vector<8x1x128xf32>
    %344 = vector.shape_cast %343 : vector<8x1x128xf32> to vector<8x128xf32>
    %345 = arith.truncf %344 : vector<8x128xf32> to vector<8x128xbf16>
    %c12_343 = arith.constant 12 : index
    %c0_344 = arith.constant 0 : index
    %c0_345 = arith.constant 0 : index
    %346 = vector.load %arg9[%c12_343, %c0_344, %c0_345] : memref<16x128x64xbf16, #tpu.memory_space<vmem>>, vector<1x128x64xbf16>
    %347 = vector.shape_cast %346 : vector<1x128x64xbf16> to vector<128x64xbf16>
    %cst_346 = arith.constant dense<0.000000e+00> : vector<8x64xf32>
    %348 = tpu.matmul %342, %347, %cst_346 {dimension_numbers = #tpu.dot_dimension_numbers<[1], [0], [0], [1], [0, 0, 1, 1], [], []>} : vector<8x128xbf16>, vector<128x64xbf16>, vector<8x64xf32> -> vector<8x64xf32>
    %349 = arith.addf %335, %348 : vector<8x64xf32>
    %c12_347 = arith.constant 12 : index
    %c0_348 = arith.constant 0 : index
    %c0_349 = arith.constant 0 : index
    %350 = vector.load %arg10[%c12_347, %c0_348, %c0_349] : memref<16x128x64xbf16, #tpu.memory_space<vmem>>, vector<1x128x64xbf16>
    %351 = vector.shape_cast %350 : vector<1x128x64xbf16> to vector<128x64xbf16>
    %cst_350 = arith.constant dense<0.000000e+00> : vector<8x64xf32>
    %352 = tpu.matmul %345, %351, %cst_350 {dimension_numbers = #tpu.dot_dimension_numbers<[1], [0], [0], [1], [0, 0, 1, 1], [], []>} : vector<8x128xbf16>, vector<128x64xbf16>, vector<8x64xf32> -> vector<8x64xf32>
    %353 = arith.addf %339, %352 : vector<8x64xf32>
    %c0_351 = arith.constant 0 : index
    %c13 = arith.constant 13 : index
    %c0_352 = arith.constant 0 : index
    %354 = vector.load %arg15[%c0_351, %c13, %c0_352] : memref<8x16x128xf32, #tpu.memory_space<vmem>>, vector<8x1x128xf32>
    %355 = vector.shape_cast %354 : vector<8x1x128xf32> to vector<8x128xf32>
    %356 = arith.truncf %355 : vector<8x128xf32> to vector<8x128xbf16>
    %c0_353 = arith.constant 0 : index
    %c13_354 = arith.constant 13 : index
    %c0_355 = arith.constant 0 : index
    %357 = vector.load %arg14[%c0_353, %c13_354, %c0_355] : memref<8x16x128xf32, #tpu.memory_space<vmem>>, vector<8x1x128xf32>
    %358 = vector.shape_cast %357 : vector<8x1x128xf32> to vector<8x128xf32>
    %359 = arith.truncf %358 : vector<8x128xf32> to vector<8x128xbf16>
    %c13_356 = arith.constant 13 : index
    %c0_357 = arith.constant 0 : index
    %c0_358 = arith.constant 0 : index
    %360 = vector.load %arg9[%c13_356, %c0_357, %c0_358] : memref<16x128x64xbf16, #tpu.memory_space<vmem>>, vector<1x128x64xbf16>
    %361 = vector.shape_cast %360 : vector<1x128x64xbf16> to vector<128x64xbf16>
    %cst_359 = arith.constant dense<0.000000e+00> : vector<8x64xf32>
    %362 = tpu.matmul %356, %361, %cst_359 {dimension_numbers = #tpu.dot_dimension_numbers<[1], [0], [0], [1], [0, 0, 1, 1], [], []>} : vector<8x128xbf16>, vector<128x64xbf16>, vector<8x64xf32> -> vector<8x64xf32>
    %363 = arith.addf %349, %362 : vector<8x64xf32>
    %c13_360 = arith.constant 13 : index
    %c0_361 = arith.constant 0 : index
    %c0_362 = arith.constant 0 : index
    %364 = vector.load %arg10[%c13_360, %c0_361, %c0_362] : memref<16x128x64xbf16, #tpu.memory_space<vmem>>, vector<1x128x64xbf16>
    %365 = vector.shape_cast %364 : vector<1x128x64xbf16> to vector<128x64xbf16>
    %cst_363 = arith.constant dense<0.000000e+00> : vector<8x64xf32>
    %366 = tpu.matmul %359, %365, %cst_363 {dimension_numbers = #tpu.dot_dimension_numbers<[1], [0], [0], [1], [0, 0, 1, 1], [], []>} : vector<8x128xbf16>, vector<128x64xbf16>, vector<8x64xf32> -> vector<8x64xf32>
    %367 = arith.addf %353, %366 : vector<8x64xf32>
    %c0_364 = arith.constant 0 : index
    %c14 = arith.constant 14 : index
    %c0_365 = arith.constant 0 : index
    %368 = vector.load %arg15[%c0_364, %c14, %c0_365] : memref<8x16x128xf32, #tpu.memory_space<vmem>>, vector<8x1x128xf32>
    %369 = vector.shape_cast %368 : vector<8x1x128xf32> to vector<8x128xf32>
    %370 = arith.truncf %369 : vector<8x128xf32> to vector<8x128xbf16>
    %c0_366 = arith.constant 0 : index
    %c14_367 = arith.constant 14 : index
    %c0_368 = arith.constant 0 : index
    %371 = vector.load %arg14[%c0_366, %c14_367, %c0_368] : memref<8x16x128xf32, #tpu.memory_space<vmem>>, vector<8x1x128xf32>
    %372 = vector.shape_cast %371 : vector<8x1x128xf32> to vector<8x128xf32>
    %373 = arith.truncf %372 : vector<8x128xf32> to vector<8x128xbf16>
    %c14_369 = arith.constant 14 : index
    %c0_370 = arith.constant 0 : index
    %c0_371 = arith.constant 0 : index
    %374 = vector.load %arg9[%c14_369, %c0_370, %c0_371] : memref<16x128x64xbf16, #tpu.memory_space<vmem>>, vector<1x128x64xbf16>
    %375 = vector.shape_cast %374 : vector<1x128x64xbf16> to vector<128x64xbf16>
    %cst_372 = arith.constant dense<0.000000e+00> : vector<8x64xf32>
    %376 = tpu.matmul %370, %375, %cst_372 {dimension_numbers = #tpu.dot_dimension_numbers<[1], [0], [0], [1], [0, 0, 1, 1], [], []>} : vector<8x128xbf16>, vector<128x64xbf16>, vector<8x64xf32> -> vector<8x64xf32>
    %377 = arith.addf %363, %376 : vector<8x64xf32>
    %c14_373 = arith.constant 14 : index
    %c0_374 = arith.constant 0 : index
    %c0_375 = arith.constant 0 : index
    %378 = vector.load %arg10[%c14_373, %c0_374, %c0_375] : memref<16x128x64xbf16, #tpu.memory_space<vmem>>, vector<1x128x64xbf16>
    %379 = vector.shape_cast %378 : vector<1x128x64xbf16> to vector<128x64xbf16>
    %cst_376 = arith.constant dense<0.000000e+00> : vector<8x64xf32>
    %380 = tpu.matmul %373, %379, %cst_376 {dimension_numbers = #tpu.dot_dimension_numbers<[1], [0], [0], [1], [0, 0, 1, 1], [], []>} : vector<8x128xbf16>, vector<128x64xbf16>, vector<8x64xf32> -> vector<8x64xf32>
    %381 = arith.addf %367, %380 : vector<8x64xf32>
    %c0_377 = arith.constant 0 : index
    %c15 = arith.constant 15 : index
    %c0_378 = arith.constant 0 : index
    %382 = vector.load %arg15[%c0_377, %c15, %c0_378] : memref<8x16x128xf32, #tpu.memory_space<vmem>>, vector<8x1x128xf32>
    %383 = vector.shape_cast %382 : vector<8x1x128xf32> to vector<8x128xf32>
    %384 = arith.truncf %383 : vector<8x128xf32> to vector<8x128xbf16>
    %c0_379 = arith.constant 0 : index
    %c15_380 = arith.constant 15 : index
    %c0_381 = arith.constant 0 : index
    %385 = vector.load %arg14[%c0_379, %c15_380, %c0_381] : memref<8x16x128xf32, #tpu.memory_space<vmem>>, vector<8x1x128xf32>
    %386 = vector.shape_cast %385 : vector<8x1x128xf32> to vector<8x128xf32>
    %387 = arith.truncf %386 : vector<8x128xf32> to vector<8x128xbf16>
    %c15_382 = arith.constant 15 : index
    %c0_383 = arith.constant 0 : index
    %c0_384 = arith.constant 0 : index
    %388 = vector.load %arg9[%c15_382, %c0_383, %c0_384] : memref<16x128x64xbf16, #tpu.memory_space<vmem>>, vector<1x128x64xbf16>
    %389 = vector.shape_cast %388 : vector<1x128x64xbf16> to vector<128x64xbf16>
    %cst_385 = arith.constant dense<0.000000e+00> : vector<8x64xf32>
    %390 = tpu.matmul %384, %389, %cst_385 {dimension_numbers = #tpu.dot_dimension_numbers<[1], [0], [0], [1], [0, 0, 1, 1], [], []>} : vector<8x128xbf16>, vector<128x64xbf16>, vector<8x64xf32> -> vector<8x64xf32>
    %391 = arith.addf %377, %390 : vector<8x64xf32>
    %c15_386 = arith.constant 15 : index
    %c0_387 = arith.constant 0 : index
    %c0_388 = arith.constant 0 : index
    %392 = vector.load %arg10[%c15_386, %c0_387, %c0_388] : memref<16x128x64xbf16, #tpu.memory_space<vmem>>, vector<1x128x64xbf16>
    %393 = vector.shape_cast %392 : vector<1x128x64xbf16> to vector<128x64xbf16>
    %cst_389 = arith.constant dense<0.000000e+00> : vector<8x64xf32>
    %394 = tpu.matmul %387, %393, %cst_389 {dimension_numbers = #tpu.dot_dimension_numbers<[1], [0], [0], [1], [0, 0, 1, 1], [], []>} : vector<8x128xbf16>, vector<128x64xbf16>, vector<8x64xf32> -> vector<8x64xf32>
    %395 = arith.addf %381, %394 : vector<8x64xf32>
    %396 = tpu.concatenate %391, %395 in 1 : vector<8x64xf32>, vector<8x64xf32> -> vector<8x128xf32>
    %c0_390 = arith.constant 0 : index
    %c0_391 = arith.constant 0 : index
    %397 = vector.load %arg11[%c0_390, %c0_391] : memref<1x128xf32, #tpu.memory_space<vmem>>, vector<1x128xf32>
    %398 = vector.broadcast %397 : vector<1x128xf32> to vector<8x128xf32>
    %399 = arith.addf %396, %398 : vector<8x128xf32>
    %c0_392 = arith.constant 0 : index
    %c0_393 = arith.constant 0 : index
    %400 = vector.load %arg12[%c0_392, %c0_393] : memref<8x128xf32, #tpu.memory_space<vmem>>, vector<8x128xf32>
    tpu.vector_store %arg12[%c0_392, %c0_393], %399 {strides = array<i32>} : memref<8x128xf32, #tpu.memory_space<vmem>>, vector<8x128xf32>,
    return
  }
}

</mosaic_0001>

<llo_original>
// kernel: tile.35
$region0: #{tile.35}
  #allocation0 [shape = 's32[1]{0}', space=sflag, size = 0x4, scoped, tag = 'scoped memory for tile.35']
  %s0 = inlined_call_operand.vmem [shape: f32[8], index: 0, kind: input, shape index: {}]
  %s1 = inlined_call_operand.vmem [shape: f32[16,8], index: 1, kind: output, shape index: {}]
  // Predicated region
  $region2: #{tile.35} parent=0 // pred_check
    _
  $region3: #{tile.35} parent=0 // pred_check_branch
    %3 = sbr.rel (0) target = $region5
  $region4: #{tile.35} parent=0 // pred_region
    _
  $region5: #{tile.35} parent=0 // pred_fallthru
    _
  %v4 = vld [vmem:[%s0] ss:$0 sm:$0xff]
  %5 = vst [vmem:[%s1] sm:$0xff] %v4
  %s6 = scalar_lea.vmem %s1, 8
  %7 = vst [vmem:[%s6] sm:$0xff] %v4

// kernel: tile.39
$region0: #{tile.39}
  %s0 = inlined_call_operand.vmem [shape: f32[16,8], index: 0, kind: input, shape index: {}]
  %s1 = inlined_call_operand.vmem [shape: f32[1,128], index: 1, kind: output, shape index: {}]
  $region1: #{tile.39} parent=0
    #allocation0 [shape = 'u8[4096]{0}', space=vmem, size = 0x1000, scoped, tag = 'scoped mem for output reshape']
    %v2 = vld [vmem:[%s0] sm:$0x1]
    %vm3 = vcmask 64512
    %4 = vst.msk [vmem:[#allocation0] sm:$0x1] %vm3, %v2
    %s5 = scalar_lea.vmem %s0, 15
    %v6 = vld [vmem:[%s5] sm:$0x1]
    %7 = vrot.lane.b32.xlu0 %v6, 120
    %v8 = vpop.permute.xlu0 %7
    %vm9 = vcmask 1048512
    %10 = vst.msk [vmem:[#allocation0] sm:$0x1] %vm9, %v8
    %s11 = scalar_lea.vmem %s0, 14
    %v12 = vld [vmem:[%s11] sm:$0x1]
    %13 = vrot.lane.b32.xlu0 %v12, 112
    %v14 = vpop.permute.xlu0 %13
    %vm15 = vcmask 982912
    %16 = vst.msk [vmem:[#allocation0] sm:$0x1] %vm15, %v14
    %s17 = scalar_lea.vmem %s0, 13
    %v18 = vld [vmem:[%s17] sm:$0x1]
    %19 = vrot.lane.b32.xlu0 %v18, 104
    %v20 = vpop.permute.xlu0 %19
    %vm21 = vcmask 917312
    %22 = vst.msk [vmem:[#allocation0] sm:$0x1] %vm21, %v20
    %s23 = scalar_lea.vmem %s0, 12
    %v24 = vld [vmem:[%s23] sm:$0x1]
    %25 = vrot.lane.b32.xlu0 %v24, 96
    %v26 = vpop.permute.xlu0 %25
    %vm27 = vcmask 851712
    %28 = vst.msk [vmem:[#allocation0] sm:$0x1] %vm27, %v26
    %s29 = scalar_lea.vmem %s0, 11
    %v30 = vld [vmem:[%s29] sm:$0x1]
    %31 = vrot.lane.b32.xlu0 %v30, 88
    %v32 = vpop.permute.xlu0 %31
    %vm33 = vcmask 786112
    %34 = vst.msk [vmem:[#allocation0] sm:$0x1] %vm33, %v32
    %s35 = scalar_lea.vmem %s0, 10
    %v36 = vld [vmem:[%s35] sm:$0x1]
    %37 = vrot.lane.b32.xlu0 %v36, 80
    %v38 = vpop.permute.xlu0 %37
    %vm39 = vcmask 720512
    %40 = vst.msk [vmem:[#allocation0] sm:$0x1] %vm39, %v38
    %s41 = scalar_lea.vmem %s0, 9
    %v42 = vld [vmem:[%s41] sm:$0x1]
    %43 = vrot.lane.b32.xlu0 %v42, 72
    %v44 = vpop.permute.xlu0 %43
    %vm45 = vcmask 654912
    %46 = vst.msk [vmem:[#allocation0] sm:$0x1] %vm45, %v44
    %s47 = scalar_lea.vmem %s0, 8
    %v48 = vld [vmem:[%s47] sm:$0x1]
    %49 = vrot.lane.b32.xlu0 %v48, 64
    %v50 = vpop.permute.xlu0 %49
    %vm51 = vcmask 589312
    %52 = vst.msk [vmem:[#allocation0] sm:$0x1] %vm51, %v50
    %s53 = scalar_lea.vmem %s0, 7
    %v54 = vld [vmem:[%s53] sm:$0x1]
    %55 = vrot.lane.b32.xlu0 %v54, 56
    %v56 = vpop.permute.xlu0 %55
    %vm57 = vcmask 523712
    %58 = vst.msk [vmem:[#allocation0] sm:$0x1] %vm57, %v56
    %s59 = scalar_lea.vmem %s0, 6
    %v60 = vld [vmem:[%s59] sm:$0x1]
    %61 = vrot.lane.b32.xlu0 %v60, 48
    %v62 = vpop.permute.xlu0 %61
    %vm63 = vcmask 458112
    %64 = vst.msk [vmem:[#allocation0] sm:$0x1] %vm63, %v62
    %s65 = scalar_lea.vmem %s0, 5
    %v66 = vld [vmem:[%s65] sm:$0x1]
    %67 = vrot.lane.b32.xlu0 %v66, 40
    %v68 = vpop.permute.xlu0 %67
    %vm69 = vcmask 392512
    %70 = vst.msk [vmem:[#allocation0] sm:$0x1] %vm69, %v68
    %s71 = scalar_lea.vmem %s0, 4
    %v72 = vld [vmem:[%s71] sm:$0x1]
    %73 = vrot.lane.b32.xlu0 %v72, 32
    %v74 = vpop.permute.xlu0 %73
    %vm75 = vcmask 326912
    %76 = vst.msk [vmem:[#allocation0] sm:$0x1] %vm75, %v74
    %s77 = scalar_lea.vmem %s0, 3
    %v78 = vld [vmem:[%s77] sm:$0x1]
    %79 = vrot.lane.b32.xlu0 %v78, 24
    %v80 = vpop.permute.xlu0 %79
    %vm81 = vcmask 261312
    %82 = vst.msk [vmem:[#allocation0] sm:$0x1] %vm81, %v80
    %s83 = scalar_lea.vmem %s0, 2
    %v84 = vld [vmem:[%s83] sm:$0x1]
    %85 = vrot.lane.b32.xlu0 %v84, 16
    %v86 = vpop.permute.xlu0 %85
    %vm87 = vcmask 195712
    %88 = vst.msk [vmem:[#allocation0] sm:$0x1] %vm87, %v86
    %s89 = scalar_lea.vmem %s0, 1
    %v90 = vld [vmem:[%s89] sm:$0x1]
    %91 = vrot.lane.b32.xlu0 %v90, 8
    %v92 = vpop.permute.xlu0 %91
    %vm93 = vcmask 130112
    %94 = vst.msk [vmem:[#allocation0] sm:$0x1] %vm93, %v92
    %s96 = sshllo.u32 0, 1
    %v98 = vld [vmem:[#allocation0] sm:%s96]
    %s99 = sshllo.u32 0, 1
    %100 = vst [vmem:[%s1] sm:%s99] %v98

// kernel: revised_st_encoder.1
$region0: #{revised_st_encoder.1}
  #allocation0 [shape = 'u32[]', space=smem, size = 0x4, offset = 0x4, fixed_abs, tag = 'smem constant byte address 0x4 - core index']
  #allocation1 [shape = 'u32[144,128]{1,0:T(1,128)}', space=vmem, size = 0x12000, scoped, tag = 'internal scratch']
  #allocation2 [shape = 'f32[2,6,32,128]{3,2,1,0:T(8,128)}', space=vmem, size = 0x30000, scoped, tag = 'scratch operand']
  #allocation3 [shape = 'f32[8,16,128]{2,1,0:T(8,128)}', space=vmem, size = 0x10000, scoped, tag = 'scratch operand']
  #allocation4 [shape = 'f32[8,16,128]{2,1,0:T(8,128)}', space=vmem, size = 0x10000, scoped, tag = 'scratch operand']
  %s0 = inlined_call_operand.vmem [shape: f32[2,4,18,128], index: 0, kind: input, shape index: {}]
  %s1 = inlined_call_operand.vmem [shape: bf16[3,128,128], index: 1, kind: input, shape index: {}]
  %s2 = inlined_call_operand.vmem [shape: bf16[3,128,128], index: 2, kind: input, shape index: {}]
  %s3 = inlined_call_operand.vmem [shape: bf16[3,128,128], index: 3, kind: input, shape index: {}]
  %s4 = inlined_call_operand.vmem [shape: bf16[3,128,128], index: 4, kind: input, shape index: {}]
  %s5 = inlined_call_operand.vmem [shape: f32[4,128], index: 5, kind: input, shape index: {}]
  %s6 = inlined_call_operand.vmem [shape: f32[3,16,128], index: 6, kind: input, shape index: {}]
  %s7 = inlined_call_operand.vmem [shape: f32[3,16,128], index: 7, kind: input, shape index: {}]
  %s8 = inlined_call_operand.vmem [shape: f32[2,16,128], index: 8, kind: input, shape index: {}]
  %s9 = inlined_call_operand.vmem [shape: bf16[16,128,64], index: 9, kind: input, shape index: {}]
  %s10 = inlined_call_operand.vmem [shape: bf16[16,128,64], index: 10, kind: input, shape index: {}]
  %s11 = inlined_call_operand.vmem [shape: f32[1,128], index: 11, kind: input, shape index: {}]
  %s12 = inlined_call_operand.vmem [shape: f32[8,128], index: 12, kind: output, shape index: {}]
  %s13 = sld [smem:[#allocation0]]
  $region58: #{revised_st_encoder.1} parent=0
    _
  %s15 = ssub.s32 1, %s13
  %s16 = scalar_select 0, %s15, %s13
  // Predicated region
  $region2: #{revised_st_encoder.1} parent=0 // pred_check
    _
  $region3: #{revised_st_encoder.1} parent=0 // pred_check_branch
    %18 = sbr.rel (0) target = $region5
  $region4: #{revised_st_encoder.1} parent=0 // pred_region
    _
  $region5: #{revised_st_encoder.1} parent=0 // pred_fallthru
    _
  // Predicated region
  $region6: #{revised_st_encoder.1} parent=0 // pred_check
    _
  $region7: #{revised_st_encoder.1} parent=0 // pred_check_branch
    %20 = sbr.rel (0) target = $region9
  $region8: #{revised_st_encoder.1} parent=0 // pred_region
    _
  $region9: #{revised_st_encoder.1} parent=0 // pred_fallthru
    _
  // Predicated region
  $region10: #{revised_st_encoder.1} parent=0 // pred_check
    _
  $region11: #{revised_st_encoder.1} parent=0 // pred_check_branch
    %22 = sbr.rel (0) target = $region13
  $region12: #{revised_st_encoder.1} parent=0 // pred_region
    _
  $region13: #{revised_st_encoder.1} parent=0 // pred_fallthru
    _
  // Predicated region
  $region14: #{revised_st_encoder.1} parent=0 // pred_check
    _
  $region15: #{revised_st_encoder.1} parent=0 // pred_check_branch
    %24 = sbr.rel (0) target = $region17
  $region16: #{revised_st_encoder.1} parent=0 // pred_region
    _
  $region17: #{revised_st_encoder.1} parent=0 // pred_fallthru
    _
  // Predicated region
  $region18: #{revised_st_encoder.1} parent=0 // pred_check
    _
  $region19: #{revised_st_encoder.1} parent=0 // pred_check_branch
    %26 = sbr.rel (0) target = $region21
  $region20: #{revised_st_encoder.1} parent=0 // pred_region
    _
  $region21: #{revised_st_encoder.1} parent=0 // pred_fallthru
    _
  // Predicated region
  $region22: #{revised_st_encoder.1} parent=0 // pred_check
    _
  $region23: #{revised_st_encoder.1} parent=0 // pred_check_branch
    %28 = sbr.rel (0) target = $region25
  $region24: #{revised_st_encoder.1} parent=0 // pred_region
    _
  $region25: #{revised_st_encoder.1} parent=0 // pred_fallthru
    _
  // Predicated region
  $region26: #{revised_st_encoder.1} parent=0 // pred_check
    _
  $region27: #{revised_st_encoder.1} parent=0 // pred_check_branch
    %30 = sbr.rel (0) target = $region29
  $region28: #{revised_st_encoder.1} parent=0 // pred_region
    _
  $region29: #{revised_st_encoder.1} parent=0 // pred_fallthru
    _
  // Predicated region
  $region30: #{revised_st_encoder.1} parent=0 // pred_check
    _
  $region31: #{revised_st_encoder.1} parent=0 // pred_check_branch
    %32 = sbr.rel (0) target = $region33
  $region32: #{revised_st_encoder.1} parent=0 // pred_region
    _
  $region33: #{revised_st_encoder.1} parent=0 // pred_fallthru
    _
  // Predicated region
  $region34: #{revised_st_encoder.1} parent=0 // pred_check
    _
  $region35: #{revised_st_encoder.1} parent=0 // pred_check_branch
    %34 = sbr.rel (0) target = $region37
  $region36: #{revised_st_encoder.1} parent=0 // pred_region
    _
  $region37: #{revised_st_encoder.1} parent=0 // pred_fallthru
    _
  // Predicated region
  $region38: #{revised_st_encoder.1} parent=0 // pred_check
    _
  $region39: #{revised_st_encoder.1} parent=0 // pred_check_branch
    %36 = sbr.rel (0) target = $region41
  $region40: #{revised_st_encoder.1} parent=0 // pred_region
    _
  $region41: #{revised_st_encoder.1} parent=0 // pred_fallthru
    _
  // Predicated region
  $region42: #{revised_st_encoder.1} parent=0 // pred_check
    _
  $region43: #{revised_st_encoder.1} parent=0 // pred_check_branch
    %38 = sbr.rel (0) target = $region45
  $region44: #{revised_st_encoder.1} parent=0 // pred_region
    _
  $region45: #{revised_st_encoder.1} parent=0 // pred_fallthru
    _
  // Predicated region
  $region46: #{revised_st_encoder.1} parent=0 // pred_check
    _
  $region47: #{revised_st_encoder.1} parent=0 // pred_check_branch
    %40 = sbr.rel (0) target = $region49
  $region48: #{revised_st_encoder.1} parent=0 // pred_region
    _
  $region49: #{revised_st_encoder.1} parent=0 // pred_fallthru
    _
  %42 = vst [vmem:[#allocation2] sm:$0xff] 0.0
  %43 = vst [vmem:[#allocation2 + $0x20] sm:$0xff] 0.0
  %44 = vst [vmem:[#allocation2 + $0x40] sm:$0xff] 0.0
  %45 = vst [vmem:[#allocation2 + $0x60] sm:$0xff] 0.0
  %46 = vst [vmem:[#allocation2 + $0x80] sm:$0xff] 0.0
  %47 = vst [vmem:[#allocation2 + $0xa0] sm:$0xff] 0.0
  %48 = vst [vmem:[#allocation2 + $0xc0] sm:$0xff] 0.0
  %49 = vst [vmem:[#allocation2 + $0xe0] sm:$0xff] 0.0
  %50 = vst [vmem:[#allocation2 + $0x100] sm:$0xff] 0.0
  %51 = vst [vmem:[#allocation2 + $0x120] sm:$0xff] 0.0
  %52 = vst [vmem:[#allocation2 + $0x140] sm:$0xff] 0.0
  %53 = vst [vmem:[#allocation2 + $0x160] sm:$0xff] 0.0
  %54 = vst [vmem:[#allocation2 + $0x18] sm:$0xff] 0.0
  %55 = vst [vmem:[#allocation2 + $0x38] sm:$0xff] 0.0
  %56 = vst [vmem:[#allocation2 + $0x58] sm:$0xff] 0.0
  %57 = vst [vmem:[#allocation2 + $0x78] sm:$0xff] 0.0
  %58 = vst [vmem:[#allocation2 + $0x98] sm:$0xff] 0.0
  %59 = vst [vmem:[#allocation2 + $0xb8] sm:$0xff] 0.0
  %60 = vst [vmem:[#allocation2 + $0xd8] sm:$0xff] 0.0
  %61 = vst [vmem:[#allocation2 + $0xf8] sm:$0xff] 0.0
  %62 = vst [vmem:[#allocation2 + $0x118] sm:$0xff] 0.0
  %63 = vst [vmem:[#allocation2 + $0x138] sm:$0xff] 0.0
  %64 = vst [vmem:[#allocation2 + $0x158] sm:$0xff] 0.0
  %65 = vst [vmem:[#allocation2 + $0x178] sm:$0xff] 0.0
  %66 = vst [vmem:[#allocation2 + $0x8] sm:$0xff] 0.0
  %67 = vst [vmem:[#allocation2 + $0x10] sm:$0xff] 0.0
  %68 = vst [vmem:[#allocation2 + $0xc8] sm:$0xff] 0.0
  %69 = vst [vmem:[#allocation2 + $0xd0] sm:$0xff] 0.0
  %s70 = scalar_lea.vmem [#allocation2], 160
  %71 = vst [vmem:[%s70 + $0x8] sm:$0xff] 0.0
  %72 = vst [vmem:[%s70 + $0x10] sm:$0xff] 0.0
  %73 = vst [vmem:[%s70 + $0xc8] sm:$0xff] 0.0
  %74 = vst [vmem:[%s70 + $0xd0] sm:$0xff] 0.0
  %v75 = vld [vmem:[%s0] sm:$0xff]
  %v76 = vld [vmem:[%s0 + $0x8] sm:$0xff]
  %v77 = vld [vmem:[%s0 + $0x18] sm:$0xff]
  %v78 = vld [vmem:[%s0 + $0x20] sm:$0xff]
  %v79 = vld [vmem:[%s0 + $0x30] sm:$0xff]
  %v80 = vld [vmem:[%s0 + $0x38] sm:$0xff]
  %v81 = vld [vmem:[%s0 + $0x48] sm:$0xff]
  %v82 = vld [vmem:[%s0 + $0x50] sm:$0xff]
  %v83 = vld [vmem:[%s0 + $0x60] sm:$0xff]
  %v84 = vld [vmem:[%s0 + $0x68] sm:$0xff]
  %v85 = vld [vmem:[%s0 + $0x78] sm:$0xff]
  %v86 = vld [vmem:[%s0 + $0x80] sm:$0xff]
  %v87 = vld [vmem:[%s0 + $0x90] sm:$0xff]
  %v88 = vld [vmem:[%s0 + $0x98] sm:$0xff]
  %v89 = vld [vmem:[%s0 + $0xa8] sm:$0xff]
  %v90 = vld [vmem:[%s0 + $0xb0] sm:$0xff]
  %v91 = vpack.c.bf16 %v76, %v75
  %v92 = vpack.c.bf16 %v78, %v77
  %v93 = vpack.c.bf16 %v80, %v79
  %v94 = vpack.c.bf16 %v82, %v81
  %v95 = vpack.c.bf16 %v84, %v83
  %v96 = vpack.c.bf16 %v86, %v85
  %v97 = vpack.c.bf16 %v88, %v87
  %v98 = vpack.c.bf16 %v90, %v89
  %v99 = vld [vmem:[%s1] sm:$0xf]
  %v100 = vld [vmem:[%s1 + $0x4] sm:$0xf]
  %v101 = vld [vmem:[%s1 + $0x8] sm:$0xf]
  %v102 = vld [vmem:[%s1 + $0xc] sm:$0xf]
  %v103 = vld [vmem:[%s1 + $0x10] sm:$0xf]
  %v104 = vld [vmem:[%s1 + $0x14] sm:$0xf]
  %v105 = vld [vmem:[%s1 + $0x18] sm:$0xf]
  %v106 = vld [vmem:[%s1 + $0x1c] sm:$0xf]
  %v107 = vld [vmem:[%s1 + $0x20] sm:$0xf]
  %v108 = vld [vmem:[%s1 + $0x24] sm:$0xf]
  %v109 = vld [vmem:[%s1 + $0x28] sm:$0xf]
  %v110 = vld [vmem:[%s1 + $0x2c] sm:$0xf]
  %v111 = vld [vmem:[%s1 + $0x30] sm:$0xf]
  %v112 = vld [vmem:[%s1 + $0x34] sm:$0xf]
  %v113 = vld [vmem:[%s1 + $0x38] sm:$0xf]
  %v114 = vld [vmem:[%s1 + $0x3c] sm:$0xf]
  %v115 = vld [vmem:[%s0 + $0x1] sm:$0xff]
  %v116 = vld [vmem:[%s0 + $0x9] sm:$0xff]
  %v117 = vld [vmem:[%s0 + $0x19] sm:$0xff]
  %v118 = vld [vmem:[%s0 + $0x21] sm:$0xff]
  %v119 = vld [vmem:[%s0 + $0x31] sm:$0xff]
  %v120 = vld [vmem:[%s0 + $0x39] sm:$0xff]
  %v121 = vld [vmem:[%s0 + $0x49] sm:$0xff]
  %v122 = vld [vmem:[%s0 + $0x51] sm:$0xff]
  %v123 = vld [vmem:[%s0 + $0x61] sm:$0xff]
  %v124 = vld [vmem:[%s0 + $0x69] sm:$0xff]
  %v125 = vld [vmem:[%s0 + $0x79] sm:$0xff]
  %v126 = vld [vmem:[%s0 + $0x81] sm:$0xff]
  %v127 = vld [vmem:[%s0 + $0x91] sm:$0xff]
  %v128 = vld [vmem:[%s0 + $0x99] sm:$0xff]
  %v129 = vld [vmem:[%s0 + $0xa9] sm:$0xff]
  %v130 = vld [vmem:[%s0 + $0xb1] sm:$0xff]
  %v131 = vpack.c.bf16 %v116, %v115
  %v132 = vpack.c.bf16 %v118, %v117
  %v133 = vpack.c.bf16 %v120, %v119
  %v134 = vpack.c.bf16 %v122, %v121
  %v135 = vpack.c.bf16 %v124, %v123
  %v136 = vpack.c.bf16 %v126, %v125
  %v137 = vpack.c.bf16 %v128, %v127
  %v138 = vpack.c.bf16 %v130, %v129
  %s139 = scalar_lea.vmem %s1, 64
  %v140 = vld [vmem:[%s139] sm:$0xf]
  %v141 = vld [vmem:[%s139 + $0x4] sm:$0xf]
  %v142 = vld [vmem:[%s139 + $0x8] sm:$0xf]
  %v143 = vld [vmem:[%s139 + $0xc] sm:$0xf]
  %v144 = vld [vmem:[%s139 + $0x10] sm:$0xf]
  %v145 = vld [vmem:[%s139 + $0x14] sm:$0xf]
  %v146 = vld [vmem:[%s139 + $0x18] sm:$0xf]
  %v147 = vld [vmem:[%s139 + $0x1c] sm:$0xf]
  %v148 = vld [vmem:[%s139 + $0x20] sm:$0xf]
  %v149 = vld [vmem:[%s139 + $0x24] sm:$0xf]
  %v150 = vld [vmem:[%s139 + $0x28] sm:$0xf]
  %v151 = vld [vmem:[%s139 + $0x2c] sm:$0xf]
  %v152 = vld [vmem:[%s139 + $0x30] sm:$0xf]
  %v153 = vld [vmem:[%s139 + $0x34] sm:$0xf]
  %v154 = vld [vmem:[%s139 + $0x38] sm:$0xf]
  %v155 = vld [vmem:[%s139 + $0x3c] sm:$0xf]
  %v172 = vunpack.c.l.b16 %v140
  %v173 = vunpack.c.l.b16 %v141
  %v174 = vunpack.c.l.b16 %v142
  %v175 = vunpack.c.l.b16 %v143
  %v176 = vunpack.c.l.b16 %v144
  %v177 = vunpack.c.l.b16 %v145
  %v178 = vunpack.c.l.b16 %v146
  %v179 = vunpack.c.l.b16 %v147
  %v180 = vunpack.c.l.b16 %v148
  %v181 = vunpack.c.l.b16 %v149
  %v182 = vunpack.c.l.b16 %v150
  %v183 = vunpack.c.l.b16 %v151
  %v184 = vunpack.c.l.b16 %v152
  %v185 = vunpack.c.l.b16 %v153
  %v186 = vunpack.c.l.b16 %v154
  %v187 = vunpack.c.l.b16 %v155
  %v188 = vpack.c.b16 %v173, %v172
  %v189 = vpack.c.b16 %v175, %v174
  %v190 = vpack.c.b16 %v177, %v176
  %v191 = vpack.c.b16 %v179, %v178
  %v192 = vpack.c.b16 %v181, %v180
  %v193 = vpack.c.b16 %v183, %v182
  %v194 = vpack.c.b16 %v185, %v184
  %v195 = vpack.c.b16 %v187, %v186
  %204 = vmatprep.subr.bf16.mxu0 0
  %205 = vmatpush1.bf16.msra.mxu0 %v188
  %206 = vmatprep.subr.bf16.mxu0 0
  %207 = vmatpush1.bf16.msra.mxu0 %v189
  %208 = vmatprep.subr.bf16.mxu0 0
  %209 = vmatpush1.bf16.msra.mxu0 %v190
  %210 = vmatprep.subr.bf16.mxu0 0
  %211 = vmatpush1.bf16.msra.mxu0 %v191
  %212 = vmatprep.subr.bf16.mxu0 0
  %213 = vmatpush1.bf16.msra.mxu0 %v192
  %214 = vmatprep.subr.bf16.mxu0 0
  %215 = vmatpush1.bf16.msra.mxu0 %v193
  %216 = vmatprep.subr.bf16.mxu0 0
  %217 = vmatpush1.bf16.msra.mxu0 %v194
  %218 = vmatprep.subr.bf16.mxu0 0
  %219 = vmatpush1.bf16.msra.mxu0 %v195
  %220 = vmatprep.subr.bf16.mxu0 0
  %221 = vmatpush1.bf16.msra.mxu0 0
  %222 = vmatprep.subr.bf16.mxu0 0
  %223 = vmatpush1.bf16.msra.mxu0 0
  %224 = vmatprep.subr.bf16.mxu0 0
  %225 = vmatpush1.bf16.msra.mxu0 0
  %226 = vmatprep.subr.bf16.mxu0 0
  %227 = vmatpush1.bf16.msra.mxu0 0
  %228 = vmatprep.subr.bf16.mxu0 0
  %229 = vmatpush1.bf16.msra.mxu0 0
  %230 = vmatprep.subr.bf16.mxu0 0
  %231 = vmatpush1.bf16.msra.mxu0 0
  %232 = vmatprep.subr.bf16.mxu0 0
  %233 = vmatpush1.bf16.msra.mxu0 0
  %234 = vmatprep.subr.bf16.mxu0 0
  %235 = vmatpush1.bf16.msra.mxu0 0
  %236 = vmatprep.mubr.bf16.mxu0 0
  %237 = vmatmul.mubr.bf16.gmra.mrb[0].mxu0 %v131
  %v238 = vpop.f32.mrb[0].mxu0
  %v239 = vadd.f32 0.0, %v238
  %v240 = vpop.f32.mrb[0].mxu0
  %v241 = vpop.f32.mrb[0].mxu0
  %v242 = vadd.f32 0.0, %v241
  %v243 = vpop.f32.mrb[0].mxu0
  %244 = vmatprep.mubr.bf16.mxu0 0
  %245 = vmatmul.mubr.bf16.gmra.mrb[0].mxu0 %v132
  %v246 = vpop.f32.mrb[0].mxu0
  %v247 = vadd.f32 0.0, %v246
  %v248 = vpop.f32.mrb[0].mxu0
  %v249 = vpop.f32.mrb[0].mxu0
  %v250 = vadd.f32 0.0, %v249
  %v251 = vpop.f32.mrb[0].mxu0
  %252 = vmatprep.mubr.bf16.mxu0 0
  %253 = vmatmul.mubr.bf16.gmra.mrb[0].mxu0 %v133
  %v254 = vpop.f32.mrb[0].mxu0
  %v255 = vadd.f32 0.0, %v254
  %v256 = vpop.f32.mrb[0].mxu0
  %v257 = vpop.f32.mrb[0].mxu0
  %v258 = vadd.f32 0.0, %v257
  %v259 = vpop.f32.mrb[0].mxu0
  %260 = vmatprep.mubr.bf16.mxu0 0
  %261 = vmatmul.mubr.bf16.gmra.mrb[0].mxu0 %v134
  %v262 = vpop.f32.mrb[0].mxu0
  %v263 = vadd.f32 0.0, %v262
  %v264 = vpop.f32.mrb[0].mxu0
  %v265 = vpop.f32.mrb[0].mxu0
  %v266 = vadd.f32 0.0, %v265
  %v267 = vpop.f32.mrb[0].mxu0
  %268 = vmatprep.mubr.bf16.mxu0 0
  %269 = vmatmul.mubr.bf16.gmra.mrb[0].mxu0 %v135
  %v270 = vpop.f32.mrb[0].mxu0
  %v271 = vadd.f32 0.0, %v270
  %v272 = vpop.f32.mrb[0].mxu0
  %v273 = vpop.f32.mrb[0].mxu0
  %v274 = vadd.f32 0.0, %v273
  %v275 = vpop.f32.mrb[0].mxu0
  %276 = vmatprep.mubr.bf16.mxu0 0
  %277 = vmatmul.mubr.bf16.gmra.mrb[0].mxu0 %v136
  %v278 = vpop.f32.mrb[0].mxu0
  %v279 = vadd.f32 0.0, %v278
  %v280 = vpop.f32.mrb[0].mxu0
  %v281 = vpop.f32.mrb[0].mxu0
  %v282 = vadd.f32 0.0, %v281
  %v283 = vpop.f32.mrb[0].mxu0
  %284 = vmatprep.mubr.bf16.mxu0 0
  %285 = vmatmul.mubr.bf16.gmra.mrb[0].mxu0 %v137
  %v286 = vpop.f32.mrb[0].mxu0
  %v287 = vadd.f32 0.0, %v286
  %v288 = vpop.f32.mrb[0].mxu0
  %v289 = vpop.f32.mrb[0].mxu0
  %v290 = vadd.f32 0.0, %v289
  %v291 = vpop.f32.mrb[0].mxu0
  %292 = vmatprep.mubr.bf16.mxu0 0
  %293 = vmatmul.mubr.bf16.gmra.mrb[0].mxu0 %v138
  %v294 = vpop.f32.mrb[0].mxu0
  %v295 = vadd.f32 0.0, %v294
  %v296 = vpop.f32.mrb[0].mxu0
  %v297 = vpop.f32.mrb[0].mxu0
  %v298 = vadd.f32 0.0, %v297
  %v299 = vpop.f32.mrb[0].mxu0
  %300 = vdwg.mxu0
  %v317 = vunpack.c.l.b16 %v99
  %v318 = vunpack.c.l.b16 %v100
  %v319 = vunpack.c.l.b16 %v101
  %v320 = vunpack.c.l.b16 %v102
  %v321 = vunpack.c.l.b16 %v103
  %v322 = vunpack.c.l.b16 %v104
  %v323 = vunpack.c.l.b16 %v105
  %v324 = vunpack.c.l.b16 %v106
  %v325 = vunpack.c.l.b16 %v107
  %v326 = vunpack.c.l.b16 %v108
  %v327 = vunpack.c.l.b16 %v109
  %v328 = vunpack.c.l.b16 %v110
  %v329 = vunpack.c.l.b16 %v111
  %v330 = vunpack.c.l.b16 %v112
  %v331 = vunpack.c.l.b16 %v113
  %v332 = vunpack.c.l.b16 %v114
  %v333 = vpack.c.b16 %v318, %v317
  %v334 = vpack.c.b16 %v320, %v319
  %v335 = vpack.c.b16 %v322, %v321
  %v336 = vpack.c.b16 %v324, %v323
  %v337 = vpack.c.b16 %v326, %v325
  %v338 = vpack.c.b16 %v328, %v327
  %v339 = vpack.c.b16 %v330, %v329
  %v340 = vpack.c.b16 %v332, %v331
  %349 = vmatprep.subr.bf16.mxu0 0
  %350 = vmatpush1.bf16.msra.mxu0 %v333
  %351 = vmatprep.subr.bf16.mxu0 0
  %352 = vmatpush1.bf16.msra.mxu0 %v334
  %353 = vmatprep.subr.bf16.mxu0 0
  %354 = vmatpush1.bf16.msra.mxu0 %v335
  %355 = vmatprep.subr.bf16.mxu0 0
  %356 = vmatpush1.bf16.msra.mxu0 %v336
  %357 = vmatprep.subr.bf16.mxu0 0
  %358 = vmatpush1.bf16.msra.mxu0 %v337
  %359 = vmatprep.subr.bf16.mxu0 0
  %360 = vmatpush1.bf16.msra.mxu0 %v338
  %361 = vmatprep.subr.bf16.mxu0 0
  %362 = vmatpush1.bf16.msra.mxu0 %v339
  %363 = vmatprep.subr.bf16.mxu0 0
  %364 = vmatpush1.bf16.msra.mxu0 %v340
  %365 = vmatprep.subr.bf16.mxu0 0
  %366 = vmatpush1.bf16.msra.mxu0 0
  %367 = vmatprep.subr.bf16.mxu0 0
  %368 = vmatpush1.bf16.msra.mxu0 0
  %369 = vmatprep.subr.bf16.mxu0 0
  %370 = vmatpush1.bf16.msra.mxu0 0
  %371 = vmatprep.subr.bf16.mxu0 0
  %372 = vmatpush1.bf16.msra.mxu0 0
  %373 = vmatprep.subr.bf16.mxu0 0
  %374 = vmatpush1.bf16.msra.mxu0 0
  %375 = vmatprep.subr.bf16.mxu0 0
  %376 = vmatpush1.bf16.msra.mxu0 0
  %377 = vmatprep.subr.bf16.mxu0 0
  %378 = vmatpush1.bf16.msra.mxu0 0
  %379 = vmatprep.subr.bf16.mxu0 0
  %380 = vmatpush1.bf16.msra.mxu0 0
  %381 = vmatprep.mubr.bf16.mxu0 0
  %382 = vmatmul.mubr.bf16.gmra.mrb[0].mxu0 %v91
  %v383 = vpop.f32.mrb[0].mxu0
  %v384 = vadd.f32 %v239, %v383
  %v385 = vpop.f32.mrb[0].mxu0
  %v386 = vpop.f32.mrb[0].mxu0
  %v387 = vadd.f32 %v242, %v386
  %v388 = vpop.f32.mrb[0].mxu0
  %389 = vmatprep.mubr.bf16.mxu0 0
  %390 = vmatmul.mubr.bf16.gmra.mrb[0].mxu0 %v92
  %v391 = vpop.f32.mrb[0].mxu0
  %v392 = vadd.f32 %v247, %v391
  %v393 = vpop.f32.mrb[0].mxu0
  %v394 = vpop.f32.mrb[0].mxu0
  %v395 = vadd.f32 %v250, %v394
  %v396 = vpop.f32.mrb[0].mxu0
  %397 = vmatprep.mubr.bf16.mxu0 0
  %398 = vmatmul.mubr.bf16.gmra.mrb[0].mxu0 %v93
  %v399 = vpop.f32.mrb[0].mxu0
  %v400 = vadd.f32 %v255, %v399
  %v401 = vpop.f32.mrb[0].mxu0
  %v402 = vpop.f32.mrb[0].mxu0
  %v403 = vadd.f32 %v258, %v402
  %v404 = vpop.f32.mrb[0].mxu0
  %405 = vmatprep.mubr.bf16.mxu0 0
  %406 = vmatmul.mubr.bf16.gmra.mrb[0].mxu0 %v94
  %v407 = vpop.f32.mrb[0].mxu0
  %v408 = vadd.f32 %v263, %v407
  %v409 = vpop.f32.mrb[0].mxu0
  %v410 = vpop.f32.mrb[0].mxu0
  %v411 = vadd.f32 %v266, %v410
  %v412 = vpop.f32.mrb[0].mxu0
  %413 = vmatprep.mubr.bf16.mxu0 0
  %414 = vmatmul.mubr.bf16.gmra.mrb[0].mxu0 %v95
  %v415 = vpop.f32.mrb[0].mxu0
  %v416 = vadd.f32 %v271, %v415
  %v417 = vpop.f32.mrb[0].mxu0
  %v418 = vpop.f32.mrb[0].mxu0
  %v419 = vadd.f32 %v274, %v418
  %v420 = vpop.f32.mrb[0].mxu0
  %421 = vmatprep.mubr.bf16.mxu0 0
  %422 = vmatmul.mubr.bf16.gmra.mrb[0].mxu0 %v96
  %v423 = vpop.f32.mrb[0].mxu0
  %v424 = vadd.f32 %v279, %v423
  %v425 = vpop.f32.mrb[0].mxu0
  %v426 = vpop.f32.mrb[0].mxu0
  %v427 = vadd.f32 %v282, %v426
  %v428 = vpop.f32.mrb[0].mxu0
  %429 = vmatprep.mubr.bf16.mxu0 0
  %430 = vmatmul.mubr.bf16.gmra.mrb[0].mxu0 %v97
  %v431 = vpop.f32.mrb[0].mxu0
  %v432 = vadd.f32 %v287, %v431
  %v433 = vpop.f32.mrb[0].mxu0
  %v434 = vpop.f32.mrb[0].mxu0
  %v435 = vadd.f32 %v290, %v434
  %v436 = vpop.f32.mrb[0].mxu0
  %437 = vmatprep.mubr.bf16.mxu0 0
  %438 = vmatmul.mubr.bf16.gmra.mrb[0].mxu0 %v98
  %v439 = vpop.f32.mrb[0].mxu0
  %v440 = vadd.f32 %v295, %v439
  %v441 = vpop.f32.mrb[0].mxu0
  %v442 = vpop.f32.mrb[0].mxu0
  %v443 = vadd.f32 %v298, %v442
  %v444 = vpop.f32.mrb[0].mxu0
  %445 = vdwg.mxu0
  %v446 = vld [vmem:[%s0 + $0x2] sm:$0xff]
  %v447 = vld [vmem:[%s0 + $0xa] sm:$0xff]
  %v448 = vld [vmem:[%s0 + $0x1a] sm:$0xff]
  %v449 = vld [vmem:[%s0 + $0x22] sm:$0xff]
  %v450 = vld [vmem:[%s0 + $0x32] sm:$0xff]
  %v451 = vld [vmem:[%s0 + $0x3a] sm:$0xff]
  %v452 = vld [vmem:[%s0 + $0x4a] sm:$0xff]
  %v453 = vld [vmem:[%s0 + $0x52] sm:$0xff]
  %v454 = vld [vmem:[%s0 + $0x62] sm:$0xff]
  %v455 = vld [vmem:[%s0 + $0x6a] sm:$0xff]
  %v456 = vld [vmem:[%s0 + $0x7a] sm:$0xff]
  %v457 = vld [vmem:[%s0 + $0x82] sm:$0xff]
  %v458 = vld [vmem:[%s0 + $0x92] sm:$0xff]
  %v459 = vld [vmem:[%s0 + $0x9a] sm:$0xff]
  %v460 = vld [vmem:[%s0 + $0xaa] sm:$0xff]
  %v461 = vld [vmem:[%s0 + $0xb2] sm:$0xff]
  %v462 = vpack.c.bf16 %v447, %v446
  %v463 = vpack.c.bf16 %v449, %v448
  %v464 = vpack.c.bf16 %v451, %v450
  %v465 = vpack.c.bf16 %v453, %v452
  %v466 = vpack.c.bf16 %v455, %v454
  %v467 = vpack.c.bf16 %v457, %v456
  %v468 = vpack.c.bf16 %v459, %v458
  %v469 = vpack.c.bf16 %v461, %v460
  %s470 = scalar_lea.vmem %s1, 128
  %v471 = vld [vmem:[%s470] sm:$0xf]
  %v472 = vld [vmem:[%s470 + $0x4] sm:$0xf]
  %v473 = vld [vmem:[%s470 + $0x8] sm:$0xf]
  %v474 = vld [vmem:[%s470 + $0xc] sm:$0xf]
  %v475 = vld [vmem:[%s470 + $0x10] sm:$0xf]
  %v476 = vld [vmem:[%s470 + $0x14] sm:$0xf]
  %v477 = vld [vmem:[%s470 + $0x18] sm:$0xf]
  %v478 = vld [vmem:[%s470 + $0x1c] sm:$0xf]
  %v479 = vld [vmem:[%s470 + $0x20] sm:$0xf]
  %v480 = vld [vmem:[%s470 + $0x24] sm:$0xf]
  %v481 = vld [vmem:[%s470 + $0x28] sm:$0xf]
  %v482 = vld [vmem:[%s470 + $0x2c] sm:$0xf]
  %v483 = vld [vmem:[%s470 + $0x30] sm:$0xf]
  %v484 = vld [vmem:[%s470 + $0x34] sm:$0xf]
  %v485 = vld [vmem:[%s470 + $0x38] sm:$0xf]
  %v486 = vld [vmem:[%s470 + $0x3c] sm:$0xf]
  %v503 = vunpack.c.l.b16 %v471
  %v504 = vunpack.c.l.b16 %v472
  %v505 = vunpack.c.l.b16 %v473
  %v506 = vunpack.c.l.b16 %v474
  %v507 = vunpack.c.l.b16 %v475
  %v508 = vunpack.c.l.b16 %v476
  %v509 = vunpack.c.l.b16 %v477
  %v510 = vunpack.c.l.b16 %v478
  %v511 = vunpack.c.l.b16 %v479
  %v512 = vunpack.c.l.b16 %v480
  %v513 = vunpack.c.l.b16 %v481
  %v514 = vunpack.c.l.b16 %v482
  %v515 = vunpack.c.l.b16 %v483
  %v516 = vunpack.c.l.b16 %v484
  %v517 = vunpack.c.l.b16 %v485
  %v518 = vunpack.c.l.b16 %v486
  %v519 = vpack.c.b16 %v504, %v503
  %v520 = vpack.c.b16 %v506, %v505
  %v521 = vpack.c.b16 %v508, %v507
  %v522 = vpack.c.b16 %v510, %v509
  %v523 = vpack.c.b16 %v512, %v511
  %v524 = vpack.c.b16 %v514, %v513
  %v525 = vpack.c.b16 %v516, %v515
  %v526 = vpack.c.b16 %v518, %v517
  %535 = vmatprep.subr.bf16.mxu0 0
  %536 = vmatpush1.bf16.msra.mxu0 %v519
  %537 = vmatprep.subr.bf16.mxu0 0
  %538 = vmatpush1.bf16.msra.mxu0 %v520
  %539 = vmatprep.subr.bf16.mxu0 0
  %540 = vmatpush1.bf16.msra.mxu0 %v521
  %541 = vmatprep.subr.bf16.mxu0 0
  %542 = vmatpush1.bf16.msra.mxu0 %v522
  %543 = vmatprep.subr.bf16.mxu0 0
  %544 = vmatpush1.bf16.msra.mxu0 %v523
  %545 = vmatprep.subr.bf16.mxu0 0
  %546 = vmatpush1.bf16.msra.mxu0 %v524
  %547 = vmatprep.subr.bf16.mxu0 0
  %548 = vmatpush1.bf16.msra.mxu0 %v525
  %549 = vmatprep.subr.bf16.mxu0 0
  %550 = vmatpush1.bf16.msra.mxu0 %v526
  %551 = vmatprep.subr.bf16.mxu0 0
  %552 = vmatpush1.bf16.msra.mxu0 0
  %553 = vmatprep.subr.bf16.mxu0 0
  %554 = vmatpush1.bf16.msra.mxu0 0
  %555 = vmatprep.subr.bf16.mxu0 0
  %556 = vmatpush1.bf16.msra.mxu0 0
  %557 = vmatprep.subr.bf16.mxu0 0
  %558 = vmatpush1.bf16.msra.mxu0 0
  %559 = vmatprep.subr.bf16.mxu0 0
  %560 = vmatpush1.bf16.msra.mxu0 0
  %561 = vmatprep.subr.bf16.mxu0 0
  %562 = vmatpush1.bf16.msra.mxu0 0
  %563 = vmatprep.subr.bf16.mxu0 0
  %564 = vmatpush1.bf16.msra.mxu0 0
  %565 = vmatprep.subr.bf16.mxu0 0
  %566 = vmatpush1.bf16.msra.mxu0 0
  %567 = vmatprep.mubr.bf16.mxu0 0
  %568 = vmatmul.mubr.bf16.gmra.mrb[0].mxu0 %v462
  %v569 = vpop.f32.mrb[0].mxu0
  %v570 = vadd.f32 0.0, %v569
  %v571 = vpop.f32.mrb[0].mxu0
  %v572 = vpop.f32.mrb[0].mxu0
  %v573 = vadd.f32 0.0, %v572
  %v574 = vpop.f32.mrb[0].mxu0
  %575 = vmatprep.mubr.bf16.mxu0 0
  %576 = vmatmul.mubr.bf16.gmra.mrb[0].mxu0 %v463
  %v577 = vpop.f32.mrb[0].mxu0
  %v578 = vadd.f32 0.0, %v577
  %v579 = vpop.f32.mrb[0].mxu0
  %v580 = vpop.f32.mrb[0].mxu0
  %v581 = vadd.f32 0.0, %v580
  %v582 = vpop.f32.mrb[0].mxu0
  %583 = vmatprep.mubr.bf16.mxu0 0
  %584 = vmatmul.mubr.bf16.gmra.mrb[0].mxu0 %v464
  %v585 = vpop.f32.mrb[0].mxu0
  %v586 = vadd.f32 0.0, %v585
  %v587 = vpop.f32.mrb[0].mxu0
  %v588 = vpop.f32.mrb[0].mxu0
  %v589 = vadd.f32 0.0, %v588
  %v590 = vpop.f32.mrb[0].mxu0
  %591 = vmatprep.mubr.bf16.mxu0 0
  %592 = vmatmul.mubr.bf16.gmra.mrb[0].mxu0 %v465
  %v593 = vpop.f32.mrb[0].mxu0
  %v594 = vadd.f32 0.0, %v593
  %v595 = vpop.f32.mrb[0].mxu0
  %v596 = vpop.f32.mrb[0].mxu0
  %v597 = vadd.f32 0.0, %v596
  %v598 = vpop.f32.mrb[0].mxu0
  %599 = vmatprep.mubr.bf16.mxu0 0
  %600 = vmatmul.mubr.bf16.gmra.mrb[0].mxu0 %v466
  %v601 = vpop.f32.mrb[0].mxu0
  %v602 = vadd.f32 0.0, %v601
  %v603 = vpop.f32.mrb[0].mxu0
  %v604 = vpop.f32.mrb[0].mxu0
  %v605 = vadd.f32 0.0, %v604
  %v606 = vpop.f32.mrb[0].mxu0
  %607 = vmatprep.mubr.bf16.mxu0 0
  %608 = vmatmul.mubr.bf16.gmra.mrb[0].mxu0 %v467
  %v609 = vpop.f32.mrb[0].mxu0
  %v610 = vadd.f32 0.0, %v609
  %v611 = vpop.f32.mrb[0].mxu0
  %v612 = vpop.f32.mrb[0].mxu0
  %v613 = vadd.f32 0.0, %v612
  %v614 = vpop.f32.mrb[0].mxu0
  %615 = vmatprep.mubr.bf16.mxu0 0
  %616 = vmatmul.mubr.bf16.gmra.mrb[0].mxu0 %v468
  %v617 = vpop.f32.mrb[0].mxu0
  %v618 = vadd.f32 0.0, %v617
  %v619 = vpop.f32.mrb[0].mxu0
  %v620 = vpop.f32.mrb[0].mxu0
  %v621 = vadd.f32 0.0, %v620
  %v622 = vpop.f32.mrb[0].mxu0
  %623 = vmatprep.mubr.bf16.mxu0 0
  %624 = vmatmul.mubr.bf16.gmra.mrb[0].mxu0 %v469
  %v625 = vpop.f32.mrb[0].mxu0
  %v626 = vadd.f32 0.0, %v625
  %v627 = vpop.f32.mrb[0].mxu0
  %v628 = vpop.f32.mrb[0].mxu0
  %v629 = vadd.f32 0.0, %v628
  %v630 = vpop.f32.mrb[0].mxu0
  %631 = vdwg.mxu0
  %v632 = vadd.f32 %v384, %v570
  %v633 = vadd.f32 %v387, %v573
  %v634 = vadd.f32 %v392, %v578
  %v635 = vadd.f32 %v395, %v581
  %v636 = vadd.f32 %v400, %v586
  %v637 = vadd.f32 %v403, %v589
  %v638 = vadd.f32 %v408, %v594
  %v639 = vadd.f32 %v411, %v597
  %v640 = vadd.f32 %v416, %v602
  %v641 = vadd.f32 %v419, %v605
  %v642 = vadd.f32 %v424, %v610
  %v643 = vadd.f32 %v427, %v613
  %v644 = vadd.f32 %v432, %v618
  %v645 = vadd.f32 %v435, %v621
  %v646 = vadd.f32 %v440, %v626
  %v647 = vadd.f32 %v443, %v629
  %v648 = vld [vmem:[%s5] sm:$0x1]
  %v649 = vlaneseq
  %v650 = vshrl.u32 %v649, 7
  %v651 = vsub.s32 0, %v650
  %v652 = vrot.slane %v648, %v651
  %v653 = vadd.f32 %v632, %v652
  %v654 = vadd.f32 %v633, %v652
  %v655 = vadd.f32 %v634, %v652
  %v656 = vadd.f32 %v635, %v652
  %v657 = vadd.f32 %v636, %v652
  %v658 = vadd.f32 %v637, %v652
  %v659 = vadd.f32 %v638, %v652
  %v660 = vadd.f32 %v639, %v652
  %v661 = vadd.f32 %v640, %v652
  %v662 = vadd.f32 %v641, %v652
  %v663 = vadd.f32 %v642, %v652
  %v664 = vadd.f32 %v643, %v652
  %v665 = vadd.f32 %v644, %v652
  %v666 = vadd.f32 %v645, %v652
  %v667 = vadd.f32 %v646, %v652
  %v668 = vadd.f32 %v647, %v652
  %v669 = vmax.f32 %v653, 0.0
  %v670 = vmax.f32 %v654, 0.0
  %v671 = vmax.f32 %v655, 0.0
  %v672 = vmax.f32 %v656, 0.0
  %v673 = vmax.f32 %v657, 0.0
  %v674 = vmax.f32 %v658, 0.0
  %v675 = vmax.f32 %v659, 0.0
  %v676 = vmax.f32 %v660, 0.0
  %v677 = vmax.f32 %v661, 0.0
  %v678 = vmax.f32 %v662, 0.0
  %v679 = vmax.f32 %v663, 0.0
  %v680 = vmax.f32 %v664, 0.0
  %v681 = vmax.f32 %v665, 0.0
  %v682 = vmax.f32 %v666, 0.0
  %v683 = vmax.f32 %v667, 0.0
  %v684 = vmax.f32 %v668, 0.0
  %s685 = scalar_lea.vmem [#allocation2], 32
  %686 = vst [vmem:[%s685 + $0x8] sm:$0xff] %v669
  %687 = vst [vmem:[%s685 + $0x10] sm:$0xff] %v670
  %688 = vst [vmem:[%s685 + $0x28] sm:$0xff] %v671
  %689 = vst [vmem:[%s685 + $0x30] sm:$0xff] %v672
  %690 = vst [vmem:[%s685 + $0x48] sm:$0xff] %v673
  %691 = vst [vmem:[%s685 + $0x50] sm:$0xff] %v674
  %692 = vst [vmem:[%s685 + $0x68] sm:$0xff] %v675
  %693 = vst [vmem:[%s685 + $0x70] sm:$0xff] %v676
  %694 = vst [vmem:[%s685 + $0xc8] sm:$0xff] %v677
  %695 = vst [vmem:[%s685 + $0xd0] sm:$0xff] %v678
  %696 = vst [vmem:[%s685 + $0xe8] sm:$0xff] %v679
  %697 = vst [vmem:[%s685 + $0xf0] sm:$0xff] %v680
  %698 = vst [vmem:[%s685 + $0x108] sm:$0xff] %v681
  %699 = vst [vmem:[%s685 + $0x110] sm:$0xff] %v682
  %700 = vst [vmem:[%s685 + $0x128] sm:$0xff] %v683
  %701 = vst [vmem:[%s685 + $0x130] sm:$0xff] %v684
  %s702 = scalar_lea.vmem %s6, 16
  %v703 = vld [vmem:[%s702] sm:$0xff]
  %v704 = vld [vmem:[%s702 + $0x8] sm:$0xff]
  %v705 = vmul.f32 %v669, %v703
  %v706 = vmul.f32 %v670, %v704
  %v707 = vmul.f32 %v671, %v703
  %v708 = vmul.f32 %v672, %v704
  %v709 = vmul.f32 %v673, %v703
  %v710 = vmul.f32 %v674, %v704
  %v711 = vmul.f32 %v675, %v703
  %v712 = vmul.f32 %v676, %v704
  %v713 = vmul.f32 %v677, %v703
  %v714 = vmul.f32 %v678, %v704
  %v715 = vmul.f32 %v679, %v703
  %v716 = vmul.f32 %v680, %v704
  %v717 = vmul.f32 %v681, %v703
  %v718 = vmul.f32 %v682, %v704
  %v719 = vmul.f32 %v683, %v703
  %v720 = vmul.f32 %v684, %v704
  %v721 = vld [vmem:[%s8] sm:$0xff]
  %v722 = vld [vmem:[%s8 + $0x8] sm:$0xff]
  %v723 = vadd.f32 %v705, %v721
  %v724 = vadd.f32 %v706, %v722
  %v725 = vadd.f32 %v707, %v721
  %v726 = vadd.f32 %v708, %v722
  %v727 = vadd.f32 %v709, %v721
  %v728 = vadd.f32 %v710, %v722
  %v729 = vadd.f32 %v711, %v721
  %v730 = vadd.f32 %v712, %v722
  %v731 = vadd.f32 %v713, %v721
  %v732 = vadd.f32 %v714, %v722
  %v733 = vadd.f32 %v715, %v721
  %v734 = vadd.f32 %v716, %v722
  %v735 = vadd.f32 %v717, %v721
  %v736 = vadd.f32 %v718, %v722
  %v737 = vadd.f32 %v719, %v721
  %v738 = vadd.f32 %v720, %v722
  %s739 = scalar_lea.vmem %s7, 16
  %v740 = vld [vmem:[%s739] sm:$0xff]
  %v741 = vld [vmem:[%s739 + $0x8] sm:$0xff]
  %v742 = vmul.f32 %v669, %v740
  %v743 = vmul.f32 %v670, %v741
  %v744 = vmul.f32 %v671, %v740
  %v745 = vmul.f32 %v672, %v741
  %v746 = vmul.f32 %v673, %v740
  %v747 = vmul.f32 %v674, %v741
  %v748 = vmul.f32 %v675, %v740
  %v749 = vmul.f32 %v676, %v741
  %v750 = vmul.f32 %v677, %v740
  %v751 = vmul.f32 %v678, %v741
  %v752 = vmul.f32 %v679, %v740
  %v753 = vmul.f32 %v680, %v741
  %v754 = vmul.f32 %v681, %v740
  %v755 = vmul.f32 %v682, %v741
  %v756 = vmul.f32 %v683, %v740
  %v757 = vmul.f32 %v684, %v741
  %s758 = scalar_lea.vmem %s8, 16
  %v759 = vld [vmem:[%s758] sm:$0xff]
  %v760 = vld [vmem:[%s758 + $0x8] sm:$0xff]
  %v761 = vadd.f32 %v742, %v759
  %v762 = vadd.f32 %v743, %v760
  %v763 = vadd.f32 %v744, %v759
  %v764 = vadd.f32 %v745, %v760
  %v765 = vadd.f32 %v746, %v759
  %v766 = vadd.f32 %v747, %v760
  %v767 = vadd.f32 %v748, %v759
  %v768 = vadd.f32 %v749, %v760
  %v769 = vadd.f32 %v750, %v759
  %v770 = vadd.f32 %v751, %v760
  %v771 = vadd.f32 %v752, %v759
  %v772 = vadd.f32 %v753, %v760
  %v773 = vadd.f32 %v754, %v759
  %v774 = vadd.f32 %v755, %v760
  %v775 = vadd.f32 %v756, %v759
  %v776 = vadd.f32 %v757, %v760
  %v777 = vld [vmem:[#allocation2 + $0x8] sm:$0xff]
  %v778 = vld [vmem:[#allocation2 + $0x10] sm:$0xff]
  %v779 = vld [vmem:[#allocation2 + $0x28] sm:$0xff]
  %v780 = vld [vmem:[#allocation2 + $0x30] sm:$0xff]
  %v781 = vld [vmem:[#allocation2 + $0x48] sm:$0xff]
  %v782 = vld [vmem:[#allocation2 + $0x50] sm:$0xff]
  %v783 = vld [vmem:[#allocation2 + $0x68] sm:$0xff]
  %v784 = vld [vmem:[#allocation2 + $0x70] sm:$0xff]
  %v785 = vld [vmem:[#allocation2 + $0xc8] sm:$0xff]
  %v786 = vld [vmem:[#allocation2 + $0xd0] sm:$0xff]
  %v787 = vld [vmem:[#allocation2 + $0xe8] sm:$0xff]
  %v788 = vld [vmem:[#allocation2 + $0xf0] sm:$0xff]
  %v789 = vld [vmem:[#allocation2 + $0x108] sm:$0xff]
  %v790 = vld [vmem:[#allocation2 + $0x110] sm:$0xff]
  %v791 = vld [vmem:[#allocation2 + $0x128] sm:$0xff]
  %v792 = vld [vmem:[#allocation2 + $0x130] sm:$0xff]
  %v793 = vld [vmem:[%s6] sm:$0xff]
  %v794 = vld [vmem:[%s6 + $0x8] sm:$0xff]
  %v795 = vmul.f32 %v777, %v793
  %v796 = vmul.f32 %v778, %v794
  %v797 = vmul.f32 %v779, %v793
  %v798 = vmul.f32 %v780, %v794
  %v799 = vmul.f32 %v781, %v793
  %v800 = vmul.f32 %v782, %v794
  %v801 = vmul.f32 %v783, %v793
  %v802 = vmul.f32 %v784, %v794
  %v803 = vmul.f32 %v785, %v793
  %v804 = vmul.f32 %v786, %v794
  %v805 = vmul.f32 %v787, %v793
  %v806 = vmul.f32 %v788, %v794
  %v807 = vmul.f32 %v789, %v793
  %v808 = vmul.f32 %v790, %v794
  %v809 = vmul.f32 %v791, %v793
  %v810 = vmul.f32 %v792, %v794
  %v811 = vadd.f32 %v723, %v795
  %v812 = vadd.f32 %v724, %v796
  %v813 = vadd.f32 %v725, %v797
  %v814 = vadd.f32 %v726, %v798
  %v815 = vadd.f32 %v727, %v799
  %v816 = vadd.f32 %v728, %v800
  %v817 = vadd.f32 %v729, %v801
  %v818 = vadd.f32 %v730, %v802
  %v819 = vadd.f32 %v731, %v803
  %v820 = vadd.f32 %v732, %v804
  %v821 = vadd.f32 %v733, %v805
  %v822 = vadd.f32 %v734, %v806
  %v823 = vadd.f32 %v735, %v807
  %v824 = vadd.f32 %v736, %v808
  %v825 = vadd.f32 %v737, %v809
  %v826 = vadd.f32 %v738, %v810
  %v827 = vld [vmem:[%s7] sm:$0xff]
  %v828 = vld [vmem:[%s7 + $0x8] sm:$0xff]
  %v829 = vmul.f32 %v777, %v827
  %v830 = vmul.f32 %v778, %v828
  %v831 = vmul.f32 %v779, %v827
  %v832 = vmul.f32 %v780, %v828
  %v833 = vmul.f32 %v781, %v827
  %v834 = vmul.f32 %v782, %v828
  %v835 = vmul.f32 %v783, %v827
  %v836 = vmul.f32 %v784, %v828
  %v837 = vmul.f32 %v785, %v827
  %v838 = vmul.f32 %v786, %v828
  %v839 = vmul.f32 %v787, %v827
  %v840 = vmul.f32 %v788, %v828
  %v841 = vmul.f32 %v789, %v827
  %v842 = vmul.f32 %v790, %v828
  %v843 = vmul.f32 %v791, %v827
  %v844 = vmul.f32 %v792, %v828
  %v845 = vadd.f32 %v761, %v829
  %v846 = vadd.f32 %v762, %v830
  %v847 = vadd.f32 %v763, %v831
  %v848 = vadd.f32 %v764, %v832
  %v849 = vadd.f32 %v765, %v833
  %v850 = vadd.f32 %v766, %v834
  %v851 = vadd.f32 %v767, %v835
  %v852 = vadd.f32 %v768, %v836
  %v853 = vadd.f32 %v769, %v837
  %v854 = vadd.f32 %v770, %v838
  %v855 = vadd.f32 %v771, %v839
  %v856 = vadd.f32 %v772, %v840
  %v857 = vadd.f32 %v773, %v841
  %v858 = vadd.f32 %v774, %v842
  %v859 = vadd.f32 %v775, %v843
  %v860 = vadd.f32 %v776, %v844
  %s861 = scalar_lea.vmem [#allocation2], 64
  %v862 = vld [vmem:[%s861 + $0x8] sm:$0xff]
  %v863 = vld [vmem:[%s861 + $0x10] sm:$0xff]
  %v864 = vld [vmem:[%s861 + $0x28] sm:$0xff]
  %v865 = vld [vmem:[%s861 + $0x30] sm:$0xff]
  %v866 = vld [vmem:[%s861 + $0x48] sm:$0xff]
  %v867 = vld [vmem:[%s861 + $0x50] sm:$0xff]
  %v868 = vld [vmem:[%s861 + $0x68] sm:$0xff]
  %v869 = vld [vmem:[%s861 + $0x70] sm:$0xff]
  %v870 = vld [vmem:[%s861 + $0xc8] sm:$0xff]
  %v871 = vld [vmem:[%s861 + $0xd0] sm:$0xff]
  %v872 = vld [vmem:[%s861 + $0xe8] sm:$0xff]
  %v873 = vld [vmem:[%s861 + $0xf0] sm:$0xff]
  %v874 = vld [vmem:[%s861 + $0x108] sm:$0xff]
  %v875 = vld [vmem:[%s861 + $0x110] sm:$0xff]
  %v876 = vld [vmem:[%s861 + $0x128] sm:$0xff]
  %v877 = vld [vmem:[%s861 + $0x130] sm:$0xff]
  %s878 = scalar_lea.vmem %s6, 32
  %v879 = vld [vmem:[%s878] sm:$0xff]
  %v880 = vld [vmem:[%s878 + $0x8] sm:$0xff]
  %v881 = vmul.f32 %v862, %v879
  %v882 = vmul.f32 %v863, %v880
  %v883 = vmul.f32 %v864, %v879
  %v884 = vmul.f32 %v865, %v880
  %v885 = vmul.f32 %v866, %v879
  %v886 = vmul.f32 %v867, %v880
  %v887 = vmul.f32 %v868, %v879
  %v888 = vmul.f32 %v869, %v880
  %v889 = vmul.f32 %v870, %v879
  %v890 = vmul.f32 %v871, %v880
  %v891 = vmul.f32 %v872, %v879
  %v892 = vmul.f32 %v873, %v880
  %v893 = vmul.f32 %v874, %v879
  %v894 = vmul.f32 %v875, %v880
  %v895 = vmul.f32 %v876, %v879
  %v896 = vmul.f32 %v877, %v880
  %v897 = vadd.f32 %v811, %v881
  %v898 = vadd.f32 %v812, %v882
  %v899 = vadd.f32 %v813, %v883
  %v900 = vadd.f32 %v814, %v884
  %v901 = vadd.f32 %v815, %v885
  %v902 = vadd.f32 %v816, %v886
  %v903 = vadd.f32 %v817, %v887
  %v904 = vadd.f32 %v818, %v888
  %v905 = vadd.f32 %v819, %v889
  %v906 = vadd.f32 %v820, %v890
  %v907 = vadd.f32 %v821, %v891
  %v908 = vadd.f32 %v822, %v892
  %v909 = vadd.f32 %v823, %v893
  %v910 = vadd.f32 %v824, %v894
  %v911 = vadd.f32 %v825, %v895
  %v912 = vadd.f32 %v826, %v896
  %s913 = scalar_lea.vmem %s7, 32
  %v914 = vld [vmem:[%s913] sm:$0xff]
  %v915 = vld [vmem:[%s913 + $0x8] sm:$0xff]
  %v916 = vmul.f32 %v862, %v914
  %v917 = vmul.f32 %v863, %v915
  %v918 = vmul.f32 %v864, %v914
  %v919 = vmul.f32 %v865, %v915
  %v920 = vmul.f32 %v866, %v914
  %v921 = vmul.f32 %v867, %v915
  %v922 = vmul.f32 %v868, %v914
  %v923 = vmul.f32 %v869, %v915
  %v924 = vmul.f32 %v870, %v914
  %v925 = vmul.f32 %v871, %v915
  %v926 = vmul.f32 %v872, %v914
  %v927 = vmul.f32 %v873, %v915
  %v928 = vmul.f32 %v874, %v914
  %v929 = vmul.f32 %v875, %v915
  %v930 = vmul.f32 %v876, %v914
  %v931 = vmul.f32 %v877, %v915
  %v932 = vadd.f32 %v845, %v916
  %v933 = vadd.f32 %v846, %v917
  %v934 = vadd.f32 %v847, %v918
  %v935 = vadd.f32 %v848, %v919
  %v936 = vadd.f32 %v849, %v920
  %v937 = vadd.f32 %v850, %v921
  %v938 = vadd.f32 %v851, %v922
  %v939 = vadd.f32 %v852, %v923
  %v940 = vadd.f32 %v853, %v924
  %v941 = vadd.f32 %v854, %v925
  %v942 = vadd.f32 %v855, %v926
  %v943 = vadd.f32 %v856, %v927
  %v944 = vadd.f32 %v857, %v928
  %v945 = vadd.f32 %v858, %v929
  %v946 = vadd.f32 %v859, %v930
  %v947 = vadd.f32 %v860, %v931
  %v948 = vtanh.pop %v897
  %v949 = vtanh.pop %v898
  %v950 = vtanh.pop %v899
  %v951 = vtanh.pop %v900
  %v952 = vtanh.pop %v901
  %v953 = vtanh.pop %v902
  %v954 = vtanh.pop %v903
  %v955 = vtanh.pop %v904
  %v956 = vtanh.pop %v905
  %v957 = vtanh.pop %v906
  %v958 = vtanh.pop %v907
  %v959 = vtanh.pop %v908
  %v960 = vtanh.pop %v909
  %v961 = vtanh.pop %v910
  %v962 = vtanh.pop %v911
  %v963 = vtanh.pop %v912
  %v964 = vsub.f32 0.0, %v932
  %v965 = vsub.f32 0.0, %v933
  %v966 = vsub.f32 0.0, %v934
  %v967 = vsub.f32 0.0, %v935
  %v968 = vsub.f32 0.0, %v936
  %v969 = vsub.f32 0.0, %v937
  %v970 = vsub.f32 0.0, %v938
  %v971 = vsub.f32 0.0, %v939
  %v972 = vsub.f32 0.0, %v940
  %v973 = vsub.f32 0.0, %v941
  %v974 = vsub.f32 0.0, %v942
  %v975 = vsub.f32 0.0, %v943
  %v976 = vsub.f32 0.0, %v944
  %v977 = vsub.f32 0.0, %v945
  %v978 = vsub.f32 0.0, %v946
  %v979 = vsub.f32 0.0, %v947
  %v980 = vmul.f32 %v964, 1.442695
  %v981 = vpow.pop %v980
  %v982 = vmul.f32 %v965, 1.442695
  %v983 = vpow.pop %v982
  %v984 = vmul.f32 %v966, 1.442695
  %v985 = vpow.pop %v984
  %v986 = vmul.f32 %v967, 1.442695
  %v987 = vpow.pop %v986
  %v988 = vmul.f32 %v968, 1.442695
  %v989 = vpow.pop %v988
  %v990 = vmul.f32 %v969, 1.442695
  %v991 = vpow.pop %v990
  %v992 = vmul.f32 %v970, 1.442695
  %v993 = vpow.pop %v992
  %v994 = vmul.f32 %v971, 1.442695
  %v995 = vpow.pop %v994
  %v996 = vmul.f32 %v972, 1.442695
  %v997 = vpow.pop %v996
  %v998 = vmul.f32 %v973, 1.442695
  %v999 = vpow.pop %v998
  %v1000 = vmul.f32 %v974, 1.442695
  %v1001 = vpow.pop %v1000
  %v1002 = vmul.f32 %v975, 1.442695
  %v1003 = vpow.pop %v1002
  %v1004 = vmul.f32 %v976, 1.442695
  %v1005 = vpow.pop %v1004
  %v1006 = vmul.f32 %v977, 1.442695
  %v1007 = vpow.pop %v1006
  %v1008 = vmul.f32 %v978, 1.442695
  %v1009 = vpow.pop %v1008
  %v1010 = vmul.f32 %v979, 1.442695
  %v1011 = vpow.pop %v1010
  %v1012 = vadd.f32 %v981, 1.0
  %v1013 = vadd.f32 %v983, 1.0
  %v1014 = vadd.f32 %v985, 1.0
  %v1015 = vadd.f32 %v987, 1.0
  %v1016 = vadd.f32 %v989, 1.0
  %v1017 = vadd.f32 %v991, 1.0
  %v1018 = vadd.f32 %v993, 1.0
  %v1019 = vadd.f32 %v995, 1.0
  %v1020 = vadd.f32 %v997, 1.0
  %v1021 = vadd.f32 %v999, 1.0
  %v1022 = vadd.f32 %v1001, 1.0
  %v1023 = vadd.f32 %v1003, 1.0
  %v1024 = vadd.f32 %v1005, 1.0
  %v1025 = vadd.f32 %v1007, 1.0
  %v1026 = vadd.f32 %v1009, 1.0
  %v1027 = vadd.f32 %v1011, 1.0
  %v1028 = vrcp.pop %v1012
  %v1029 = vrcp.pop %v1013
  %v1030 = vrcp.pop %v1014
  %v1031 = vrcp.pop %v1015
  %v1032 = vrcp.pop %v1016
  %v1033 = vrcp.pop %v1017
  %v1034 = vrcp.pop %v1018
  %v1035 = vrcp.pop %v1019
  %v1036 = vrcp.pop %v1020
  %v1037 = vrcp.pop %v1021
  %v1038 = vrcp.pop %v1022
  %v1039 = vrcp.pop %v1023
  %v1040 = vrcp.pop %v1024
  %v1041 = vrcp.pop %v1025
  %v1042 = vrcp.pop %v1026
  %v1043 = vrcp.pop %v1027
  %v1044 = vmul.f32 %v948, %v1028
  %v1045 = vmul.f32 %v949, %v1029
  %v1046 = vmul.f32 %v950, %v1030
  %v1047 = vmul.f32 %v951, %v1031
  %v1048 = vmul.f32 %v952, %v1032
  %v1049 = vmul.f32 %v953, %v1033
  %v1050 = vmul.f32 %v954, %v1034
  %v1051 = vmul.f32 %v955, %v1035
  %v1052 = vmul.f32 %v956, %v1036
  %v1053 = vmul.f32 %v957, %v1037
  %v1054 = vmul.f32 %v958, %v1038
  %v1055 = vmul.f32 %v959, %v1039
  %v1056 = vmul.f32 %v960, %v1040
  %v1057 = vmul.f32 %v961, %v1041
  %v1058 = vmul.f32 %v962, %v1042
  %v1059 = vmul.f32 %v963, %v1043
  %1060 = vst [vmem:[#allocation3] sm:$0xff] %v1044
  %1061 = vst [vmem:[#allocation3 + $0x8] sm:$0xff] %v1045
  %1062 = vst [vmem:[#allocation3 + $0x10] sm:$0xff] %v1046
  %1063 = vst [vmem:[#allocation3 + $0x18] sm:$0xff] %v1047
  %1064 = vst [vmem:[#allocation3 + $0x20] sm:$0xff] %v1048
  %1065 = vst [vmem:[#allocation3 + $0x28] sm:$0xff] %v1049
  %1066 = vst [vmem:[#allocation3 + $0x30] sm:$0xff] %v1050
  %1067 = vst [vmem:[#allocation3 + $0x38] sm:$0xff] %v1051
  %1068 = vst [vmem:[#allocation3 + $0x40] sm:$0xff] %v1052
  %1069 = vst [vmem:[#allocation3 + $0x48] sm:$0xff] %v1053
  %1070 = vst [vmem:[#allocation3 + $0x50] sm:$0xff] %v1054
  %1071 = vst [vmem:[#allocation3 + $0x58] sm:$0xff] %v1055
  %1072 = vst [vmem:[#allocation3 + $0x60] sm:$0xff] %v1056
  %1073 = vst [vmem:[#allocation3 + $0x68] sm:$0xff] %v1057
  %1074 = vst [vmem:[#allocation3 + $0x70] sm:$0xff] %v1058
  %1075 = vst [vmem:[#allocation3 + $0x78] sm:$0xff] %v1059
  %v1076 = vld [vmem:[%s685 + $0x7] sm:$0xff]
  %v1077 = vld [vmem:[%s685 + $0xf] sm:$0xff]
  %v1078 = vld [vmem:[%s685 + $0x27] sm:$0xff]
  %v1079 = vld [vmem:[%s685 + $0x2f] sm:$0xff]
  %v1080 = vld [vmem:[%s685 + $0x47] sm:$0xff]
  %v1081 = vld [vmem:[%s685 + $0x4f] sm:$0xff]
  %v1082 = vld [vmem:[%s685 + $0x67] sm:$0xff]
  %v1083 = vld [vmem:[%s685 + $0x6f] sm:$0xff]
  %v1084 = vld [vmem:[%s685 + $0xc7] sm:$0xff]
  %v1085 = vld [vmem:[%s685 + $0xcf] sm:$0xff]
  %v1086 = vld [vmem:[%s685 + $0xe7] sm:$0xff]
  %v1087 = vld [vmem:[%s685 + $0xef] sm:$0xff]
  %v1088 = vld [vmem:[%s685 + $0x107] sm:$0xff]
  %v1089 = vld [vmem:[%s685 + $0x10f] sm:$0xff]
  %v1090 = vld [vmem:[%s685 + $0x127] sm:$0xff]
  %v1091 = vld [vmem:[%s685 + $0x12f] sm:$0xff]
  %v1092 = vpack.c.bf16 %v1077, %v1076
  %v1093 = vpack.c.bf16 %v1079, %v1078
  %v1094 = vpack.c.bf16 %v1081, %v1080
  %v1095 = vpack.c.bf16 %v1083, %v1082
  %v1096 = vpack.c.bf16 %v1085, %v1084
  %v1097 = vpack.c.bf16 %v1087, %v1086
  %v1098 = vpack.c.bf16 %v1089, %v1088
  %v1099 = vpack.c.bf16 %v1091, %v1090
  %v1100 = vld [vmem:[%s2] sm:$0xf]
  %v1101 = vld [vmem:[%s2 + $0x4] sm:$0xf]
  %v1102 = vld [vmem:[%s2 + $0x8] sm:$0xf]
  %v1103 = vld [vmem:[%s2 + $0xc] sm:$0xf]
  %v1104 = vld [vmem:[%s2 + $0x10] sm:$0xf]
  %v1105 = vld [vmem:[%s2 + $0x14] sm:$0xf]
  %v1106 = vld [vmem:[%s2 + $0x18] sm:$0xf]
  %v1107 = vld [vmem:[%s2 + $0x1c] sm:$0xf]
  %v1108 = vld [vmem:[%s2 + $0x20] sm:$0xf]
  %v1109 = vld [vmem:[%s2 + $0x24] sm:$0xf]
  %v1110 = vld [vmem:[%s2 + $0x28] sm:$0xf]
  %v1111 = vld [vmem:[%s2 + $0x2c] sm:$0xf]
  %v1112 = vld [vmem:[%s2 + $0x30] sm:$0xf]
  %v1113 = vld [vmem:[%s2 + $0x34] sm:$0xf]
  %v1114 = vld [vmem:[%s2 + $0x38] sm:$0xf]
  %v1115 = vld [vmem:[%s2 + $0x3c] sm:$0xf]
  %v1116 = vld [vmem:[%s685 + $0x8] sm:$0xff]
  %v1117 = vld [vmem:[%s685 + $0x10] sm:$0xff]
  %v1118 = vld [vmem:[%s685 + $0x28] sm:$0xff]
  %v1119 = vld [vmem:[%s685 + $0x30] sm:$0xff]
  %v1120 = vld [vmem:[%s685 + $0x48] sm:$0xff]
  %v1121 = vld [vmem:[%s685 + $0x50] sm:$0xff]
  %v1122 = vld [vmem:[%s685 + $0x68] sm:$0xff]
  %v1123 = vld [vmem:[%s685 + $0x70] sm:$0xff]
  %v1124 = vld [vmem:[%s685 + $0xc8] sm:$0xff]
  %v1125 = vld [vmem:[%s685 + $0xd0] sm:$0xff]
  %v1126 = vld [vmem:[%s685 + $0xe8] sm:$0xff]
  %v1127 = vld [vmem:[%s685 + $0xf0] sm:$0xff]
  %v1128 = vld [vmem:[%s685 + $0x108] sm:$0xff]
  %v1129 = vld [vmem:[%s685 + $0x110] sm:$0xff]
  %v1130 = vld [vmem:[%s685 + $0x128] sm:$0xff]
  %v1131 = vld [vmem:[%s685 + $0x130] sm:$0xff]
  %v1132 = vpack.c.bf16 %v1117, %v1116
  %v1133 = vpack.c.bf16 %v1119, %v1118
  %v1134 = vpack.c.bf16 %v1121, %v1120
  %v1135 = vpack.c.bf16 %v1123, %v1122
  %v1136 = vpack.c.bf16 %v1125, %v1124
  %v1137 = vpack.c.bf16 %v1127, %v1126
  %v1138 = vpack.c.bf16 %v1129, %v1128
  %v1139 = vpack.c.bf16 %v1131, %v1130
  %s1140 = scalar_lea.vmem %s2, 64
  %v1141 = vld [vmem:[%s1140] sm:$0xf]
  %v1142 = vld [vmem:[%s1140 + $0x4] sm:$0xf]
  %v1143 = vld [vmem:[%s1140 + $0x8] sm:$0xf]
  %v1144 = vld [vmem:[%s1140 + $0xc] sm:$0xf]
  %v1145 = vld [vmem:[%s1140 + $0x10] sm:$0xf]
  %v1146 = vld [vmem:[%s1140 + $0x14] sm:$0xf]
  %v1147 = vld [vmem:[%s1140 + $0x18] sm:$0xf]
  %v1148 = vld [vmem:[%s1140 + $0x1c] sm:$0xf]
  %v1149 = vld [vmem:[%s1140 + $0x20] sm:$0xf]
  %v1150 = vld [vmem:[%s1140 + $0x24] sm:$0xf]
  %v1151 = vld [vmem:[%s1140 + $0x28] sm:$0xf]
  %v1152 = vld [vmem:[%s1140 + $0x2c] sm:$0xf]
  %v1153 = vld [vmem:[%s1140 + $0x30] sm:$0xf]
  %v1154 = vld [vmem:[%s1140 + $0x34] sm:$0xf]
  %v1155 = vld [vmem:[%s1140 + $0x38] sm:$0xf]
  %v1156 = vld [vmem:[%s1140 + $0x3c] sm:$0xf]
  %v1173 = vunpack.c.l.b16 %v1141
  %v1174 = vunpack.c.l.b16 %v1142
  %v1175 = vunpack.c.l.b16 %v1143
  %v1176 = vunpack.c.l.b16 %v1144
  %v1177 = vunpack.c.l.b16 %v1145
  %v1178 = vunpack.c.l.b16 %v1146
  %v1179 = vunpack.c.l.b16 %v1147
  %v1180 = vunpack.c.l.b16 %v1148
  %v1181 = vunpack.c.l.b16 %v1149
  %v1182 = vunpack.c.l.b16 %v1150
  %v1183 = vunpack.c.l.b16 %v1151
  %v1184 = vunpack.c.l.b16 %v1152
  %v1185 = vunpack.c.l.b16 %v1153
  %v1186 = vunpack.c.l.b16 %v1154
  %v1187 = vunpack.c.l.b16 %v1155
  %v1188 = vunpack.c.l.b16 %v1156
  %v1189 = vpack.c.b16 %v1174, %v1173
  %v1190 = vpack.c.b16 %v1176, %v1175
  %v1191 = vpack.c.b16 %v1178, %v1177
  %v1192 = vpack.c.b16 %v1180, %v1179
  %v1193 = vpack.c.b16 %v1182, %v1181
  %v1194 = vpack.c.b16 %v1184, %v1183
  %v1195 = vpack.c.b16 %v1186, %v1185
  %v1196 = vpack.c.b16 %v1188, %v1187
  %1205 = vmatprep.subr.bf16.mxu0 0
  %1206 = vmatpush1.bf16.msra.mxu0 %v1189
  %1207 = vmatprep.subr.bf16.mxu0 0
  %1208 = vmatpush1.bf16.msra.mxu0 %v1190
  %1209 = vmatprep.subr.bf16.mxu0 0
  %1210 = vmatpush1.bf16.msra.mxu0 %v1191
  %1211 = vmatprep.subr.bf16.mxu0 0
  %1212 = vmatpush1.bf16.msra.mxu0 %v1192
  %1213 = vmatprep.subr.bf16.mxu0 0
  %1214 = vmatpush1.bf16.msra.mxu0 %v1193
  %1215 = vmatprep.subr.bf16.mxu0 0
  %1216 = vmatpush1.bf16.msra.mxu0 %v1194
  %1217 = vmatprep.subr.bf16.mxu0 0
  %1218 = vmatpush1.bf16.msra.mxu0 %v1195
  %1219 = vmatprep.subr.bf16.mxu0 0
  %1220 = vmatpush1.bf16.msra.mxu0 %v1196
  %1221 = vmatprep.subr.bf16.mxu0 0
  %1222 = vmatpush1.bf16.msra.mxu0 0
  %1223 = vmatprep.subr.bf16.mxu0 0
  %1224 = vmatpush1.bf16.msra.mxu0 0
  %1225 = vmatprep.subr.bf16.mxu0 0
  %1226 = vmatpush1.bf16.msra.mxu0 0
  %1227 = vmatprep.subr.bf16.mxu0 0
  %1228 = vmatpush1.bf16.msra.mxu0 0
  %1229 = vmatprep.subr.bf16.mxu0 0
  %1230 = vmatpush1.bf16.msra.mxu0 0
  %1231 = vmatprep.subr.bf16.mxu0 0
  %1232 = vmatpush1.bf16.msra.mxu0 0
  %1233 = vmatprep.subr.bf16.mxu0 0
  %1234 = vmatpush1.bf16.msra.mxu0 0
  %1235 = vmatprep.subr.bf16.mxu0 0
  %1236 = vmatpush1.bf16.msra.mxu0 0
  %1237 = vmatprep.mubr.bf16.mxu0 0
  %1238 = vmatmul.mubr.bf16.gmra.mrb[0].mxu0 %v1132
  %v1239 = vpop.f32.mrb[0].mxu0
  %v1240 = vadd.f32 0.0, %v1239
  %v1241 = vpop.f32.mrb[0].mxu0
  %v1242 = vpop.f32.mrb[0].mxu0
  %v1243 = vadd.f32 0.0, %v1242
  %v1244 = vpop.f32.mrb[0].mxu0
  %1245 = vmatprep.mubr.bf16.mxu0 0
  %1246 = vmatmul.mubr.bf16.gmra.mrb[0].mxu0 %v1133
  %v1247 = vpop.f32.mrb[0].mxu0
  %v1248 = vadd.f32 0.0, %v1247
  %v1249 = vpop.f32.mrb[0].mxu0
  %v1250 = vpop.f32.mrb[0].mxu0
  %v1251 = vadd.f32 0.0, %v1250
  %v1252 = vpop.f32.mrb[0].mxu0
  %1253 = vmatprep.mubr.bf16.mxu0 0
  %1254 = vmatmul.mubr.bf16.gmra.mrb[0].mxu0 %v1134
  %v1255 = vpop.f32.mrb[0].mxu0
  %v1256 = vadd.f32 0.0, %v1255
  %v1257 = vpop.f32.mrb[0].mxu0
  %v1258 = vpop.f32.mrb[0].mxu0
  %v1259 = vadd.f32 0.0, %v1258
  %v1260 = vpop.f32.mrb[0].mxu0
  %1261 = vmatprep.mubr.bf16.mxu0 0
  %1262 = vmatmul.mubr.bf16.gmra.mrb[0].mxu0 %v1135
  %v1263 = vpop.f32.mrb[0].mxu0
  %v1264 = vadd.f32 0.0, %v1263
  %v1265 = vpop.f32.mrb[0].mxu0
  %v1266 = vpop.f32.mrb[0].mxu0
  %v1267 = vadd.f32 0.0, %v1266
  %v1268 = vpop.f32.mrb[0].mxu0
  %1269 = vmatprep.mubr.bf16.mxu0 0
  %1270 = vmatmul.mubr.bf16.gmra.mrb[0].mxu0 %v1136
  %v1271 = vpop.f32.mrb[0].mxu0
  %v1272 = vadd.f32 0.0, %v1271
  %v1273 = vpop.f32.mrb[0].mxu0
  %v1274 = vpop.f32.mrb[0].mxu0
  %v1275 = vadd.f32 0.0, %v1274
  %v1276 = vpop.f32.mrb[0].mxu0
  %1277 = vmatprep.mubr.bf16.mxu0 0
  %1278 = vmatmul.mubr.bf16.gmra.mrb[0].mxu0 %v1137
  %v1279 = vpop.f32.mrb[0].mxu0
  %v1280 = vadd.f32 0.0, %v1279
  %v1281 = vpop.f32.mrb[0].mxu0
  %v1282 = vpop.f32.mrb[0].mxu0
  %v1283 = vadd.f32 0.0, %v1282
  %v1284 = vpop.f32.mrb[0].mxu0
  %1285 = vmatprep.mubr.bf16.mxu0 0
  %1286 = vmatmul.mubr.bf16.gmra.mrb[0].mxu0 %v1138
  %v1287 = vpop.f32.mrb[0].mxu0
  %v1288 = vadd.f32 0.0, %v1287
  %v1289 = vpop.f32.mrb[0].mxu0
  %v1290 = vpop.f32.mrb[0].mxu0
  %v1291 = vadd.f32 0.0, %v1290
  %v1292 = vpop.f32.mrb[0].mxu0
  %1293 = vmatprep.mubr.bf16.mxu0 0
  %1294 = vmatmul.mubr.bf16.gmra.mrb[0].mxu0 %v1139
  %v1295 = vpop.f32.mrb[0].mxu0
  %v1296 = vadd.f32 0.0, %v1295
  %v1297 = vpop.f32.mrb[0].mxu0
  %v1298 = vpop.f32.mrb[0].mxu0
  %v1299 = vadd.f32 0.0, %v1298
  %v1300 = vpop.f32.mrb[0].mxu0
  %1301 = vdwg.mxu0
  %v1318 = vunpack.c.l.b16 %v1100
  %v1319 = vunpack.c.l.b16 %v1101
  %v1320 = vunpack.c.l.b16 %v1102
  %v1321 = vunpack.c.l.b16 %v1103
  %v1322 = vunpack.c.l.b16 %v1104
  %v1323 = vunpack.c.l.b16 %v1105
  %v1324 = vunpack.c.l.b16 %v1106
  %v1325 = vunpack.c.l.b16 %v1107
  %v1326 = vunpack.c.l.b16 %v1108
  %v1327 = vunpack.c.l.b16 %v1109
  %v1328 = vunpack.c.l.b16 %v1110
  %v1329 = vunpack.c.l.b16 %v1111
  %v1330 = vunpack.c.l.b16 %v1112
  %v1331 = vunpack.c.l.b16 %v1113
  %v1332 = vunpack.c.l.b16 %v1114
  %v1333 = vunpack.c.l.b16 %v1115
  %v1334 = vpack.c.b16 %v1319, %v1318
  %v1335 = vpack.c.b16 %v1321, %v1320
  %v1336 = vpack.c.b16 %v1323, %v1322
  %v1337 = vpack.c.b16 %v1325, %v1324
  %v1338 = vpack.c.b16 %v1327, %v1326
  %v1339 = vpack.c.b16 %v1329, %v1328
  %v1340 = vpack.c.b16 %v1331, %v1330
  %v1341 = vpack.c.b16 %v1333, %v1332
  %1350 = vmatprep.subr.bf16.mxu0 0
  %1351 = vmatpush1.bf16.msra.mxu0 %v1334
  %1352 = vmatprep.subr.bf16.mxu0 0
  %1353 = vmatpush1.bf16.msra.mxu0 %v1335
  %1354 = vmatprep.subr.bf16.mxu0 0
  %1355 = vmatpush1.bf16.msra.mxu0 %v1336
  %1356 = vmatprep.subr.bf16.mxu0 0
  %1357 = vmatpush1.bf16.msra.mxu0 %v1337
  %1358 = vmatprep.subr.bf16.mxu0 0
  %1359 = vmatpush1.bf16.msra.mxu0 %v1338
  %1360 = vmatprep.subr.bf16.mxu0 0
  %1361 = vmatpush1.bf16.msra.mxu0 %v1339
  %1362 = vmatprep.subr.bf16.mxu0 0
  %1363 = vmatpush1.bf16.msra.mxu0 %v1340
  %1364 = vmatprep.subr.bf16.mxu0 0
  %1365 = vmatpush1.bf16.msra.mxu0 %v1341
  %1366 = vmatprep.subr.bf16.mxu0 0
  %1367 = vmatpush1.bf16.msra.mxu0 0
  %1368 = vmatprep.subr.bf16.mxu0 0
  %1369 = vmatpush1.bf16.msra.mxu0 0
  %1370 = vmatprep.subr.bf16.mxu0 0
  %1371 = vmatpush1.bf16.msra.mxu0 0
  %1372 = vmatprep.subr.bf16.mxu0 0
  %1373 = vmatpush1.bf16.msra.mxu0 0
  %1374 = vmatprep.subr.bf16.mxu0 0
  %1375 = vmatpush1.bf16.msra.mxu0 0
  %1376 = vmatprep.subr.bf16.mxu0 0
  %1377 = vmatpush1.bf16.msra.mxu0 0
  %1378 = vmatprep.subr.bf16.mxu0 0
  %1379 = vmatpush1.bf16.msra.mxu0 0
  %1380 = vmatprep.subr.bf16.mxu0 0
  %1381 = vmatpush1.bf16.msra.mxu0 0
  %1382 = vmatprep.mubr.bf16.mxu0 0
  %1383 = vmatmul.mubr.bf16.gmra.mrb[0].mxu0 %v1092
  %v1384 = vpop.f32.mrb[0].mxu0
  %v1385 = vadd.f32 %v1240, %v1384
  %v1386 = vpop.f32.mrb[0].mxu0
  %v1387 = vpop.f32.mrb[0].mxu0
  %v1388 = vadd.f32 %v1243, %v1387
  %v1389 = vpop.f32.mrb[0].mxu0
  %1390 = vmatprep.mubr.bf16.mxu0 0
  %1391 = vmatmul.mubr.bf16.gmra.mrb[0].mxu0 %v1093
  %v1392 = vpop.f32.mrb[0].mxu0
  %v1393 = vadd.f32 %v1248, %v1392
  %v1394 = vpop.f32.mrb[0].mxu0
  %v1395 = vpop.f32.mrb[0].mxu0
  %v1396 = vadd.f32 %v1251, %v1395
  %v1397 = vpop.f32.mrb[0].mxu0
  %1398 = vmatprep.mubr.bf16.mxu0 0
  %1399 = vmatmul.mubr.bf16.gmra.mrb[0].mxu0 %v1094
  %v1400 = vpop.f32.mrb[0].mxu0
  %v1401 = vadd.f32 %v1256, %v1400
  %v1402 = vpop.f32.mrb[0].mxu0
  %v1403 = vpop.f32.mrb[0].mxu0
  %v1404 = vadd.f32 %v1259, %v1403
  %v1405 = vpop.f32.mrb[0].mxu0
  %1406 = vmatprep.mubr.bf16.mxu0 0
  %1407 = vmatmul.mubr.bf16.gmra.mrb[0].mxu0 %v1095
  %v1408 = vpop.f32.mrb[0].mxu0
  %v1409 = vadd.f32 %v1264, %v1408
  %v1410 = vpop.f32.mrb[0].mxu0
  %v1411 = vpop.f32.mrb[0].mxu0
  %v1412 = vadd.f32 %v1267, %v1411
  %v1413 = vpop.f32.mrb[0].mxu0
  %1414 = vmatprep.mubr.bf16.mxu0 0
  %1415 = vmatmul.mubr.bf16.gmra.mrb[0].mxu0 %v1096
  %v1416 = vpop.f32.mrb[0].mxu0
  %v1417 = vadd.f32 %v1272, %v1416
  %v1418 = vpop.f32.mrb[0].mxu0
  %v1419 = vpop.f32.mrb[0].mxu0
  %v1420 = vadd.f32 %v1275, %v1419
  %v1421 = vpop.f32.mrb[0].mxu0
  %1422 = vmatprep.mubr.bf16.mxu0 0
  %1423 = vmatmul.mubr.bf16.gmra.mrb[0].mxu0 %v1097
  %v1424 = vpop.f32.mrb[0].mxu0
  %v1425 = vadd.f32 %v1280, %v1424
  %v1426 = vpop.f32.mrb[0].mxu0
  %v1427 = vpop.f32.mrb[0].mxu0
  %v1428 = vadd.f32 %v1283, %v1427
  %v1429 = vpop.f32.mrb[0].mxu0
  %1430 = vmatprep.mubr.bf16.mxu0 0
  %1431 = vmatmul.mubr.bf16.gmra.mrb[0].mxu0 %v1098
  %v1432 = vpop.f32.mrb[0].mxu0
  %v1433 = vadd.f32 %v1288, %v1432
  %v1434 = vpop.f32.mrb[0].mxu0
  %v1435 = vpop.f32.mrb[0].mxu0
  %v1436 = vadd.f32 %v1291, %v1435
  %v1437 = vpop.f32.mrb[0].mxu0
  %1438 = vmatprep.mubr.bf16.mxu0 0
  %1439 = vmatmul.mubr.bf16.gmra.mrb[0].mxu0 %v1099
  %v1440 = vpop.f32.mrb[0].mxu0
  %v1441 = vadd.f32 %v1296, %v1440
  %v1442 = vpop.f32.mrb[0].mxu0
  %v1443 = vpop.f32.mrb[0].mxu0
  %v1444 = vadd.f32 %v1299, %v1443
  %v1445 = vpop.f32.mrb[0].mxu0
  %1446 = vdwg.mxu0
  %v1447 = vld [vmem:[%s685 + $0x9] sm:$0xff]
  %v1448 = vld [vmem:[%s685 + $0x11] sm:$0xff]
  %v1449 = vld [vmem:[%s685 + $0x29] sm:$0xff]
  %v1450 = vld [vmem:[%s685 + $0x31] sm:$0xff]
  %v1451 = vld [vmem:[%s685 + $0x49] sm:$0xff]
  %v1452 = vld [vmem:[%s685 + $0x51] sm:$0xff]
  %v1453 = vld [vmem:[%s685 + $0x69] sm:$0xff]
  %v1454 = vld [vmem:[%s685 + $0x71] sm:$0xff]
  %v1455 = vld [vmem:[%s685 + $0xc9] sm:$0xff]
  %v1456 = vld [vmem:[%s685 + $0xd1] sm:$0xff]
  %v1457 = vld [vmem:[%s685 + $0xe9] sm:$0xff]
  %v1458 = vld [vmem:[%s685 + $0xf1] sm:$0xff]
  %v1459 = vld [vmem:[%s685 + $0x109] sm:$0xff]
  %v1460 = vld [vmem:[%s685 + $0x111] sm:$0xff]
  %v1461 = vld [vmem:[%s685 + $0x129] sm:$0xff]
  %v1462 = vld [vmem:[%s685 + $0x131] sm:$0xff]
  %v1463 = vpack.c.bf16 %v1448, %v1447
  %v1464 = vpack.c.bf16 %v1450, %v1449
  %v1465 = vpack.c.bf16 %v1452, %v1451
  %v1466 = vpack.c.bf16 %v1454, %v1453
  %v1467 = vpack.c.bf16 %v1456, %v1455
  %v1468 = vpack.c.bf16 %v1458, %v1457
  %v1469 = vpack.c.bf16 %v1460, %v1459
  %v1470 = vpack.c.bf16 %v1462, %v1461
  %s1471 = scalar_lea.vmem %s2, 128
  %v1472 = vld [vmem:[%s1471] sm:$0xf]
  %v1473 = vld [vmem:[%s1471 + $0x4] sm:$0xf]
  %v1474 = vld [vmem:[%s1471 + $0x8] sm:$0xf]
  %v1475 = vld [vmem:[%s1471 + $0xc] sm:$0xf]
  %v1476 = vld [vmem:[%s1471 + $0x10] sm:$0xf]
  %v1477 = vld [vmem:[%s1471 + $0x14] sm:$0xf]
  %v1478 = vld [vmem:[%s1471 + $0x18] sm:$0xf]
  %v1479 = vld [vmem:[%s1471 + $0x1c] sm:$0xf]
  %v1480 = vld [vmem:[%s1471 + $0x20] sm:$0xf]
  %v1481 = vld [vmem:[%s1471 + $0x24] sm:$0xf]
  %v1482 = vld [vmem:[%s1471 + $0x28] sm:$0xf]
  %v1483 = vld [vmem:[%s1471 + $0x2c] sm:$0xf]
  %v1484 = vld [vmem:[%s1471 + $0x30] sm:$0xf]
  %v1485 = vld [vmem:[%s1471 + $0x34] sm:$0xf]
  %v1486 = vld [vmem:[%s1471 + $0x38] sm:$0xf]
  %v1487 = vld [vmem:[%s1471 + $0x3c] sm:$0xf]
  %v1504 = vunpack.c.l.b16 %v1472
  %v1505 = vunpack.c.l.b16 %v1473
  %v1506 = vunpack.c.l.b16 %v1474
  %v1507 = vunpack.c.l.b16 %v1475
  %v1508 = vunpack.c.l.b16 %v1476
  %v1509 = vunpack.c.l.b16 %v1477
  %v1510 = vunpack.c.l.b16 %v1478
  %v1511 = vunpack.c.l.b16 %v1479
  %v1512 = vunpack.c.l.b16 %v1480
  %v1513 = vunpack.c.l.b16 %v1481
  %v1514 = vunpack.c.l.b16 %v1482
  %v1515 = vunpack.c.l.b16 %v1483
  %v1516 = vunpack.c.l.b16 %v1484
  %v1517 = vunpack.c.l.b16 %v1485
  %v1518 = vunpack.c.l.b16 %v1486
  %v1519 = vunpack.c.l.b16 %v1487
  %v1520 = vpack.c.b16 %v1505, %v1504
  %v1521 = vpack.c.b16 %v1507, %v1506
  %v1522 = vpack.c.b16 %v1509, %v1508
  %v1523 = vpack.c.b16 %v1511, %v1510
  %v1524 = vpack.c.b16 %v1513, %v1512
  %v1525 = vpack.c.b16 %v1515, %v1514
  %v1526 = vpack.c.b16 %v1517, %v1516
  %v1527 = vpack.c.b16 %v1519, %v1518
  %1536 = vmatprep.subr.bf16.mxu0 0
  %1537 = vmatpush1.bf16.msra.mxu0 %v1520
  %1538 = vmatprep.subr.bf16.mxu0 0
  %1539 = vmatpush1.bf16.msra.mxu0 %v1521
  %1540 = vmatprep.subr.bf16.mxu0 0
  %1541 = vmatpush1.bf16.msra.mxu0 %v1522
  %1542 = vmatprep.subr.bf16.mxu0 0
  %1543 = vmatpush1.bf16.msra.mxu0 %v1523
  %1544 = vmatprep.subr.bf16.mxu0 0
  %1545 = vmatpush1.bf16.msra.mxu0 %v1524
  %1546 = vmatprep.subr.bf16.mxu0 0
  %1547 = vmatpush1.bf16.msra.mxu0 %v1525
  %1548 = vmatprep.subr.bf16.mxu0 0
  %1549 = vmatpush1.bf16.msra.mxu0 %v1526
  %1550 = vmatprep.subr.bf16.mxu0 0
  %1551 = vmatpush1.bf16.msra.mxu0 %v1527
  %1552 = vmatprep.subr.bf16.mxu0 0
  %1553 = vmatpush1.bf16.msra.mxu0 0
  %1554 = vmatprep.subr.bf16.mxu0 0
  %1555 = vmatpush1.bf16.msra.mxu0 0
  %1556 = vmatprep.subr.bf16.mxu0 0
  %1557 = vmatpush1.bf16.msra.mxu0 0
  %1558 = vmatprep.subr.bf16.mxu0 0
  %1559 = vmatpush1.bf16.msra.mxu0 0
  %1560 = vmatprep.subr.bf16.mxu0 0
  %1561 = vmatpush1.bf16.msra.mxu0 0
  %1562 = vmatprep.subr.bf16.mxu0 0
  %1563 = vmatpush1.bf16.msra.mxu0 0
  %1564 = vmatprep.subr.bf16.mxu0 0
  %1565 = vmatpush1.bf16.msra.mxu0 0
  %1566 = vmatprep.subr.bf16.mxu0 0
  %1567 = vmatpush1.bf16.msra.mxu0 0
  %1568 = vmatprep.mubr.bf16.mxu0 0
  %1569 = vmatmul.mubr.bf16.gmra.mrb[0].mxu0 %v1463
  %v1570 = vpop.f32.mrb[0].mxu0
  %v1571 = vadd.f32 0.0, %v1570
  %v1572 = vpop.f32.mrb[0].mxu0
  %v1573 = vpop.f32.mrb[0].mxu0
  %v1574 = vadd.f32 0.0, %v1573
  %v1575 = vpop.f32.mrb[0].mxu0
  %1576 = vmatprep.mubr.bf16.mxu0 0
  %1577 = vmatmul.mubr.bf16.gmra.mrb[0].mxu0 %v1464
  %v1578 = vpop.f32.mrb[0].mxu0
  %v1579 = vadd.f32 0.0, %v1578
  %v1580 = vpop.f32.mrb[0].mxu0
  %v1581 = vpop.f32.mrb[0].mxu0
  %v1582 = vadd.f32 0.0, %v1581
  %v1583 = vpop.f32.mrb[0].mxu0
  %1584 = vmatprep.mubr.bf16.mxu0 0
  %1585 = vmatmul.mubr.bf16.gmra.mrb[0].mxu0 %v1465
  %v1586 = vpop.f32.mrb[0].mxu0
  %v1587 = vadd.f32 0.0, %v1586
  %v1588 = vpop.f32.mrb[0].mxu0
  %v1589 = vpop.f32.mrb[0].mxu0
  %v1590 = vadd.f32 0.0, %v1589
  %v1591 = vpop.f32.mrb[0].mxu0
  %1592 = vmatprep.mubr.bf16.mxu0 0
  %1593 = vmatmul.mubr.bf16.gmra.mrb[0].mxu0 %v1466
  %v1594 = vpop.f32.mrb[0].mxu0
  %v1595 = vadd.f32 0.0, %v1594
  %v1596 = vpop.f32.mrb[0].mxu0
  %v1597 = vpop.f32.mrb[0].mxu0
  %v1598 = vadd.f32 0.0, %v1597
  %v1599 = vpop.f32.mrb[0].mxu0
  %1600 = vmatprep.mubr.bf16.mxu0 0
  %1601 = vmatmul.mubr.bf16.gmra.mrb[0].mxu0 %v1467
  %v1602 = vpop.f32.mrb[0].mxu0
  %v1603 = vadd.f32 0.0, %v1602
  %v1604 = vpop.f32.mrb[0].mxu0
  %v1605 = vpop.f32.mrb[0].mxu0
  %v1606 = vadd.f32 0.0, %v1605
  %v1607 = vpop.f32.mrb[0].mxu0
  %1608 = vmatprep.mubr.bf16.mxu0 0
  %1609 = vmatmul.mubr.bf16.gmra.mrb[0].mxu0 %v1468
  %v1610 = vpop.f32.mrb[0].mxu0
  %v1611 = vadd.f32 0.0, %v1610
  %v1612 = vpop.f32.mrb[0].mxu0
  %v1613 = vpop.f32.mrb[0].mxu0
  %v1614 = vadd.f32 0.0, %v1613
  %v1615 = vpop.f32.mrb[0].mxu0
  %1616 = vmatprep.mubr.bf16.mxu0 0
  %1617 = vmatmul.mubr.bf16.gmra.mrb[0].mxu0 %v1469
  %v1618 = vpop.f32.mrb[0].mxu0
  %v1619 = vadd.f32 0.0, %v1618
  %v1620 = vpop.f32.mrb[0].mxu0
  %v1621 = vpop.f32.mrb[0].mxu0
  %v1622 = vadd.f32 0.0, %v1621
  %v1623 = vpop.f32.mrb[0].mxu0
  %1624 = vmatprep.mubr.bf16.mxu0 0
  %1625 = vmatmul.mubr.bf16.gmra.mrb[0].mxu0 %v1470
  %v1626 = vpop.f32.mrb[0].mxu0
  %v1627 = vadd.f32 0.0, %v1626
  %v1628 = vpop.f32.mrb[0].mxu0
  %v1629 = vpop.f32.mrb[0].mxu0
  %v1630 = vadd.f32 0.0, %v1629
  %v1631 = vpop.f32.mrb[0].mxu0
  %1632 = vdwg.mxu0
  %v1633 = vadd.f32 %v1385, %v1571
  %v1634 = vadd.f32 %v1388, %v1574
  %v1635 = vadd.f32 %v1393, %v1579
  %v1636 = vadd.f32 %v1396, %v1582
  %v1637 = vadd.f32 %v1401, %v1587
  %v1638 = vadd.f32 %v1404, %v1590
  %v1639 = vadd.f32 %v1409, %v1595
  %v1640 = vadd.f32 %v1412, %v1598
  %v1641 = vadd.f32 %v1417, %v1603
  %v1642 = vadd.f32 %v1420, %v1606
  %v1643 = vadd.f32 %v1425, %v1611
  %v1644 = vadd.f32 %v1428, %v1614
  %v1645 = vadd.f32 %v1433, %v1619
  %v1646 = vadd.f32 %v1436, %v1622
  %v1647 = vadd.f32 %v1441, %v1627
  %v1648 = vadd.f32 %v1444, %v1630
  %v1649 = vld [vmem:[%s5 + $0x1] sm:$0x1]
  %v1650 = vlaneseq
  %v1651 = vshrl.u32 %v1650, 7
  %v1652 = vsub.s32 0, %v1651
  %v1653 = vrot.slane %v1649, %v1652
  %v1654 = vadd.f32 %v1633, %v1653
  %v1655 = vadd.f32 %v1634, %v1653
  %v1656 = vadd.f32 %v1635, %v1653
  %v1657 = vadd.f32 %v1636, %v1653
  %v1658 = vadd.f32 %v1637, %v1653
  %v1659 = vadd.f32 %v1638, %v1653
  %v1660 = vadd.f32 %v1639, %v1653
  %v1661 = vadd.f32 %v1640, %v1653
  %v1662 = vadd.f32 %v1641, %v1653
  %v1663 = vadd.f32 %v1642, %v1653
  %v1664 = vadd.f32 %v1643, %v1653
  %v1665 = vadd.f32 %v1644, %v1653
  %v1666 = vadd.f32 %v1645, %v1653
  %v1667 = vadd.f32 %v1646, %v1653
  %v1668 = vadd.f32 %v1647, %v1653
  %v1669 = vadd.f32 %v1648, %v1653
  %v1670 = vadd.f32 %v1654, %v1116
  %v1671 = vadd.f32 %v1655, %v1117
  %v1672 = vadd.f32 %v1656, %v1118
  %v1673 = vadd.f32 %v1657, %v1119
  %v1674 = vadd.f32 %v1658, %v1120
  %v1675 = vadd.f32 %v1659, %v1121
  %v1676 = vadd.f32 %v1660, %v1122
  %v1677 = vadd.f32 %v1661, %v1123
  %v1678 = vadd.f32 %v1662, %v1124
  %v1679 = vadd.f32 %v1663, %v1125
  %v1680 = vadd.f32 %v1664, %v1126
  %v1681 = vadd.f32 %v1665, %v1127
  %v1682 = vadd.f32 %v1666, %v1128
  %v1683 = vadd.f32 %v1667, %v1129
  %v1684 = vadd.f32 %v1668, %v1130
  %v1685 = vadd.f32 %v1669, %v1131
  %1686 = vst [vmem:[%s685 + $0x8] sm:$0xff] %v1670
  %1687 = vst [vmem:[%s685 + $0x10] sm:$0xff] %v1671
  %1688 = vst [vmem:[%s685 + $0x28] sm:$0xff] %v1672
  %1689 = vst [vmem:[%s685 + $0x30] sm:$0xff] %v1673
  %1690 = vst [vmem:[%s685 + $0x48] sm:$0xff] %v1674
  %1691 = vst [vmem:[%s685 + $0x50] sm:$0xff] %v1675
  %1692 = vst [vmem:[%s685 + $0x68] sm:$0xff] %v1676
  %1693 = vst [vmem:[%s685 + $0x70] sm:$0xff] %v1677
  %1694 = vst [vmem:[%s685 + $0xc8] sm:$0xff] %v1678
  %1695 = vst [vmem:[%s685 + $0xd0] sm:$0xff] %v1679
  %1696 = vst [vmem:[%s685 + $0xe8] sm:$0xff] %v1680
  %1697 = vst [vmem:[%s685 + $0xf0] sm:$0xff] %v1681
  %1698 = vst [vmem:[%s685 + $0x108] sm:$0xff] %v1682
  %1699 = vst [vmem:[%s685 + $0x110] sm:$0xff] %v1683
  %1700 = vst [vmem:[%s685 + $0x128] sm:$0xff] %v1684
  %1701 = vst [vmem:[%s685 + $0x130] sm:$0xff] %v1685
  %v1702 = vld [vmem:[%s685 + $0x7] sm:$0xff]
  %v1703 = vld [vmem:[%s685 + $0xf] sm:$0xff]
  %v1704 = vld [vmem:[%s685 + $0x27] sm:$0xff]
  %v1705 = vld [vmem:[%s685 + $0x2f] sm:$0xff]
  %v1706 = vld [vmem:[%s685 + $0x47] sm:$0xff]
  %v1707 = vld [vmem:[%s685 + $0x4f] sm:$0xff]
  %v1708 = vld [vmem:[%s685 + $0x67] sm:$0xff]
  %v1709 = vld [vmem:[%s685 + $0x6f] sm:$0xff]
  %v1710 = vld [vmem:[%s685 + $0xc7] sm:$0xff]
  %v1711 = vld [vmem:[%s685 + $0xcf] sm:$0xff]
  %v1712 = vld [vmem:[%s685 + $0xe7] sm:$0xff]
  %v1713 = vld [vmem:[%s685 + $0xef] sm:$0xff]
  %v1714 = vld [vmem:[%s685 + $0x107] sm:$0xff]
  %v1715 = vld [vmem:[%s685 + $0x10f] sm:$0xff]
  %v1716 = vld [vmem:[%s685 + $0x127] sm:$0xff]
  %v1717 = vld [vmem:[%s685 + $0x12f] sm:$0xff]
  %v1718 = vpack.c.bf16 %v1703, %v1702
  %v1719 = vpack.c.bf16 %v1705, %v1704
  %v1720 = vpack.c.bf16 %v1707, %v1706
  %v1721 = vpack.c.bf16 %v1709, %v1708
  %v1722 = vpack.c.bf16 %v1711, %v1710
  %v1723 = vpack.c.bf16 %v1713, %v1712
  %v1724 = vpack.c.bf16 %v1715, %v1714
  %v1725 = vpack.c.bf16 %v1717, %v1716
  %v1726 = vld [vmem:[%s3] sm:$0xf]
  %v1727 = vld [vmem:[%s3 + $0x4] sm:$0xf]
  %v1728 = vld [vmem:[%s3 + $0x8] sm:$0xf]
  %v1729 = vld [vmem:[%s3 + $0xc] sm:$0xf]
  %v1730 = vld [vmem:[%s3 + $0x10] sm:$0xf]
  %v1731 = vld [vmem:[%s3 + $0x14] sm:$0xf]
  %v1732 = vld [vmem:[%s3 + $0x18] sm:$0xf]
  %v1733 = vld [vmem:[%s3 + $0x1c] sm:$0xf]
  %v1734 = vld [vmem:[%s3 + $0x20] sm:$0xf]
  %v1735 = vld [vmem:[%s3 + $0x24] sm:$0xf]
  %v1736 = vld [vmem:[%s3 + $0x28] sm:$0xf]
  %v1737 = vld [vmem:[%s3 + $0x2c] sm:$0xf]
  %v1738 = vld [vmem:[%s3 + $0x30] sm:$0xf]
  %v1739 = vld [vmem:[%s3 + $0x34] sm:$0xf]
  %v1740 = vld [vmem:[%s3 + $0x38] sm:$0xf]
  %v1741 = vld [vmem:[%s3 + $0x3c] sm:$0xf]
  %v1742 = vld [vmem:[%s685 + $0x8] sm:$0xff]
  %v1743 = vld [vmem:[%s685 + $0x10] sm:$0xff]
  %v1744 = vld [vmem:[%s685 + $0x28] sm:$0xff]
  %v1745 = vld [vmem:[%s685 + $0x30] sm:$0xff]
  %v1746 = vld [vmem:[%s685 + $0x48] sm:$0xff]
  %v1747 = vld [vmem:[%s685 + $0x50] sm:$0xff]
  %v1748 = vld [vmem:[%s685 + $0x68] sm:$0xff]
  %v1749 = vld [vmem:[%s685 + $0x70] sm:$0xff]
  %v1750 = vld [vmem:[%s685 + $0xc8] sm:$0xff]
  %v1751 = vld [vmem:[%s685 + $0xd0] sm:$0xff]
  %v1752 = vld [vmem:[%s685 + $0xe8] sm:$0xff]
  %v1753 = vld [vmem:[%s685 + $0xf0] sm:$0xff]
  %v1754 = vld [vmem:[%s685 + $0x108] sm:$0xff]
  %v1755 = vld [vmem:[%s685 + $0x110] sm:$0xff]
  %v1756 = vld [vmem:[%s685 + $0x128] sm:$0xff]
  %v1757 = vld [vmem:[%s685 + $0x130] sm:$0xff]
  %v1758 = vpack.c.bf16 %v1743, %v1742
  %v1759 = vpack.c.bf16 %v1745, %v1744
  %v1760 = vpack.c.bf16 %v1747, %v1746
  %v1761 = vpack.c.bf16 %v1749, %v1748
  %v1762 = vpack.c.bf16 %v1751, %v1750
  %v1763 = vpack.c.bf16 %v1753, %v1752
  %v1764 = vpack.c.bf16 %v1755, %v1754
  %v1765 = vpack.c.bf16 %v1757, %v1756
  %s1766 = scalar_lea.vmem %s3, 64
  %v1767 = vld [vmem:[%s1766] sm:$0xf]
  %v1768 = vld [vmem:[%s1766 + $0x4] sm:$0xf]
  %v1769 = vld [vmem:[%s1766 + $0x8] sm:$0xf]
  %v1770 = vld [vmem:[%s1766 + $0xc] sm:$0xf]
  %v1771 = vld [vmem:[%s1766 + $0x10] sm:$0xf]
  %v1772 = vld [vmem:[%s1766 + $0x14] sm:$0xf]
  %v1773 = vld [vmem:[%s1766 + $0x18] sm:$0xf]
  %v1774 = vld [vmem:[%s1766 + $0x1c] sm:$0xf]
  %v1775 = vld [vmem:[%s1766 + $0x20] sm:$0xf]
  %v1776 = vld [vmem:[%s1766 + $0x24] sm:$0xf]
  %v1777 = vld [vmem:[%s1766 + $0x28] sm:$0xf]
  %v1778 = vld [vmem:[%s1766 + $0x2c] sm:$0xf]
  %v1779 = vld [vmem:[%s1766 + $0x30] sm:$0xf]
  %v1780 = vld [vmem:[%s1766 + $0x34] sm:$0xf]
  %v1781 = vld [vmem:[%s1766 + $0x38] sm:$0xf]
  %v1782 = vld [vmem:[%s1766 + $0x3c] sm:$0xf]
  %v1799 = vunpack.c.l.b16 %v1767
  %v1800 = vunpack.c.l.b16 %v1768
  %v1801 = vunpack.c.l.b16 %v1769
  %v1802 = vunpack.c.l.b16 %v1770
  %v1803 = vunpack.c.l.b16 %v1771
  %v1804 = vunpack.c.l.b16 %v1772
  %v1805 = vunpack.c.l.b16 %v1773
  %v1806 = vunpack.c.l.b16 %v1774
  %v1807 = vunpack.c.l.b16 %v1775
  %v1808 = vunpack.c.l.b16 %v1776
  %v1809 = vunpack.c.l.b16 %v1777
  %v1810 = vunpack.c.l.b16 %v1778
  %v1811 = vunpack.c.l.b16 %v1779
  %v1812 = vunpack.c.l.b16 %v1780
  %v1813 = vunpack.c.l.b16 %v1781
  %v1814 = vunpack.c.l.b16 %v1782
  %v1815 = vpack.c.b16 %v1800, %v1799
  %v1816 = vpack.c.b16 %v1802, %v1801
  %v1817 = vpack.c.b16 %v1804, %v1803
  %v1818 = vpack.c.b16 %v1806, %v1805
  %v1819 = vpack.c.b16 %v1808, %v1807
  %v1820 = vpack.c.b16 %v1810, %v1809
  %v1821 = vpack.c.b16 %v1812, %v1811
  %v1822 = vpack.c.b16 %v1814, %v1813
  %1831 = vmatprep.subr.bf16.mxu0 0
  %1832 = vmatpush1.bf16.msra.mxu0 %v1815
  %1833 = vmatprep.subr.bf16.mxu0 0
  %1834 = vmatpush1.bf16.msra.mxu0 %v1816
  %1835 = vmatprep.subr.bf16.mxu0 0
  %1836 = vmatpush1.bf16.msra.mxu0 %v1817
  %1837 = vmatprep.subr.bf16.mxu0 0
  %1838 = vmatpush1.bf16.msra.mxu0 %v1818
  %1839 = vmatprep.subr.bf16.mxu0 0
  %1840 = vmatpush1.bf16.msra.mxu0 %v1819
  %1841 = vmatprep.subr.bf16.mxu0 0
  %1842 = vmatpush1.bf16.msra.mxu0 %v1820
  %1843 = vmatprep.subr.bf16.mxu0 0
  %1844 = vmatpush1.bf16.msra.mxu0 %v1821
  %1845 = vmatprep.subr.bf16.mxu0 0
  %1846 = vmatpush1.bf16.msra.mxu0 %v1822
  %1847 = vmatprep.subr.bf16.mxu0 0
  %1848 = vmatpush1.bf16.msra.mxu0 0
  %1849 = vmatprep.subr.bf16.mxu0 0
  %1850 = vmatpush1.bf16.msra.mxu0 0
  %1851 = vmatprep.subr.bf16.mxu0 0
  %1852 = vmatpush1.bf16.msra.mxu0 0
  %1853 = vmatprep.subr.bf16.mxu0 0
  %1854 = vmatpush1.bf16.msra.mxu0 0
  %1855 = vmatprep.subr.bf16.mxu0 0
  %1856 = vmatpush1.bf16.msra.mxu0 0
  %1857 = vmatprep.subr.bf16.mxu0 0
  %1858 = vmatpush1.bf16.msra.mxu0 0
  %1859 = vmatprep.subr.bf16.mxu0 0
  %1860 = vmatpush1.bf16.msra.mxu0 0
  %1861 = vmatprep.subr.bf16.mxu0 0
  %1862 = vmatpush1.bf16.msra.mxu0 0
  %1863 = vmatprep.mubr.bf16.mxu0 0
  %1864 = vmatmul.mubr.bf16.gmra.mrb[0].mxu0 %v1758
  %v1865 = vpop.f32.mrb[0].mxu0
  %v1866 = vadd.f32 0.0, %v1865
  %v1867 = vpop.f32.mrb[0].mxu0
  %v1868 = vpop.f32.mrb[0].mxu0
  %v1869 = vadd.f32 0.0, %v1868
  %v1870 = vpop.f32.mrb[0].mxu0
  %1871 = vmatprep.mubr.bf16.mxu0 0
  %1872 = vmatmul.mubr.bf16.gmra.mrb[0].mxu0 %v1759
  %v1873 = vpop.f32.mrb[0].mxu0
  %v1874 = vadd.f32 0.0, %v1873
  %v1875 = vpop.f32.mrb[0].mxu0
  %v1876 = vpop.f32.mrb[0].mxu0
  %v1877 = vadd.f32 0.0, %v1876
  %v1878 = vpop.f32.mrb[0].mxu0
  %1879 = vmatprep.mubr.bf16.mxu0 0
  %1880 = vmatmul.mubr.bf16.gmra.mrb[0].mxu0 %v1760
  %v1881 = vpop.f32.mrb[0].mxu0
  %v1882 = vadd.f32 0.0, %v1881
  %v1883 = vpop.f32.mrb[0].mxu0
  %v1884 = vpop.f32.mrb[0].mxu0
  %v1885 = vadd.f32 0.0, %v1884
  %v1886 = vpop.f32.mrb[0].mxu0
  %1887 = vmatprep.mubr.bf16.mxu0 0
  %1888 = vmatmul.mubr.bf16.gmra.mrb[0].mxu0 %v1761
  %v1889 = vpop.f32.mrb[0].mxu0
  %v1890 = vadd.f32 0.0, %v1889
  %v1891 = vpop.f32.mrb[0].mxu0
  %v1892 = vpop.f32.mrb[0].mxu0
  %v1893 = vadd.f32 0.0, %v1892
  %v1894 = vpop.f32.mrb[0].mxu0
  %1895 = vmatprep.mubr.bf16.mxu0 0
  %1896 = vmatmul.mubr.bf16.gmra.mrb[0].mxu0 %v1762
  %v1897 = vpop.f32.mrb[0].mxu0
  %v1898 = vadd.f32 0.0, %v1897
  %v1899 = vpop.f32.mrb[0].mxu0
  %v1900 = vpop.f32.mrb[0].mxu0
  %v1901 = vadd.f32 0.0, %v1900
  %v1902 = vpop.f32.mrb[0].mxu0
  %1903 = vmatprep.mubr.bf16.mxu0 0
  %1904 = vmatmul.mubr.bf16.gmra.mrb[0].mxu0 %v1763
  %v1905 = vpop.f32.mrb[0].mxu0
  %v1906 = vadd.f32 0.0, %v1905
  %v1907 = vpop.f32.mrb[0].mxu0
  %v1908 = vpop.f32.mrb[0].mxu0
  %v1909 = vadd.f32 0.0, %v1908
  %v1910 = vpop.f32.mrb[0].mxu0
  %1911 = vmatprep.mubr.bf16.mxu0 0
  %1912 = vmatmul.mubr.bf16.gmra.mrb[0].mxu0 %v1764
  %v1913 = vpop.f32.mrb[0].mxu0
  %v1914 = vadd.f32 0.0, %v1913
  %v1915 = vpop.f32.mrb[0].mxu0
  %v1916 = vpop.f32.mrb[0].mxu0
  %v1917 = vadd.f32 0.0, %v1916
  %v1918 = vpop.f32.mrb[0].mxu0
  %1919 = vmatprep.mubr.bf16.mxu0 0
  %1920 = vmatmul.mubr.bf16.gmra.mrb[0].mxu0 %v1765
  %v1921 = vpop.f32.mrb[0].mxu0
  %v1922 = vadd.f32 0.0, %v1921
  %v1923 = vpop.f32.mrb[0].mxu0
  %v1924 = vpop.f32.mrb[0].mxu0
  %v1925 = vadd.f32 0.0, %v1924
  %v1926 = vpop.f32.mrb[0].mxu0
  %1927 = vdwg.mxu0
  %v1944 = vunpack.c.l.b16 %v1726
  %v1945 = vunpack.c.l.b16 %v1727
  %v1946 = vunpack.c.l.b16 %v1728
  %v1947 = vunpack.c.l.b16 %v1729
  %v1948 = vunpack.c.l.b16 %v1730
  %v1949 = vunpack.c.l.b16 %v1731
  %v1950 = vunpack.c.l.b16 %v1732
  %v1951 = vunpack.c.l.b16 %v1733
  %v1952 = vunpack.c.l.b16 %v1734
  %v1953 = vunpack.c.l.b16 %v1735
  %v1954 = vunpack.c.l.b16 %v1736
  %v1955 = vunpack.c.l.b16 %v1737
  %v1956 = vunpack.c.l.b16 %v1738
  %v1957 = vunpack.c.l.b16 %v1739
  %v1958 = vunpack.c.l.b16 %v1740
  %v1959 = vunpack.c.l.b16 %v1741
  %v1960 = vpack.c.b16 %v1945, %v1944
  %v1961 = vpack.c.b16 %v1947, %v1946
  %v1962 = vpack.c.b16 %v1949, %v1948
  %v1963 = vpack.c.b16 %v1951, %v1950
  %v1964 = vpack.c.b16 %v1953, %v1952
  %v1965 = vpack.c.b16 %v1955, %v1954
  %v1966 = vpack.c.b16 %v1957, %v1956
  %v1967 = vpack.c.b16 %v1959, %v1958
  %1976 = vmatprep.subr.bf16.mxu0 0
  %1977 = vmatpush1.bf16.msra.mxu0 %v1960
  %1978 = vmatprep.subr.bf16.mxu0 0
  %1979 = vmatpush1.bf16.msra.mxu0 %v1961
  %1980 = vmatprep.subr.bf16.mxu0 0
  %1981 = vmatpush1.bf16.msra.mxu0 %v1962
  %1982 = vmatprep.subr.bf16.mxu0 0
  %1983 = vmatpush1.bf16.msra.mxu0 %v1963
  %1984 = vmatprep.subr.bf16.mxu0 0
  %1985 = vmatpush1.bf16.msra.mxu0 %v1964
  %1986 = vmatprep.subr.bf16.mxu0 0
  %1987 = vmatpush1.bf16.msra.mxu0 %v1965
  %1988 = vmatprep.subr.bf16.mxu0 0
  %1989 = vmatpush1.bf16.msra.mxu0 %v1966
  %1990 = vmatprep.subr.bf16.mxu0 0
  %1991 = vmatpush1.bf16.msra.mxu0 %v1967
  %1992 = vmatprep.subr.bf16.mxu0 0
  %1993 = vmatpush1.bf16.msra.mxu0 0
  %1994 = vmatprep.subr.bf16.mxu0 0
  %1995 = vmatpush1.bf16.msra.mxu0 0
  %1996 = vmatprep.subr.bf16.mxu0 0
  %1997 = vmatpush1.bf16.msra.mxu0 0
  %1998 = vmatprep.subr.bf16.mxu0 0
  %1999 = vmatpush1.bf16.msra.mxu0 0
  %2000 = vmatprep.subr.bf16.mxu0 0
  %2001 = vmatpush1.bf16.msra.mxu0 0
  %2002 = vmatprep.subr.bf16.mxu0 0
  %2003 = vmatpush1.bf16.msra.mxu0 0
  %2004 = vmatprep.subr.bf16.mxu0 0
  %2005 = vmatpush1.bf16.msra.mxu0 0
  %2006 = vmatprep.subr.bf16.mxu0 0
  %2007 = vmatpush1.bf16.msra.mxu0 0
  %2008 = vmatprep.mubr.bf16.mxu0 0
  %2009 = vmatmul.mubr.bf16.gmra.mrb[0].mxu0 %v1718
  %v2010 = vpop.f32.mrb[0].mxu0
  %v2011 = vadd.f32 %v1866, %v2010
  %v2012 = vpop.f32.mrb[0].mxu0
  %v2013 = vpop.f32.mrb[0].mxu0
  %v2014 = vadd.f32 %v1869, %v2013
  %v2015 = vpop.f32.mrb[0].mxu0
  %2016 = vmatprep.mubr.bf16.mxu0 0
  %2017 = vmatmul.mubr.bf16.gmra.mrb[0].mxu0 %v1719
  %v2018 = vpop.f32.mrb[0].mxu0
  %v2019 = vadd.f32 %v1874, %v2018
  %v2020 = vpop.f32.mrb[0].mxu0
  %v2021 = vpop.f32.mrb[0].mxu0
  %v2022 = vadd.f32 %v1877, %v2021
  %v2023 = vpop.f32.mrb[0].mxu0
  %2024 = vmatprep.mubr.bf16.mxu0 0
  %2025 = vmatmul.mubr.bf16.gmra.mrb[0].mxu0 %v1720
  %v2026 = vpop.f32.mrb[0].mxu0
  %v2027 = vadd.f32 %v1882, %v2026
  %v2028 = vpop.f32.mrb[0].mxu0
  %v2029 = vpop.f32.mrb[0].mxu0
  %v2030 = vadd.f32 %v1885, %v2029
  %v2031 = vpop.f32.mrb[0].mxu0
  %2032 = vmatprep.mubr.bf16.mxu0 0
  %2033 = vmatmul.mubr.bf16.gmra.mrb[0].mxu0 %v1721
  %v2034 = vpop.f32.mrb[0].mxu0
  %v2035 = vadd.f32 %v1890, %v2034
  %v2036 = vpop.f32.mrb[0].mxu0
  %v2037 = vpop.f32.mrb[0].mxu0
  %v2038 = vadd.f32 %v1893, %v2037
  %v2039 = vpop.f32.mrb[0].mxu0
  %2040 = vmatprep.mubr.bf16.mxu0 0
  %2041 = vmatmul.mubr.bf16.gmra.mrb[0].mxu0 %v1722
  %v2042 = vpop.f32.mrb[0].mxu0
  %v2043 = vadd.f32 %v1898, %v2042
  %v2044 = vpop.f32.mrb[0].mxu0
  %v2045 = vpop.f32.mrb[0].mxu0
  %v2046 = vadd.f32 %v1901, %v2045
  %v2047 = vpop.f32.mrb[0].mxu0
  %2048 = vmatprep.mubr.bf16.mxu0 0
  %2049 = vmatmul.mubr.bf16.gmra.mrb[0].mxu0 %v1723
  %v2050 = vpop.f32.mrb[0].mxu0
  %v2051 = vadd.f32 %v1906, %v2050
  %v2052 = vpop.f32.mrb[0].mxu0
  %v2053 = vpop.f32.mrb[0].mxu0
  %v2054 = vadd.f32 %v1909, %v2053
  %v2055 = vpop.f32.mrb[0].mxu0
  %2056 = vmatprep.mubr.bf16.mxu0 0
  %2057 = vmatmul.mubr.bf16.gmra.mrb[0].mxu0 %v1724
  %v2058 = vpop.f32.mrb[0].mxu0
  %v2059 = vadd.f32 %v1914, %v2058
  %v2060 = vpop.f32.mrb[0].mxu0
  %v2061 = vpop.f32.mrb[0].mxu0
  %v2062 = vadd.f32 %v1917, %v2061
  %v2063 = vpop.f32.mrb[0].mxu0
  %2064 = vmatprep.mubr.bf16.mxu0 0
  %2065 = vmatmul.mubr.bf16.gmra.mrb[0].mxu0 %v1725
  %v2066 = vpop.f32.mrb[0].mxu0
  %v2067 = vadd.f32 %v1922, %v2066
  %v2068 = vpop.f32.mrb[0].mxu0
  %v2069 = vpop.f32.mrb[0].mxu0
  %v2070 = vadd.f32 %v1925, %v2069
  %v2071 = vpop.f32.mrb[0].mxu0
  %2072 = vdwg.mxu0
  %v2073 = vld [vmem:[%s685 + $0x9] sm:$0xff]
  %v2074 = vld [vmem:[%s685 + $0x11] sm:$0xff]
  %v2075 = vld [vmem:[%s685 + $0x29] sm:$0xff]
  %v2076 = vld [vmem:[%s685 + $0x31] sm:$0xff]
  %v2077 = vld [vmem:[%s685 + $0x49] sm:$0xff]
  %v2078 = vld [vmem:[%s685 + $0x51] sm:$0xff]
  %v2079 = vld [vmem:[%s685 + $0x69] sm:$0xff]
  %v2080 = vld [vmem:[%s685 + $0x71] sm:$0xff]
  %v2081 = vld [vmem:[%s685 + $0xc9] sm:$0xff]
  %v2082 = vld [vmem:[%s685 + $0xd1] sm:$0xff]
  %v2083 = vld [vmem:[%s685 + $0xe9] sm:$0xff]
  %v2084 = vld [vmem:[%s685 + $0xf1] sm:$0xff]
  %v2085 = vld [vmem:[%s685 + $0x109] sm:$0xff]
  %v2086 = vld [vmem:[%s685 + $0x111] sm:$0xff]
  %v2087 = vld [vmem:[%s685 + $0x129] sm:$0xff]
  %v2088 = vld [vmem:[%s685 + $0x131] sm:$0xff]
  %v2089 = vpack.c.bf16 %v2074, %v2073
  %v2090 = vpack.c.bf16 %v2076, %v2075
  %v2091 = vpack.c.bf16 %v2078, %v2077
  %v2092 = vpack.c.bf16 %v2080, %v2079
  %v2093 = vpack.c.bf16 %v2082, %v2081
  %v2094 = vpack.c.bf16 %v2084, %v2083
  %v2095 = vpack.c.bf16 %v2086, %v2085
  %v2096 = vpack.c.bf16 %v2088, %v2087
  %s2097 = scalar_lea.vmem %s3, 128
  %v2098 = vld [vmem:[%s2097] sm:$0xf]
  %v2099 = vld [vmem:[%s2097 + $0x4] sm:$0xf]
  %v2100 = vld [vmem:[%s2097 + $0x8] sm:$0xf]
  %v2101 = vld [vmem:[%s2097 + $0xc] sm:$0xf]
  %v2102 = vld [vmem:[%s2097 + $0x10] sm:$0xf]
  %v2103 = vld [vmem:[%s2097 + $0x14] sm:$0xf]
  %v2104 = vld [vmem:[%s2097 + $0x18] sm:$0xf]
  %v2105 = vld [vmem:[%s2097 + $0x1c] sm:$0xf]
  %v2106 = vld [vmem:[%s2097 + $0x20] sm:$0xf]
  %v2107 = vld [vmem:[%s2097 + $0x24] sm:$0xf]
  %v2108 = vld [vmem:[%s2097 + $0x28] sm:$0xf]
  %v2109 = vld [vmem:[%s2097 + $0x2c] sm:$0xf]
  %v2110 = vld [vmem:[%s2097 + $0x30] sm:$0xf]
  %v2111 = vld [vmem:[%s2097 + $0x34] sm:$0xf]
  %v2112 = vld [vmem:[%s2097 + $0x38] sm:$0xf]
  %v2113 = vld [vmem:[%s2097 + $0x3c] sm:$0xf]
  %v2130 = vunpack.c.l.b16 %v2098
  %v2131 = vunpack.c.l.b16 %v2099
  %v2132 = vunpack.c.l.b16 %v2100
  %v2133 = vunpack.c.l.b16 %v2101
  %v2134 = vunpack.c.l.b16 %v2102
  %v2135 = vunpack.c.l.b16 %v2103
  %v2136 = vunpack.c.l.b16 %v2104
  %v2137 = vunpack.c.l.b16 %v2105
  %v2138 = vunpack.c.l.b16 %v2106
  %v2139 = vunpack.c.l.b16 %v2107
  %v2140 = vunpack.c.l.b16 %v2108
  %v2141 = vunpack.c.l.b16 %v2109
  %v2142 = vunpack.c.l.b16 %v2110
  %v2143 = vunpack.c.l.b16 %v2111
  %v2144 = vunpack.c.l.b16 %v2112
  %v2145 = vunpack.c.l.b16 %v2113
  %v2146 = vpack.c.b16 %v2131, %v2130
  %v2147 = vpack.c.b16 %v2133, %v2132
  %v2148 = vpack.c.b16 %v2135, %v2134
  %v2149 = vpack.c.b16 %v2137, %v2136
  %v2150 = vpack.c.b16 %v2139, %v2138
  %v2151 = vpack.c.b16 %v2141, %v2140
  %v2152 = vpack.c.b16 %v2143, %v2142
  %v2153 = vpack.c.b16 %v2145, %v2144
  %2162 = vmatprep.subr.bf16.mxu0 0
  %2163 = vmatpush1.bf16.msra.mxu0 %v2146
  %2164 = vmatprep.subr.bf16.mxu0 0
  %2165 = vmatpush1.bf16.msra.mxu0 %v2147
  %2166 = vmatprep.subr.bf16.mxu0 0
  %2167 = vmatpush1.bf16.msra.mxu0 %v2148
  %2168 = vmatprep.subr.bf16.mxu0 0
  %2169 = vmatpush1.bf16.msra.mxu0 %v2149
  %2170 = vmatprep.subr.bf16.mxu0 0
  %2171 = vmatpush1.bf16.msra.mxu0 %v2150
  %2172 = vmatprep.subr.bf16.mxu0 0
  %2173 = vmatpush1.bf16.msra.mxu0 %v2151
  %2174 = vmatprep.subr.bf16.mxu0 0
  %2175 = vmatpush1.bf16.msra.mxu0 %v2152
  %2176 = vmatprep.subr.bf16.mxu0 0
  %2177 = vmatpush1.bf16.msra.mxu0 %v2153
  %2178 = vmatprep.subr.bf16.mxu0 0
  %2179 = vmatpush1.bf16.msra.mxu0 0
  %2180 = vmatprep.subr.bf16.mxu0 0
  %2181 = vmatpush1.bf16.msra.mxu0 0
  %2182 = vmatprep.subr.bf16.mxu0 0
  %2183 = vmatpush1.bf16.msra.mxu0 0
  %2184 = vmatprep.subr.bf16.mxu0 0
  %2185 = vmatpush1.bf16.msra.mxu0 0
  %2186 = vmatprep.subr.bf16.mxu0 0
  %2187 = vmatpush1.bf16.msra.mxu0 0
  %2188 = vmatprep.subr.bf16.mxu0 0
  %2189 = vmatpush1.bf16.msra.mxu0 0
  %2190 = vmatprep.subr.bf16.mxu0 0
  %2191 = vmatpush1.bf16.msra.mxu0 0
  %2192 = vmatprep.subr.bf16.mxu0 0
  %2193 = vmatpush1.bf16.msra.mxu0 0
  %2194 = vmatprep.mubr.bf16.mxu0 0
  %2195 = vmatmul.mubr.bf16.gmra.mrb[0].mxu0 %v2089
  %v2196 = vpop.f32.mrb[0].mxu0
  %v2197 = vadd.f32 0.0, %v2196
  %v2198 = vpop.f32.mrb[0].mxu0
  %v2199 = vpop.f32.mrb[0].mxu0
  %v2200 = vadd.f32 0.0, %v2199
  %v2201 = vpop.f32.mrb[0].mxu0
  %2202 = vmatprep.mubr.bf16.mxu0 0
  %2203 = vmatmul.mubr.bf16.gmra.mrb[0].mxu0 %v2090
  %v2204 = vpop.f32.mrb[0].mxu0
  %v2205 = vadd.f32 0.0, %v2204
  %v2206 = vpop.f32.mrb[0].mxu0
  %v2207 = vpop.f32.mrb[0].mxu0
  %v2208 = vadd.f32 0.0, %v2207
  %v2209 = vpop.f32.mrb[0].mxu0
  %2210 = vmatprep.mubr.bf16.mxu0 0
  %2211 = vmatmul.mubr.bf16.gmra.mrb[0].mxu0 %v2091
  %v2212 = vpop.f32.mrb[0].mxu0
  %v2213 = vadd.f32 0.0, %v2212
  %v2214 = vpop.f32.mrb[0].mxu0
  %v2215 = vpop.f32.mrb[0].mxu0
  %v2216 = vadd.f32 0.0, %v2215
  %v2217 = vpop.f32.mrb[0].mxu0
  %2218 = vmatprep.mubr.bf16.mxu0 0
  %2219 = vmatmul.mubr.bf16.gmra.mrb[0].mxu0 %v2092
  %v2220 = vpop.f32.mrb[0].mxu0
  %v2221 = vadd.f32 0.0, %v2220
  %v2222 = vpop.f32.mrb[0].mxu0
  %v2223 = vpop.f32.mrb[0].mxu0
  %v2224 = vadd.f32 0.0, %v2223
  %v2225 = vpop.f32.mrb[0].mxu0
  %2226 = vmatprep.mubr.bf16.mxu0 0
  %2227 = vmatmul.mubr.bf16.gmra.mrb[0].mxu0 %v2093
  %v2228 = vpop.f32.mrb[0].mxu0
  %v2229 = vadd.f32 0.0, %v2228
  %v2230 = vpop.f32.mrb[0].mxu0
  %v2231 = vpop.f32.mrb[0].mxu0
  %v2232 = vadd.f32 0.0, %v2231
  %v2233 = vpop.f32.mrb[0].mxu0
  %2234 = vmatprep.mubr.bf16.mxu0 0
  %2235 = vmatmul.mubr.bf16.gmra.mrb[0].mxu0 %v2094
  %v2236 = vpop.f32.mrb[0].mxu0
  %v2237 = vadd.f32 0.0, %v2236
  %v2238 = vpop.f32.mrb[0].mxu0
  %v2239 = vpop.f32.mrb[0].mxu0
  %v2240 = vadd.f32 0.0, %v2239
  %v2241 = vpop.f32.mrb[0].mxu0
  %2242 = vmatprep.mubr.bf16.mxu0 0
  %2243 = vmatmul.mubr.bf16.gmra.mrb[0].mxu0 %v2095
  %v2244 = vpop.f32.mrb[0].mxu0
  %v2245 = vadd.f32 0.0, %v2244
  %v2246 = vpop.f32.mrb[0].mxu0
  %v2247 = vpop.f32.mrb[0].mxu0
  %v2248 = vadd.f32 0.0, %v2247
  %v2249 = vpop.f32.mrb[0].mxu0
  %2250 = vmatprep.mubr.bf16.mxu0 0
  %2251 = vmatmul.mubr.bf16.gmra.mrb[0].mxu0 %v2096
  %v2252 = vpop.f32.mrb[0].mxu0
  %v2253 = vadd.f32 0.0, %v2252
  %v2254 = vpop.f32.mrb[0].mxu0
  %v2255 = vpop.f32.mrb[0].mxu0
  %v2256 = vadd.f32 0.0, %v2255
  %v2257 = vpop.f32.mrb[0].mxu0
  %2258 = vdwg.mxu0
  %v2259 = vadd.f32 %v2011, %v2197
  %v2260 = vadd.f32 %v2014, %v2200
  %v2261 = vadd.f32 %v2019, %v2205
  %v2262 = vadd.f32 %v2022, %v2208
  %v2263 = vadd.f32 %v2027, %v2213
  %v2264 = vadd.f32 %v2030, %v2216
  %v2265 = vadd.f32 %v2035, %v2221
  %v2266 = vadd.f32 %v2038, %v2224
  %v2267 = vadd.f32 %v2043, %v2229
  %v2268 = vadd.f32 %v2046, %v2232
  %v2269 = vadd.f32 %v2051, %v2237
  %v2270 = vadd.f32 %v2054, %v2240
  %v2271 = vadd.f32 %v2059, %v2245
  %v2272 = vadd.f32 %v2062, %v2248
  %v2273 = vadd.f32 %v2067, %v2253
  %v2274 = vadd.f32 %v2070, %v2256
  %v2275 = vld [vmem:[%s5 + $0x2] sm:$0x1]
  %v2276 = vlaneseq
  %v2277 = vshrl.u32 %v2276, 7
  %v2278 = vsub.s32 0, %v2277
  %v2279 = vrot.slane %v2275, %v2278
  %v2280 = vadd.f32 %v2259, %v2279
  %v2281 = vadd.f32 %v2260, %v2279
  %v2282 = vadd.f32 %v2261, %v2279
  %v2283 = vadd.f32 %v2262, %v2279
  %v2284 = vadd.f32 %v2263, %v2279
  %v2285 = vadd.f32 %v2264, %v2279
  %v2286 = vadd.f32 %v2265, %v2279
  %v2287 = vadd.f32 %v2266, %v2279
  %v2288 = vadd.f32 %v2267, %v2279
  %v2289 = vadd.f32 %v2268, %v2279
  %v2290 = vadd.f32 %v2269, %v2279
  %v2291 = vadd.f32 %v2270, %v2279
  %v2292 = vadd.f32 %v2271, %v2279
  %v2293 = vadd.f32 %v2272, %v2279
  %v2294 = vadd.f32 %v2273, %v2279
  %v2295 = vadd.f32 %v2274, %v2279
  %v2296 = vld [vmem:[#allocation3] sm:$0xff]
  %v2297 = vld [vmem:[#allocation3 + $0x8] sm:$0xff]
  %v2298 = vld [vmem:[#allocation3 + $0x10] sm:$0xff]
  %v2299 = vld [vmem:[#allocation3 + $0x18] sm:$0xff]
  %v2300 = vld [vmem:[#allocation3 + $0x20] sm:$0xff]
  %v2301 = vld [vmem:[#allocation3 + $0x28] sm:$0xff]
  %v2302 = vld [vmem:[#allocation3 + $0x30] sm:$0xff]
  %v2303 = vld [vmem:[#allocation3 + $0x38] sm:$0xff]
  %v2304 = vld [vmem:[#allocation3 + $0x40] sm:$0xff]
  %v2305 = vld [vmem:[#allocation3 + $0x48] sm:$0xff]
  %v2306 = vld [vmem:[#allocation3 + $0x50] sm:$0xff]
  %v2307 = vld [vmem:[#allocation3 + $0x58] sm:$0xff]
  %v2308 = vld [vmem:[#allocation3 + $0x60] sm:$0xff]
  %v2309 = vld [vmem:[#allocation3 + $0x68] sm:$0xff]
  %v2310 = vld [vmem:[#allocation3 + $0x70] sm:$0xff]
  %v2311 = vld [vmem:[#allocation3 + $0x78] sm:$0xff]
  %v2312 = vadd.f32 %v2280, %v2296
  %v2313 = vadd.f32 %v2281, %v2297
  %v2314 = vadd.f32 %v2282, %v2298
  %v2315 = vadd.f32 %v2283, %v2299
  %v2316 = vadd.f32 %v2284, %v2300
  %v2317 = vadd.f32 %v2285, %v2301
  %v2318 = vadd.f32 %v2286, %v2302
  %v2319 = vadd.f32 %v2287, %v2303
  %v2320 = vadd.f32 %v2288, %v2304
  %v2321 = vadd.f32 %v2289, %v2305
  %v2322 = vadd.f32 %v2290, %v2306
  %v2323 = vadd.f32 %v2291, %v2307
  %v2324 = vadd.f32 %v2292, %v2308
  %v2325 = vadd.f32 %v2293, %v2309
  %v2326 = vadd.f32 %v2294, %v2310
  %v2327 = vadd.f32 %v2295, %v2311
  %2328 = vst [vmem:[%s685 + $0x8] sm:$0xff] %v2312
  %2329 = vst [vmem:[%s685 + $0x10] sm:$0xff] %v2313
  %2330 = vst [vmem:[%s685 + $0x28] sm:$0xff] %v2314
  %2331 = vst [vmem:[%s685 + $0x30] sm:$0xff] %v2315
  %2332 = vst [vmem:[%s685 + $0x48] sm:$0xff] %v2316
  %2333 = vst [vmem:[%s685 + $0x50] sm:$0xff] %v2317
  %2334 = vst [vmem:[%s685 + $0x68] sm:$0xff] %v2318
  %2335 = vst [vmem:[%s685 + $0x70] sm:$0xff] %v2319
  %2336 = vst [vmem:[%s685 + $0xc8] sm:$0xff] %v2320
  %2337 = vst [vmem:[%s685 + $0xd0] sm:$0xff] %v2321
  %2338 = vst [vmem:[%s685 + $0xe8] sm:$0xff] %v2322
  %2339 = vst [vmem:[%s685 + $0xf0] sm:$0xff] %v2323
  %2340 = vst [vmem:[%s685 + $0x108] sm:$0xff] %v2324
  %2341 = vst [vmem:[%s685 + $0x110] sm:$0xff] %v2325
  %2342 = vst [vmem:[%s685 + $0x128] sm:$0xff] %v2326
  %2343 = vst [vmem:[%s685 + $0x130] sm:$0xff] %v2327
  %v2344 = vld [vmem:[%s685 + $0x7] sm:$0xff]
  %v2345 = vld [vmem:[%s685 + $0xf] sm:$0xff]
  %v2346 = vld [vmem:[%s685 + $0x27] sm:$0xff]
  %v2347 = vld [vmem:[%s685 + $0x2f] sm:$0xff]
  %v2348 = vld [vmem:[%s685 + $0x47] sm:$0xff]
  %v2349 = vld [vmem:[%s685 + $0x4f] sm:$0xff]
  %v2350 = vld [vmem:[%s685 + $0x67] sm:$0xff]
  %v2351 = vld [vmem:[%s685 + $0x6f] sm:$0xff]
  %v2352 = vld [vmem:[%s685 + $0xc7] sm:$0xff]
  %v2353 = vld [vmem:[%s685 + $0xcf] sm:$0xff]
  %v2354 = vld [vmem:[%s685 + $0xe7] sm:$0xff]
  %v2355 = vld [vmem:[%s685 + $0xef] sm:$0xff]
  %v2356 = vld [vmem:[%s685 + $0x107] sm:$0xff]
  %v2357 = vld [vmem:[%s685 + $0x10f] sm:$0xff]
  %v2358 = vld [vmem:[%s685 + $0x127] sm:$0xff]
  %v2359 = vld [vmem:[%s685 + $0x12f] sm:$0xff]
  %v2360 = vpack.c.bf16 %v2345, %v2344
  %v2361 = vpack.c.bf16 %v2347, %v2346
  %v2362 = vpack.c.bf16 %v2349, %v2348
  %v2363 = vpack.c.bf16 %v2351, %v2350
  %v2364 = vpack.c.bf16 %v2353, %v2352
  %v2365 = vpack.c.bf16 %v2355, %v2354
  %v2366 = vpack.c.bf16 %v2357, %v2356
  %v2367 = vpack.c.bf16 %v2359, %v2358
  %v2368 = vld [vmem:[%s4] sm:$0xf]
  %v2369 = vld [vmem:[%s4 + $0x4] sm:$0xf]
  %v2370 = vld [vmem:[%s4 + $0x8] sm:$0xf]
  %v2371 = vld [vmem:[%s4 + $0xc] sm:$0xf]
  %v2372 = vld [vmem:[%s4 + $0x10] sm:$0xf]
  %v2373 = vld [vmem:[%s4 + $0x14] sm:$0xf]
  %v2374 = vld [vmem:[%s4 + $0x18] sm:$0xf]
  %v2375 = vld [vmem:[%s4 + $0x1c] sm:$0xf]
  %v2376 = vld [vmem:[%s4 + $0x20] sm:$0xf]
  %v2377 = vld [vmem:[%s4 + $0x24] sm:$0xf]
  %v2378 = vld [vmem:[%s4 + $0x28] sm:$0xf]
  %v2379 = vld [vmem:[%s4 + $0x2c] sm:$0xf]
  %v2380 = vld [vmem:[%s4 + $0x30] sm:$0xf]
  %v2381 = vld [vmem:[%s4 + $0x34] sm:$0xf]
  %v2382 = vld [vmem:[%s4 + $0x38] sm:$0xf]
  %v2383 = vld [vmem:[%s4 + $0x3c] sm:$0xf]
  %v2384 = vld [vmem:[%s685 + $0x8] sm:$0xff]
  %v2385 = vld [vmem:[%s685 + $0x10] sm:$0xff]
  %v2386 = vld [vmem:[%s685 + $0x28] sm:$0xff]
  %v2387 = vld [vmem:[%s685 + $0x30] sm:$0xff]
  %v2388 = vld [vmem:[%s685 + $0x48] sm:$0xff]
  %v2389 = vld [vmem:[%s685 + $0x50] sm:$0xff]
  %v2390 = vld [vmem:[%s685 + $0x68] sm:$0xff]
  %v2391 = vld [vmem:[%s685 + $0x70] sm:$0xff]
  %v2392 = vld [vmem:[%s685 + $0xc8] sm:$0xff]
  %v2393 = vld [vmem:[%s685 + $0xd0] sm:$0xff]
  %v2394 = vld [vmem:[%s685 + $0xe8] sm:$0xff]
  %v2395 = vld [vmem:[%s685 + $0xf0] sm:$0xff]
  %v2396 = vld [vmem:[%s685 + $0x108] sm:$0xff]
  %v2397 = vld [vmem:[%s685 + $0x110] sm:$0xff]
  %v2398 = vld [vmem:[%s685 + $0x128] sm:$0xff]
  %v2399 = vld [vmem:[%s685 + $0x130] sm:$0xff]
  %v2400 = vpack.c.bf16 %v2385, %v2384
  %v2401 = vpack.c.bf16 %v2387, %v2386
  %v2402 = vpack.c.bf16 %v2389, %v2388
  %v2403 = vpack.c.bf16 %v2391, %v2390
  %v2404 = vpack.c.bf16 %v2393, %v2392
  %v2405 = vpack.c.bf16 %v2395, %v2394
  %v2406 = vpack.c.bf16 %v2397, %v2396
  %v2407 = vpack.c.bf16 %v2399, %v2398
  %s2408 = scalar_lea.vmem %s4, 64
  %v2409 = vld [vmem:[%s2408] sm:$0xf]
  %v2410 = vld [vmem:[%s2408 + $0x4] sm:$0xf]
  %v2411 = vld [vmem:[%s2408 + $0x8] sm:$0xf]
  %v2412 = vld [vmem:[%s2408 + $0xc] sm:$0xf]
  %v2413 = vld [vmem:[%s2408 + $0x10] sm:$0xf]
  %v2414 = vld [vmem:[%s2408 + $0x14] sm:$0xf]
  %v2415 = vld [vmem:[%s2408 + $0x18] sm:$0xf]
  %v2416 = vld [vmem:[%s2408 + $0x1c] sm:$0xf]
  %v2417 = vld [vmem:[%s2408 + $0x20] sm:$0xf]
  %v2418 = vld [vmem:[%s2408 + $0x24] sm:$0xf]
  %v2419 = vld [vmem:[%s2408 + $0x28] sm:$0xf]
  %v2420 = vld [vmem:[%s2408 + $0x2c] sm:$0xf]
  %v2421 = vld [vmem:[%s2408 + $0x30] sm:$0xf]
  %v2422 = vld [vmem:[%s2408 + $0x34] sm:$0xf]
  %v2423 = vld [vmem:[%s2408 + $0x38] sm:$0xf]
  %v2424 = vld [vmem:[%s2408 + $0x3c] sm:$0xf]
  %v2441 = vunpack.c.l.b16 %v2409
  %v2442 = vunpack.c.l.b16 %v2410
  %v2443 = vunpack.c.l.b16 %v2411
  %v2444 = vunpack.c.l.b16 %v2412
  %v2445 = vunpack.c.l.b16 %v2413
  %v2446 = vunpack.c.l.b16 %v2414
  %v2447 = vunpack.c.l.b16 %v2415
  %v2448 = vunpack.c.l.b16 %v2416
  %v2449 = vunpack.c.l.b16 %v2417
  %v2450 = vunpack.c.l.b16 %v2418
  %v2451 = vunpack.c.l.b16 %v2419
  %v2452 = vunpack.c.l.b16 %v2420
  %v2453 = vunpack.c.l.b16 %v2421
  %v2454 = vunpack.c.l.b16 %v2422
  %v2455 = vunpack.c.l.b16 %v2423
  %v2456 = vunpack.c.l.b16 %v2424
  %v2457 = vpack.c.b16 %v2442, %v2441
  %v2458 = vpack.c.b16 %v2444, %v2443
  %v2459 = vpack.c.b16 %v2446, %v2445
  %v2460 = vpack.c.b16 %v2448, %v2447
  %v2461 = vpack.c.b16 %v2450, %v2449
  %v2462 = vpack.c.b16 %v2452, %v2451
  %v2463 = vpack.c.b16 %v2454, %v2453
  %v2464 = vpack.c.b16 %v2456, %v2455
  %2473 = vmatprep.subr.bf16.mxu0 0
  %2474 = vmatpush1.bf16.msra.mxu0 %v2457
  %2475 = vmatprep.subr.bf16.mxu0 0
  %2476 = vmatpush1.bf16.msra.mxu0 %v2458
  %2477 = vmatprep.subr.bf16.mxu0 0
  %2478 = vmatpush1.bf16.msra.mxu0 %v2459
  %2479 = vmatprep.subr.bf16.mxu0 0
  %2480 = vmatpush1.bf16.msra.mxu0 %v2460
  %2481 = vmatprep.subr.bf16.mxu0 0
  %2482 = vmatpush1.bf16.msra.mxu0 %v2461
  %2483 = vmatprep.subr.bf16.mxu0 0
  %2484 = vmatpush1.bf16.msra.mxu0 %v2462
  %2485 = vmatprep.subr.bf16.mxu0 0
  %2486 = vmatpush1.bf16.msra.mxu0 %v2463
  %2487 = vmatprep.subr.bf16.mxu0 0
  %2488 = vmatpush1.bf16.msra.mxu0 %v2464
  %2489 = vmatprep.subr.bf16.mxu0 0
  %2490 = vmatpush1.bf16.msra.mxu0 0
  %2491 = vmatprep.subr.bf16.mxu0 0
  %2492 = vmatpush1.bf16.msra.mxu0 0
  %2493 = vmatprep.subr.bf16.mxu0 0
  %2494 = vmatpush1.bf16.msra.mxu0 0
  %2495 = vmatprep.subr.bf16.mxu0 0
  %2496 = vmatpush1.bf16.msra.mxu0 0
  %2497 = vmatprep.subr.bf16.mxu0 0
  %2498 = vmatpush1.bf16.msra.mxu0 0
  %2499 = vmatprep.subr.bf16.mxu0 0
  %2500 = vmatpush1.bf16.msra.mxu0 0
  %2501 = vmatprep.subr.bf16.mxu0 0
  %2502 = vmatpush1.bf16.msra.mxu0 0
  %2503 = vmatprep.subr.bf16.mxu0 0
  %2504 = vmatpush1.bf16.msra.mxu0 0
  %2505 = vmatprep.mubr.bf16.mxu0 0
  %2506 = vmatmul.mubr.bf16.gmra.mrb[0].mxu0 %v2400
  %v2507 = vpop.f32.mrb[0].mxu0
  %v2508 = vadd.f32 0.0, %v2507
  %v2509 = vpop.f32.mrb[0].mxu0
  %v2510 = vpop.f32.mrb[0].mxu0
  %v2511 = vadd.f32 0.0, %v2510
  %v2512 = vpop.f32.mrb[0].mxu0
  %2513 = vmatprep.mubr.bf16.mxu0 0
  %2514 = vmatmul.mubr.bf16.gmra.mrb[0].mxu0 %v2401
  %v2515 = vpop.f32.mrb[0].mxu0
  %v2516 = vadd.f32 0.0, %v2515
  %v2517 = vpop.f32.mrb[0].mxu0
  %v2518 = vpop.f32.mrb[0].mxu0
  %v2519 = vadd.f32 0.0, %v2518
  %v2520 = vpop.f32.mrb[0].mxu0
  %2521 = vmatprep.mubr.bf16.mxu0 0
  %2522 = vmatmul.mubr.bf16.gmra.mrb[0].mxu0 %v2402
  %v2523 = vpop.f32.mrb[0].mxu0
  %v2524 = vadd.f32 0.0, %v2523
  %v2525 = vpop.f32.mrb[0].mxu0
  %v2526 = vpop.f32.mrb[0].mxu0
  %v2527 = vadd.f32 0.0, %v2526
  %v2528 = vpop.f32.mrb[0].mxu0
  %2529 = vmatprep.mubr.bf16.mxu0 0
  %2530 = vmatmul.mubr.bf16.gmra.mrb[0].mxu0 %v2403
  %v2531 = vpop.f32.mrb[0].mxu0
  %v2532 = vadd.f32 0.0, %v2531
  %v2533 = vpop.f32.mrb[0].mxu0
  %v2534 = vpop.f32.mrb[0].mxu0
  %v2535 = vadd.f32 0.0, %v2534
  %v2536 = vpop.f32.mrb[0].mxu0
  %2537 = vmatprep.mubr.bf16.mxu0 0
  %2538 = vmatmul.mubr.bf16.gmra.mrb[0].mxu0 %v2404
  %v2539 = vpop.f32.mrb[0].mxu0
  %v2540 = vadd.f32 0.0, %v2539
  %v2541 = vpop.f32.mrb[0].mxu0
  %v2542 = vpop.f32.mrb[0].mxu0
  %v2543 = vadd.f32 0.0, %v2542
  %v2544 = vpop.f32.mrb[0].mxu0
  %2545 = vmatprep.mubr.bf16.mxu0 0
  %2546 = vmatmul.mubr.bf16.gmra.mrb[0].mxu0 %v2405
  %v2547 = vpop.f32.mrb[0].mxu0
  %v2548 = vadd.f32 0.0, %v2547
  %v2549 = vpop.f32.mrb[0].mxu0
  %v2550 = vpop.f32.mrb[0].mxu0
  %v2551 = vadd.f32 0.0, %v2550
  %v2552 = vpop.f32.mrb[0].mxu0
  %2553 = vmatprep.mubr.bf16.mxu0 0
  %2554 = vmatmul.mubr.bf16.gmra.mrb[0].mxu0 %v2406
  %v2555 = vpop.f32.mrb[0].mxu0
  %v2556 = vadd.f32 0.0, %v2555
  %v2557 = vpop.f32.mrb[0].mxu0
  %v2558 = vpop.f32.mrb[0].mxu0
  %v2559 = vadd.f32 0.0, %v2558
  %v2560 = vpop.f32.mrb[0].mxu0
  %2561 = vmatprep.mubr.bf16.mxu0 0
  %2562 = vmatmul.mubr.bf16.gmra.mrb[0].mxu0 %v2407
  %v2563 = vpop.f32.mrb[0].mxu0
  %v2564 = vadd.f32 0.0, %v2563
  %v2565 = vpop.f32.mrb[0].mxu0
  %v2566 = vpop.f32.mrb[0].mxu0
  %v2567 = vadd.f32 0.0, %v2566
  %v2568 = vpop.f32.mrb[0].mxu0
  %2569 = vdwg.mxu0
  %v2586 = vunpack.c.l.b16 %v2368
  %v2587 = vunpack.c.l.b16 %v2369
  %v2588 = vunpack.c.l.b16 %v2370
  %v2589 = vunpack.c.l.b16 %v2371
  %v2590 = vunpack.c.l.b16 %v2372
  %v2591 = vunpack.c.l.b16 %v2373
  %v2592 = vunpack.c.l.b16 %v2374
  %v2593 = vunpack.c.l.b16 %v2375
  %v2594 = vunpack.c.l.b16 %v2376
  %v2595 = vunpack.c.l.b16 %v2377
  %v2596 = vunpack.c.l.b16 %v2378
  %v2597 = vunpack.c.l.b16 %v2379
  %v2598 = vunpack.c.l.b16 %v2380
  %v2599 = vunpack.c.l.b16 %v2381
  %v2600 = vunpack.c.l.b16 %v2382
  %v2601 = vunpack.c.l.b16 %v2383
  %v2602 = vpack.c.b16 %v2587, %v2586
  %v2603 = vpack.c.b16 %v2589, %v2588
  %v2604 = vpack.c.b16 %v2591, %v2590
  %v2605 = vpack.c.b16 %v2593, %v2592
  %v2606 = vpack.c.b16 %v2595, %v2594
  %v2607 = vpack.c.b16 %v2597, %v2596
  %v2608 = vpack.c.b16 %v2599, %v2598
  %v2609 = vpack.c.b16 %v2601, %v2600
  %2618 = vmatprep.subr.bf16.mxu0 0
  %2619 = vmatpush1.bf16.msra.mxu0 %v2602
  %2620 = vmatprep.subr.bf16.mxu0 0
  %2621 = vmatpush1.bf16.msra.mxu0 %v2603
  %2622 = vmatprep.subr.bf16.mxu0 0
  %2623 = vmatpush1.bf16.msra.mxu0 %v2604
  %2624 = vmatprep.subr.bf16.mxu0 0
  %2625 = vmatpush1.bf16.msra.mxu0 %v2605
  %2626 = vmatprep.subr.bf16.mxu0 0
  %2627 = vmatpush1.bf16.msra.mxu0 %v2606
  %2628 = vmatprep.subr.bf16.mxu0 0
  %2629 = vmatpush1.bf16.msra.mxu0 %v2607
  %2630 = vmatprep.subr.bf16.mxu0 0
  %2631 = vmatpush1.bf16.msra.mxu0 %v2608
  %2632 = vmatprep.subr.bf16.mxu0 0
  %2633 = vmatpush1.bf16.msra.mxu0 %v2609
  %2634 = vmatprep.subr.bf16.mxu0 0
  %2635 = vmatpush1.bf16.msra.mxu0 0
  %2636 = vmatprep.subr.bf16.mxu0 0
  %2637 = vmatpush1.bf16.msra.mxu0 0
  %2638 = vmatprep.subr.bf16.mxu0 0
  %2639 = vmatpush1.bf16.msra.mxu0 0
  %2640 = vmatprep.subr.bf16.mxu0 0
  %2641 = vmatpush1.bf16.msra.mxu0 0
  %2642 = vmatprep.subr.bf16.mxu0 0
  %2643 = vmatpush1.bf16.msra.mxu0 0
  %2644 = vmatprep.subr.bf16.mxu0 0
  %2645 = vmatpush1.bf16.msra.mxu0 0
  %2646 = vmatprep.subr.bf16.mxu0 0
  %2647 = vmatpush1.bf16.msra.mxu0 0
  %2648 = vmatprep.subr.bf16.mxu0 0
  %2649 = vmatpush1.bf16.msra.mxu0 0
  %2650 = vmatprep.mubr.bf16.mxu0 0
  %2651 = vmatmul.mubr.bf16.gmra.mrb[0].mxu0 %v2360
  %v2652 = vpop.f32.mrb[0].mxu0
  %v2653 = vadd.f32 %v2508, %v2652
  %v2654 = vpop.f32.mrb[0].mxu0
  %v2655 = vpop.f32.mrb[0].mxu0
  %v2656 = vadd.f32 %v2511, %v2655
  %v2657 = vpop.f32.mrb[0].mxu0
  %2658 = vmatprep.mubr.bf16.mxu0 0
  %2659 = vmatmul.mubr.bf16.gmra.mrb[0].mxu0 %v2361
  %v2660 = vpop.f32.mrb[0].mxu0
  %v2661 = vadd.f32 %v2516, %v2660
  %v2662 = vpop.f32.mrb[0].mxu0
  %v2663 = vpop.f32.mrb[0].mxu0
  %v2664 = vadd.f32 %v2519, %v2663
  %v2665 = vpop.f32.mrb[0].mxu0
  %2666 = vmatprep.mubr.bf16.mxu0 0
  %2667 = vmatmul.mubr.bf16.gmra.mrb[0].mxu0 %v2362
  %v2668 = vpop.f32.mrb[0].mxu0
  %v2669 = vadd.f32 %v2524, %v2668
  %v2670 = vpop.f32.mrb[0].mxu0
  %v2671 = vpop.f32.mrb[0].mxu0
  %v2672 = vadd.f32 %v2527, %v2671
  %v2673 = vpop.f32.mrb[0].mxu0
  %2674 = vmatprep.mubr.bf16.mxu0 0
  %2675 = vmatmul.mubr.bf16.gmra.mrb[0].mxu0 %v2363
  %v2676 = vpop.f32.mrb[0].mxu0
  %v2677 = vadd.f32 %v2532, %v2676
  %v2678 = vpop.f32.mrb[0].mxu0
  %v2679 = vpop.f32.mrb[0].mxu0
  %v2680 = vadd.f32 %v2535, %v2679
  %v2681 = vpop.f32.mrb[0].mxu0
  %2682 = vmatprep.mubr.bf16.mxu0 0
  %2683 = vmatmul.mubr.bf16.gmra.mrb[0].mxu0 %v2364
  %v2684 = vpop.f32.mrb[0].mxu0
  %v2685 = vadd.f32 %v2540, %v2684
  %v2686 = vpop.f32.mrb[0].mxu0
  %v2687 = vpop.f32.mrb[0].mxu0
  %v2688 = vadd.f32 %v2543, %v2687
  %v2689 = vpop.f32.mrb[0].mxu0
  %2690 = vmatprep.mubr.bf16.mxu0 0
  %2691 = vmatmul.mubr.bf16.gmra.mrb[0].mxu0 %v2365
  %v2692 = vpop.f32.mrb[0].mxu0
  %v2693 = vadd.f32 %v2548, %v2692
  %v2694 = vpop.f32.mrb[0].mxu0
  %v2695 = vpop.f32.mrb[0].mxu0
  %v2696 = vadd.f32 %v2551, %v2695
  %v2697 = vpop.f32.mrb[0].mxu0
  %2698 = vmatprep.mubr.bf16.mxu0 0
  %2699 = vmatmul.mubr.bf16.gmra.mrb[0].mxu0 %v2366
  %v2700 = vpop.f32.mrb[0].mxu0
  %v2701 = vadd.f32 %v2556, %v2700
  %v2702 = vpop.f32.mrb[0].mxu0
  %v2703 = vpop.f32.mrb[0].mxu0
  %v2704 = vadd.f32 %v2559, %v2703
  %v2705 = vpop.f32.mrb[0].mxu0
  %2706 = vmatprep.mubr.bf16.mxu0 0
  %2707 = vmatmul.mubr.bf16.gmra.mrb[0].mxu0 %v2367
  %v2708 = vpop.f32.mrb[0].mxu0
  %v2709 = vadd.f32 %v2564, %v2708
  %v2710 = vpop.f32.mrb[0].mxu0
  %v2711 = vpop.f32.mrb[0].mxu0
  %v2712 = vadd.f32 %v2567, %v2711
  %v2713 = vpop.f32.mrb[0].mxu0
  %2714 = vdwg.mxu0
  %v2715 = vld [vmem:[%s685 + $0x9] sm:$0xff]
  %v2716 = vld [vmem:[%s685 + $0x11] sm:$0xff]
  %v2717 = vld [vmem:[%s685 + $0x29] sm:$0xff]
  %v2718 = vld [vmem:[%s685 + $0x31] sm:$0xff]
  %v2719 = vld [vmem:[%s685 + $0x49] sm:$0xff]
  %v2720 = vld [vmem:[%s685 + $0x51] sm:$0xff]
  %v2721 = vld [vmem:[%s685 + $0x69] sm:$0xff]
  %v2722 = vld [vmem:[%s685 + $0x71] sm:$0xff]
  %v2723 = vld [vmem:[%s685 + $0xc9] sm:$0xff]
  %v2724 = vld [vmem:[%s685 + $0xd1] sm:$0xff]
  %v2725 = vld [vmem:[%s685 + $0xe9] sm:$0xff]
  %v2726 = vld [vmem:[%s685 + $0xf1] sm:$0xff]
  %v2727 = vld [vmem:[%s685 + $0x109] sm:$0xff]
  %v2728 = vld [vmem:[%s685 + $0x111] sm:$0xff]
  %v2729 = vld [vmem:[%s685 + $0x129] sm:$0xff]
  %v2730 = vld [vmem:[%s685 + $0x131] sm:$0xff]
  %v2731 = vpack.c.bf16 %v2716, %v2715
  %v2732 = vpack.c.bf16 %v2718, %v2717
  %v2733 = vpack.c.bf16 %v2720, %v2719
  %v2734 = vpack.c.bf16 %v2722, %v2721
  %v2735 = vpack.c.bf16 %v2724, %v2723
  %v2736 = vpack.c.bf16 %v2726, %v2725
  %v2737 = vpack.c.bf16 %v2728, %v2727
  %v2738 = vpack.c.bf16 %v2730, %v2729
  %s2739 = scalar_lea.vmem %s4, 128
  %v2740 = vld [vmem:[%s2739] sm:$0xf]
  %v2741 = vld [vmem:[%s2739 + $0x4] sm:$0xf]
  %v2742 = vld [vmem:[%s2739 + $0x8] sm:$0xf]
  %v2743 = vld [vmem:[%s2739 + $0xc] sm:$0xf]
  %v2744 = vld [vmem:[%s2739 + $0x10] sm:$0xf]
  %v2745 = vld [vmem:[%s2739 + $0x14] sm:$0xf]
  %v2746 = vld [vmem:[%s2739 + $0x18] sm:$0xf]
  %v2747 = vld [vmem:[%s2739 + $0x1c] sm:$0xf]
  %v2748 = vld [vmem:[%s2739 + $0x20] sm:$0xf]
  %v2749 = vld [vmem:[%s2739 + $0x24] sm:$0xf]
  %v2750 = vld [vmem:[%s2739 + $0x28] sm:$0xf]
  %v2751 = vld [vmem:[%s2739 + $0x2c] sm:$0xf]
  %v2752 = vld [vmem:[%s2739 + $0x30] sm:$0xf]
  %v2753 = vld [vmem:[%s2739 + $0x34] sm:$0xf]
  %v2754 = vld [vmem:[%s2739 + $0x38] sm:$0xf]
  %v2755 = vld [vmem:[%s2739 + $0x3c] sm:$0xf]
  %v2772 = vunpack.c.l.b16 %v2740
  %v2773 = vunpack.c.l.b16 %v2741
  %v2774 = vunpack.c.l.b16 %v2742
  %v2775 = vunpack.c.l.b16 %v2743
  %v2776 = vunpack.c.l.b16 %v2744
  %v2777 = vunpack.c.l.b16 %v2745
  %v2778 = vunpack.c.l.b16 %v2746
  %v2779 = vunpack.c.l.b16 %v2747
  %v2780 = vunpack.c.l.b16 %v2748
  %v2781 = vunpack.c.l.b16 %v2749
  %v2782 = vunpack.c.l.b16 %v2750
  %v2783 = vunpack.c.l.b16 %v2751
  %v2784 = vunpack.c.l.b16 %v2752
  %v2785 = vunpack.c.l.b16 %v2753
  %v2786 = vunpack.c.l.b16 %v2754
  %v2787 = vunpack.c.l.b16 %v2755
  %v2788 = vpack.c.b16 %v2773, %v2772
  %v2789 = vpack.c.b16 %v2775, %v2774
  %v2790 = vpack.c.b16 %v2777, %v2776
  %v2791 = vpack.c.b16 %v2779, %v2778
  %v2792 = vpack.c.b16 %v2781, %v2780
  %v2793 = vpack.c.b16 %v2783, %v2782
  %v2794 = vpack.c.b16 %v2785, %v2784
  %v2795 = vpack.c.b16 %v2787, %v2786
  %2804 = vmatprep.subr.bf16.mxu0 0
  %2805 = vmatpush1.bf16.msra.mxu0 %v2788
  %2806 = vmatprep.subr.bf16.mxu0 0
  %2807 = vmatpush1.bf16.msra.mxu0 %v2789
  %2808 = vmatprep.subr.bf16.mxu0 0
  %2809 = vmatpush1.bf16.msra.mxu0 %v2790
  %2810 = vmatprep.subr.bf16.mxu0 0
  %2811 = vmatpush1.bf16.msra.mxu0 %v2791
  %2812 = vmatprep.subr.bf16.mxu0 0
  %2813 = vmatpush1.bf16.msra.mxu0 %v2792
  %2814 = vmatprep.subr.bf16.mxu0 0
  %2815 = vmatpush1.bf16.msra.mxu0 %v2793
  %2816 = vmatprep.subr.bf16.mxu0 0
  %2817 = vmatpush1.bf16.msra.mxu0 %v2794
  %2818 = vmatprep.subr.bf16.mxu0 0
  %2819 = vmatpush1.bf16.msra.mxu0 %v2795
  %2820 = vmatprep.subr.bf16.mxu0 0
  %2821 = vmatpush1.bf16.msra.mxu0 0
  %2822 = vmatprep.subr.bf16.mxu0 0
  %2823 = vmatpush1.bf16.msra.mxu0 0
  %2824 = vmatprep.subr.bf16.mxu0 0
  %2825 = vmatpush1.bf16.msra.mxu0 0
  %2826 = vmatprep.subr.bf16.mxu0 0
  %2827 = vmatpush1.bf16.msra.mxu0 0
  %2828 = vmatprep.subr.bf16.mxu0 0
  %2829 = vmatpush1.bf16.msra.mxu0 0
  %2830 = vmatprep.subr.bf16.mxu0 0
  %2831 = vmatpush1.bf16.msra.mxu0 0
  %2832 = vmatprep.subr.bf16.mxu0 0
  %2833 = vmatpush1.bf16.msra.mxu0 0
  %2834 = vmatprep.subr.bf16.mxu0 0
  %2835 = vmatpush1.bf16.msra.mxu0 0
  %2836 = vmatprep.mubr.bf16.mxu0 0
  %2837 = vmatmul.mubr.bf16.gmra.mrb[0].mxu0 %v2731
  %v2838 = vpop.f32.mrb[0].mxu0
  %v2839 = vadd.f32 0.0, %v2838
  %v2840 = vpop.f32.mrb[0].mxu0
  %v2841 = vpop.f32.mrb[0].mxu0
  %v2842 = vadd.f32 0.0, %v2841
  %v2843 = vpop.f32.mrb[0].mxu0
  %2844 = vmatprep.mubr.bf16.mxu0 0
  %2845 = vmatmul.mubr.bf16.gmra.mrb[0].mxu0 %v2732
  %v2846 = vpop.f32.mrb[0].mxu0
  %v2847 = vadd.f32 0.0, %v2846
  %v2848 = vpop.f32.mrb[0].mxu0
  %v2849 = vpop.f32.mrb[0].mxu0
  %v2850 = vadd.f32 0.0, %v2849
  %v2851 = vpop.f32.mrb[0].mxu0
  %2852 = vmatprep.mubr.bf16.mxu0 0
  %2853 = vmatmul.mubr.bf16.gmra.mrb[0].mxu0 %v2733
  %v2854 = vpop.f32.mrb[0].mxu0
  %v2855 = vadd.f32 0.0, %v2854
  %v2856 = vpop.f32.mrb[0].mxu0
  %v2857 = vpop.f32.mrb[0].mxu0
  %v2858 = vadd.f32 0.0, %v2857
  %v2859 = vpop.f32.mrb[0].mxu0
  %2860 = vmatprep.mubr.bf16.mxu0 0
  %2861 = vmatmul.mubr.bf16.gmra.mrb[0].mxu0 %v2734
  %v2862 = vpop.f32.mrb[0].mxu0
  %v2863 = vadd.f32 0.0, %v2862
  %v2864 = vpop.f32.mrb[0].mxu0
  %v2865 = vpop.f32.mrb[0].mxu0
  %v2866 = vadd.f32 0.0, %v2865
  %v2867 = vpop.f32.mrb[0].mxu0
  %2868 = vmatprep.mubr.bf16.mxu0 0
  %2869 = vmatmul.mubr.bf16.gmra.mrb[0].mxu0 %v2735
  %v2870 = vpop.f32.mrb[0].mxu0
  %v2871 = vadd.f32 0.0, %v2870
  %v2872 = vpop.f32.mrb[0].mxu0
  %v2873 = vpop.f32.mrb[0].mxu0
  %v2874 = vadd.f32 0.0, %v2873
  %v2875 = vpop.f32.mrb[0].mxu0
  %2876 = vmatprep.mubr.bf16.mxu0 0
  %2877 = vmatmul.mubr.bf16.gmra.mrb[0].mxu0 %v2736
  %v2878 = vpop.f32.mrb[0].mxu0
  %v2879 = vadd.f32 0.0, %v2878
  %v2880 = vpop.f32.mrb[0].mxu0
  %v2881 = vpop.f32.mrb[0].mxu0
  %v2882 = vadd.f32 0.0, %v2881
  %v2883 = vpop.f32.mrb[0].mxu0
  %2884 = vmatprep.mubr.bf16.mxu0 0
  %2885 = vmatmul.mubr.bf16.gmra.mrb[0].mxu0 %v2737
  %v2886 = vpop.f32.mrb[0].mxu0
  %v2887 = vadd.f32 0.0, %v2886
  %v2888 = vpop.f32.mrb[0].mxu0
  %v2889 = vpop.f32.mrb[0].mxu0
  %v2890 = vadd.f32 0.0, %v2889
  %v2891 = vpop.f32.mrb[0].mxu0
  %2892 = vmatprep.mubr.bf16.mxu0 0
  %2893 = vmatmul.mubr.bf16.gmra.mrb[0].mxu0 %v2738
  %v2894 = vpop.f32.mrb[0].mxu0
  %v2895 = vadd.f32 0.0, %v2894
  %v2896 = vpop.f32.mrb[0].mxu0
  %v2897 = vpop.f32.mrb[0].mxu0
  %v2898 = vadd.f32 0.0, %v2897
  %v2899 = vpop.f32.mrb[0].mxu0
  %2900 = vdwg.mxu0
  %v2901 = vadd.f32 %v2653, %v2839
  %v2902 = vadd.f32 %v2656, %v2842
  %v2903 = vadd.f32 %v2661, %v2847
  %v2904 = vadd.f32 %v2664, %v2850
  %v2905 = vadd.f32 %v2669, %v2855
  %v2906 = vadd.f32 %v2672, %v2858
  %v2907 = vadd.f32 %v2677, %v2863
  %v2908 = vadd.f32 %v2680, %v2866
  %v2909 = vadd.f32 %v2685, %v2871
  %v2910 = vadd.f32 %v2688, %v2874
  %v2911 = vadd.f32 %v2693, %v2879
  %v2912 = vadd.f32 %v2696, %v2882
  %v2913 = vadd.f32 %v2701, %v2887
  %v2914 = vadd.f32 %v2704, %v2890
  %v2915 = vadd.f32 %v2709, %v2895
  %v2916 = vadd.f32 %v2712, %v2898
  %v2917 = vld [vmem:[%s5 + $0x3] sm:$0x1]
  %v2918 = vlaneseq
  %v2919 = vshrl.u32 %v2918, 7
  %v2920 = vsub.s32 0, %v2919
  %v2921 = vrot.slane %v2917, %v2920
  %v2922 = vadd.f32 %v2901, %v2921
  %v2923 = vadd.f32 %v2902, %v2921
  %v2924 = vadd.f32 %v2903, %v2921
  %v2925 = vadd.f32 %v2904, %v2921
  %v2926 = vadd.f32 %v2905, %v2921
  %v2927 = vadd.f32 %v2906, %v2921
  %v2928 = vadd.f32 %v2907, %v2921
  %v2929 = vadd.f32 %v2908, %v2921
  %v2930 = vadd.f32 %v2909, %v2921
  %v2931 = vadd.f32 %v2910, %v2921
  %v2932 = vadd.f32 %v2911, %v2921
  %v2933 = vadd.f32 %v2912, %v2921
  %v2934 = vadd.f32 %v2913, %v2921
  %v2935 = vadd.f32 %v2914, %v2921
  %v2936 = vadd.f32 %v2915, %v2921
  %v2937 = vadd.f32 %v2916, %v2921
  %2938 = vst [vmem:[#allocation4] sm:$0xff] %v2922
  %2939 = vst [vmem:[#allocation4 + $0x8] sm:$0xff] %v2923
  %2940 = vst [vmem:[#allocation4 + $0x10] sm:$0xff] %v2924
  %2941 = vst [vmem:[#allocation4 + $0x18] sm:$0xff] %v2925
  %2942 = vst [vmem:[#allocation4 + $0x20] sm:$0xff] %v2926
  %2943 = vst [vmem:[#allocation4 + $0x28] sm:$0xff] %v2927
  %2944 = vst [vmem:[#allocation4 + $0x30] sm:$0xff] %v2928
  %2945 = vst [vmem:[#allocation4 + $0x38] sm:$0xff] %v2929
  %2946 = vst [vmem:[#allocation4 + $0x40] sm:$0xff] %v2930
  %2947 = vst [vmem:[#allocation4 + $0x48] sm:$0xff] %v2931
  %2948 = vst [vmem:[#allocation4 + $0x50] sm:$0xff] %v2932
  %2949 = vst [vmem:[#allocation4 + $0x58] sm:$0xff] %v2933
  %2950 = vst [vmem:[#allocation4 + $0x60] sm:$0xff] %v2934
  %2951 = vst [vmem:[#allocation4 + $0x68] sm:$0xff] %v2935
  %2952 = vst [vmem:[#allocation4 + $0x70] sm:$0xff] %v2936
  %2953 = vst [vmem:[#allocation4 + $0x78] sm:$0xff] %v2937
  %v2954 = vld [vmem:[#allocation4] sm:$0x1]
  %v2955 = vld [vmem:[#allocation4 + $0x10] sm:$0x1]
  %v2956 = vld [vmem:[#allocation4 + $0x20] sm:$0x1]
  %v2957 = vld [vmem:[#allocation4 + $0x30] sm:$0x1]
  %v2958 = vld [vmem:[#allocation4 + $0x40] sm:$0x1]
  %v2959 = vld [vmem:[#allocation4 + $0x50] sm:$0x1]
  %v2960 = vld [vmem:[#allocation4 + $0x60] sm:$0x1]
  %v2961 = vld [vmem:[#allocation4 + $0x70] sm:$0x1]
  %v2962 = vpack.c.bf16 %v2954, %v2954
  %v2963 = vpack.c.bf16 %v2955, %v2955
  %v2964 = vpack.c.bf16 %v2956, %v2956
  %v2965 = vpack.c.bf16 %v2957, %v2957
  %v2966 = vpack.c.bf16 %v2958, %v2958
  %v2967 = vpack.c.bf16 %v2959, %v2959
  %v2968 = vpack.c.bf16 %v2960, %v2960
  %v2969 = vpack.c.bf16 %v2961, %v2961
  %v2970 = vld [vmem:[#allocation3] sm:$0x1]
  %v2971 = vld [vmem:[#allocation3 + $0x10] sm:$0x1]
  %v2972 = vld [vmem:[#allocation3 + $0x20] sm:$0x1]
  %v2973 = vld [vmem:[#allocation3 + $0x30] sm:$0x1]
  %v2974 = vld [vmem:[#allocation3 + $0x40] sm:$0x1]
  %v2975 = vld [vmem:[#allocation3 + $0x50] sm:$0x1]
  %v2976 = vld [vmem:[#allocation3 + $0x60] sm:$0x1]
  %v2977 = vld [vmem:[#allocation3 + $0x70] sm:$0x1]
  %v2978 = vpack.c.bf16 %v2970, %v2970
  %v2979 = vpack.c.bf16 %v2971, %v2971
  %v2980 = vpack.c.bf16 %v2972, %v2972
  %v2981 = vpack.c.bf16 %v2973, %v2973
  %v2982 = vpack.c.bf16 %v2974, %v2974
  %v2983 = vpack.c.bf16 %v2975, %v2975
  %v2984 = vpack.c.bf16 %v2976, %v2976
  %v2985 = vpack.c.bf16 %v2977, %v2977
  %v2986 = vld [vmem:[%s9] sm:$0xf]
  %v2987 = vld [vmem:[%s9 + $0x4] sm:$0xf]
  %v2988 = vld [vmem:[%s9 + $0x8] sm:$0xf]
  %v2989 = vld [vmem:[%s9 + $0xc] sm:$0xf]
  %v2990 = vld [vmem:[%s9 + $0x10] sm:$0xf]
  %v2991 = vld [vmem:[%s9 + $0x14] sm:$0xf]
  %v2992 = vld [vmem:[%s9 + $0x18] sm:$0xf]
  %v2993 = vld [vmem:[%s9 + $0x1c] sm:$0xf]
  %v2994 = vld [vmem:[%s9 + $0x20] sm:$0xf]
  %v2995 = vld [vmem:[%s9 + $0x24] sm:$0xf]
  %v2996 = vld [vmem:[%s9 + $0x28] sm:$0xf]
  %v2997 = vld [vmem:[%s9 + $0x2c] sm:$0xf]
  %v2998 = vld [vmem:[%s9 + $0x30] sm:$0xf]
  %v2999 = vld [vmem:[%s9 + $0x34] sm:$0xf]
  %v3000 = vld [vmem:[%s9 + $0x38] sm:$0xf]
  %v3001 = vld [vmem:[%s9 + $0x3c] sm:$0xf]
  %v3002 = vld [vmem:[%s10] sm:$0xf]
  %v3003 = vld [vmem:[%s10 + $0x4] sm:$0xf]
  %v3004 = vld [vmem:[%s10 + $0x8] sm:$0xf]
  %v3005 = vld [vmem:[%s10 + $0xc] sm:$0xf]
  %v3006 = vld [vmem:[%s10 + $0x10] sm:$0xf]
  %v3007 = vld [vmem:[%s10 + $0x14] sm:$0xf]
  %v3008 = vld [vmem:[%s10 + $0x18] sm:$0xf]
  %v3009 = vld [vmem:[%s10 + $0x1c] sm:$0xf]
  %v3010 = vld [vmem:[%s10 + $0x20] sm:$0xf]
  %v3011 = vld [vmem:[%s10 + $0x24] sm:$0xf]
  %v3012 = vld [vmem:[%s10 + $0x28] sm:$0xf]
  %v3013 = vld [vmem:[%s10 + $0x2c] sm:$0xf]
  %v3014 = vld [vmem:[%s10 + $0x30] sm:$0xf]
  %v3015 = vld [vmem:[%s10 + $0x34] sm:$0xf]
  %v3016 = vld [vmem:[%s10 + $0x38] sm:$0xf]
  %v3017 = vld [vmem:[%s10 + $0x3c] sm:$0xf]
  %v3018 = vld [vmem:[#allocation4 + $0x1] sm:$0x1]
  %v3019 = vld [vmem:[#allocation4 + $0x11] sm:$0x1]
  %v3020 = vld [vmem:[#allocation4 + $0x21] sm:$0x1]
  %v3021 = vld [vmem:[#allocation4 + $0x31] sm:$0x1]
  %v3022 = vld [vmem:[#allocation4 + $0x41] sm:$0x1]
  %v3023 = vld [vmem:[#allocation4 + $0x51] sm:$0x1]
  %v3024 = vld [vmem:[#allocation4 + $0x61] sm:$0x1]
  %v3025 = vld [vmem:[#allocation4 + $0x71] sm:$0x1]
  %v3026 = vpack.c.bf16 %v3018, %v3018
  %v3027 = vpack.c.bf16 %v3019, %v3019
  %v3028 = vpack.c.bf16 %v3020, %v3020
  %v3029 = vpack.c.bf16 %v3021, %v3021
  %v3030 = vpack.c.bf16 %v3022, %v3022
  %v3031 = vpack.c.bf16 %v3023, %v3023
  %v3032 = vpack.c.bf16 %v3024, %v3024
  %v3033 = vpack.c.bf16 %v3025, %v3025
  %v3034 = vld [vmem:[#allocation3 + $0x1] sm:$0x1]
  %v3035 = vld [vmem:[#allocation3 + $0x11] sm:$0x1]
  %v3036 = vld [vmem:[#allocation3 + $0x21] sm:$0x1]
  %v3037 = vld [vmem:[#allocation3 + $0x31] sm:$0x1]
  %v3038 = vld [vmem:[#allocation3 + $0x41] sm:$0x1]
  %v3039 = vld [vmem:[#allocation3 + $0x51] sm:$0x1]
  %v3040 = vld [vmem:[#allocation3 + $0x61] sm:$0x1]
  %v3041 = vld [vmem:[#allocation3 + $0x71] sm:$0x1]
  %v3042 = vpack.c.bf16 %v3034, %v3034
  %v3043 = vpack.c.bf16 %v3035, %v3035
  %v3044 = vpack.c.bf16 %v3036, %v3036
  %v3045 = vpack.c.bf16 %v3037, %v3037
  %v3046 = vpack.c.bf16 %v3038, %v3038
  %v3047 = vpack.c.bf16 %v3039, %v3039
  %v3048 = vpack.c.bf16 %v3040, %v3040
  %v3049 = vpack.c.bf16 %v3041, %v3041
  %s3050 = scalar_lea.vmem %s9, 64
  %v3051 = vld [vmem:[%s3050] sm:$0xf]
  %v3052 = vld [vmem:[%s3050 + $0x4] sm:$0xf]
  %v3053 = vld [vmem:[%s3050 + $0x8] sm:$0xf]
  %v3054 = vld [vmem:[%s3050 + $0xc] sm:$0xf]
  %v3055 = vld [vmem:[%s3050 + $0x10] sm:$0xf]
  %v3056 = vld [vmem:[%s3050 + $0x14] sm:$0xf]
  %v3057 = vld [vmem:[%s3050 + $0x18] sm:$0xf]
  %v3058 = vld [vmem:[%s3050 + $0x1c] sm:$0xf]
  %v3059 = vld [vmem:[%s3050 + $0x20] sm:$0xf]
  %v3060 = vld [vmem:[%s3050 + $0x24] sm:$0xf]
  %v3061 = vld [vmem:[%s3050 + $0x28] sm:$0xf]
  %v3062 = vld [vmem:[%s3050 + $0x2c] sm:$0xf]
  %v3063 = vld [vmem:[%s3050 + $0x30] sm:$0xf]
  %v3064 = vld [vmem:[%s3050 + $0x34] sm:$0xf]
  %v3065 = vld [vmem:[%s3050 + $0x38] sm:$0xf]
  %v3066 = vld [vmem:[%s3050 + $0x3c] sm:$0xf]
  %v3075 = vunpack.c.l.b16 %v3026
  %v3076 = vunpack.c.l.b16 %v3027
  %v3077 = vunpack.c.l.b16 %v3028
  %v3078 = vunpack.c.l.b16 %v3029
  %v3079 = vunpack.c.l.b16 %v3030
  %v3080 = vunpack.c.l.b16 %v3031
  %v3081 = vunpack.c.l.b16 %v3032
  %v3082 = vunpack.c.l.b16 %v3033
  %v3083 = vrot.slane %v3076, 7
  %vm3084 = vcmask 1041409
  %v3085 = vsel %vm3084, %v3083, %v3075
  %v3086 = vrot.slane %v3077, 6
  %vm3087 = vcmask 1042434
  %v3088 = vsel %vm3087, %v3086, %v3085
  %v3089 = vrot.slane %v3078, 5
  %vm3090 = vcmask 1043459
  %v3091 = vsel %vm3090, %v3089, %v3088
  %v3092 = vrot.slane %v3079, 4
  %vm3093 = vcmask 1044484
  %v3094 = vsel %vm3093, %v3092, %v3091
  %v3095 = vrot.slane %v3080, 3
  %vm3096 = vcmask 1045509
  %v3097 = vsel %vm3096, %v3095, %v3094
  %v3098 = vrot.slane %v3081, 2
  %vm3099 = vcmask 1046534
  %v3100 = vsel %vm3099, %v3098, %v3097
  %v3101 = vrot.slane %v3082, 1
  %vm3102 = vcmask 1047559
  %v3103 = vsel %vm3102, %v3101, %v3100
  %v3104 = vpack.c.b16 %v3103, %v3103
  %v3122 = vunpack.c.l.b16 %v3051
  %v3123 = vunpack.c.l.b16 %v3052
  %v3124 = vunpack.c.l.b16 %v3053
  %v3125 = vunpack.c.l.b16 %v3054
  %v3126 = vunpack.c.l.b16 %v3055
  %v3127 = vunpack.c.l.b16 %v3056
  %v3128 = vunpack.c.l.b16 %v3057
  %v3129 = vunpack.c.l.b16 %v3058
  %v3130 = vunpack.c.l.b16 %v3059
  %v3131 = vunpack.c.l.b16 %v3060
  %v3132 = vunpack.c.l.b16 %v3061
  %v3133 = vunpack.c.l.b16 %v3062
  %v3134 = vunpack.c.l.b16 %v3063
  %v3135 = vunpack.c.l.b16 %v3064
  %v3136 = vunpack.c.l.b16 %v3065
  %v3137 = vunpack.c.l.b16 %v3066
  %v3138 = vpack.c.b16 %v3123, %v3122
  %v3139 = vpack.c.b16 %v3125, %v3124
  %v3140 = vpack.c.b16 %v3127, %v3126
  %v3141 = vpack.c.b16 %v3129, %v3128
  %v3142 = vpack.c.b16 %v3131, %v3130
  %v3143 = vpack.c.b16 %v3133, %v3132
  %v3144 = vpack.c.b16 %v3135, %v3134
  %v3145 = vpack.c.b16 %v3137, %v3136
  %3154 = vmatprep.subr.bf16.mxu0 0
  %3155 = vmatpush1.bf16.msra.mxu0 %v3138
  %3156 = vmatprep.subr.bf16.mxu0 0
  %3157 = vmatpush1.bf16.msra.mxu0 %v3139
  %3158 = vmatprep.subr.bf16.mxu0 0
  %3159 = vmatpush1.bf16.msra.mxu0 %v3140
  %3160 = vmatprep.subr.bf16.mxu0 0
  %3161 = vmatpush1.bf16.msra.mxu0 %v3141
  %3162 = vmatprep.subr.bf16.mxu0 0
  %3163 = vmatpush1.bf16.msra.mxu0 %v3142
  %3164 = vmatprep.subr.bf16.mxu0 0
  %3165 = vmatpush1.bf16.msra.mxu0 %v3143
  %3166 = vmatprep.subr.bf16.mxu0 0
  %3167 = vmatpush1.bf16.msra.mxu0 %v3144
  %3168 = vmatprep.subr.bf16.mxu0 0
  %3169 = vmatpush1.bf16.msra.mxu0 %v3145
  %3170 = vmatprep.subr.bf16.mxu0 0
  %3171 = vmatpush1.bf16.msra.mxu0 0
  %3172 = vmatprep.subr.bf16.mxu0 0
  %3173 = vmatpush1.bf16.msra.mxu0 0
  %3174 = vmatprep.subr.bf16.mxu0 0
  %3175 = vmatpush1.bf16.msra.mxu0 0
  %3176 = vmatprep.subr.bf16.mxu0 0
  %3177 = vmatpush1.bf16.msra.mxu0 0
  %3178 = vmatprep.subr.bf16.mxu0 0
  %3179 = vmatpush1.bf16.msra.mxu0 0
  %3180 = vmatprep.subr.bf16.mxu0 0
  %3181 = vmatpush1.bf16.msra.mxu0 0
  %3182 = vmatprep.subr.bf16.mxu0 0
  %3183 = vmatpush1.bf16.msra.mxu0 0
  %3184 = vmatprep.subr.bf16.mxu0 0
  %3185 = vmatpush1.bf16.msra.mxu0 0
  %3186 = vmatprep.mubr.bf16.mxu0 0
  %3187 = vmatmul.mubr.bf16.gmra.mrb[0].mxu0 %v3104
  %v3188 = vpop.f32.mrb[0].mxu0
  %v3189 = vadd.f32 0.0, %v3188
  %v3190 = vpop.f32.mrb[0].mxu0
  %v3191 = vpop.f32.mrb[0].mxu0
  %v3192 = vpop.f32.mrb[0].mxu0
  %3193 = vdwg.mxu0
  %v3202 = vunpack.c.l.b16 %v2962
  %v3203 = vunpack.c.l.b16 %v2963
  %v3204 = vunpack.c.l.b16 %v2964
  %v3205 = vunpack.c.l.b16 %v2965
  %v3206 = vunpack.c.l.b16 %v2966
  %v3207 = vunpack.c.l.b16 %v2967
  %v3208 = vunpack.c.l.b16 %v2968
  %v3209 = vunpack.c.l.b16 %v2969
  %v3210 = vrot.slane %v3203, 7
  %v3211 = vsel %vm3084, %v3210, %v3202
  %v3212 = vrot.slane %v3204, 6
  %v3213 = vsel %vm3087, %v3212, %v3211
  %v3214 = vrot.slane %v3205, 5
  %v3215 = vsel %vm3090, %v3214, %v3213
  %v3216 = vrot.slane %v3206, 4
  %v3217 = vsel %vm3093, %v3216, %v3215
  %v3218 = vrot.slane %v3207, 3
  %v3219 = vsel %vm3096, %v3218, %v3217
  %v3220 = vrot.slane %v3208, 2
  %v3221 = vsel %vm3099, %v3220, %v3219
  %v3222 = vrot.slane %v3209, 1
  %v3223 = vsel %vm3102, %v3222, %v3221
  %v3224 = vpack.c.b16 %v3223, %v3223
  %v3242 = vunpack.c.l.b16 %v2986
  %v3243 = vunpack.c.l.b16 %v2987
  %v3244 = vunpack.c.l.b16 %v2988
  %v3245 = vunpack.c.l.b16 %v2989
  %v3246 = vunpack.c.l.b16 %v2990
  %v3247 = vunpack.c.l.b16 %v2991
  %v3248 = vunpack.c.l.b16 %v2992
  %v3249 = vunpack.c.l.b16 %v2993
  %v3250 = vunpack.c.l.b16 %v2994
  %v3251 = vunpack.c.l.b16 %v2995
  %v3252 = vunpack.c.l.b16 %v2996
  %v3253 = vunpack.c.l.b16 %v2997
  %v3254 = vunpack.c.l.b16 %v2998
  %v3255 = vunpack.c.l.b16 %v2999
  %v3256 = vunpack.c.l.b16 %v3000
  %v3257 = vunpack.c.l.b16 %v3001
  %v3258 = vpack.c.b16 %v3243, %v3242
  %v3259 = vpack.c.b16 %v3245, %v3244
  %v3260 = vpack.c.b16 %v3247, %v3246
  %v3261 = vpack.c.b16 %v3249, %v3248
  %v3262 = vpack.c.b16 %v3251, %v3250
  %v3263 = vpack.c.b16 %v3253, %v3252
  %v3264 = vpack.c.b16 %v3255, %v3254
  %v3265 = vpack.c.b16 %v3257, %v3256
  %3274 = vmatprep.subr.bf16.mxu0 0
  %3275 = vmatpush1.bf16.msra.mxu0 %v3258
  %3276 = vmatprep.subr.bf16.mxu0 0
  %3277 = vmatpush1.bf16.msra.mxu0 %v3259
  %3278 = vmatprep.subr.bf16.mxu0 0
  %3279 = vmatpush1.bf16.msra.mxu0 %v3260
  %3280 = vmatprep.subr.bf16.mxu0 0
  %3281 = vmatpush1.bf16.msra.mxu0 %v3261
  %3282 = vmatprep.subr.bf16.mxu0 0
  %3283 = vmatpush1.bf16.msra.mxu0 %v3262
  %3284 = vmatprep.subr.bf16.mxu0 0
  %3285 = vmatpush1.bf16.msra.mxu0 %v3263
  %3286 = vmatprep.subr.bf16.mxu0 0
  %3287 = vmatpush1.bf16.msra.mxu0 %v3264
  %3288 = vmatprep.subr.bf16.mxu0 0
  %3289 = vmatpush1.bf16.msra.mxu0 %v3265
  %3290 = vmatprep.subr.bf16.mxu0 0
  %3291 = vmatpush1.bf16.msra.mxu0 0
  %3292 = vmatprep.subr.bf16.mxu0 0
  %3293 = vmatpush1.bf16.msra.mxu0 0
  %3294 = vmatprep.subr.bf16.mxu0 0
  %3295 = vmatpush1.bf16.msra.mxu0 0
  %3296 = vmatprep.subr.bf16.mxu0 0
  %3297 = vmatpush1.bf16.msra.mxu0 0
  %3298 = vmatprep.subr.bf16.mxu0 0
  %3299 = vmatpush1.bf16.msra.mxu0 0
  %3300 = vmatprep.subr.bf16.mxu0 0
  %3301 = vmatpush1.bf16.msra.mxu0 0
  %3302 = vmatprep.subr.bf16.mxu0 0
  %3303 = vmatpush1.bf16.msra.mxu0 0
  %3304 = vmatprep.subr.bf16.mxu0 0
  %3305 = vmatpush1.bf16.msra.mxu0 0
  %3306 = vmatprep.mubr.bf16.mxu0 0
  %3307 = vmatmul.mubr.bf16.gmra.mrb[0].mxu0 %v3224
  %v3308 = vpop.f32.mrb[0].mxu0
  %v3309 = vadd.f32 %v3189, %v3308
  %v3310 = vpop.f32.mrb[0].mxu0
  %v3311 = vpop.f32.mrb[0].mxu0
  %v3312 = vpop.f32.mrb[0].mxu0
  %3313 = vdwg.mxu0
  %s3314 = scalar_lea.vmem %s10, 64
  %v3315 = vld [vmem:[%s3314] sm:$0xf]
  %v3316 = vld [vmem:[%s3314 + $0x4] sm:$0xf]
  %v3317 = vld [vmem:[%s3314 + $0x8] sm:$0xf]
  %v3318 = vld [vmem:[%s3314 + $0xc] sm:$0xf]
  %v3319 = vld [vmem:[%s3314 + $0x10] sm:$0xf]
  %v3320 = vld [vmem:[%s3314 + $0x14] sm:$0xf]
  %v3321 = vld [vmem:[%s3314 + $0x18] sm:$0xf]
  %v3322 = vld [vmem:[%s3314 + $0x1c] sm:$0xf]
  %v3323 = vld [vmem:[%s3314 + $0x20] sm:$0xf]
  %v3324 = vld [vmem:[%s3314 + $0x24] sm:$0xf]
  %v3325 = vld [vmem:[%s3314 + $0x28] sm:$0xf]
  %v3326 = vld [vmem:[%s3314 + $0x2c] sm:$0xf]
  %v3327 = vld [vmem:[%s3314 + $0x30] sm:$0xf]
  %v3328 = vld [vmem:[%s3314 + $0x34] sm:$0xf]
  %v3329 = vld [vmem:[%s3314 + $0x38] sm:$0xf]
  %v3330 = vld [vmem:[%s3314 + $0x3c] sm:$0xf]
  %v3339 = vunpack.c.l.b16 %v3042
  %v3340 = vunpack.c.l.b16 %v3043
  %v3341 = vunpack.c.l.b16 %v3044
  %v3342 = vunpack.c.l.b16 %v3045
  %v3343 = vunpack.c.l.b16 %v3046
  %v3344 = vunpack.c.l.b16 %v3047
  %v3345 = vunpack.c.l.b16 %v3048
  %v3346 = vunpack.c.l.b16 %v3049
  %v3347 = vrot.slane %v3340, 7
  %v3348 = vsel %vm3084, %v3347, %v3339
  %v3349 = vrot.slane %v3341, 6
  %v3350 = vsel %vm3087, %v3349, %v3348
  %v3351 = vrot.slane %v3342, 5
  %v3352 = vsel %vm3090, %v3351, %v3350
  %v3353 = vrot.slane %v3343, 4
  %v3354 = vsel %vm3093, %v3353, %v3352
  %v3355 = vrot.slane %v3344, 3
  %v3356 = vsel %vm3096, %v3355, %v3354
  %v3357 = vrot.slane %v3345, 2
  %v3358 = vsel %vm3099, %v3357, %v3356
  %v3359 = vrot.slane %v3346, 1
  %v3360 = vsel %vm3102, %v3359, %v3358
  %v3361 = vpack.c.b16 %v3360, %v3360
  %v3379 = vunpack.c.l.b16 %v3315
  %v3380 = vunpack.c.l.b16 %v3316
  %v3381 = vunpack.c.l.b16 %v3317
  %v3382 = vunpack.c.l.b16 %v3318
  %v3383 = vunpack.c.l.b16 %v3319
  %v3384 = vunpack.c.l.b16 %v3320
  %v3385 = vunpack.c.l.b16 %v3321
  %v3386 = vunpack.c.l.b16 %v3322
  %v3387 = vunpack.c.l.b16 %v3323
  %v3388 = vunpack.c.l.b16 %v3324
  %v3389 = vunpack.c.l.b16 %v3325
  %v3390 = vunpack.c.l.b16 %v3326
  %v3391 = vunpack.c.l.b16 %v3327
  %v3392 = vunpack.c.l.b16 %v3328
  %v3393 = vunpack.c.l.b16 %v3329
  %v3394 = vunpack.c.l.b16 %v3330
  %v3395 = vpack.c.b16 %v3380, %v3379
  %v3396 = vpack.c.b16 %v3382, %v3381
  %v3397 = vpack.c.b16 %v3384, %v3383
  %v3398 = vpack.c.b16 %v3386, %v3385
  %v3399 = vpack.c.b16 %v3388, %v3387
  %v3400 = vpack.c.b16 %v3390, %v3389
  %v3401 = vpack.c.b16 %v3392, %v3391
  %v3402 = vpack.c.b16 %v3394, %v3393
  %3411 = vmatprep.subr.bf16.mxu0 0
  %3412 = vmatpush1.bf16.msra.mxu0 %v3395
  %3413 = vmatprep.subr.bf16.mxu0 0
  %3414 = vmatpush1.bf16.msra.mxu0 %v3396
  %3415 = vmatprep.subr.bf16.mxu0 0
  %3416 = vmatpush1.bf16.msra.mxu0 %v3397
  %3417 = vmatprep.subr.bf16.mxu0 0
  %3418 = vmatpush1.bf16.msra.mxu0 %v3398
  %3419 = vmatprep.subr.bf16.mxu0 0
  %3420 = vmatpush1.bf16.msra.mxu0 %v3399
  %3421 = vmatprep.subr.bf16.mxu0 0
  %3422 = vmatpush1.bf16.msra.mxu0 %v3400
  %3423 = vmatprep.subr.bf16.mxu0 0
  %3424 = vmatpush1.bf16.msra.mxu0 %v3401
  %3425 = vmatprep.subr.bf16.mxu0 0
  %3426 = vmatpush1.bf16.msra.mxu0 %v3402
  %3427 = vmatprep.subr.bf16.mxu0 0
  %3428 = vmatpush1.bf16.msra.mxu0 0
  %3429 = vmatprep.subr.bf16.mxu0 0
  %3430 = vmatpush1.bf16.msra.mxu0 0
  %3431 = vmatprep.subr.bf16.mxu0 0
  %3432 = vmatpush1.bf16.msra.mxu0 0
  %3433 = vmatprep.subr.bf16.mxu0 0
  %3434 = vmatpush1.bf16.msra.mxu0 0
  %3435 = vmatprep.subr.bf16.mxu0 0
  %3436 = vmatpush1.bf16.msra.mxu0 0
  %3437 = vmatprep.subr.bf16.mxu0 0
  %3438 = vmatpush1.bf16.msra.mxu0 0
  %3439 = vmatprep.subr.bf16.mxu0 0
  %3440 = vmatpush1.bf16.msra.mxu0 0
  %3441 = vmatprep.subr.bf16.mxu0 0
  %3442 = vmatpush1.bf16.msra.mxu0 0
  %3443 = vmatprep.mubr.bf16.mxu0 0
  %3444 = vmatmul.mubr.bf16.gmra.mrb[0].mxu0 %v3361
  %v3445 = vpop.f32.mrb[0].mxu0
  %v3446 = vadd.f32 0.0, %v3445
  %v3447 = vpop.f32.mrb[0].mxu0
  %v3448 = vpop.f32.mrb[0].mxu0
  %v3449 = vpop.f32.mrb[0].mxu0
  %3450 = vdwg.mxu0
  %v3459 = vunpack.c.l.b16 %v2978
  %v3460 = vunpack.c.l.b16 %v2979
  %v3461 = vunpack.c.l.b16 %v2980
  %v3462 = vunpack.c.l.b16 %v2981
  %v3463 = vunpack.c.l.b16 %v2982
  %v3464 = vunpack.c.l.b16 %v2983
  %v3465 = vunpack.c.l.b16 %v2984
  %v3466 = vunpack.c.l.b16 %v2985
  %v3467 = vrot.slane %v3460, 7
  %v3468 = vsel %vm3084, %v3467, %v3459
  %v3469 = vrot.slane %v3461, 6
  %v3470 = vsel %vm3087, %v3469, %v3468
  %v3471 = vrot.slane %v3462, 5
  %v3472 = vsel %vm3090, %v3471, %v3470
  %v3473 = vrot.slane %v3463, 4
  %v3474 = vsel %vm3093, %v3473, %v3472
  %v3475 = vrot.slane %v3464, 3
  %v3476 = vsel %vm3096, %v3475, %v3474
  %v3477 = vrot.slane %v3465, 2
  %v3478 = vsel %vm3099, %v3477, %v3476
  %v3479 = vrot.slane %v3466, 1
  %v3480 = vsel %vm3102, %v3479, %v3478
  %v3481 = vpack.c.b16 %v3480, %v3480
  %v3499 = vunpack.c.l.b16 %v3002
  %v3500 = vunpack.c.l.b16 %v3003
  %v3501 = vunpack.c.l.b16 %v3004
  %v3502 = vunpack.c.l.b16 %v3005
  %v3503 = vunpack.c.l.b16 %v3006
  %v3504 = vunpack.c.l.b16 %v3007
  %v3505 = vunpack.c.l.b16 %v3008
  %v3506 = vunpack.c.l.b16 %v3009
  %v3507 = vunpack.c.l.b16 %v3010
  %v3508 = vunpack.c.l.b16 %v3011
  %v3509 = vunpack.c.l.b16 %v3012
  %v3510 = vunpack.c.l.b16 %v3013
  %v3511 = vunpack.c.l.b16 %v3014
  %v3512 = vunpack.c.l.b16 %v3015
  %v3513 = vunpack.c.l.b16 %v3016
  %v3514 = vunpack.c.l.b16 %v3017
  %v3515 = vpack.c.b16 %v3500, %v3499
  %v3516 = vpack.c.b16 %v3502, %v3501
  %v3517 = vpack.c.b16 %v3504, %v3503
  %v3518 = vpack.c.b16 %v3506, %v3505
  %v3519 = vpack.c.b16 %v3508, %v3507
  %v3520 = vpack.c.b16 %v3510, %v3509
  %v3521 = vpack.c.b16 %v3512, %v3511
  %v3522 = vpack.c.b16 %v3514, %v3513
  %3531 = vmatprep.subr.bf16.mxu0 0
  %3532 = vmatpush1.bf16.msra.mxu0 %v3515
  %3533 = vmatprep.subr.bf16.mxu0 0
  %3534 = vmatpush1.bf16.msra.mxu0 %v3516
  %3535 = vmatprep.subr.bf16.mxu0 0
  %3536 = vmatpush1.bf16.msra.mxu0 %v3517
  %3537 = vmatprep.subr.bf16.mxu0 0
  %3538 = vmatpush1.bf16.msra.mxu0 %v3518
  %3539 = vmatprep.subr.bf16.mxu0 0
  %3540 = vmatpush1.bf16.msra.mxu0 %v3519
  %3541 = vmatprep.subr.bf16.mxu0 0
  %3542 = vmatpush1.bf16.msra.mxu0 %v3520
  %3543 = vmatprep.subr.bf16.mxu0 0
  %3544 = vmatpush1.bf16.msra.mxu0 %v3521
  %3545 = vmatprep.subr.bf16.mxu0 0
  %3546 = vmatpush1.bf16.msra.mxu0 %v3522
  %3547 = vmatprep.subr.bf16.mxu0 0
  %3548 = vmatpush1.bf16.msra.mxu0 0
  %3549 = vmatprep.subr.bf16.mxu0 0
  %3550 = vmatpush1.bf16.msra.mxu0 0
  %3551 = vmatprep.subr.bf16.mxu0 0
  %3552 = vmatpush1.bf16.msra.mxu0 0
  %3553 = vmatprep.subr.bf16.mxu0 0
  %3554 = vmatpush1.bf16.msra.mxu0 0
  %3555 = vmatprep.subr.bf16.mxu0 0
  %3556 = vmatpush1.bf16.msra.mxu0 0
  %3557 = vmatprep.subr.bf16.mxu0 0
  %3558 = vmatpush1.bf16.msra.mxu0 0
  %3559 = vmatprep.subr.bf16.mxu0 0
  %3560 = vmatpush1.bf16.msra.mxu0 0
  %3561 = vmatprep.subr.bf16.mxu0 0
  %3562 = vmatpush1.bf16.msra.mxu0 0
  %3563 = vmatprep.mubr.bf16.mxu0 0
  %3564 = vmatmul.mubr.bf16.gmra.mrb[0].mxu0 %v3481
  %v3565 = vpop.f32.mrb[0].mxu0
  %v3566 = vadd.f32 %v3446, %v3565
  %v3567 = vpop.f32.mrb[0].mxu0
  %v3568 = vpop.f32.mrb[0].mxu0
  %v3569 = vpop.f32.mrb[0].mxu0
  %3570 = vdwg.mxu0
  %v3571 = vld [vmem:[#allocation4 + $0x2] sm:$0x1]
  %v3572 = vld [vmem:[#allocation4 + $0x12] sm:$0x1]
  %v3573 = vld [vmem:[#allocation4 + $0x22] sm:$0x1]
  %v3574 = vld [vmem:[#allocation4 + $0x32] sm:$0x1]
  %v3575 = vld [vmem:[#allocation4 + $0x42] sm:$0x1]
  %v3576 = vld [vmem:[#allocation4 + $0x52] sm:$0x1]
  %v3577 = vld [vmem:[#allocation4 + $0x62] sm:$0x1]
  %v3578 = vld [vmem:[#allocation4 + $0x72] sm:$0x1]
  %v3579 = vpack.c.bf16 %v3571, %v3571
  %v3580 = vpack.c.bf16 %v3572, %v3572
  %v3581 = vpack.c.bf16 %v3573, %v3573
  %v3582 = vpack.c.bf16 %v3574, %v3574
  %v3583 = vpack.c.bf16 %v3575, %v3575
  %v3584 = vpack.c.bf16 %v3576, %v3576
  %v3585 = vpack.c.bf16 %v3577, %v3577
  %v3586 = vpack.c.bf16 %v3578, %v3578
  %v3587 = vld [vmem:[#allocation3 + $0x2] sm:$0x1]
  %v3588 = vld [vmem:[#allocation3 + $0x12] sm:$0x1]
  %v3589 = vld [vmem:[#allocation3 + $0x22] sm:$0x1]
  %v3590 = vld [vmem:[#allocation3 + $0x32] sm:$0x1]
  %v3591 = vld [vmem:[#allocation3 + $0x42] sm:$0x1]
  %v3592 = vld [vmem:[#allocation3 + $0x52] sm:$0x1]
  %v3593 = vld [vmem:[#allocation3 + $0x62] sm:$0x1]
  %v3594 = vld [vmem:[#allocation3 + $0x72] sm:$0x1]
  %v3595 = vpack.c.bf16 %v3587, %v3587
  %v3596 = vpack.c.bf16 %v3588, %v3588
  %v3597 = vpack.c.bf16 %v3589, %v3589
  %v3598 = vpack.c.bf16 %v3590, %v3590
  %v3599 = vpack.c.bf16 %v3591, %v3591
  %v3600 = vpack.c.bf16 %v3592, %v3592
  %v3601 = vpack.c.bf16 %v3593, %v3593
  %v3602 = vpack.c.bf16 %v3594, %v3594
  %s3603 = scalar_lea.vmem %s9, 128
  %v3604 = vld [vmem:[%s3603] sm:$0xf]
  %v3605 = vld [vmem:[%s3603 + $0x4] sm:$0xf]
  %v3606 = vld [vmem:[%s3603 + $0x8] sm:$0xf]
  %v3607 = vld [vmem:[%s3603 + $0xc] sm:$0xf]
  %v3608 = vld [vmem:[%s3603 + $0x10] sm:$0xf]
  %v3609 = vld [vmem:[%s3603 + $0x14] sm:$0xf]
  %v3610 = vld [vmem:[%s3603 + $0x18] sm:$0xf]
  %v3611 = vld [vmem:[%s3603 + $0x1c] sm:$0xf]
  %v3612 = vld [vmem:[%s3603 + $0x20] sm:$0xf]
  %v3613 = vld [vmem:[%s3603 + $0x24] sm:$0xf]
  %v3614 = vld [vmem:[%s3603 + $0x28] sm:$0xf]
  %v3615 = vld [vmem:[%s3603 + $0x2c] sm:$0xf]
  %v3616 = vld [vmem:[%s3603 + $0x30] sm:$0xf]
  %v3617 = vld [vmem:[%s3603 + $0x34] sm:$0xf]
  %v3618 = vld [vmem:[%s3603 + $0x38] sm:$0xf]
  %v3619 = vld [vmem:[%s3603 + $0x3c] sm:$0xf]
  %v3628 = vunpack.c.l.b16 %v3579
  %v3629 = vunpack.c.l.b16 %v3580
  %v3630 = vunpack.c.l.b16 %v3581
  %v3631 = vunpack.c.l.b16 %v3582
  %v3632 = vunpack.c.l.b16 %v3583
  %v3633 = vunpack.c.l.b16 %v3584
  %v3634 = vunpack.c.l.b16 %v3585
  %v3635 = vunpack.c.l.b16 %v3586
  %v3636 = vrot.slane %v3629, 7
  %v3637 = vsel %vm3084, %v3636, %v3628
  %v3638 = vrot.slane %v3630, 6
  %v3639 = vsel %vm3087, %v3638, %v3637
  %v3640 = vrot.slane %v3631, 5
  %v3641 = vsel %vm3090, %v3640, %v3639
  %v3642 = vrot.slane %v3632, 4
  %v3643 = vsel %vm3093, %v3642, %v3641
  %v3644 = vrot.slane %v3633, 3
  %v3645 = vsel %vm3096, %v3644, %v3643
  %v3646 = vrot.slane %v3634, 2
  %v3647 = vsel %vm3099, %v3646, %v3645
  %v3648 = vrot.slane %v3635, 1
  %v3649 = vsel %vm3102, %v3648, %v3647
  %v3650 = vpack.c.b16 %v3649, %v3649
  %v3668 = vunpack.c.l.b16 %v3604
  %v3669 = vunpack.c.l.b16 %v3605
  %v3670 = vunpack.c.l.b16 %v3606
  %v3671 = vunpack.c.l.b16 %v3607
  %v3672 = vunpack.c.l.b16 %v3608
  %v3673 = vunpack.c.l.b16 %v3609
  %v3674 = vunpack.c.l.b16 %v3610
  %v3675 = vunpack.c.l.b16 %v3611
  %v3676 = vunpack.c.l.b16 %v3612
  %v3677 = vunpack.c.l.b16 %v3613
  %v3678 = vunpack.c.l.b16 %v3614
  %v3679 = vunpack.c.l.b16 %v3615
  %v3680 = vunpack.c.l.b16 %v3616
  %v3681 = vunpack.c.l.b16 %v3617
  %v3682 = vunpack.c.l.b16 %v3618
  %v3683 = vunpack.c.l.b16 %v3619
  %v3684 = vpack.c.b16 %v3669, %v3668
  %v3685 = vpack.c.b16 %v3671, %v3670
  %v3686 = vpack.c.b16 %v3673, %v3672
  %v3687 = vpack.c.b16 %v3675, %v3674
  %v3688 = vpack.c.b16 %v3677, %v3676
  %v3689 = vpack.c.b16 %v3679, %v3678
  %v3690 = vpack.c.b16 %v3681, %v3680
  %v3691 = vpack.c.b16 %v3683, %v3682
  %3700 = vmatprep.subr.bf16.mxu0 0
  %3701 = vmatpush1.bf16.msra.mxu0 %v3684
  %3702 = vmatprep.subr.bf16.mxu0 0
  %3703 = vmatpush1.bf16.msra.mxu0 %v3685
  %3704 = vmatprep.subr.bf16.mxu0 0
  %3705 = vmatpush1.bf16.msra.mxu0 %v3686
  %3706 = vmatprep.subr.bf16.mxu0 0
  %3707 = vmatpush1.bf16.msra.mxu0 %v3687
  %3708 = vmatprep.subr.bf16.mxu0 0
  %3709 = vmatpush1.bf16.msra.mxu0 %v3688
  %3710 = vmatprep.subr.bf16.mxu0 0
  %3711 = vmatpush1.bf16.msra.mxu0 %v3689
  %3712 = vmatprep.subr.bf16.mxu0 0
  %3713 = vmatpush1.bf16.msra.mxu0 %v3690
  %3714 = vmatprep.subr.bf16.mxu0 0
  %3715 = vmatpush1.bf16.msra.mxu0 %v3691
  %3716 = vmatprep.subr.bf16.mxu0 0
  %3717 = vmatpush1.bf16.msra.mxu0 0
  %3718 = vmatprep.subr.bf16.mxu0 0
  %3719 = vmatpush1.bf16.msra.mxu0 0
  %3720 = vmatprep.subr.bf16.mxu0 0
  %3721 = vmatpush1.bf16.msra.mxu0 0
  %3722 = vmatprep.subr.bf16.mxu0 0
  %3723 = vmatpush1.bf16.msra.mxu0 0
  %3724 = vmatprep.subr.bf16.mxu0 0
  %3725 = vmatpush1.bf16.msra.mxu0 0
  %3726 = vmatprep.subr.bf16.mxu0 0
  %3727 = vmatpush1.bf16.msra.mxu0 0
  %3728 = vmatprep.subr.bf16.mxu0 0
  %3729 = vmatpush1.bf16.msra.mxu0 0
  %3730 = vmatprep.subr.bf16.mxu0 0
  %3731 = vmatpush1.bf16.msra.mxu0 0
  %3732 = vmatprep.mubr.bf16.mxu0 0
  %3733 = vmatmul.mubr.bf16.gmra.mrb[0].mxu0 %v3650
  %v3734 = vpop.f32.mrb[0].mxu0
  %v3735 = vadd.f32 0.0, %v3734
  %v3736 = vpop.f32.mrb[0].mxu0
  %v3737 = vpop.f32.mrb[0].mxu0
  %v3738 = vpop.f32.mrb[0].mxu0
  %3739 = vdwg.mxu0
  %v3740 = vadd.f32 %v3309, %v3735
  %s3741 = scalar_lea.vmem %s10, 128
  %v3742 = vld [vmem:[%s3741] sm:$0xf]
  %v3743 = vld [vmem:[%s3741 + $0x4] sm:$0xf]
  %v3744 = vld [vmem:[%s3741 + $0x8] sm:$0xf]
  %v3745 = vld [vmem:[%s3741 + $0xc] sm:$0xf]
  %v3746 = vld [vmem:[%s3741 + $0x10] sm:$0xf]
  %v3747 = vld [vmem:[%s3741 + $0x14] sm:$0xf]
  %v3748 = vld [vmem:[%s3741 + $0x18] sm:$0xf]
  %v3749 = vld [vmem:[%s3741 + $0x1c] sm:$0xf]
  %v3750 = vld [vmem:[%s3741 + $0x20] sm:$0xf]
  %v3751 = vld [vmem:[%s3741 + $0x24] sm:$0xf]
  %v3752 = vld [vmem:[%s3741 + $0x28] sm:$0xf]
  %v3753 = vld [vmem:[%s3741 + $0x2c] sm:$0xf]
  %v3754 = vld [vmem:[%s3741 + $0x30] sm:$0xf]
  %v3755 = vld [vmem:[%s3741 + $0x34] sm:$0xf]
  %v3756 = vld [vmem:[%s3741 + $0x38] sm:$0xf]
  %v3757 = vld [vmem:[%s3741 + $0x3c] sm:$0xf]
  %v3766 = vunpack.c.l.b16 %v3595
  %v3767 = vunpack.c.l.b16 %v3596
  %v3768 = vunpack.c.l.b16 %v3597
  %v3769 = vunpack.c.l.b16 %v3598
  %v3770 = vunpack.c.l.b16 %v3599
  %v3771 = vunpack.c.l.b16 %v3600
  %v3772 = vunpack.c.l.b16 %v3601
  %v3773 = vunpack.c.l.b16 %v3602
  %v3774 = vrot.slane %v3767, 7
  %v3775 = vsel %vm3084, %v3774, %v3766
  %v3776 = vrot.slane %v3768, 6
  %v3777 = vsel %vm3087, %v3776, %v3775
  %v3778 = vrot.slane %v3769, 5
  %v3779 = vsel %vm3090, %v3778, %v3777
  %v3780 = vrot.slane %v3770, 4
  %v3781 = vsel %vm3093, %v3780, %v3779
  %v3782 = vrot.slane %v3771, 3
  %v3783 = vsel %vm3096, %v3782, %v3781
  %v3784 = vrot.slane %v3772, 2
  %v3785 = vsel %vm3099, %v3784, %v3783
  %v3786 = vrot.slane %v3773, 1
  %v3787 = vsel %vm3102, %v3786, %v3785
  %v3788 = vpack.c.b16 %v3787, %v3787
  %v3806 = vunpack.c.l.b16 %v3742
  %v3807 = vunpack.c.l.b16 %v3743
  %v3808 = vunpack.c.l.b16 %v3744
  %v3809 = vunpack.c.l.b16 %v3745
  %v3810 = vunpack.c.l.b16 %v3746
  %v3811 = vunpack.c.l.b16 %v3747
  %v3812 = vunpack.c.l.b16 %v3748
  %v3813 = vunpack.c.l.b16 %v3749
  %v3814 = vunpack.c.l.b16 %v3750
  %v3815 = vunpack.c.l.b16 %v3751
  %v3816 = vunpack.c.l.b16 %v3752
  %v3817 = vunpack.c.l.b16 %v3753
  %v3818 = vunpack.c.l.b16 %v3754
  %v3819 = vunpack.c.l.b16 %v3755
  %v3820 = vunpack.c.l.b16 %v3756
  %v3821 = vunpack.c.l.b16 %v3757
  %v3822 = vpack.c.b16 %v3807, %v3806
  %v3823 = vpack.c.b16 %v3809, %v3808
  %v3824 = vpack.c.b16 %v3811, %v3810
  %v3825 = vpack.c.b16 %v3813, %v3812
  %v3826 = vpack.c.b16 %v3815, %v3814
  %v3827 = vpack.c.b16 %v3817, %v3816
  %v3828 = vpack.c.b16 %v3819, %v3818
  %v3829 = vpack.c.b16 %v3821, %v3820
  %3838 = vmatprep.subr.bf16.mxu0 0
  %3839 = vmatpush1.bf16.msra.mxu0 %v3822
  %3840 = vmatprep.subr.bf16.mxu0 0
  %3841 = vmatpush1.bf16.msra.mxu0 %v3823
  %3842 = vmatprep.subr.bf16.mxu0 0
  %3843 = vmatpush1.bf16.msra.mxu0 %v3824
  %3844 = vmatprep.subr.bf16.mxu0 0
  %3845 = vmatpush1.bf16.msra.mxu0 %v3825
  %3846 = vmatprep.subr.bf16.mxu0 0
  %3847 = vmatpush1.bf16.msra.mxu0 %v3826
  %3848 = vmatprep.subr.bf16.mxu0 0
  %3849 = vmatpush1.bf16.msra.mxu0 %v3827
  %3850 = vmatprep.subr.bf16.mxu0 0
  %3851 = vmatpush1.bf16.msra.mxu0 %v3828
  %3852 = vmatprep.subr.bf16.mxu0 0
  %3853 = vmatpush1.bf16.msra.mxu0 %v3829
  %3854 = vmatprep.subr.bf16.mxu0 0
  %3855 = vmatpush1.bf16.msra.mxu0 0
  %3856 = vmatprep.subr.bf16.mxu0 0
  %3857 = vmatpush1.bf16.msra.mxu0 0
  %3858 = vmatprep.subr.bf16.mxu0 0
  %3859 = vmatpush1.bf16.msra.mxu0 0
  %3860 = vmatprep.subr.bf16.mxu0 0
  %3861 = vmatpush1.bf16.msra.mxu0 0
  %3862 = vmatprep.subr.bf16.mxu0 0
  %3863 = vmatpush1.bf16.msra.mxu0 0
  %3864 = vmatprep.subr.bf16.mxu0 0
  %3865 = vmatpush1.bf16.msra.mxu0 0
  %3866 = vmatprep.subr.bf16.mxu0 0
  %3867 = vmatpush1.bf16.msra.mxu0 0
  %3868 = vmatprep.subr.bf16.mxu0 0
  %3869 = vmatpush1.bf16.msra.mxu0 0
  %3870 = vmatprep.mubr.bf16.mxu0 0
  %3871 = vmatmul.mubr.bf16.gmra.mrb[0].mxu0 %v3788
  %v3872 = vpop.f32.mrb[0].mxu0
  %v3873 = vadd.f32 0.0, %v3872
  %v3874 = vpop.f32.mrb[0].mxu0
  %v3875 = vpop.f32.mrb[0].mxu0
  %v3876 = vpop.f32.mrb[0].mxu0
  %3877 = vdwg.mxu0
  %v3878 = vadd.f32 %v3566, %v3873
  %v3879 = vld [vmem:[#allocation4 + $0x3] sm:$0x1]
  %v3880 = vld [vmem:[#allocation4 + $0x13] sm:$0x1]
  %v3881 = vld [vmem:[#allocation4 + $0x23] sm:$0x1]
  %v3882 = vld [vmem:[#allocation4 + $0x33] sm:$0x1]
  %v3883 = vld [vmem:[#allocation4 + $0x43] sm:$0x1]
  %v3884 = vld [vmem:[#allocation4 + $0x53] sm:$0x1]
  %v3885 = vld [vmem:[#allocation4 + $0x63] sm:$0x1]
  %v3886 = vld [vmem:[#allocation4 + $0x73] sm:$0x1]
  %v3887 = vpack.c.bf16 %v3879, %v3879
  %v3888 = vpack.c.bf16 %v3880, %v3880
  %v3889 = vpack.c.bf16 %v3881, %v3881
  %v3890 = vpack.c.bf16 %v3882, %v3882
  %v3891 = vpack.c.bf16 %v3883, %v3883
  %v3892 = vpack.c.bf16 %v3884, %v3884
  %v3893 = vpack.c.bf16 %v3885, %v3885
  %v3894 = vpack.c.bf16 %v3886, %v3886
  %v3895 = vld [vmem:[#allocation3 + $0x3] sm:$0x1]
  %v3896 = vld [vmem:[#allocation3 + $0x13] sm:$0x1]
  %v3897 = vld [vmem:[#allocation3 + $0x23] sm:$0x1]
  %v3898 = vld [vmem:[#allocation3 + $0x33] sm:$0x1]
  %v3899 = vld [vmem:[#allocation3 + $0x43] sm:$0x1]
  %v3900 = vld [vmem:[#allocation3 + $0x53] sm:$0x1]
  %v3901 = vld [vmem:[#allocation3 + $0x63] sm:$0x1]
  %v3902 = vld [vmem:[#allocation3 + $0x73] sm:$0x1]
  %v3903 = vpack.c.bf16 %v3895, %v3895
  %v3904 = vpack.c.bf16 %v3896, %v3896
  %v3905 = vpack.c.bf16 %v3897, %v3897
  %v3906 = vpack.c.bf16 %v3898, %v3898
  %v3907 = vpack.c.bf16 %v3899, %v3899
  %v3908 = vpack.c.bf16 %v3900, %v3900
  %v3909 = vpack.c.bf16 %v3901, %v3901
  %v3910 = vpack.c.bf16 %v3902, %v3902
  %s3911 = scalar_lea.vmem %s9, 192
  %v3912 = vld [vmem:[%s3911] sm:$0xf]
  %v3913 = vld [vmem:[%s3911 + $0x4] sm:$0xf]
  %v3914 = vld [vmem:[%s3911 + $0x8] sm:$0xf]
  %v3915 = vld [vmem:[%s3911 + $0xc] sm:$0xf]
  %v3916 = vld [vmem:[%s3911 + $0x10] sm:$0xf]
  %v3917 = vld [vmem:[%s3911 + $0x14] sm:$0xf]
  %v3918 = vld [vmem:[%s3911 + $0x18] sm:$0xf]
  %v3919 = vld [vmem:[%s3911 + $0x1c] sm:$0xf]
  %v3920 = vld [vmem:[%s3911 + $0x20] sm:$0xf]
  %v3921 = vld [vmem:[%s3911 + $0x24] sm:$0xf]
  %v3922 = vld [vmem:[%s3911 + $0x28] sm:$0xf]
  %v3923 = vld [vmem:[%s3911 + $0x2c] sm:$0xf]
  %v3924 = vld [vmem:[%s3911 + $0x30] sm:$0xf]
  %v3925 = vld [vmem:[%s3911 + $0x34] sm:$0xf]
  %v3926 = vld [vmem:[%s3911 + $0x38] sm:$0xf]
  %v3927 = vld [vmem:[%s3911 + $0x3c] sm:$0xf]
  %v3936 = vunpack.c.l.b16 %v3887
  %v3937 = vunpack.c.l.b16 %v3888
  %v3938 = vunpack.c.l.b16 %v3889
  %v3939 = vunpack.c.l.b16 %v3890
  %v3940 = vunpack.c.l.b16 %v3891
  %v3941 = vunpack.c.l.b16 %v3892
  %v3942 = vunpack.c.l.b16 %v3893
  %v3943 = vunpack.c.l.b16 %v3894
  %v3944 = vrot.slane %v3937, 7
  %v3945 = vsel %vm3084, %v3944, %v3936
  %v3946 = vrot.slane %v3938, 6
  %v3947 = vsel %vm3087, %v3946, %v3945
  %v3948 = vrot.slane %v3939, 5
  %v3949 = vsel %vm3090, %v3948, %v3947
  %v3950 = vrot.slane %v3940, 4
  %v3951 = vsel %vm3093, %v3950, %v3949
  %v3952 = vrot.slane %v3941, 3
  %v3953 = vsel %vm3096, %v3952, %v3951
  %v3954 = vrot.slane %v3942, 2
  %v3955 = vsel %vm3099, %v3954, %v3953
  %v3956 = vrot.slane %v3943, 1
  %v3957 = vsel %vm3102, %v3956, %v3955
  %v3958 = vpack.c.b16 %v3957, %v3957
  %v3976 = vunpack.c.l.b16 %v3912
  %v3977 = vunpack.c.l.b16 %v3913
  %v3978 = vunpack.c.l.b16 %v3914
  %v3979 = vunpack.c.l.b16 %v3915
  %v3980 = vunpack.c.l.b16 %v3916
  %v3981 = vunpack.c.l.b16 %v3917
  %v3982 = vunpack.c.l.b16 %v3918
  %v3983 = vunpack.c.l.b16 %v3919
  %v3984 = vunpack.c.l.b16 %v3920
  %v3985 = vunpack.c.l.b16 %v3921
  %v3986 = vunpack.c.l.b16 %v3922
  %v3987 = vunpack.c.l.b16 %v3923
  %v3988 = vunpack.c.l.b16 %v3924
  %v3989 = vunpack.c.l.b16 %v3925
  %v3990 = vunpack.c.l.b16 %v3926
  %v3991 = vunpack.c.l.b16 %v3927
  %v3992 = vpack.c.b16 %v3977, %v3976
  %v3993 = vpack.c.b16 %v3979, %v3978
  %v3994 = vpack.c.b16 %v3981, %v3980
  %v3995 = vpack.c.b16 %v3983, %v3982
  %v3996 = vpack.c.b16 %v3985, %v3984
  %v3997 = vpack.c.b16 %v3987, %v3986
  %v3998 = vpack.c.b16 %v3989, %v3988
  %v3999 = vpack.c.b16 %v3991, %v3990
  %4008 = vmatprep.subr.bf16.mxu0 0
  %4009 = vmatpush1.bf16.msra.mxu0 %v3992
  %4010 = vmatprep.subr.bf16.mxu0 0
  %4011 = vmatpush1.bf16.msra.mxu0 %v3993
  %4012 = vmatprep.subr.bf16.mxu0 0
  %4013 = vmatpush1.bf16.msra.mxu0 %v3994
  %4014 = vmatprep.subr.bf16.mxu0 0
  %4015 = vmatpush1.bf16.msra.mxu0 %v3995
  %4016 = vmatprep.subr.bf16.mxu0 0
  %4017 = vmatpush1.bf16.msra.mxu0 %v3996
  %4018 = vmatprep.subr.bf16.mxu0 0
  %4019 = vmatpush1.bf16.msra.mxu0 %v3997
  %4020 = vmatprep.subr.bf16.mxu0 0
  %4021 = vmatpush1.bf16.msra.mxu0 %v3998
  %4022 = vmatprep.subr.bf16.mxu0 0
  %4023 = vmatpush1.bf16.msra.mxu0 %v3999
  %4024 = vmatprep.subr.bf16.mxu0 0
  %4025 = vmatpush1.bf16.msra.mxu0 0
  %4026 = vmatprep.subr.bf16.mxu0 0
  %4027 = vmatpush1.bf16.msra.mxu0 0
  %4028 = vmatprep.subr.bf16.mxu0 0
  %4029 = vmatpush1.bf16.msra.mxu0 0
  %4030 = vmatprep.subr.bf16.mxu0 0
  %4031 = vmatpush1.bf16.msra.mxu0 0
  %4032 = vmatprep.subr.bf16.mxu0 0
  %4033 = vmatpush1.bf16.msra.mxu0 0
  %4034 = vmatprep.subr.bf16.mxu0 0
  %4035 = vmatpush1.bf16.msra.mxu0 0
  %4036 = vmatprep.subr.bf16.mxu0 0
  %4037 = vmatpush1.bf16.msra.mxu0 0
  %4038 = vmatprep.subr.bf16.mxu0 0
  %4039 = vmatpush1.bf16.msra.mxu0 0
  %4040 = vmatprep.mubr.bf16.mxu0 0
  %4041 = vmatmul.mubr.bf16.gmra.mrb[0].mxu0 %v3958
  %v4042 = vpop.f32.mrb[0].mxu0
  %v4043 = vadd.f32 0.0, %v4042
  %v4044 = vpop.f32.mrb[0].mxu0
  %v4045 = vpop.f32.mrb[0].mxu0
  %v4046 = vpop.f32.mrb[0].mxu0
  %4047 = vdwg.mxu0
  %v4048 = vadd.f32 %v3740, %v4043
  %s4049 = scalar_lea.vmem %s10, 192
  %v4050 = vld [vmem:[%s4049] sm:$0xf]
  %v4051 = vld [vmem:[%s4049 + $0x4] sm:$0xf]
  %v4052 = vld [vmem:[%s4049 + $0x8] sm:$0xf]
  %v4053 = vld [vmem:[%s4049 + $0xc] sm:$0xf]
  %v4054 = vld [vmem:[%s4049 + $0x10] sm:$0xf]
  %v4055 = vld [vmem:[%s4049 + $0x14] sm:$0xf]
  %v4056 = vld [vmem:[%s4049 + $0x18] sm:$0xf]
  %v4057 = vld [vmem:[%s4049 + $0x1c] sm:$0xf]
  %v4058 = vld [vmem:[%s4049 + $0x20] sm:$0xf]
  %v4059 = vld [vmem:[%s4049 + $0x24] sm:$0xf]
  %v4060 = vld [vmem:[%s4049 + $0x28] sm:$0xf]
  %v4061 = vld [vmem:[%s4049 + $0x2c] sm:$0xf]
  %v4062 = vld [vmem:[%s4049 + $0x30] sm:$0xf]
  %v4063 = vld [vmem:[%s4049 + $0x34] sm:$0xf]
  %v4064 = vld [vmem:[%s4049 + $0x38] sm:$0xf]
  %v4065 = vld [vmem:[%s4049 + $0x3c] sm:$0xf]
  %v4074 = vunpack.c.l.b16 %v3903
  %v4075 = vunpack.c.l.b16 %v3904
  %v4076 = vunpack.c.l.b16 %v3905
  %v4077 = vunpack.c.l.b16 %v3906
  %v4078 = vunpack.c.l.b16 %v3907
  %v4079 = vunpack.c.l.b16 %v3908
  %v4080 = vunpack.c.l.b16 %v3909
  %v4081 = vunpack.c.l.b16 %v3910
  %v4082 = vrot.slane %v4075, 7
  %v4083 = vsel %vm3084, %v4082, %v4074
  %v4084 = vrot.slane %v4076, 6
  %v4085 = vsel %vm3087, %v4084, %v4083
  %v4086 = vrot.slane %v4077, 5
  %v4087 = vsel %vm3090, %v4086, %v4085
  %v4088 = vrot.slane %v4078, 4
  %v4089 = vsel %vm3093, %v4088, %v4087
  %v4090 = vrot.slane %v4079, 3
  %v4091 = vsel %vm3096, %v4090, %v4089
  %v4092 = vrot.slane %v4080, 2
  %v4093 = vsel %vm3099, %v4092, %v4091
  %v4094 = vrot.slane %v4081, 1
  %v4095 = vsel %vm3102, %v4094, %v4093
  %v4096 = vpack.c.b16 %v4095, %v4095
  %v4114 = vunpack.c.l.b16 %v4050
  %v4115 = vunpack.c.l.b16 %v4051
  %v4116 = vunpack.c.l.b16 %v4052
  %v4117 = vunpack.c.l.b16 %v4053
  %v4118 = vunpack.c.l.b16 %v4054
  %v4119 = vunpack.c.l.b16 %v4055
  %v4120 = vunpack.c.l.b16 %v4056
  %v4121 = vunpack.c.l.b16 %v4057
  %v4122 = vunpack.c.l.b16 %v4058
  %v4123 = vunpack.c.l.b16 %v4059
  %v4124 = vunpack.c.l.b16 %v4060
  %v4125 = vunpack.c.l.b16 %v4061
  %v4126 = vunpack.c.l.b16 %v4062
  %v4127 = vunpack.c.l.b16 %v4063
  %v4128 = vunpack.c.l.b16 %v4064
  %v4129 = vunpack.c.l.b16 %v4065
  %v4130 = vpack.c.b16 %v4115, %v4114
  %v4131 = vpack.c.b16 %v4117, %v4116
  %v4132 = vpack.c.b16 %v4119, %v4118
  %v4133 = vpack.c.b16 %v4121, %v4120
  %v4134 = vpack.c.b16 %v4123, %v4122
  %v4135 = vpack.c.b16 %v4125, %v4124
  %v4136 = vpack.c.b16 %v4127, %v4126
  %v4137 = vpack.c.b16 %v4129, %v4128
  %4146 = vmatprep.subr.bf16.mxu0 0
  %4147 = vmatpush1.bf16.msra.mxu0 %v4130
  %4148 = vmatprep.subr.bf16.mxu0 0
  %4149 = vmatpush1.bf16.msra.mxu0 %v4131
  %4150 = vmatprep.subr.bf16.mxu0 0
  %4151 = vmatpush1.bf16.msra.mxu0 %v4132
  %4152 = vmatprep.subr.bf16.mxu0 0
  %4153 = vmatpush1.bf16.msra.mxu0 %v4133
  %4154 = vmatprep.subr.bf16.mxu0 0
  %4155 = vmatpush1.bf16.msra.mxu0 %v4134
  %4156 = vmatprep.subr.bf16.mxu0 0
  %4157 = vmatpush1.bf16.msra.mxu0 %v4135
  %4158 = vmatprep.subr.bf16.mxu0 0
  %4159 = vmatpush1.bf16.msra.mxu0 %v4136
  %4160 = vmatprep.subr.bf16.mxu0 0
  %4161 = vmatpush1.bf16.msra.mxu0 %v4137
  %4162 = vmatprep.subr.bf16.mxu0 0
  %4163 = vmatpush1.bf16.msra.mxu0 0
  %4164 = vmatprep.subr.bf16.mxu0 0
  %4165 = vmatpush1.bf16.msra.mxu0 0
  %4166 = vmatprep.subr.bf16.mxu0 0
  %4167 = vmatpush1.bf16.msra.mxu0 0
  %4168 = vmatprep.subr.bf16.mxu0 0
  %4169 = vmatpush1.bf16.msra.mxu0 0
  %4170 = vmatprep.subr.bf16.mxu0 0
  %4171 = vmatpush1.bf16.msra.mxu0 0
  %4172 = vmatprep.subr.bf16.mxu0 0
  %4173 = vmatpush1.bf16.msra.mxu0 0
  %4174 = vmatprep.subr.bf16.mxu0 0
  %4175 = vmatpush1.bf16.msra.mxu0 0
  %4176 = vmatprep.subr.bf16.mxu0 0
  %4177 = vmatpush1.bf16.msra.mxu0 0
  %4178 = vmatprep.mubr.bf16.mxu0 0
  %4179 = vmatmul.mubr.bf16.gmra.mrb[0].mxu0 %v4096
  %v4180 = vpop.f32.mrb[0].mxu0
  %v4181 = vadd.f32 0.0, %v4180
  %v4182 = vpop.f32.mrb[0].mxu0
  %v4183 = vpop.f32.mrb[0].mxu0
  %v4184 = vpop.f32.mrb[0].mxu0
  %4185 = vdwg.mxu0
  %v4186 = vadd.f32 %v3878, %v4181
  %v4187 = vld [vmem:[#allocation4 + $0x4] sm:$0x1]
  %v4188 = vld [vmem:[#allocation4 + $0x14] sm:$0x1]
  %v4189 = vld [vmem:[#allocation4 + $0x24] sm:$0x1]
  %v4190 = vld [vmem:[#allocation4 + $0x34] sm:$0x1]
  %v4191 = vld [vmem:[#allocation4 + $0x44] sm:$0x1]
  %v4192 = vld [vmem:[#allocation4 + $0x54] sm:$0x1]
  %v4193 = vld [vmem:[#allocation4 + $0x64] sm:$0x1]
  %v4194 = vld [vmem:[#allocation4 + $0x74] sm:$0x1]
  %v4195 = vpack.c.bf16 %v4187, %v4187
  %v4196 = vpack.c.bf16 %v4188, %v4188
  %v4197 = vpack.c.bf16 %v4189, %v4189
  %v4198 = vpack.c.bf16 %v4190, %v4190
  %v4199 = vpack.c.bf16 %v4191, %v4191
  %v4200 = vpack.c.bf16 %v4192, %v4192
  %v4201 = vpack.c.bf16 %v4193, %v4193
  %v4202 = vpack.c.bf16 %v4194, %v4194
  %v4203 = vld [vmem:[#allocation3 + $0x4] sm:$0x1]
  %v4204 = vld [vmem:[#allocation3 + $0x14] sm:$0x1]
  %v4205 = vld [vmem:[#allocation3 + $0x24] sm:$0x1]
  %v4206 = vld [vmem:[#allocation3 + $0x34] sm:$0x1]
  %v4207 = vld [vmem:[#allocation3 + $0x44] sm:$0x1]
  %v4208 = vld [vmem:[#allocation3 + $0x54] sm:$0x1]
  %v4209 = vld [vmem:[#allocation3 + $0x64] sm:$0x1]
  %v4210 = vld [vmem:[#allocation3 + $0x74] sm:$0x1]
  %v4211 = vpack.c.bf16 %v4203, %v4203
  %v4212 = vpack.c.bf16 %v4204, %v4204
  %v4213 = vpack.c.bf16 %v4205, %v4205
  %v4214 = vpack.c.bf16 %v4206, %v4206
  %v4215 = vpack.c.bf16 %v4207, %v4207
  %v4216 = vpack.c.bf16 %v4208, %v4208
  %v4217 = vpack.c.bf16 %v4209, %v4209
  %v4218 = vpack.c.bf16 %v4210, %v4210
  %s4219 = scalar_lea.vmem %s9, 256
  %v4220 = vld [vmem:[%s4219] sm:$0xf]
  %v4221 = vld [vmem:[%s4219 + $0x4] sm:$0xf]
  %v4222 = vld [vmem:[%s4219 + $0x8] sm:$0xf]
  %v4223 = vld [vmem:[%s4219 + $0xc] sm:$0xf]
  %v4224 = vld [vmem:[%s4219 + $0x10] sm:$0xf]
  %v4225 = vld [vmem:[%s4219 + $0x14] sm:$0xf]
  %v4226 = vld [vmem:[%s4219 + $0x18] sm:$0xf]
  %v4227 = vld [vmem:[%s4219 + $0x1c] sm:$0xf]
  %v4228 = vld [vmem:[%s4219 + $0x20] sm:$0xf]
  %v4229 = vld [vmem:[%s4219 + $0x24] sm:$0xf]
  %v4230 = vld [vmem:[%s4219 + $0x28] sm:$0xf]
  %v4231 = vld [vmem:[%s4219 + $0x2c] sm:$0xf]
  %v4232 = vld [vmem:[%s4219 + $0x30] sm:$0xf]
  %v4233 = vld [vmem:[%s4219 + $0x34] sm:$0xf]
  %v4234 = vld [vmem:[%s4219 + $0x38] sm:$0xf]
  %v4235 = vld [vmem:[%s4219 + $0x3c] sm:$0xf]
  %v4244 = vunpack.c.l.b16 %v4195
  %v4245 = vunpack.c.l.b16 %v4196
  %v4246 = vunpack.c.l.b16 %v4197
  %v4247 = vunpack.c.l.b16 %v4198
  %v4248 = vunpack.c.l.b16 %v4199
  %v4249 = vunpack.c.l.b16 %v4200
  %v4250 = vunpack.c.l.b16 %v4201
  %v4251 = vunpack.c.l.b16 %v4202
  %v4252 = vrot.slane %v4245, 7
  %v4253 = vsel %vm3084, %v4252, %v4244
  %v4254 = vrot.slane %v4246, 6
  %v4255 = vsel %vm3087, %v4254, %v4253
  %v4256 = vrot.slane %v4247, 5
  %v4257 = vsel %vm3090, %v4256, %v4255
  %v4258 = vrot.slane %v4248, 4
  %v4259 = vsel %vm3093, %v4258, %v4257
  %v4260 = vrot.slane %v4249, 3
  %v4261 = vsel %vm3096, %v4260, %v4259
  %v4262 = vrot.slane %v4250, 2
  %v4263 = vsel %vm3099, %v4262, %v4261
  %v4264 = vrot.slane %v4251, 1
  %v4265 = vsel %vm3102, %v4264, %v4263
  %v4266 = vpack.c.b16 %v4265, %v4265
  %v4284 = vunpack.c.l.b16 %v4220
  %v4285 = vunpack.c.l.b16 %v4221
  %v4286 = vunpack.c.l.b16 %v4222
  %v4287 = vunpack.c.l.b16 %v4223
  %v4288 = vunpack.c.l.b16 %v4224
  %v4289 = vunpack.c.l.b16 %v4225
  %v4290 = vunpack.c.l.b16 %v4226
  %v4291 = vunpack.c.l.b16 %v4227
  %v4292 = vunpack.c.l.b16 %v4228
  %v4293 = vunpack.c.l.b16 %v4229
  %v4294 = vunpack.c.l.b16 %v4230
  %v4295 = vunpack.c.l.b16 %v4231
  %v4296 = vunpack.c.l.b16 %v4232
  %v4297 = vunpack.c.l.b16 %v4233
  %v4298 = vunpack.c.l.b16 %v4234
  %v4299 = vunpack.c.l.b16 %v4235
  %v4300 = vpack.c.b16 %v4285, %v4284
  %v4301 = vpack.c.b16 %v4287, %v4286
  %v4302 = vpack.c.b16 %v4289, %v4288
  %v4303 = vpack.c.b16 %v4291, %v4290
  %v4304 = vpack.c.b16 %v4293, %v4292
  %v4305 = vpack.c.b16 %v4295, %v4294
  %v4306 = vpack.c.b16 %v4297, %v4296
  %v4307 = vpack.c.b16 %v4299, %v4298
  %4316 = vmatprep.subr.bf16.mxu0 0
  %4317 = vmatpush1.bf16.msra.mxu0 %v4300
  %4318 = vmatprep.subr.bf16.mxu0 0
  %4319 = vmatpush1.bf16.msra.mxu0 %v4301
  %4320 = vmatprep.subr.bf16.mxu0 0
  %4321 = vmatpush1.bf16.msra.mxu0 %v4302
  %4322 = vmatprep.subr.bf16.mxu0 0
  %4323 = vmatpush1.bf16.msra.mxu0 %v4303
  %4324 = vmatprep.subr.bf16.mxu0 0
  %4325 = vmatpush1.bf16.msra.mxu0 %v4304
  %4326 = vmatprep.subr.bf16.mxu0 0
  %4327 = vmatpush1.bf16.msra.mxu0 %v4305
  %4328 = vmatprep.subr.bf16.mxu0 0
  %4329 = vmatpush1.bf16.msra.mxu0 %v4306
  %4330 = vmatprep.subr.bf16.mxu0 0
  %4331 = vmatpush1.bf16.msra.mxu0 %v4307
  %4332 = vmatprep.subr.bf16.mxu0 0
  %4333 = vmatpush1.bf16.msra.mxu0 0
  %4334 = vmatprep.subr.bf16.mxu0 0
  %4335 = vmatpush1.bf16.msra.mxu0 0
  %4336 = vmatprep.subr.bf16.mxu0 0
  %4337 = vmatpush1.bf16.msra.mxu0 0
  %4338 = vmatprep.subr.bf16.mxu0 0
  %4339 = vmatpush1.bf16.msra.mxu0 0
  %4340 = vmatprep.subr.bf16.mxu0 0
  %4341 = vmatpush1.bf16.msra.mxu0 0
  %4342 = vmatprep.subr.bf16.mxu0 0
  %4343 = vmatpush1.bf16.msra.mxu0 0
  %4344 = vmatprep.subr.bf16.mxu0 0
  %4345 = vmatpush1.bf16.msra.mxu0 0
  %4346 = vmatprep.subr.bf16.mxu0 0
  %4347 = vmatpush1.bf16.msra.mxu0 0
  %4348 = vmatprep.mubr.bf16.mxu0 0
  %4349 = vmatmul.mubr.bf16.gmra.mrb[0].mxu0 %v4266
  %v4350 = vpop.f32.mrb[0].mxu0
  %v4351 = vadd.f32 0.0, %v4350
  %v4352 = vpop.f32.mrb[0].mxu0
  %v4353 = vpop.f32.mrb[0].mxu0
  %v4354 = vpop.f32.mrb[0].mxu0
  %4355 = vdwg.mxu0
  %v4356 = vadd.f32 %v4048, %v4351
  %s4357 = scalar_lea.vmem %s10, 256
  %v4358 = vld [vmem:[%s4357] sm:$0xf]
  %v4359 = vld [vmem:[%s4357 + $0x4] sm:$0xf]
  %v4360 = vld [vmem:[%s4357 + $0x8] sm:$0xf]
  %v4361 = vld [vmem:[%s4357 + $0xc] sm:$0xf]
  %v4362 = vld [vmem:[%s4357 + $0x10] sm:$0xf]
  %v4363 = vld [vmem:[%s4357 + $0x14] sm:$0xf]
  %v4364 = vld [vmem:[%s4357 + $0x18] sm:$0xf]
  %v4365 = vld [vmem:[%s4357 + $0x1c] sm:$0xf]
  %v4366 = vld [vmem:[%s4357 + $0x20] sm:$0xf]
  %v4367 = vld [vmem:[%s4357 + $0x24] sm:$0xf]
  %v4368 = vld [vmem:[%s4357 + $0x28] sm:$0xf]
  %v4369 = vld [vmem:[%s4357 + $0x2c] sm:$0xf]
  %v4370 = vld [vmem:[%s4357 + $0x30] sm:$0xf]
  %v4371 = vld [vmem:[%s4357 + $0x34] sm:$0xf]
  %v4372 = vld [vmem:[%s4357 + $0x38] sm:$0xf]
  %v4373 = vld [vmem:[%s4357 + $0x3c] sm:$0xf]
  %v4382 = vunpack.c.l.b16 %v4211
  %v4383 = vunpack.c.l.b16 %v4212
  %v4384 = vunpack.c.l.b16 %v4213
  %v4385 = vunpack.c.l.b16 %v4214
  %v4386 = vunpack.c.l.b16 %v4215
  %v4387 = vunpack.c.l.b16 %v4216
  %v4388 = vunpack.c.l.b16 %v4217
  %v4389 = vunpack.c.l.b16 %v4218
  %v4390 = vrot.slane %v4383, 7
  %v4391 = vsel %vm3084, %v4390, %v4382
  %v4392 = vrot.slane %v4384, 6
  %v4393 = vsel %vm3087, %v4392, %v4391
  %v4394 = vrot.slane %v4385, 5
  %v4395 = vsel %vm3090, %v4394, %v4393
  %v4396 = vrot.slane %v4386, 4
  %v4397 = vsel %vm3093, %v4396, %v4395
  %v4398 = vrot.slane %v4387, 3
  %v4399 = vsel %vm3096, %v4398, %v4397
  %v4400 = vrot.slane %v4388, 2
  %v4401 = vsel %vm3099, %v4400, %v4399
  %v4402 = vrot.slane %v4389, 1
  %v4403 = vsel %vm3102, %v4402, %v4401
  %v4404 = vpack.c.b16 %v4403, %v4403
  %v4422 = vunpack.c.l.b16 %v4358
  %v4423 = vunpack.c.l.b16 %v4359
  %v4424 = vunpack.c.l.b16 %v4360
  %v4425 = vunpack.c.l.b16 %v4361
  %v4426 = vunpack.c.l.b16 %v4362
  %v4427 = vunpack.c.l.b16 %v4363
  %v4428 = vunpack.c.l.b16 %v4364
  %v4429 = vunpack.c.l.b16 %v4365
  %v4430 = vunpack.c.l.b16 %v4366
  %v4431 = vunpack.c.l.b16 %v4367
  %v4432 = vunpack.c.l.b16 %v4368
  %v4433 = vunpack.c.l.b16 %v4369
  %v4434 = vunpack.c.l.b16 %v4370
  %v4435 = vunpack.c.l.b16 %v4371
  %v4436 = vunpack.c.l.b16 %v4372
  %v4437 = vunpack.c.l.b16 %v4373
  %v4438 = vpack.c.b16 %v4423, %v4422
  %v4439 = vpack.c.b16 %v4425, %v4424
  %v4440 = vpack.c.b16 %v4427, %v4426
  %v4441 = vpack.c.b16 %v4429, %v4428
  %v4442 = vpack.c.b16 %v4431, %v4430
  %v4443 = vpack.c.b16 %v4433, %v4432
  %v4444 = vpack.c.b16 %v4435, %v4434
  %v4445 = vpack.c.b16 %v4437, %v4436
  %4454 = vmatprep.subr.bf16.mxu0 0
  %4455 = vmatpush1.bf16.msra.mxu0 %v4438
  %4456 = vmatprep.subr.bf16.mxu0 0
  %4457 = vmatpush1.bf16.msra.mxu0 %v4439
  %4458 = vmatprep.subr.bf16.mxu0 0
  %4459 = vmatpush1.bf16.msra.mxu0 %v4440
  %4460 = vmatprep.subr.bf16.mxu0 0
  %4461 = vmatpush1.bf16.msra.mxu0 %v4441
  %4462 = vmatprep.subr.bf16.mxu0 0
  %4463 = vmatpush1.bf16.msra.mxu0 %v4442
  %4464 = vmatprep.subr.bf16.mxu0 0
  %4465 = vmatpush1.bf16.msra.mxu0 %v4443
  %4466 = vmatprep.subr.bf16.mxu0 0
  %4467 = vmatpush1.bf16.msra.mxu0 %v4444
  %4468 = vmatprep.subr.bf16.mxu0 0
  %4469 = vmatpush1.bf16.msra.mxu0 %v4445
  %4470 = vmatprep.subr.bf16.mxu0 0
  %4471 = vmatpush1.bf16.msra.mxu0 0
  %4472 = vmatprep.subr.bf16.mxu0 0
  %4473 = vmatpush1.bf16.msra.mxu0 0
  %4474 = vmatprep.subr.bf16.mxu0 0
  %4475 = vmatpush1.bf16.msra.mxu0 0
  %4476 = vmatprep.subr.bf16.mxu0 0
  %4477 = vmatpush1.bf16.msra.mxu0 0
  %4478 = vmatprep.subr.bf16.mxu0 0
  %4479 = vmatpush1.bf16.msra.mxu0 0
  %4480 = vmatprep.subr.bf16.mxu0 0
  %4481 = vmatpush1.bf16.msra.mxu0 0
  %4482 = vmatprep.subr.bf16.mxu0 0
  %4483 = vmatpush1.bf16.msra.mxu0 0
  %4484 = vmatprep.subr.bf16.mxu0 0
  %4485 = vmatpush1.bf16.msra.mxu0 0
  %4486 = vmatprep.mubr.bf16.mxu0 0
  %4487 = vmatmul.mubr.bf16.gmra.mrb[0].mxu0 %v4404
  %v4488 = vpop.f32.mrb[0].mxu0
  %v4489 = vadd.f32 0.0, %v4488
  %v4490 = vpop.f32.mrb[0].mxu0
  %v4491 = vpop.f32.mrb[0].mxu0
  %v4492 = vpop.f32.mrb[0].mxu0
  %4493 = vdwg.mxu0
  %v4494 = vadd.f32 %v4186, %v4489
  %v4495 = vld [vmem:[#allocation4 + $0x5] sm:$0x1]
  %v4496 = vld [vmem:[#allocation4 + $0x15] sm:$0x1]
  %v4497 = vld [vmem:[#allocation4 + $0x25] sm:$0x1]
  %v4498 = vld [vmem:[#allocation4 + $0x35] sm:$0x1]
  %v4499 = vld [vmem:[#allocation4 + $0x45] sm:$0x1]
  %v4500 = vld [vmem:[#allocation4 + $0x55] sm:$0x1]
  %v4501 = vld [vmem:[#allocation4 + $0x65] sm:$0x1]
  %v4502 = vld [vmem:[#allocation4 + $0x75] sm:$0x1]
  %v4503 = vpack.c.bf16 %v4495, %v4495
  %v4504 = vpack.c.bf16 %v4496, %v4496
  %v4505 = vpack.c.bf16 %v4497, %v4497
  %v4506 = vpack.c.bf16 %v4498, %v4498
  %v4507 = vpack.c.bf16 %v4499, %v4499
  %v4508 = vpack.c.bf16 %v4500, %v4500
  %v4509 = vpack.c.bf16 %v4501, %v4501
  %v4510 = vpack.c.bf16 %v4502, %v4502
  %v4511 = vld [vmem:[#allocation3 + $0x5] sm:$0x1]
  %v4512 = vld [vmem:[#allocation3 + $0x15] sm:$0x1]
  %v4513 = vld [vmem:[#allocation3 + $0x25] sm:$0x1]
  %v4514 = vld [vmem:[#allocation3 + $0x35] sm:$0x1]
  %v4515 = vld [vmem:[#allocation3 + $0x45] sm:$0x1]
  %v4516 = vld [vmem:[#allocation3 + $0x55] sm:$0x1]
  %v4517 = vld [vmem:[#allocation3 + $0x65] sm:$0x1]
  %v4518 = vld [vmem:[#allocation3 + $0x75] sm:$0x1]
  %v4519 = vpack.c.bf16 %v4511, %v4511
  %v4520 = vpack.c.bf16 %v4512, %v4512
  %v4521 = vpack.c.bf16 %v4513, %v4513
  %v4522 = vpack.c.bf16 %v4514, %v4514
  %v4523 = vpack.c.bf16 %v4515, %v4515
  %v4524 = vpack.c.bf16 %v4516, %v4516
  %v4525 = vpack.c.bf16 %v4517, %v4517
  %v4526 = vpack.c.bf16 %v4518, %v4518
  %s4527 = scalar_lea.vmem %s9, 320
  %v4528 = vld [vmem:[%s4527] sm:$0xf]
  %v4529 = vld [vmem:[%s4527 + $0x4] sm:$0xf]
  %v4530 = vld [vmem:[%s4527 + $0x8] sm:$0xf]
  %v4531 = vld [vmem:[%s4527 + $0xc] sm:$0xf]
  %v4532 = vld [vmem:[%s4527 + $0x10] sm:$0xf]
  %v4533 = vld [vmem:[%s4527 + $0x14] sm:$0xf]
  %v4534 = vld [vmem:[%s4527 + $0x18] sm:$0xf]
  %v4535 = vld [vmem:[%s4527 + $0x1c] sm:$0xf]
  %v4536 = vld [vmem:[%s4527 + $0x20] sm:$0xf]
  %v4537 = vld [vmem:[%s4527 + $0x24] sm:$0xf]
  %v4538 = vld [vmem:[%s4527 + $0x28] sm:$0xf]
  %v4539 = vld [vmem:[%s4527 + $0x2c] sm:$0xf]
  %v4540 = vld [vmem:[%s4527 + $0x30] sm:$0xf]
  %v4541 = vld [vmem:[%s4527 + $0x34] sm:$0xf]
  %v4542 = vld [vmem:[%s4527 + $0x38] sm:$0xf]
  %v4543 = vld [vmem:[%s4527 + $0x3c] sm:$0xf]
  %v4552 = vunpack.c.l.b16 %v4503
  %v4553 = vunpack.c.l.b16 %v4504
  %v4554 = vunpack.c.l.b16 %v4505
  %v4555 = vunpack.c.l.b16 %v4506
  %v4556 = vunpack.c.l.b16 %v4507
  %v4557 = vunpack.c.l.b16 %v4508
  %v4558 = vunpack.c.l.b16 %v4509
  %v4559 = vunpack.c.l.b16 %v4510
  %v4560 = vrot.slane %v4553, 7
  %v4561 = vsel %vm3084, %v4560, %v4552
  %v4562 = vrot.slane %v4554, 6
  %v4563 = vsel %vm3087, %v4562, %v4561
  %v4564 = vrot.slane %v4555, 5
  %v4565 = vsel %vm3090, %v4564, %v4563
  %v4566 = vrot.slane %v4556, 4
  %v4567 = vsel %vm3093, %v4566, %v4565
  %v4568 = vrot.slane %v4557, 3
  %v4569 = vsel %vm3096, %v4568, %v4567
  %v4570 = vrot.slane %v4558, 2
  %v4571 = vsel %vm3099, %v4570, %v4569
  %v4572 = vrot.slane %v4559, 1
  %v4573 = vsel %vm3102, %v4572, %v4571
  %v4574 = vpack.c.b16 %v4573, %v4573
  %v4592 = vunpack.c.l.b16 %v4528
  %v4593 = vunpack.c.l.b16 %v4529
  %v4594 = vunpack.c.l.b16 %v4530
  %v4595 = vunpack.c.l.b16 %v4531
  %v4596 = vunpack.c.l.b16 %v4532
  %v4597 = vunpack.c.l.b16 %v4533
  %v4598 = vunpack.c.l.b16 %v4534
  %v4599 = vunpack.c.l.b16 %v4535
  %v4600 = vunpack.c.l.b16 %v4536
  %v4601 = vunpack.c.l.b16 %v4537
  %v4602 = vunpack.c.l.b16 %v4538
  %v4603 = vunpack.c.l.b16 %v4539
  %v4604 = vunpack.c.l.b16 %v4540
  %v4605 = vunpack.c.l.b16 %v4541
  %v4606 = vunpack.c.l.b16 %v4542
  %v4607 = vunpack.c.l.b16 %v4543
  %v4608 = vpack.c.b16 %v4593, %v4592
  %v4609 = vpack.c.b16 %v4595, %v4594
  %v4610 = vpack.c.b16 %v4597, %v4596
  %v4611 = vpack.c.b16 %v4599, %v4598
  %v4612 = vpack.c.b16 %v4601, %v4600
  %v4613 = vpack.c.b16 %v4603, %v4602
  %v4614 = vpack.c.b16 %v4605, %v4604
  %v4615 = vpack.c.b16 %v4607, %v4606
  %4624 = vmatprep.subr.bf16.mxu0 0
  %4625 = vmatpush1.bf16.msra.mxu0 %v4608
  %4626 = vmatprep.subr.bf16.mxu0 0
  %4627 = vmatpush1.bf16.msra.mxu0 %v4609
  %4628 = vmatprep.subr.bf16.mxu0 0
  %4629 = vmatpush1.bf16.msra.mxu0 %v4610
  %4630 = vmatprep.subr.bf16.mxu0 0
  %4631 = vmatpush1.bf16.msra.mxu0 %v4611
  %4632 = vmatprep.subr.bf16.mxu0 0
  %4633 = vmatpush1.bf16.msra.mxu0 %v4612
  %4634 = vmatprep.subr.bf16.mxu0 0
  %4635 = vmatpush1.bf16.msra.mxu0 %v4613
  %4636 = vmatprep.subr.bf16.mxu0 0
  %4637 = vmatpush1.bf16.msra.mxu0 %v4614
  %4638 = vmatprep.subr.bf16.mxu0 0
  %4639 = vmatpush1.bf16.msra.mxu0 %v4615
  %4640 = vmatprep.subr.bf16.mxu0 0
  %4641 = vmatpush1.bf16.msra.mxu0 0
  %4642 = vmatprep.subr.bf16.mxu0 0
  %4643 = vmatpush1.bf16.msra.mxu0 0
  %4644 = vmatprep.subr.bf16.mxu0 0
  %4645 = vmatpush1.bf16.msra.mxu0 0
  %4646 = vmatprep.subr.bf16.mxu0 0
  %4647 = vmatpush1.bf16.msra.mxu0 0
  %4648 = vmatprep.subr.bf16.mxu0 0
  %4649 = vmatpush1.bf16.msra.mxu0 0
  %4650 = vmatprep.subr.bf16.mxu0 0
  %4651 = vmatpush1.bf16.msra.mxu0 0
  %4652 = vmatprep.subr.bf16.mxu0 0
  %4653 = vmatpush1.bf16.msra.mxu0 0
  %4654 = vmatprep.subr.bf16.mxu0 0
  %4655 = vmatpush1.bf16.msra.mxu0 0
  %4656 = vmatprep.mubr.bf16.mxu0 0
  %4657 = vmatmul.mubr.bf16.gmra.mrb[0].mxu0 %v4574
  %v4658 = vpop.f32.mrb[0].mxu0
  %v4659 = vadd.f32 0.0, %v4658
  %v4660 = vpop.f32.mrb[0].mxu0
  %v4661 = vpop.f32.mrb[0].mxu0
  %v4662 = vpop.f32.mrb[0].mxu0
  %4663 = vdwg.mxu0
  %v4664 = vadd.f32 %v4356, %v4659
  %s4665 = scalar_lea.vmem %s10, 320
  %v4666 = vld [vmem:[%s4665] sm:$0xf]
  %v4667 = vld [vmem:[%s4665 + $0x4] sm:$0xf]
  %v4668 = vld [vmem:[%s4665 + $0x8] sm:$0xf]
  %v4669 = vld [vmem:[%s4665 + $0xc] sm:$0xf]
  %v4670 = vld [vmem:[%s4665 + $0x10] sm:$0xf]
  %v4671 = vld [vmem:[%s4665 + $0x14] sm:$0xf]
  %v4672 = vld [vmem:[%s4665 + $0x18] sm:$0xf]
  %v4673 = vld [vmem:[%s4665 + $0x1c] sm:$0xf]
  %v4674 = vld [vmem:[%s4665 + $0x20] sm:$0xf]
  %v4675 = vld [vmem:[%s4665 + $0x24] sm:$0xf]
  %v4676 = vld [vmem:[%s4665 + $0x28] sm:$0xf]
  %v4677 = vld [vmem:[%s4665 + $0x2c] sm:$0xf]
  %v4678 = vld [vmem:[%s4665 + $0x30] sm:$0xf]
  %v4679 = vld [vmem:[%s4665 + $0x34] sm:$0xf]
  %v4680 = vld [vmem:[%s4665 + $0x38] sm:$0xf]
  %v4681 = vld [vmem:[%s4665 + $0x3c] sm:$0xf]
  %v4690 = vunpack.c.l.b16 %v4519
  %v4691 = vunpack.c.l.b16 %v4520
  %v4692 = vunpack.c.l.b16 %v4521
  %v4693 = vunpack.c.l.b16 %v4522
  %v4694 = vunpack.c.l.b16 %v4523
  %v4695 = vunpack.c.l.b16 %v4524
  %v4696 = vunpack.c.l.b16 %v4525
  %v4697 = vunpack.c.l.b16 %v4526
  %v4698 = vrot.slane %v4691, 7
  %v4699 = vsel %vm3084, %v4698, %v4690
  %v4700 = vrot.slane %v4692, 6
  %v4701 = vsel %vm3087, %v4700, %v4699
  %v4702 = vrot.slane %v4693, 5
  %v4703 = vsel %vm3090, %v4702, %v4701
  %v4704 = vrot.slane %v4694, 4
  %v4705 = vsel %vm3093, %v4704, %v4703
  %v4706 = vrot.slane %v4695, 3
  %v4707 = vsel %vm3096, %v4706, %v4705
  %v4708 = vrot.slane %v4696, 2
  %v4709 = vsel %vm3099, %v4708, %v4707
  %v4710 = vrot.slane %v4697, 1
  %v4711 = vsel %vm3102, %v4710, %v4709
  %v4712 = vpack.c.b16 %v4711, %v4711
  %v4730 = vunpack.c.l.b16 %v4666
  %v4731 = vunpack.c.l.b16 %v4667
  %v4732 = vunpack.c.l.b16 %v4668
  %v4733 = vunpack.c.l.b16 %v4669
  %v4734 = vunpack.c.l.b16 %v4670
  %v4735 = vunpack.c.l.b16 %v4671
  %v4736 = vunpack.c.l.b16 %v4672
  %v4737 = vunpack.c.l.b16 %v4673
  %v4738 = vunpack.c.l.b16 %v4674
  %v4739 = vunpack.c.l.b16 %v4675
  %v4740 = vunpack.c.l.b16 %v4676
  %v4741 = vunpack.c.l.b16 %v4677
  %v4742 = vunpack.c.l.b16 %v4678
  %v4743 = vunpack.c.l.b16 %v4679
  %v4744 = vunpack.c.l.b16 %v4680
  %v4745 = vunpack.c.l.b16 %v4681
  %v4746 = vpack.c.b16 %v4731, %v4730
  %v4747 = vpack.c.b16 %v4733, %v4732
  %v4748 = vpack.c.b16 %v4735, %v4734
  %v4749 = vpack.c.b16 %v4737, %v4736
  %v4750 = vpack.c.b16 %v4739, %v4738
  %v4751 = vpack.c.b16 %v4741, %v4740
  %v4752 = vpack.c.b16 %v4743, %v4742
  %v4753 = vpack.c.b16 %v4745, %v4744
  %4762 = vmatprep.subr.bf16.mxu0 0
  %4763 = vmatpush1.bf16.msra.mxu0 %v4746
  %4764 = vmatprep.subr.bf16.mxu0 0
  %4765 = vmatpush1.bf16.msra.mxu0 %v4747
  %4766 = vmatprep.subr.bf16.mxu0 0
  %4767 = vmatpush1.bf16.msra.mxu0 %v4748
  %4768 = vmatprep.subr.bf16.mxu0 0
  %4769 = vmatpush1.bf16.msra.mxu0 %v4749
  %4770 = vmatprep.subr.bf16.mxu0 0
  %4771 = vmatpush1.bf16.msra.mxu0 %v4750
  %4772 = vmatprep.subr.bf16.mxu0 0
  %4773 = vmatpush1.bf16.msra.mxu0 %v4751
  %4774 = vmatprep.subr.bf16.mxu0 0
  %4775 = vmatpush1.bf16.msra.mxu0 %v4752
  %4776 = vmatprep.subr.bf16.mxu0 0
  %4777 = vmatpush1.bf16.msra.mxu0 %v4753
  %4778 = vmatprep.subr.bf16.mxu0 0
  %4779 = vmatpush1.bf16.msra.mxu0 0
  %4780 = vmatprep.subr.bf16.mxu0 0
  %4781 = vmatpush1.bf16.msra.mxu0 0
  %4782 = vmatprep.subr.bf16.mxu0 0
  %4783 = vmatpush1.bf16.msra.mxu0 0
  %4784 = vmatprep.subr.bf16.mxu0 0
  %4785 = vmatpush1.bf16.msra.mxu0 0
  %4786 = vmatprep.subr.bf16.mxu0 0
  %4787 = vmatpush1.bf16.msra.mxu0 0
  %4788 = vmatprep.subr.bf16.mxu0 0
  %4789 = vmatpush1.bf16.msra.mxu0 0
  %4790 = vmatprep.subr.bf16.mxu0 0
  %4791 = vmatpush1.bf16.msra.mxu0 0
  %4792 = vmatprep.subr.bf16.mxu0 0
  %4793 = vmatpush1.bf16.msra.mxu0 0
  %4794 = vmatprep.mubr.bf16.mxu0 0
  %4795 = vmatmul.mubr.bf16.gmra.mrb[0].mxu0 %v4712
  %v4796 = vpop.f32.mrb[0].mxu0
  %v4797 = vadd.f32 0.0, %v4796
  %v4798 = vpop.f32.mrb[0].mxu0
  %v4799 = vpop.f32.mrb[0].mxu0
  %v4800 = vpop.f32.mrb[0].mxu0
  %4801 = vdwg.mxu0
  %v4802 = vadd.f32 %v4494, %v4797
  %v4803 = vld [vmem:[#allocation4 + $0x6] sm:$0x1]
  %v4804 = vld [vmem:[#allocation4 + $0x16] sm:$0x1]
  %v4805 = vld [vmem:[#allocation4 + $0x26] sm:$0x1]
  %v4806 = vld [vmem:[#allocation4 + $0x36] sm:$0x1]
  %v4807 = vld [vmem:[#allocation4 + $0x46] sm:$0x1]
  %v4808 = vld [vmem:[#allocation4 + $0x56] sm:$0x1]
  %v4809 = vld [vmem:[#allocation4 + $0x66] sm:$0x1]
  %v4810 = vld [vmem:[#allocation4 + $0x76] sm:$0x1]
  %v4811 = vpack.c.bf16 %v4803, %v4803
  %v4812 = vpack.c.bf16 %v4804, %v4804
  %v4813 = vpack.c.bf16 %v4805, %v4805
  %v4814 = vpack.c.bf16 %v4806, %v4806
  %v4815 = vpack.c.bf16 %v4807, %v4807
  %v4816 = vpack.c.bf16 %v4808, %v4808
  %v4817 = vpack.c.bf16 %v4809, %v4809
  %v4818 = vpack.c.bf16 %v4810, %v4810
  %v4819 = vld [vmem:[#allocation3 + $0x6] sm:$0x1]
  %v4820 = vld [vmem:[#allocation3 + $0x16] sm:$0x1]
  %v4821 = vld [vmem:[#allocation3 + $0x26] sm:$0x1]
  %v4822 = vld [vmem:[#allocation3 + $0x36] sm:$0x1]
  %v4823 = vld [vmem:[#allocation3 + $0x46] sm:$0x1]
  %v4824 = vld [vmem:[#allocation3 + $0x56] sm:$0x1]
  %v4825 = vld [vmem:[#allocation3 + $0x66] sm:$0x1]
  %v4826 = vld [vmem:[#allocation3 + $0x76] sm:$0x1]
  %v4827 = vpack.c.bf16 %v4819, %v4819
  %v4828 = vpack.c.bf16 %v4820, %v4820
  %v4829 = vpack.c.bf16 %v4821, %v4821
  %v4830 = vpack.c.bf16 %v4822, %v4822
  %v4831 = vpack.c.bf16 %v4823, %v4823
  %v4832 = vpack.c.bf16 %v4824, %v4824
  %v4833 = vpack.c.bf16 %v4825, %v4825
  %v4834 = vpack.c.bf16 %v4826, %v4826
  %s4835 = scalar_lea.vmem %s9, 384
  %v4836 = vld [vmem:[%s4835] sm:$0xf]
  %v4837 = vld [vmem:[%s4835 + $0x4] sm:$0xf]
  %v4838 = vld [vmem:[%s4835 + $0x8] sm:$0xf]
  %v4839 = vld [vmem:[%s4835 + $0xc] sm:$0xf]
  %v4840 = vld [vmem:[%s4835 + $0x10] sm:$0xf]
  %v4841 = vld [vmem:[%s4835 + $0x14] sm:$0xf]
  %v4842 = vld [vmem:[%s4835 + $0x18] sm:$0xf]
  %v4843 = vld [vmem:[%s4835 + $0x1c] sm:$0xf]
  %v4844 = vld [vmem:[%s4835 + $0x20] sm:$0xf]
  %v4845 = vld [vmem:[%s4835 + $0x24] sm:$0xf]
  %v4846 = vld [vmem:[%s4835 + $0x28] sm:$0xf]
  %v4847 = vld [vmem:[%s4835 + $0x2c] sm:$0xf]
  %v4848 = vld [vmem:[%s4835 + $0x30] sm:$0xf]
  %v4849 = vld [vmem:[%s4835 + $0x34] sm:$0xf]
  %v4850 = vld [vmem:[%s4835 + $0x38] sm:$0xf]
  %v4851 = vld [vmem:[%s4835 + $0x3c] sm:$0xf]
  %v4860 = vunpack.c.l.b16 %v4811
  %v4861 = vunpack.c.l.b16 %v4812
  %v4862 = vunpack.c.l.b16 %v4813
  %v4863 = vunpack.c.l.b16 %v4814
  %v4864 = vunpack.c.l.b16 %v4815
  %v4865 = vunpack.c.l.b16 %v4816
  %v4866 = vunpack.c.l.b16 %v4817
  %v4867 = vunpack.c.l.b16 %v4818
  %v4868 = vrot.slane %v4861, 7
  %v4869 = vsel %vm3084, %v4868, %v4860
  %v4870 = vrot.slane %v4862, 6
  %v4871 = vsel %vm3087, %v4870, %v4869
  %v4872 = vrot.slane %v4863, 5
  %v4873 = vsel %vm3090, %v4872, %v4871
  %v4874 = vrot.slane %v4864, 4
  %v4875 = vsel %vm3093, %v4874, %v4873
  %v4876 = vrot.slane %v4865, 3
  %v4877 = vsel %vm3096, %v4876, %v4875
  %v4878 = vrot.slane %v4866, 2
  %v4879 = vsel %vm3099, %v4878, %v4877
  %v4880 = vrot.slane %v4867, 1
  %v4881 = vsel %vm3102, %v4880, %v4879
  %v4882 = vpack.c.b16 %v4881, %v4881
  %v4900 = vunpack.c.l.b16 %v4836
  %v4901 = vunpack.c.l.b16 %v4837
  %v4902 = vunpack.c.l.b16 %v4838
  %v4903 = vunpack.c.l.b16 %v4839
  %v4904 = vunpack.c.l.b16 %v4840
  %v4905 = vunpack.c.l.b16 %v4841
  %v4906 = vunpack.c.l.b16 %v4842
  %v4907 = vunpack.c.l.b16 %v4843
  %v4908 = vunpack.c.l.b16 %v4844
  %v4909 = vunpack.c.l.b16 %v4845
  %v4910 = vunpack.c.l.b16 %v4846
  %v4911 = vunpack.c.l.b16 %v4847
  %v4912 = vunpack.c.l.b16 %v4848
  %v4913 = vunpack.c.l.b16 %v4849
  %v4914 = vunpack.c.l.b16 %v4850
  %v4915 = vunpack.c.l.b16 %v4851
  %v4916 = vpack.c.b16 %v4901, %v4900
  %v4917 = vpack.c.b16 %v4903, %v4902
  %v4918 = vpack.c.b16 %v4905, %v4904
  %v4919 = vpack.c.b16 %v4907, %v4906
  %v4920 = vpack.c.b16 %v4909, %v4908
  %v4921 = vpack.c.b16 %v4911, %v4910
  %v4922 = vpack.c.b16 %v4913, %v4912
  %v4923 = vpack.c.b16 %v4915, %v4914
  %4932 = vmatprep.subr.bf16.mxu0 0
  %4933 = vmatpush1.bf16.msra.mxu0 %v4916
  %4934 = vmatprep.subr.bf16.mxu0 0
  %4935 = vmatpush1.bf16.msra.mxu0 %v4917
  %4936 = vmatprep.subr.bf16.mxu0 0
  %4937 = vmatpush1.bf16.msra.mxu0 %v4918
  %4938 = vmatprep.subr.bf16.mxu0 0
  %4939 = vmatpush1.bf16.msra.mxu0 %v4919
  %4940 = vmatprep.subr.bf16.mxu0 0
  %4941 = vmatpush1.bf16.msra.mxu0 %v4920
  %4942 = vmatprep.subr.bf16.mxu0 0
  %4943 = vmatpush1.bf16.msra.mxu0 %v4921
  %4944 = vmatprep.subr.bf16.mxu0 0
  %4945 = vmatpush1.bf16.msra.mxu0 %v4922
  %4946 = vmatprep.subr.bf16.mxu0 0
  %4947 = vmatpush1.bf16.msra.mxu0 %v4923
  %4948 = vmatprep.subr.bf16.mxu0 0
  %4949 = vmatpush1.bf16.msra.mxu0 0
  %4950 = vmatprep.subr.bf16.mxu0 0
  %4951 = vmatpush1.bf16.msra.mxu0 0
  %4952 = vmatprep.subr.bf16.mxu0 0
  %4953 = vmatpush1.bf16.msra.mxu0 0
  %4954 = vmatprep.subr.bf16.mxu0 0
  %4955 = vmatpush1.bf16.msra.mxu0 0
  %4956 = vmatprep.subr.bf16.mxu0 0
  %4957 = vmatpush1.bf16.msra.mxu0 0
  %4958 = vmatprep.subr.bf16.mxu0 0
  %4959 = vmatpush1.bf16.msra.mxu0 0
  %4960 = vmatprep.subr.bf16.mxu0 0
  %4961 = vmatpush1.bf16.msra.mxu0 0
  %4962 = vmatprep.subr.bf16.mxu0 0
  %4963 = vmatpush1.bf16.msra.mxu0 0
  %4964 = vmatprep.mubr.bf16.mxu0 0
  %4965 = vmatmul.mubr.bf16.gmra.mrb[0].mxu0 %v4882
  %v4966 = vpop.f32.mrb[0].mxu0
  %v4967 = vadd.f32 0.0, %v4966
  %v4968 = vpop.f32.mrb[0].mxu0
  %v4969 = vpop.f32.mrb[0].mxu0
  %v4970 = vpop.f32.mrb[0].mxu0
  %4971 = vdwg.mxu0
  %v4972 = vadd.f32 %v4664, %v4967
  %s4973 = scalar_lea.vmem %s10, 384
  %v4974 = vld [vmem:[%s4973] sm:$0xf]
  %v4975 = vld [vmem:[%s4973 + $0x4] sm:$0xf]
  %v4976 = vld [vmem:[%s4973 + $0x8] sm:$0xf]
  %v4977 = vld [vmem:[%s4973 + $0xc] sm:$0xf]
  %v4978 = vld [vmem:[%s4973 + $0x10] sm:$0xf]
  %v4979 = vld [vmem:[%s4973 + $0x14] sm:$0xf]
  %v4980 = vld [vmem:[%s4973 + $0x18] sm:$0xf]
  %v4981 = vld [vmem:[%s4973 + $0x1c] sm:$0xf]
  %v4982 = vld [vmem:[%s4973 + $0x20] sm:$0xf]
  %v4983 = vld [vmem:[%s4973 + $0x24] sm:$0xf]
  %v4984 = vld [vmem:[%s4973 + $0x28] sm:$0xf]
  %v4985 = vld [vmem:[%s4973 + $0x2c] sm:$0xf]
  %v4986 = vld [vmem:[%s4973 + $0x30] sm:$0xf]
  %v4987 = vld [vmem:[%s4973 + $0x34] sm:$0xf]
  %v4988 = vld [vmem:[%s4973 + $0x38] sm:$0xf]
  %v4989 = vld [vmem:[%s4973 + $0x3c] sm:$0xf]
  %v4998 = vunpack.c.l.b16 %v4827
  %v4999 = vunpack.c.l.b16 %v4828
  %v5000 = vunpack.c.l.b16 %v4829
  %v5001 = vunpack.c.l.b16 %v4830
  %v5002 = vunpack.c.l.b16 %v4831
  %v5003 = vunpack.c.l.b16 %v4832
  %v5004 = vunpack.c.l.b16 %v4833
  %v5005 = vunpack.c.l.b16 %v4834
  %v5006 = vrot.slane %v4999, 7
  %v5007 = vsel %vm3084, %v5006, %v4998
  %v5008 = vrot.slane %v5000, 6
  %v5009 = vsel %vm3087, %v5008, %v5007
  %v5010 = vrot.slane %v5001, 5
  %v5011 = vsel %vm3090, %v5010, %v5009
  %v5012 = vrot.slane %v5002, 4
  %v5013 = vsel %vm3093, %v5012, %v5011
  %v5014 = vrot.slane %v5003, 3
  %v5015 = vsel %vm3096, %v5014, %v5013
  %v5016 = vrot.slane %v5004, 2
  %v5017 = vsel %vm3099, %v5016, %v5015
  %v5018 = vrot.slane %v5005, 1
  %v5019 = vsel %vm3102, %v5018, %v5017
  %v5020 = vpack.c.b16 %v5019, %v5019
  %v5038 = vunpack.c.l.b16 %v4974
  %v5039 = vunpack.c.l.b16 %v4975
  %v5040 = vunpack.c.l.b16 %v4976
  %v5041 = vunpack.c.l.b16 %v4977
  %v5042 = vunpack.c.l.b16 %v4978
  %v5043 = vunpack.c.l.b16 %v4979
  %v5044 = vunpack.c.l.b16 %v4980
  %v5045 = vunpack.c.l.b16 %v4981
  %v5046 = vunpack.c.l.b16 %v4982
  %v5047 = vunpack.c.l.b16 %v4983
  %v5048 = vunpack.c.l.b16 %v4984
  %v5049 = vunpack.c.l.b16 %v4985
  %v5050 = vunpack.c.l.b16 %v4986
  %v5051 = vunpack.c.l.b16 %v4987
  %v5052 = vunpack.c.l.b16 %v4988
  %v5053 = vunpack.c.l.b16 %v4989
  %v5054 = vpack.c.b16 %v5039, %v5038
  %v5055 = vpack.c.b16 %v5041, %v5040
  %v5056 = vpack.c.b16 %v5043, %v5042
  %v5057 = vpack.c.b16 %v5045, %v5044
  %v5058 = vpack.c.b16 %v5047, %v5046
  %v5059 = vpack.c.b16 %v5049, %v5048
  %v5060 = vpack.c.b16 %v5051, %v5050
  %v5061 = vpack.c.b16 %v5053, %v5052
  %5070 = vmatprep.subr.bf16.mxu0 0
  %5071 = vmatpush1.bf16.msra.mxu0 %v5054
  %5072 = vmatprep.subr.bf16.mxu0 0
  %5073 = vmatpush1.bf16.msra.mxu0 %v5055
  %5074 = vmatprep.subr.bf16.mxu0 0
  %5075 = vmatpush1.bf16.msra.mxu0 %v5056
  %5076 = vmatprep.subr.bf16.mxu0 0
  %5077 = vmatpush1.bf16.msra.mxu0 %v5057
  %5078 = vmatprep.subr.bf16.mxu0 0
  %5079 = vmatpush1.bf16.msra.mxu0 %v5058
  %5080 = vmatprep.subr.bf16.mxu0 0
  %5081 = vmatpush1.bf16.msra.mxu0 %v5059
  %5082 = vmatprep.subr.bf16.mxu0 0
  %5083 = vmatpush1.bf16.msra.mxu0 %v5060
  %5084 = vmatprep.subr.bf16.mxu0 0
  %5085 = vmatpush1.bf16.msra.mxu0 %v5061
  %5086 = vmatprep.subr.bf16.mxu0 0
  %5087 = vmatpush1.bf16.msra.mxu0 0
  %5088 = vmatprep.subr.bf16.mxu0 0
  %5089 = vmatpush1.bf16.msra.mxu0 0
  %5090 = vmatprep.subr.bf16.mxu0 0
  %5091 = vmatpush1.bf16.msra.mxu0 0
  %5092 = vmatprep.subr.bf16.mxu0 0
  %5093 = vmatpush1.bf16.msra.mxu0 0
  %5094 = vmatprep.subr.bf16.mxu0 0
  %5095 = vmatpush1.bf16.msra.mxu0 0
  %5096 = vmatprep.subr.bf16.mxu0 0
  %5097 = vmatpush1.bf16.msra.mxu0 0
  %5098 = vmatprep.subr.bf16.mxu0 0
  %5099 = vmatpush1.bf16.msra.mxu0 0
  %5100 = vmatprep.subr.bf16.mxu0 0
  %5101 = vmatpush1.bf16.msra.mxu0 0
  %5102 = vmatprep.mubr.bf16.mxu0 0
  %5103 = vmatmul.mubr.bf16.gmra.mrb[0].mxu0 %v5020
  %v5104 = vpop.f32.mrb[0].mxu0
  %v5105 = vadd.f32 0.0, %v5104
  %v5106 = vpop.f32.mrb[0].mxu0
  %v5107 = vpop.f32.mrb[0].mxu0
  %v5108 = vpop.f32.mrb[0].mxu0
  %5109 = vdwg.mxu0
  %v5110 = vadd.f32 %v4802, %v5105
  %v5111 = vld [vmem:[#allocation4 + $0x7] sm:$0x1]
  %v5112 = vld [vmem:[#allocation4 + $0x17] sm:$0x1]
  %v5113 = vld [vmem:[#allocation4 + $0x27] sm:$0x1]
  %v5114 = vld [vmem:[#allocation4 + $0x37] sm:$0x1]
  %v5115 = vld [vmem:[#allocation4 + $0x47] sm:$0x1]
  %v5116 = vld [vmem:[#allocation4 + $0x57] sm:$0x1]
  %v5117 = vld [vmem:[#allocation4 + $0x67] sm:$0x1]
  %v5118 = vld [vmem:[#allocation4 + $0x77] sm:$0x1]
  %v5119 = vpack.c.bf16 %v5111, %v5111
  %v5120 = vpack.c.bf16 %v5112, %v5112
  %v5121 = vpack.c.bf16 %v5113, %v5113
  %v5122 = vpack.c.bf16 %v5114, %v5114
  %v5123 = vpack.c.bf16 %v5115, %v5115
  %v5124 = vpack.c.bf16 %v5116, %v5116
  %v5125 = vpack.c.bf16 %v5117, %v5117
  %v5126 = vpack.c.bf16 %v5118, %v5118
  %v5127 = vld [vmem:[#allocation3 + $0x7] sm:$0x1]
  %v5128 = vld [vmem:[#allocation3 + $0x17] sm:$0x1]
  %v5129 = vld [vmem:[#allocation3 + $0x27] sm:$0x1]
  %v5130 = vld [vmem:[#allocation3 + $0x37] sm:$0x1]
  %v5131 = vld [vmem:[#allocation3 + $0x47] sm:$0x1]
  %v5132 = vld [vmem:[#allocation3 + $0x57] sm:$0x1]
  %v5133 = vld [vmem:[#allocation3 + $0x67] sm:$0x1]
  %v5134 = vld [vmem:[#allocation3 + $0x77] sm:$0x1]
  %v5135 = vpack.c.bf16 %v5127, %v5127
  %v5136 = vpack.c.bf16 %v5128, %v5128
  %v5137 = vpack.c.bf16 %v5129, %v5129
  %v5138 = vpack.c.bf16 %v5130, %v5130
  %v5139 = vpack.c.bf16 %v5131, %v5131
  %v5140 = vpack.c.bf16 %v5132, %v5132
  %v5141 = vpack.c.bf16 %v5133, %v5133
  %v5142 = vpack.c.bf16 %v5134, %v5134
  %s5143 = scalar_lea.vmem %s9, 448
  %v5144 = vld [vmem:[%s5143] sm:$0xf]
  %v5145 = vld [vmem:[%s5143 + $0x4] sm:$0xf]
  %v5146 = vld [vmem:[%s5143 + $0x8] sm:$0xf]
  %v5147 = vld [vmem:[%s5143 + $0xc] sm:$0xf]
  %v5148 = vld [vmem:[%s5143 + $0x10] sm:$0xf]
  %v5149 = vld [vmem:[%s5143 + $0x14] sm:$0xf]
  %v5150 = vld [vmem:[%s5143 + $0x18] sm:$0xf]
  %v5151 = vld [vmem:[%s5143 + $0x1c] sm:$0xf]
  %v5152 = vld [vmem:[%s5143 + $0x20] sm:$0xf]
  %v5153 = vld [vmem:[%s5143 + $0x24] sm:$0xf]
  %v5154 = vld [vmem:[%s5143 + $0x28] sm:$0xf]
  %v5155 = vld [vmem:[%s5143 + $0x2c] sm:$0xf]
  %v5156 = vld [vmem:[%s5143 + $0x30] sm:$0xf]
  %v5157 = vld [vmem:[%s5143 + $0x34] sm:$0xf]
  %v5158 = vld [vmem:[%s5143 + $0x38] sm:$0xf]
  %v5159 = vld [vmem:[%s5143 + $0x3c] sm:$0xf]
  %v5168 = vunpack.c.l.b16 %v5119
  %v5169 = vunpack.c.l.b16 %v5120
  %v5170 = vunpack.c.l.b16 %v5121
  %v5171 = vunpack.c.l.b16 %v5122
  %v5172 = vunpack.c.l.b16 %v5123
  %v5173 = vunpack.c.l.b16 %v5124
  %v5174 = vunpack.c.l.b16 %v5125
  %v5175 = vunpack.c.l.b16 %v5126
  %v5176 = vrot.slane %v5169, 7
  %v5177 = vsel %vm3084, %v5176, %v5168
  %v5178 = vrot.slane %v5170, 6
  %v5179 = vsel %vm3087, %v5178, %v5177
  %v5180 = vrot.slane %v5171, 5
  %v5181 = vsel %vm3090, %v5180, %v5179
  %v5182 = vrot.slane %v5172, 4
  %v5183 = vsel %vm3093, %v5182, %v5181
  %v5184 = vrot.slane %v5173, 3
  %v5185 = vsel %vm3096, %v5184, %v5183
  %v5186 = vrot.slane %v5174, 2
  %v5187 = vsel %vm3099, %v5186, %v5185
  %v5188 = vrot.slane %v5175, 1
  %v5189 = vsel %vm3102, %v5188, %v5187
  %v5190 = vpack.c.b16 %v5189, %v5189
  %v5208 = vunpack.c.l.b16 %v5144
  %v5209 = vunpack.c.l.b16 %v5145
  %v5210 = vunpack.c.l.b16 %v5146
  %v5211 = vunpack.c.l.b16 %v5147
  %v5212 = vunpack.c.l.b16 %v5148
  %v5213 = vunpack.c.l.b16 %v5149
  %v5214 = vunpack.c.l.b16 %v5150
  %v5215 = vunpack.c.l.b16 %v5151
  %v5216 = vunpack.c.l.b16 %v5152
  %v5217 = vunpack.c.l.b16 %v5153
  %v5218 = vunpack.c.l.b16 %v5154
  %v5219 = vunpack.c.l.b16 %v5155
  %v5220 = vunpack.c.l.b16 %v5156
  %v5221 = vunpack.c.l.b16 %v5157
  %v5222 = vunpack.c.l.b16 %v5158
  %v5223 = vunpack.c.l.b16 %v5159
  %v5224 = vpack.c.b16 %v5209, %v5208
  %v5225 = vpack.c.b16 %v5211, %v5210
  %v5226 = vpack.c.b16 %v5213, %v5212
  %v5227 = vpack.c.b16 %v5215, %v5214
  %v5228 = vpack.c.b16 %v5217, %v5216
  %v5229 = vpack.c.b16 %v5219, %v5218
  %v5230 = vpack.c.b16 %v5221, %v5220
  %v5231 = vpack.c.b16 %v5223, %v5222
  %5240 = vmatprep.subr.bf16.mxu0 0
  %5241 = vmatpush1.bf16.msra.mxu0 %v5224
  %5242 = vmatprep.subr.bf16.mxu0 0
  %5243 = vmatpush1.bf16.msra.mxu0 %v5225
  %5244 = vmatprep.subr.bf16.mxu0 0
  %5245 = vmatpush1.bf16.msra.mxu0 %v5226
  %5246 = vmatprep.subr.bf16.mxu0 0
  %5247 = vmatpush1.bf16.msra.mxu0 %v5227
  %5248 = vmatprep.subr.bf16.mxu0 0
  %5249 = vmatpush1.bf16.msra.mxu0 %v5228
  %5250 = vmatprep.subr.bf16.mxu0 0
  %5251 = vmatpush1.bf16.msra.mxu0 %v5229
  %5252 = vmatprep.subr.bf16.mxu0 0
  %5253 = vmatpush1.bf16.msra.mxu0 %v5230
  %5254 = vmatprep.subr.bf16.mxu0 0
  %5255 = vmatpush1.bf16.msra.mxu0 %v5231
  %5256 = vmatprep.subr.bf16.mxu0 0
  %5257 = vmatpush1.bf16.msra.mxu0 0
  %5258 = vmatprep.subr.bf16.mxu0 0
  %5259 = vmatpush1.bf16.msra.mxu0 0
  %5260 = vmatprep.subr.bf16.mxu0 0
  %5261 = vmatpush1.bf16.msra.mxu0 0
  %5262 = vmatprep.subr.bf16.mxu0 0
  %5263 = vmatpush1.bf16.msra.mxu0 0
  %5264 = vmatprep.subr.bf16.mxu0 0
  %5265 = vmatpush1.bf16.msra.mxu0 0
  %5266 = vmatprep.subr.bf16.mxu0 0
  %5267 = vmatpush1.bf16.msra.mxu0 0
  %5268 = vmatprep.subr.bf16.mxu0 0
  %5269 = vmatpush1.bf16.msra.mxu0 0
  %5270 = vmatprep.subr.bf16.mxu0 0
  %5271 = vmatpush1.bf16.msra.mxu0 0
  %5272 = vmatprep.mubr.bf16.mxu0 0
  %5273 = vmatmul.mubr.bf16.gmra.mrb[0].mxu0 %v5190
  %v5274 = vpop.f32.mrb[0].mxu0
  %v5275 = vadd.f32 0.0, %v5274
  %v5276 = vpop.f32.mrb[0].mxu0
  %v5277 = vpop.f32.mrb[0].mxu0
  %v5278 = vpop.f32.mrb[0].mxu0
  %5279 = vdwg.mxu0
  %v5280 = vadd.f32 %v4972, %v5275
  %s5281 = scalar_lea.vmem %s10, 448
  %v5282 = vld [vmem:[%s5281] sm:$0xf]
  %v5283 = vld [vmem:[%s5281 + $0x4] sm:$0xf]
  %v5284 = vld [vmem:[%s5281 + $0x8] sm:$0xf]
  %v5285 = vld [vmem:[%s5281 + $0xc] sm:$0xf]
  %v5286 = vld [vmem:[%s5281 + $0x10] sm:$0xf]
  %v5287 = vld [vmem:[%s5281 + $0x14] sm:$0xf]
  %v5288 = vld [vmem:[%s5281 + $0x18] sm:$0xf]
  %v5289 = vld [vmem:[%s5281 + $0x1c] sm:$0xf]
  %v5290 = vld [vmem:[%s5281 + $0x20] sm:$0xf]
  %v5291 = vld [vmem:[%s5281 + $0x24] sm:$0xf]
  %v5292 = vld [vmem:[%s5281 + $0x28] sm:$0xf]
  %v5293 = vld [vmem:[%s5281 + $0x2c] sm:$0xf]
  %v5294 = vld [vmem:[%s5281 + $0x30] sm:$0xf]
  %v5295 = vld [vmem:[%s5281 + $0x34] sm:$0xf]
  %v5296 = vld [vmem:[%s5281 + $0x38] sm:$0xf]
  %v5297 = vld [vmem:[%s5281 + $0x3c] sm:$0xf]
  %v5306 = vunpack.c.l.b16 %v5135
  %v5307 = vunpack.c.l.b16 %v5136
  %v5308 = vunpack.c.l.b16 %v5137
  %v5309 = vunpack.c.l.b16 %v5138
  %v5310 = vunpack.c.l.b16 %v5139
  %v5311 = vunpack.c.l.b16 %v5140
  %v5312 = vunpack.c.l.b16 %v5141
  %v5313 = vunpack.c.l.b16 %v5142
  %v5314 = vrot.slane %v5307, 7
  %v5315 = vsel %vm3084, %v5314, %v5306
  %v5316 = vrot.slane %v5308, 6
  %v5317 = vsel %vm3087, %v5316, %v5315
  %v5318 = vrot.slane %v5309, 5
  %v5319 = vsel %vm3090, %v5318, %v5317
  %v5320 = vrot.slane %v5310, 4
  %v5321 = vsel %vm3093, %v5320, %v5319
  %v5322 = vrot.slane %v5311, 3
  %v5323 = vsel %vm3096, %v5322, %v5321
  %v5324 = vrot.slane %v5312, 2
  %v5325 = vsel %vm3099, %v5324, %v5323
  %v5326 = vrot.slane %v5313, 1
  %v5327 = vsel %vm3102, %v5326, %v5325
  %v5328 = vpack.c.b16 %v5327, %v5327
  %v5346 = vunpack.c.l.b16 %v5282
  %v5347 = vunpack.c.l.b16 %v5283
  %v5348 = vunpack.c.l.b16 %v5284
  %v5349 = vunpack.c.l.b16 %v5285
  %v5350 = vunpack.c.l.b16 %v5286
  %v5351 = vunpack.c.l.b16 %v5287
  %v5352 = vunpack.c.l.b16 %v5288
  %v5353 = vunpack.c.l.b16 %v5289
  %v5354 = vunpack.c.l.b16 %v5290
  %v5355 = vunpack.c.l.b16 %v5291
  %v5356 = vunpack.c.l.b16 %v5292
  %v5357 = vunpack.c.l.b16 %v5293
  %v5358 = vunpack.c.l.b16 %v5294
  %v5359 = vunpack.c.l.b16 %v5295
  %v5360 = vunpack.c.l.b16 %v5296
  %v5361 = vunpack.c.l.b16 %v5297
  %v5362 = vpack.c.b16 %v5347, %v5346
  %v5363 = vpack.c.b16 %v5349, %v5348
  %v5364 = vpack.c.b16 %v5351, %v5350
  %v5365 = vpack.c.b16 %v5353, %v5352
  %v5366 = vpack.c.b16 %v5355, %v5354
  %v5367 = vpack.c.b16 %v5357, %v5356
  %v5368 = vpack.c.b16 %v5359, %v5358
  %v5369 = vpack.c.b16 %v5361, %v5360
  %5378 = vmatprep.subr.bf16.mxu0 0
  %5379 = vmatpush1.bf16.msra.mxu0 %v5362
  %5380 = vmatprep.subr.bf16.mxu0 0
  %5381 = vmatpush1.bf16.msra.mxu0 %v5363
  %5382 = vmatprep.subr.bf16.mxu0 0
  %5383 = vmatpush1.bf16.msra.mxu0 %v5364
  %5384 = vmatprep.subr.bf16.mxu0 0
  %5385 = vmatpush1.bf16.msra.mxu0 %v5365
  %5386 = vmatprep.subr.bf16.mxu0 0
  %5387 = vmatpush1.bf16.msra.mxu0 %v5366
  %5388 = vmatprep.subr.bf16.mxu0 0
  %5389 = vmatpush1.bf16.msra.mxu0 %v5367
  %5390 = vmatprep.subr.bf16.mxu0 0
  %5391 = vmatpush1.bf16.msra.mxu0 %v5368
  %5392 = vmatprep.subr.bf16.mxu0 0
  %5393 = vmatpush1.bf16.msra.mxu0 %v5369
  %5394 = vmatprep.subr.bf16.mxu0 0
  %5395 = vmatpush1.bf16.msra.mxu0 0
  %5396 = vmatprep.subr.bf16.mxu0 0
  %5397 = vmatpush1.bf16.msra.mxu0 0
  %5398 = vmatprep.subr.bf16.mxu0 0
  %5399 = vmatpush1.bf16.msra.mxu0 0
  %5400 = vmatprep.subr.bf16.mxu0 0
  %5401 = vmatpush1.bf16.msra.mxu0 0
  %5402 = vmatprep.subr.bf16.mxu0 0
  %5403 = vmatpush1.bf16.msra.mxu0 0
  %5404 = vmatprep.subr.bf16.mxu0 0
  %5405 = vmatpush1.bf16.msra.mxu0 0
  %5406 = vmatprep.subr.bf16.mxu0 0
  %5407 = vmatpush1.bf16.msra.mxu0 0
  %5408 = vmatprep.subr.bf16.mxu0 0
  %5409 = vmatpush1.bf16.msra.mxu0 0
  %5410 = vmatprep.mubr.bf16.mxu0 0
  %5411 = vmatmul.mubr.bf16.gmra.mrb[0].mxu0 %v5328
  %v5412 = vpop.f32.mrb[0].mxu0
  %v5413 = vadd.f32 0.0, %v5412
  %v5414 = vpop.f32.mrb[0].mxu0
  %v5415 = vpop.f32.mrb[0].mxu0
  %v5416 = vpop.f32.mrb[0].mxu0
  %5417 = vdwg.mxu0
  %v5418 = vadd.f32 %v5110, %v5413
  %v5419 = vld [vmem:[#allocation4 + $0x8] sm:$0x1]
  %v5420 = vld [vmem:[#allocation4 + $0x18] sm:$0x1]
  %v5421 = vld [vmem:[#allocation4 + $0x28] sm:$0x1]
  %v5422 = vld [vmem:[#allocation4 + $0x38] sm:$0x1]
  %v5423 = vld [vmem:[#allocation4 + $0x48] sm:$0x1]
  %v5424 = vld [vmem:[#allocation4 + $0x58] sm:$0x1]
  %v5425 = vld [vmem:[#allocation4 + $0x68] sm:$0x1]
  %v5426 = vld [vmem:[#allocation4 + $0x78] sm:$0x1]
  %v5427 = vpack.c.bf16 %v5419, %v5419
  %v5428 = vpack.c.bf16 %v5420, %v5420
  %v5429 = vpack.c.bf16 %v5421, %v5421
  %v5430 = vpack.c.bf16 %v5422, %v5422
  %v5431 = vpack.c.bf16 %v5423, %v5423
  %v5432 = vpack.c.bf16 %v5424, %v5424
  %v5433 = vpack.c.bf16 %v5425, %v5425
  %v5434 = vpack.c.bf16 %v5426, %v5426
  %v5435 = vld [vmem:[#allocation3 + $0x8] sm:$0x1]
  %v5436 = vld [vmem:[#allocation3 + $0x18] sm:$0x1]
  %v5437 = vld [vmem:[#allocation3 + $0x28] sm:$0x1]
  %v5438 = vld [vmem:[#allocation3 + $0x38] sm:$0x1]
  %v5439 = vld [vmem:[#allocation3 + $0x48] sm:$0x1]
  %v5440 = vld [vmem:[#allocation3 + $0x58] sm:$0x1]
  %v5441 = vld [vmem:[#allocation3 + $0x68] sm:$0x1]
  %v5442 = vld [vmem:[#allocation3 + $0x78] sm:$0x1]
  %v5443 = vpack.c.bf16 %v5435, %v5435
  %v5444 = vpack.c.bf16 %v5436, %v5436
  %v5445 = vpack.c.bf16 %v5437, %v5437
  %v5446 = vpack.c.bf16 %v5438, %v5438
  %v5447 = vpack.c.bf16 %v5439, %v5439
  %v5448 = vpack.c.bf16 %v5440, %v5440
  %v5449 = vpack.c.bf16 %v5441, %v5441
  %v5450 = vpack.c.bf16 %v5442, %v5442
  %s5451 = scalar_lea.vmem %s9, 512
  %v5452 = vld [vmem:[%s5451] sm:$0xf]
  %v5453 = vld [vmem:[%s5451 + $0x4] sm:$0xf]
  %v5454 = vld [vmem:[%s5451 + $0x8] sm:$0xf]
  %v5455 = vld [vmem:[%s5451 + $0xc] sm:$0xf]
  %v5456 = vld [vmem:[%s5451 + $0x10] sm:$0xf]
  %v5457 = vld [vmem:[%s5451 + $0x14] sm:$0xf]
  %v5458 = vld [vmem:[%s5451 + $0x18] sm:$0xf]
  %v5459 = vld [vmem:[%s5451 + $0x1c] sm:$0xf]
  %v5460 = vld [vmem:[%s5451 + $0x20] sm:$0xf]
  %v5461 = vld [vmem:[%s5451 + $0x24] sm:$0xf]
  %v5462 = vld [vmem:[%s5451 + $0x28] sm:$0xf]
  %v5463 = vld [vmem:[%s5451 + $0x2c] sm:$0xf]
  %v5464 = vld [vmem:[%s5451 + $0x30] sm:$0xf]
  %v5465 = vld [vmem:[%s5451 + $0x34] sm:$0xf]
  %v5466 = vld [vmem:[%s5451 + $0x38] sm:$0xf]
  %v5467 = vld [vmem:[%s5451 + $0x3c] sm:$0xf]
  %v5476 = vunpack.c.l.b16 %v5427
  %v5477 = vunpack.c.l.b16 %v5428
  %v5478 = vunpack.c.l.b16 %v5429
  %v5479 = vunpack.c.l.b16 %v5430
  %v5480 = vunpack.c.l.b16 %v5431
  %v5481 = vunpack.c.l.b16 %v5432
  %v5482 = vunpack.c.l.b16 %v5433
  %v5483 = vunpack.c.l.b16 %v5434
  %v5484 = vrot.slane %v5477, 7
  %v5485 = vsel %vm3084, %v5484, %v5476
  %v5486 = vrot.slane %v5478, 6
  %v5487 = vsel %vm3087, %v5486, %v5485
  %v5488 = vrot.slane %v5479, 5
  %v5489 = vsel %vm3090, %v5488, %v5487
  %v5490 = vrot.slane %v5480, 4
  %v5491 = vsel %vm3093, %v5490, %v5489
  %v5492 = vrot.slane %v5481, 3
  %v5493 = vsel %vm3096, %v5492, %v5491
  %v5494 = vrot.slane %v5482, 2
  %v5495 = vsel %vm3099, %v5494, %v5493
  %v5496 = vrot.slane %v5483, 1
  %v5497 = vsel %vm3102, %v5496, %v5495
  %v5498 = vpack.c.b16 %v5497, %v5497
  %v5516 = vunpack.c.l.b16 %v5452
  %v5517 = vunpack.c.l.b16 %v5453
  %v5518 = vunpack.c.l.b16 %v5454
  %v5519 = vunpack.c.l.b16 %v5455
  %v5520 = vunpack.c.l.b16 %v5456
  %v5521 = vunpack.c.l.b16 %v5457
  %v5522 = vunpack.c.l.b16 %v5458
  %v5523 = vunpack.c.l.b16 %v5459
  %v5524 = vunpack.c.l.b16 %v5460
  %v5525 = vunpack.c.l.b16 %v5461
  %v5526 = vunpack.c.l.b16 %v5462
  %v5527 = vunpack.c.l.b16 %v5463
  %v5528 = vunpack.c.l.b16 %v5464
  %v5529 = vunpack.c.l.b16 %v5465
  %v5530 = vunpack.c.l.b16 %v5466
  %v5531 = vunpack.c.l.b16 %v5467
  %v5532 = vpack.c.b16 %v5517, %v5516
  %v5533 = vpack.c.b16 %v5519, %v5518
  %v5534 = vpack.c.b16 %v5521, %v5520
  %v5535 = vpack.c.b16 %v5523, %v5522
  %v5536 = vpack.c.b16 %v5525, %v5524
  %v5537 = vpack.c.b16 %v5527, %v5526
  %v5538 = vpack.c.b16 %v5529, %v5528
  %v5539 = vpack.c.b16 %v5531, %v5530
  %5548 = vmatprep.subr.bf16.mxu0 0
  %5549 = vmatpush1.bf16.msra.mxu0 %v5532
  %5550 = vmatprep.subr.bf16.mxu0 0
  %5551 = vmatpush1.bf16.msra.mxu0 %v5533
  %5552 = vmatprep.subr.bf16.mxu0 0
  %5553 = vmatpush1.bf16.msra.mxu0 %v5534
  %5554 = vmatprep.subr.bf16.mxu0 0
  %5555 = vmatpush1.bf16.msra.mxu0 %v5535
  %5556 = vmatprep.subr.bf16.mxu0 0
  %5557 = vmatpush1.bf16.msra.mxu0 %v5536
  %5558 = vmatprep.subr.bf16.mxu0 0
  %5559 = vmatpush1.bf16.msra.mxu0 %v5537
  %5560 = vmatprep.subr.bf16.mxu0 0
  %5561 = vmatpush1.bf16.msra.mxu0 %v5538
  %5562 = vmatprep.subr.bf16.mxu0 0
  %5563 = vmatpush1.bf16.msra.mxu0 %v5539
  %5564 = vmatprep.subr.bf16.mxu0 0
  %5565 = vmatpush1.bf16.msra.mxu0 0
  %5566 = vmatprep.subr.bf16.mxu0 0
  %5567 = vmatpush1.bf16.msra.mxu0 0
  %5568 = vmatprep.subr.bf16.mxu0 0
  %5569 = vmatpush1.bf16.msra.mxu0 0
  %5570 = vmatprep.subr.bf16.mxu0 0
  %5571 = vmatpush1.bf16.msra.mxu0 0
  %5572 = vmatprep.subr.bf16.mxu0 0
  %5573 = vmatpush1.bf16.msra.mxu0 0
  %5574 = vmatprep.subr.bf16.mxu0 0
  %5575 = vmatpush1.bf16.msra.mxu0 0
  %5576 = vmatprep.subr.bf16.mxu0 0
  %5577 = vmatpush1.bf16.msra.mxu0 0
  %5578 = vmatprep.subr.bf16.mxu0 0
  %5579 = vmatpush1.bf16.msra.mxu0 0
  %5580 = vmatprep.mubr.bf16.mxu0 0
  %5581 = vmatmul.mubr.bf16.gmra.mrb[0].mxu0 %v5498
  %v5582 = vpop.f32.mrb[0].mxu0
  %v5583 = vadd.f32 0.0, %v5582
  %v5584 = vpop.f32.mrb[0].mxu0
  %v5585 = vpop.f32.mrb[0].mxu0
  %v5586 = vpop.f32.mrb[0].mxu0
  %5587 = vdwg.mxu0
  %v5588 = vadd.f32 %v5280, %v5583
  %s5589 = scalar_lea.vmem %s10, 512
  %v5590 = vld [vmem:[%s5589] sm:$0xf]
  %v5591 = vld [vmem:[%s5589 + $0x4] sm:$0xf]
  %v5592 = vld [vmem:[%s5589 + $0x8] sm:$0xf]
  %v5593 = vld [vmem:[%s5589 + $0xc] sm:$0xf]
  %v5594 = vld [vmem:[%s5589 + $0x10] sm:$0xf]
  %v5595 = vld [vmem:[%s5589 + $0x14] sm:$0xf]
  %v5596 = vld [vmem:[%s5589 + $0x18] sm:$0xf]
  %v5597 = vld [vmem:[%s5589 + $0x1c] sm:$0xf]
  %v5598 = vld [vmem:[%s5589 + $0x20] sm:$0xf]
  %v5599 = vld [vmem:[%s5589 + $0x24] sm:$0xf]
  %v5600 = vld [vmem:[%s5589 + $0x28] sm:$0xf]
  %v5601 = vld [vmem:[%s5589 + $0x2c] sm:$0xf]
  %v5602 = vld [vmem:[%s5589 + $0x30] sm:$0xf]
  %v5603 = vld [vmem:[%s5589 + $0x34] sm:$0xf]
  %v5604 = vld [vmem:[%s5589 + $0x38] sm:$0xf]
  %v5605 = vld [vmem:[%s5589 + $0x3c] sm:$0xf]
  %v5614 = vunpack.c.l.b16 %v5443
  %v5615 = vunpack.c.l.b16 %v5444
  %v5616 = vunpack.c.l.b16 %v5445
  %v5617 = vunpack.c.l.b16 %v5446
  %v5618 = vunpack.c.l.b16 %v5447
  %v5619 = vunpack.c.l.b16 %v5448
  %v5620 = vunpack.c.l.b16 %v5449
  %v5621 = vunpack.c.l.b16 %v5450
  %v5622 = vrot.slane %v5615, 7
  %v5623 = vsel %vm3084, %v5622, %v5614
  %v5624 = vrot.slane %v5616, 6
  %v5625 = vsel %vm3087, %v5624, %v5623
  %v5626 = vrot.slane %v5617, 5
  %v5627 = vsel %vm3090, %v5626, %v5625
  %v5628 = vrot.slane %v5618, 4
  %v5629 = vsel %vm3093, %v5628, %v5627
  %v5630 = vrot.slane %v5619, 3
  %v5631 = vsel %vm3096, %v5630, %v5629
  %v5632 = vrot.slane %v5620, 2
  %v5633 = vsel %vm3099, %v5632, %v5631
  %v5634 = vrot.slane %v5621, 1
  %v5635 = vsel %vm3102, %v5634, %v5633
  %v5636 = vpack.c.b16 %v5635, %v5635
  %v5654 = vunpack.c.l.b16 %v5590
  %v5655 = vunpack.c.l.b16 %v5591
  %v5656 = vunpack.c.l.b16 %v5592
  %v5657 = vunpack.c.l.b16 %v5593
  %v5658 = vunpack.c.l.b16 %v5594
  %v5659 = vunpack.c.l.b16 %v5595
  %v5660 = vunpack.c.l.b16 %v5596
  %v5661 = vunpack.c.l.b16 %v5597
  %v5662 = vunpack.c.l.b16 %v5598
  %v5663 = vunpack.c.l.b16 %v5599
  %v5664 = vunpack.c.l.b16 %v5600
  %v5665 = vunpack.c.l.b16 %v5601
  %v5666 = vunpack.c.l.b16 %v5602
  %v5667 = vunpack.c.l.b16 %v5603
  %v5668 = vunpack.c.l.b16 %v5604
  %v5669 = vunpack.c.l.b16 %v5605
  %v5670 = vpack.c.b16 %v5655, %v5654
  %v5671 = vpack.c.b16 %v5657, %v5656
  %v5672 = vpack.c.b16 %v5659, %v5658
  %v5673 = vpack.c.b16 %v5661, %v5660
  %v5674 = vpack.c.b16 %v5663, %v5662
  %v5675 = vpack.c.b16 %v5665, %v5664
  %v5676 = vpack.c.b16 %v5667, %v5666
  %v5677 = vpack.c.b16 %v5669, %v5668
  %5686 = vmatprep.subr.bf16.mxu0 0
  %5687 = vmatpush1.bf16.msra.mxu0 %v5670
  %5688 = vmatprep.subr.bf16.mxu0 0
  %5689 = vmatpush1.bf16.msra.mxu0 %v5671
  %5690 = vmatprep.subr.bf16.mxu0 0
  %5691 = vmatpush1.bf16.msra.mxu0 %v5672
  %5692 = vmatprep.subr.bf16.mxu0 0
  %5693 = vmatpush1.bf16.msra.mxu0 %v5673
  %5694 = vmatprep.subr.bf16.mxu0 0
  %5695 = vmatpush1.bf16.msra.mxu0 %v5674
  %5696 = vmatprep.subr.bf16.mxu0 0
  %5697 = vmatpush1.bf16.msra.mxu0 %v5675
  %5698 = vmatprep.subr.bf16.mxu0 0
  %5699 = vmatpush1.bf16.msra.mxu0 %v5676
  %5700 = vmatprep.subr.bf16.mxu0 0
  %5701 = vmatpush1.bf16.msra.mxu0 %v5677
  %5702 = vmatprep.subr.bf16.mxu0 0
  %5703 = vmatpush1.bf16.msra.mxu0 0
  %5704 = vmatprep.subr.bf16.mxu0 0
  %5705 = vmatpush1.bf16.msra.mxu0 0
  %5706 = vmatprep.subr.bf16.mxu0 0
  %5707 = vmatpush1.bf16.msra.mxu0 0
  %5708 = vmatprep.subr.bf16.mxu0 0
  %5709 = vmatpush1.bf16.msra.mxu0 0
  %5710 = vmatprep.subr.bf16.mxu0 0
  %5711 = vmatpush1.bf16.msra.mxu0 0
  %5712 = vmatprep.subr.bf16.mxu0 0
  %5713 = vmatpush1.bf16.msra.mxu0 0
  %5714 = vmatprep.subr.bf16.mxu0 0
  %5715 = vmatpush1.bf16.msra.mxu0 0
  %5716 = vmatprep.subr.bf16.mxu0 0
  %5717 = vmatpush1.bf16.msra.mxu0 0
  %5718 = vmatprep.mubr.bf16.mxu0 0
  %5719 = vmatmul.mubr.bf16.gmra.mrb[0].mxu0 %v5636
  %v5720 = vpop.f32.mrb[0].mxu0
  %v5721 = vadd.f32 0.0, %v5720
  %v5722 = vpop.f32.mrb[0].mxu0
  %v5723 = vpop.f32.mrb[0].mxu0
  %v5724 = vpop.f32.mrb[0].mxu0
  %5725 = vdwg.mxu0
  %v5726 = vadd.f32 %v5418, %v5721
  %v5727 = vld [vmem:[#allocation4 + $0x9] sm:$0x1]
  %v5728 = vld [vmem:[#allocation4 + $0x19] sm:$0x1]
  %v5729 = vld [vmem:[#allocation4 + $0x29] sm:$0x1]
  %v5730 = vld [vmem:[#allocation4 + $0x39] sm:$0x1]
  %v5731 = vld [vmem:[#allocation4 + $0x49] sm:$0x1]
  %v5732 = vld [vmem:[#allocation4 + $0x59] sm:$0x1]
  %v5733 = vld [vmem:[#allocation4 + $0x69] sm:$0x1]
  %v5734 = vld [vmem:[#allocation4 + $0x79] sm:$0x1]
  %v5735 = vpack.c.bf16 %v5727, %v5727
  %v5736 = vpack.c.bf16 %v5728, %v5728
  %v5737 = vpack.c.bf16 %v5729, %v5729
  %v5738 = vpack.c.bf16 %v5730, %v5730
  %v5739 = vpack.c.bf16 %v5731, %v5731
  %v5740 = vpack.c.bf16 %v5732, %v5732
  %v5741 = vpack.c.bf16 %v5733, %v5733
  %v5742 = vpack.c.bf16 %v5734, %v5734
  %v5743 = vld [vmem:[#allocation3 + $0x9] sm:$0x1]
  %v5744 = vld [vmem:[#allocation3 + $0x19] sm:$0x1]
  %v5745 = vld [vmem:[#allocation3 + $0x29] sm:$0x1]
  %v5746 = vld [vmem:[#allocation3 + $0x39] sm:$0x1]
  %v5747 = vld [vmem:[#allocation3 + $0x49] sm:$0x1]
  %v5748 = vld [vmem:[#allocation3 + $0x59] sm:$0x1]
  %v5749 = vld [vmem:[#allocation3 + $0x69] sm:$0x1]
  %v5750 = vld [vmem:[#allocation3 + $0x79] sm:$0x1]
  %v5751 = vpack.c.bf16 %v5743, %v5743
  %v5752 = vpack.c.bf16 %v5744, %v5744
  %v5753 = vpack.c.bf16 %v5745, %v5745
  %v5754 = vpack.c.bf16 %v5746, %v5746
  %v5755 = vpack.c.bf16 %v5747, %v5747
  %v5756 = vpack.c.bf16 %v5748, %v5748
  %v5757 = vpack.c.bf16 %v5749, %v5749
  %v5758 = vpack.c.bf16 %v5750, %v5750
  %s5759 = scalar_lea.vmem %s9, 576
  %v5760 = vld [vmem:[%s5759] sm:$0xf]
  %v5761 = vld [vmem:[%s5759 + $0x4] sm:$0xf]
  %v5762 = vld [vmem:[%s5759 + $0x8] sm:$0xf]
  %v5763 = vld [vmem:[%s5759 + $0xc] sm:$0xf]
  %v5764 = vld [vmem:[%s5759 + $0x10] sm:$0xf]
  %v5765 = vld [vmem:[%s5759 + $0x14] sm:$0xf]
  %v5766 = vld [vmem:[%s5759 + $0x18] sm:$0xf]
  %v5767 = vld [vmem:[%s5759 + $0x1c] sm:$0xf]
  %v5768 = vld [vmem:[%s5759 + $0x20] sm:$0xf]
  %v5769 = vld [vmem:[%s5759 + $0x24] sm:$0xf]
  %v5770 = vld [vmem:[%s5759 + $0x28] sm:$0xf]
  %v5771 = vld [vmem:[%s5759 + $0x2c] sm:$0xf]
  %v5772 = vld [vmem:[%s5759 + $0x30] sm:$0xf]
  %v5773 = vld [vmem:[%s5759 + $0x34] sm:$0xf]
  %v5774 = vld [vmem:[%s5759 + $0x38] sm:$0xf]
  %v5775 = vld [vmem:[%s5759 + $0x3c] sm:$0xf]
  %v5784 = vunpack.c.l.b16 %v5735
  %v5785 = vunpack.c.l.b16 %v5736
  %v5786 = vunpack.c.l.b16 %v5737
  %v5787 = vunpack.c.l.b16 %v5738
  %v5788 = vunpack.c.l.b16 %v5739
  %v5789 = vunpack.c.l.b16 %v5740
  %v5790 = vunpack.c.l.b16 %v5741
  %v5791 = vunpack.c.l.b16 %v5742
  %v5792 = vrot.slane %v5785, 7
  %v5793 = vsel %vm3084, %v5792, %v5784
  %v5794 = vrot.slane %v5786, 6
  %v5795 = vsel %vm3087, %v5794, %v5793
  %v5796 = vrot.slane %v5787, 5
  %v5797 = vsel %vm3090, %v5796, %v5795
  %v5798 = vrot.slane %v5788, 4
  %v5799 = vsel %vm3093, %v5798, %v5797
  %v5800 = vrot.slane %v5789, 3
  %v5801 = vsel %vm3096, %v5800, %v5799
  %v5802 = vrot.slane %v5790, 2
  %v5803 = vsel %vm3099, %v5802, %v5801
  %v5804 = vrot.slane %v5791, 1
  %v5805 = vsel %vm3102, %v5804, %v5803
  %v5806 = vpack.c.b16 %v5805, %v5805
  %v5824 = vunpack.c.l.b16 %v5760
  %v5825 = vunpack.c.l.b16 %v5761
  %v5826 = vunpack.c.l.b16 %v5762
  %v5827 = vunpack.c.l.b16 %v5763
  %v5828 = vunpack.c.l.b16 %v5764
  %v5829 = vunpack.c.l.b16 %v5765
  %v5830 = vunpack.c.l.b16 %v5766
  %v5831 = vunpack.c.l.b16 %v5767
  %v5832 = vunpack.c.l.b16 %v5768
  %v5833 = vunpack.c.l.b16 %v5769
  %v5834 = vunpack.c.l.b16 %v5770
  %v5835 = vunpack.c.l.b16 %v5771
  %v5836 = vunpack.c.l.b16 %v5772
  %v5837 = vunpack.c.l.b16 %v5773
  %v5838 = vunpack.c.l.b16 %v5774
  %v5839 = vunpack.c.l.b16 %v5775
  %v5840 = vpack.c.b16 %v5825, %v5824
  %v5841 = vpack.c.b16 %v5827, %v5826
  %v5842 = vpack.c.b16 %v5829, %v5828
  %v5843 = vpack.c.b16 %v5831, %v5830
  %v5844 = vpack.c.b16 %v5833, %v5832
  %v5845 = vpack.c.b16 %v5835, %v5834
  %v5846 = vpack.c.b16 %v5837, %v5836
  %v5847 = vpack.c.b16 %v5839, %v5838
  %5856 = vmatprep.subr.bf16.mxu0 0
  %5857 = vmatpush1.bf16.msra.mxu0 %v5840
  %5858 = vmatprep.subr.bf16.mxu0 0
  %5859 = vmatpush1.bf16.msra.mxu0 %v5841
  %5860 = vmatprep.subr.bf16.mxu0 0
  %5861 = vmatpush1.bf16.msra.mxu0 %v5842
  %5862 = vmatprep.subr.bf16.mxu0 0
  %5863 = vmatpush1.bf16.msra.mxu0 %v5843
  %5864 = vmatprep.subr.bf16.mxu0 0
  %5865 = vmatpush1.bf16.msra.mxu0 %v5844
  %5866 = vmatprep.subr.bf16.mxu0 0
  %5867 = vmatpush1.bf16.msra.mxu0 %v5845
  %5868 = vmatprep.subr.bf16.mxu0 0
  %5869 = vmatpush1.bf16.msra.mxu0 %v5846
  %5870 = vmatprep.subr.bf16.mxu0 0
  %5871 = vmatpush1.bf16.msra.mxu0 %v5847
  %5872 = vmatprep.subr.bf16.mxu0 0
  %5873 = vmatpush1.bf16.msra.mxu0 0
  %5874 = vmatprep.subr.bf16.mxu0 0
  %5875 = vmatpush1.bf16.msra.mxu0 0
  %5876 = vmatprep.subr.bf16.mxu0 0
  %5877 = vmatpush1.bf16.msra.mxu0 0
  %5878 = vmatprep.subr.bf16.mxu0 0
  %5879 = vmatpush1.bf16.msra.mxu0 0
  %5880 = vmatprep.subr.bf16.mxu0 0
  %5881 = vmatpush1.bf16.msra.mxu0 0
  %5882 = vmatprep.subr.bf16.mxu0 0
  %5883 = vmatpush1.bf16.msra.mxu0 0
  %5884 = vmatprep.subr.bf16.mxu0 0
  %5885 = vmatpush1.bf16.msra.mxu0 0
  %5886 = vmatprep.subr.bf16.mxu0 0
  %5887 = vmatpush1.bf16.msra.mxu0 0
  %5888 = vmatprep.mubr.bf16.mxu0 0
  %5889 = vmatmul.mubr.bf16.gmra.mrb[0].mxu0 %v5806
  %v5890 = vpop.f32.mrb[0].mxu0
  %v5891 = vadd.f32 0.0, %v5890
  %v5892 = vpop.f32.mrb[0].mxu0
  %v5893 = vpop.f32.mrb[0].mxu0
  %v5894 = vpop.f32.mrb[0].mxu0
  %5895 = vdwg.mxu0
  %v5896 = vadd.f32 %v5588, %v5891
  %s5897 = scalar_lea.vmem %s10, 576
  %v5898 = vld [vmem:[%s5897] sm:$0xf]
  %v5899 = vld [vmem:[%s5897 + $0x4] sm:$0xf]
  %v5900 = vld [vmem:[%s5897 + $0x8] sm:$0xf]
  %v5901 = vld [vmem:[%s5897 + $0xc] sm:$0xf]
  %v5902 = vld [vmem:[%s5897 + $0x10] sm:$0xf]
  %v5903 = vld [vmem:[%s5897 + $0x14] sm:$0xf]
  %v5904 = vld [vmem:[%s5897 + $0x18] sm:$0xf]
  %v5905 = vld [vmem:[%s5897 + $0x1c] sm:$0xf]
  %v5906 = vld [vmem:[%s5897 + $0x20] sm:$0xf]
  %v5907 = vld [vmem:[%s5897 + $0x24] sm:$0xf]
  %v5908 = vld [vmem:[%s5897 + $0x28] sm:$0xf]
  %v5909 = vld [vmem:[%s5897 + $0x2c] sm:$0xf]
  %v5910 = vld [vmem:[%s5897 + $0x30] sm:$0xf]
  %v5911 = vld [vmem:[%s5897 + $0x34] sm:$0xf]
  %v5912 = vld [vmem:[%s5897 + $0x38] sm:$0xf]
  %v5913 = vld [vmem:[%s5897 + $0x3c] sm:$0xf]
  %v5922 = vunpack.c.l.b16 %v5751
  %v5923 = vunpack.c.l.b16 %v5752
  %v5924 = vunpack.c.l.b16 %v5753
  %v5925 = vunpack.c.l.b16 %v5754
  %v5926 = vunpack.c.l.b16 %v5755
  %v5927 = vunpack.c.l.b16 %v5756
  %v5928 = vunpack.c.l.b16 %v5757
  %v5929 = vunpack.c.l.b16 %v5758
  %v5930 = vrot.slane %v5923, 7
  %v5931 = vsel %vm3084, %v5930, %v5922
  %v5932 = vrot.slane %v5924, 6
  %v5933 = vsel %vm3087, %v5932, %v5931
  %v5934 = vrot.slane %v5925, 5
  %v5935 = vsel %vm3090, %v5934, %v5933
  %v5936 = vrot.slane %v5926, 4
  %v5937 = vsel %vm3093, %v5936, %v5935
  %v5938 = vrot.slane %v5927, 3
  %v5939 = vsel %vm3096, %v5938, %v5937
  %v5940 = vrot.slane %v5928, 2
  %v5941 = vsel %vm3099, %v5940, %v5939
  %v5942 = vrot.slane %v5929, 1
  %v5943 = vsel %vm3102, %v5942, %v5941
  %v5944 = vpack.c.b16 %v5943, %v5943
  %v5962 = vunpack.c.l.b16 %v5898
  %v5963 = vunpack.c.l.b16 %v5899
  %v5964 = vunpack.c.l.b16 %v5900
  %v5965 = vunpack.c.l.b16 %v5901
  %v5966 = vunpack.c.l.b16 %v5902
  %v5967 = vunpack.c.l.b16 %v5903
  %v5968 = vunpack.c.l.b16 %v5904
  %v5969 = vunpack.c.l.b16 %v5905
  %v5970 = vunpack.c.l.b16 %v5906
  %v5971 = vunpack.c.l.b16 %v5907
  %v5972 = vunpack.c.l.b16 %v5908
  %v5973 = vunpack.c.l.b16 %v5909
  %v5974 = vunpack.c.l.b16 %v5910
  %v5975 = vunpack.c.l.b16 %v5911
  %v5976 = vunpack.c.l.b16 %v5912
  %v5977 = vunpack.c.l.b16 %v5913
  %v5978 = vpack.c.b16 %v5963, %v5962
  %v5979 = vpack.c.b16 %v5965, %v5964
  %v5980 = vpack.c.b16 %v5967, %v5966
  %v5981 = vpack.c.b16 %v5969, %v5968
  %v5982 = vpack.c.b16 %v5971, %v5970
  %v5983 = vpack.c.b16 %v5973, %v5972
  %v5984 = vpack.c.b16 %v5975, %v5974
  %v5985 = vpack.c.b16 %v5977, %v5976
  %5994 = vmatprep.subr.bf16.mxu0 0
  %5995 = vmatpush1.bf16.msra.mxu0 %v5978
  %5996 = vmatprep.subr.bf16.mxu0 0
  %5997 = vmatpush1.bf16.msra.mxu0 %v5979
  %5998 = vmatprep.subr.bf16.mxu0 0
  %5999 = vmatpush1.bf16.msra.mxu0 %v5980
  %6000 = vmatprep.subr.bf16.mxu0 0
  %6001 = vmatpush1.bf16.msra.mxu0 %v5981
  %6002 = vmatprep.subr.bf16.mxu0 0
  %6003 = vmatpush1.bf16.msra.mxu0 %v5982
  %6004 = vmatprep.subr.bf16.mxu0 0
  %6005 = vmatpush1.bf16.msra.mxu0 %v5983
  %6006 = vmatprep.subr.bf16.mxu0 0
  %6007 = vmatpush1.bf16.msra.mxu0 %v5984
  %6008 = vmatprep.subr.bf16.mxu0 0
  %6009 = vmatpush1.bf16.msra.mxu0 %v5985
  %6010 = vmatprep.subr.bf16.mxu0 0
  %6011 = vmatpush1.bf16.msra.mxu0 0
  %6012 = vmatprep.subr.bf16.mxu0 0
  %6013 = vmatpush1.bf16.msra.mxu0 0
  %6014 = vmatprep.subr.bf16.mxu0 0
  %6015 = vmatpush1.bf16.msra.mxu0 0
  %6016 = vmatprep.subr.bf16.mxu0 0
  %6017 = vmatpush1.bf16.msra.mxu0 0
  %6018 = vmatprep.subr.bf16.mxu0 0
  %6019 = vmatpush1.bf16.msra.mxu0 0
  %6020 = vmatprep.subr.bf16.mxu0 0
  %6021 = vmatpush1.bf16.msra.mxu0 0
  %6022 = vmatprep.subr.bf16.mxu0 0
  %6023 = vmatpush1.bf16.msra.mxu0 0
  %6024 = vmatprep.subr.bf16.mxu0 0
  %6025 = vmatpush1.bf16.msra.mxu0 0
  %6026 = vmatprep.mubr.bf16.mxu0 0
  %6027 = vmatmul.mubr.bf16.gmra.mrb[0].mxu0 %v5944
  %v6028 = vpop.f32.mrb[0].mxu0
  %v6029 = vadd.f32 0.0, %v6028
  %v6030 = vpop.f32.mrb[0].mxu0
  %v6031 = vpop.f32.mrb[0].mxu0
  %v6032 = vpop.f32.mrb[0].mxu0
  %6033 = vdwg.mxu0
  %v6034 = vadd.f32 %v5726, %v6029
  %v6035 = vld [vmem:[#allocation4 + $0xa] sm:$0x1]
  %v6036 = vld [vmem:[#allocation4 + $0x1a] sm:$0x1]
  %v6037 = vld [vmem:[#allocation4 + $0x2a] sm:$0x1]
  %v6038 = vld [vmem:[#allocation4 + $0x3a] sm:$0x1]
  %v6039 = vld [vmem:[#allocation4 + $0x4a] sm:$0x1]
  %v6040 = vld [vmem:[#allocation4 + $0x5a] sm:$0x1]
  %v6041 = vld [vmem:[#allocation4 + $0x6a] sm:$0x1]
  %v6042 = vld [vmem:[#allocation4 + $0x7a] sm:$0x1]
  %v6043 = vpack.c.bf16 %v6035, %v6035
  %v6044 = vpack.c.bf16 %v6036, %v6036
  %v6045 = vpack.c.bf16 %v6037, %v6037
  %v6046 = vpack.c.bf16 %v6038, %v6038
  %v6047 = vpack.c.bf16 %v6039, %v6039
  %v6048 = vpack.c.bf16 %v6040, %v6040
  %v6049 = vpack.c.bf16 %v6041, %v6041
  %v6050 = vpack.c.bf16 %v6042, %v6042
  %v6051 = vld [vmem:[#allocation3 + $0xa] sm:$0x1]
  %v6052 = vld [vmem:[#allocation3 + $0x1a] sm:$0x1]
  %v6053 = vld [vmem:[#allocation3 + $0x2a] sm:$0x1]
  %v6054 = vld [vmem:[#allocation3 + $0x3a] sm:$0x1]
  %v6055 = vld [vmem:[#allocation3 + $0x4a] sm:$0x1]
  %v6056 = vld [vmem:[#allocation3 + $0x5a] sm:$0x1]
  %v6057 = vld [vmem:[#allocation3 + $0x6a] sm:$0x1]
  %v6058 = vld [vmem:[#allocation3 + $0x7a] sm:$0x1]
  %v6059 = vpack.c.bf16 %v6051, %v6051
  %v6060 = vpack.c.bf16 %v6052, %v6052
  %v6061 = vpack.c.bf16 %v6053, %v6053
  %v6062 = vpack.c.bf16 %v6054, %v6054
  %v6063 = vpack.c.bf16 %v6055, %v6055
  %v6064 = vpack.c.bf16 %v6056, %v6056
  %v6065 = vpack.c.bf16 %v6057, %v6057
  %v6066 = vpack.c.bf16 %v6058, %v6058
  %s6067 = scalar_lea.vmem %s9, 640
  %v6068 = vld [vmem:[%s6067] sm:$0xf]
  %v6069 = vld [vmem:[%s6067 + $0x4] sm:$0xf]
  %v6070 = vld [vmem:[%s6067 + $0x8] sm:$0xf]
  %v6071 = vld [vmem:[%s6067 + $0xc] sm:$0xf]
  %v6072 = vld [vmem:[%s6067 + $0x10] sm:$0xf]
  %v6073 = vld [vmem:[%s6067 + $0x14] sm:$0xf]
  %v6074 = vld [vmem:[%s6067 + $0x18] sm:$0xf]
  %v6075 = vld [vmem:[%s6067 + $0x1c] sm:$0xf]
  %v6076 = vld [vmem:[%s6067 + $0x20] sm:$0xf]
  %v6077 = vld [vmem:[%s6067 + $0x24] sm:$0xf]
  %v6078 = vld [vmem:[%s6067 + $0x28] sm:$0xf]
  %v6079 = vld [vmem:[%s6067 + $0x2c] sm:$0xf]
  %v6080 = vld [vmem:[%s6067 + $0x30] sm:$0xf]
  %v6081 = vld [vmem:[%s6067 + $0x34] sm:$0xf]
  %v6082 = vld [vmem:[%s6067 + $0x38] sm:$0xf]
  %v6083 = vld [vmem:[%s6067 + $0x3c] sm:$0xf]
  %v6092 = vunpack.c.l.b16 %v6043
  %v6093 = vunpack.c.l.b16 %v6044
  %v6094 = vunpack.c.l.b16 %v6045
  %v6095 = vunpack.c.l.b16 %v6046
  %v6096 = vunpack.c.l.b16 %v6047
  %v6097 = vunpack.c.l.b16 %v6048
  %v6098 = vunpack.c.l.b16 %v6049
  %v6099 = vunpack.c.l.b16 %v6050
  %v6100 = vrot.slane %v6093, 7
  %v6101 = vsel %vm3084, %v6100, %v6092
  %v6102 = vrot.slane %v6094, 6
  %v6103 = vsel %vm3087, %v6102, %v6101
  %v6104 = vrot.slane %v6095, 5
  %v6105 = vsel %vm3090, %v6104, %v6103
  %v6106 = vrot.slane %v6096, 4
  %v6107 = vsel %vm3093, %v6106, %v6105
  %v6108 = vrot.slane %v6097, 3
  %v6109 = vsel %vm3096, %v6108, %v6107
  %v6110 = vrot.slane %v6098, 2
  %v6111 = vsel %vm3099, %v6110, %v6109
  %v6112 = vrot.slane %v6099, 1
  %v6113 = vsel %vm3102, %v6112, %v6111
  %v6114 = vpack.c.b16 %v6113, %v6113
  %v6132 = vunpack.c.l.b16 %v6068
  %v6133 = vunpack.c.l.b16 %v6069
  %v6134 = vunpack.c.l.b16 %v6070
  %v6135 = vunpack.c.l.b16 %v6071
  %v6136 = vunpack.c.l.b16 %v6072
  %v6137 = vunpack.c.l.b16 %v6073
  %v6138 = vunpack.c.l.b16 %v6074
  %v6139 = vunpack.c.l.b16 %v6075
  %v6140 = vunpack.c.l.b16 %v6076
  %v6141 = vunpack.c.l.b16 %v6077
  %v6142 = vunpack.c.l.b16 %v6078
  %v6143 = vunpack.c.l.b16 %v6079
  %v6144 = vunpack.c.l.b16 %v6080
  %v6145 = vunpack.c.l.b16 %v6081
  %v6146 = vunpack.c.l.b16 %v6082
  %v6147 = vunpack.c.l.b16 %v6083
  %v6148 = vpack.c.b16 %v6133, %v6132
  %v6149 = vpack.c.b16 %v6135, %v6134
  %v6150 = vpack.c.b16 %v6137, %v6136
  %v6151 = vpack.c.b16 %v6139, %v6138
  %v6152 = vpack.c.b16 %v6141, %v6140
  %v6153 = vpack.c.b16 %v6143, %v6142
  %v6154 = vpack.c.b16 %v6145, %v6144
  %v6155 = vpack.c.b16 %v6147, %v6146
  %6164 = vmatprep.subr.bf16.mxu0 0
  %6165 = vmatpush1.bf16.msra.mxu0 %v6148
  %6166 = vmatprep.subr.bf16.mxu0 0
  %6167 = vmatpush1.bf16.msra.mxu0 %v6149
  %6168 = vmatprep.subr.bf16.mxu0 0
  %6169 = vmatpush1.bf16.msra.mxu0 %v6150
  %6170 = vmatprep.subr.bf16.mxu0 0
  %6171 = vmatpush1.bf16.msra.mxu0 %v6151
  %6172 = vmatprep.subr.bf16.mxu0 0
  %6173 = vmatpush1.bf16.msra.mxu0 %v6152
  %6174 = vmatprep.subr.bf16.mxu0 0
  %6175 = vmatpush1.bf16.msra.mxu0 %v6153
  %6176 = vmatprep.subr.bf16.mxu0 0
  %6177 = vmatpush1.bf16.msra.mxu0 %v6154
  %6178 = vmatprep.subr.bf16.mxu0 0
  %6179 = vmatpush1.bf16.msra.mxu0 %v6155
  %6180 = vmatprep.subr.bf16.mxu0 0
  %6181 = vmatpush1.bf16.msra.mxu0 0
  %6182 = vmatprep.subr.bf16.mxu0 0
  %6183 = vmatpush1.bf16.msra.mxu0 0
  %6184 = vmatprep.subr.bf16.mxu0 0
  %6185 = vmatpush1.bf16.msra.mxu0 0
  %6186 = vmatprep.subr.bf16.mxu0 0
  %6187 = vmatpush1.bf16.msra.mxu0 0
  %6188 = vmatprep.subr.bf16.mxu0 0
  %6189 = vmatpush1.bf16.msra.mxu0 0
  %6190 = vmatprep.subr.bf16.mxu0 0
  %6191 = vmatpush1.bf16.msra.mxu0 0
  %6192 = vmatprep.subr.bf16.mxu0 0
  %6193 = vmatpush1.bf16.msra.mxu0 0
  %6194 = vmatprep.subr.bf16.mxu0 0
  %6195 = vmatpush1.bf16.msra.mxu0 0
  %6196 = vmatprep.mubr.bf16.mxu0 0
  %6197 = vmatmul.mubr.bf16.gmra.mrb[0].mxu0 %v6114
  %v6198 = vpop.f32.mrb[0].mxu0
  %v6199 = vadd.f32 0.0, %v6198
  %v6200 = vpop.f32.mrb[0].mxu0
  %v6201 = vpop.f32.mrb[0].mxu0
  %v6202 = vpop.f32.mrb[0].mxu0
  %6203 = vdwg.mxu0
  %v6204 = vadd.f32 %v5896, %v6199
  %s6205 = scalar_lea.vmem %s10, 640
  %v6206 = vld [vmem:[%s6205] sm:$0xf]
  %v6207 = vld [vmem:[%s6205 + $0x4] sm:$0xf]
  %v6208 = vld [vmem:[%s6205 + $0x8] sm:$0xf]
  %v6209 = vld [vmem:[%s6205 + $0xc] sm:$0xf]
  %v6210 = vld [vmem:[%s6205 + $0x10] sm:$0xf]
  %v6211 = vld [vmem:[%s6205 + $0x14] sm:$0xf]
  %v6212 = vld [vmem:[%s6205 + $0x18] sm:$0xf]
  %v6213 = vld [vmem:[%s6205 + $0x1c] sm:$0xf]
  %v6214 = vld [vmem:[%s6205 + $0x20] sm:$0xf]
  %v6215 = vld [vmem:[%s6205 + $0x24] sm:$0xf]
  %v6216 = vld [vmem:[%s6205 + $0x28] sm:$0xf]
  %v6217 = vld [vmem:[%s6205 + $0x2c] sm:$0xf]
  %v6218 = vld [vmem:[%s6205 + $0x30] sm:$0xf]
  %v6219 = vld [vmem:[%s6205 + $0x34] sm:$0xf]
  %v6220 = vld [vmem:[%s6205 + $0x38] sm:$0xf]
  %v6221 = vld [vmem:[%s6205 + $0x3c] sm:$0xf]
  %v6230 = vunpack.c.l.b16 %v6059
  %v6231 = vunpack.c.l.b16 %v6060
  %v6232 = vunpack.c.l.b16 %v6061
  %v6233 = vunpack.c.l.b16 %v6062
  %v6234 = vunpack.c.l.b16 %v6063
  %v6235 = vunpack.c.l.b16 %v6064
  %v6236 = vunpack.c.l.b16 %v6065
  %v6237 = vunpack.c.l.b16 %v6066
  %v6238 = vrot.slane %v6231, 7
  %v6239 = vsel %vm3084, %v6238, %v6230
  %v6240 = vrot.slane %v6232, 6
  %v6241 = vsel %vm3087, %v6240, %v6239
  %v6242 = vrot.slane %v6233, 5
  %v6243 = vsel %vm3090, %v6242, %v6241
  %v6244 = vrot.slane %v6234, 4
  %v6245 = vsel %vm3093, %v6244, %v6243
  %v6246 = vrot.slane %v6235, 3
  %v6247 = vsel %vm3096, %v6246, %v6245
  %v6248 = vrot.slane %v6236, 2
  %v6249 = vsel %vm3099, %v6248, %v6247
  %v6250 = vrot.slane %v6237, 1
  %v6251 = vsel %vm3102, %v6250, %v6249
  %v6252 = vpack.c.b16 %v6251, %v6251
  %v6270 = vunpack.c.l.b16 %v6206
  %v6271 = vunpack.c.l.b16 %v6207
  %v6272 = vunpack.c.l.b16 %v6208
  %v6273 = vunpack.c.l.b16 %v6209
  %v6274 = vunpack.c.l.b16 %v6210
  %v6275 = vunpack.c.l.b16 %v6211
  %v6276 = vunpack.c.l.b16 %v6212
  %v6277 = vunpack.c.l.b16 %v6213
  %v6278 = vunpack.c.l.b16 %v6214
  %v6279 = vunpack.c.l.b16 %v6215
  %v6280 = vunpack.c.l.b16 %v6216
  %v6281 = vunpack.c.l.b16 %v6217
  %v6282 = vunpack.c.l.b16 %v6218
  %v6283 = vunpack.c.l.b16 %v6219
  %v6284 = vunpack.c.l.b16 %v6220
  %v6285 = vunpack.c.l.b16 %v6221
  %v6286 = vpack.c.b16 %v6271, %v6270
  %v6287 = vpack.c.b16 %v6273, %v6272
  %v6288 = vpack.c.b16 %v6275, %v6274
  %v6289 = vpack.c.b16 %v6277, %v6276
  %v6290 = vpack.c.b16 %v6279, %v6278
  %v6291 = vpack.c.b16 %v6281, %v6280
  %v6292 = vpack.c.b16 %v6283, %v6282
  %v6293 = vpack.c.b16 %v6285, %v6284
  %6302 = vmatprep.subr.bf16.mxu0 0
  %6303 = vmatpush1.bf16.msra.mxu0 %v6286
  %6304 = vmatprep.subr.bf16.mxu0 0
  %6305 = vmatpush1.bf16.msra.mxu0 %v6287
  %6306 = vmatprep.subr.bf16.mxu0 0
  %6307 = vmatpush1.bf16.msra.mxu0 %v6288
  %6308 = vmatprep.subr.bf16.mxu0 0
  %6309 = vmatpush1.bf16.msra.mxu0 %v6289
  %6310 = vmatprep.subr.bf16.mxu0 0
  %6311 = vmatpush1.bf16.msra.mxu0 %v6290
  %6312 = vmatprep.subr.bf16.mxu0 0
  %6313 = vmatpush1.bf16.msra.mxu0 %v6291
  %6314 = vmatprep.subr.bf16.mxu0 0
  %6315 = vmatpush1.bf16.msra.mxu0 %v6292
  %6316 = vmatprep.subr.bf16.mxu0 0
  %6317 = vmatpush1.bf16.msra.mxu0 %v6293
  %6318 = vmatprep.subr.bf16.mxu0 0
  %6319 = vmatpush1.bf16.msra.mxu0 0
  %6320 = vmatprep.subr.bf16.mxu0 0
  %6321 = vmatpush1.bf16.msra.mxu0 0
  %6322 = vmatprep.subr.bf16.mxu0 0
  %6323 = vmatpush1.bf16.msra.mxu0 0
  %6324 = vmatprep.subr.bf16.mxu0 0
  %6325 = vmatpush1.bf16.msra.mxu0 0
  %6326 = vmatprep.subr.bf16.mxu0 0
  %6327 = vmatpush1.bf16.msra.mxu0 0
  %6328 = vmatprep.subr.bf16.mxu0 0
  %6329 = vmatpush1.bf16.msra.mxu0 0
  %6330 = vmatprep.subr.bf16.mxu0 0
  %6331 = vmatpush1.bf16.msra.mxu0 0
  %6332 = vmatprep.subr.bf16.mxu0 0
  %6333 = vmatpush1.bf16.msra.mxu0 0
  %6334 = vmatprep.mubr.bf16.mxu0 0
  %6335 = vmatmul.mubr.bf16.gmra.mrb[0].mxu0 %v6252
  %v6336 = vpop.f32.mrb[0].mxu0
  %v6337 = vadd.f32 0.0, %v6336
  %v6338 = vpop.f32.mrb[0].mxu0
  %v6339 = vpop.f32.mrb[0].mxu0
  %v6340 = vpop.f32.mrb[0].mxu0
  %6341 = vdwg.mxu0
  %v6342 = vadd.f32 %v6034, %v6337
  %v6343 = vld [vmem:[#allocation4 + $0xb] sm:$0x1]
  %v6344 = vld [vmem:[#allocation4 + $0x1b] sm:$0x1]
  %v6345 = vld [vmem:[#allocation4 + $0x2b] sm:$0x1]
  %v6346 = vld [vmem:[#allocation4 + $0x3b] sm:$0x1]
  %v6347 = vld [vmem:[#allocation4 + $0x4b] sm:$0x1]
  %v6348 = vld [vmem:[#allocation4 + $0x5b] sm:$0x1]
  %v6349 = vld [vmem:[#allocation4 + $0x6b] sm:$0x1]
  %v6350 = vld [vmem:[#allocation4 + $0x7b] sm:$0x1]
  %v6351 = vpack.c.bf16 %v6343, %v6343
  %v6352 = vpack.c.bf16 %v6344, %v6344
  %v6353 = vpack.c.bf16 %v6345, %v6345
  %v6354 = vpack.c.bf16 %v6346, %v6346
  %v6355 = vpack.c.bf16 %v6347, %v6347
  %v6356 = vpack.c.bf16 %v6348, %v6348
  %v6357 = vpack.c.bf16 %v6349, %v6349
  %v6358 = vpack.c.bf16 %v6350, %v6350
  %v6359 = vld [vmem:[#allocation3 + $0xb] sm:$0x1]
  %v6360 = vld [vmem:[#allocation3 + $0x1b] sm:$0x1]
  %v6361 = vld [vmem:[#allocation3 + $0x2b] sm:$0x1]
  %v6362 = vld [vmem:[#allocation3 + $0x3b] sm:$0x1]
  %v6363 = vld [vmem:[#allocation3 + $0x4b] sm:$0x1]
  %v6364 = vld [vmem:[#allocation3 + $0x5b] sm:$0x1]
  %v6365 = vld [vmem:[#allocation3 + $0x6b] sm:$0x1]
  %v6366 = vld [vmem:[#allocation3 + $0x7b] sm:$0x1]
  %v6367 = vpack.c.bf16 %v6359, %v6359
  %v6368 = vpack.c.bf16 %v6360, %v6360
  %v6369 = vpack.c.bf16 %v6361, %v6361
  %v6370 = vpack.c.bf16 %v6362, %v6362
  %v6371 = vpack.c.bf16 %v6363, %v6363
  %v6372 = vpack.c.bf16 %v6364, %v6364
  %v6373 = vpack.c.bf16 %v6365, %v6365
  %v6374 = vpack.c.bf16 %v6366, %v6366
  %s6375 = scalar_lea.vmem %s9, 704
  %v6376 = vld [vmem:[%s6375] sm:$0xf]
  %v6377 = vld [vmem:[%s6375 + $0x4] sm:$0xf]
  %v6378 = vld [vmem:[%s6375 + $0x8] sm:$0xf]
  %v6379 = vld [vmem:[%s6375 + $0xc] sm:$0xf]
  %v6380 = vld [vmem:[%s6375 + $0x10] sm:$0xf]
  %v6381 = vld [vmem:[%s6375 + $0x14] sm:$0xf]
  %v6382 = vld [vmem:[%s6375 + $0x18] sm:$0xf]
  %v6383 = vld [vmem:[%s6375 + $0x1c] sm:$0xf]
  %v6384 = vld [vmem:[%s6375 + $0x20] sm:$0xf]
  %v6385 = vld [vmem:[%s6375 + $0x24] sm:$0xf]
  %v6386 = vld [vmem:[%s6375 + $0x28] sm:$0xf]
  %v6387 = vld [vmem:[%s6375 + $0x2c] sm:$0xf]
  %v6388 = vld [vmem:[%s6375 + $0x30] sm:$0xf]
  %v6389 = vld [vmem:[%s6375 + $0x34] sm:$0xf]
  %v6390 = vld [vmem:[%s6375 + $0x38] sm:$0xf]
  %v6391 = vld [vmem:[%s6375 + $0x3c] sm:$0xf]
  %v6400 = vunpack.c.l.b16 %v6351
  %v6401 = vunpack.c.l.b16 %v6352
  %v6402 = vunpack.c.l.b16 %v6353
  %v6403 = vunpack.c.l.b16 %v6354
  %v6404 = vunpack.c.l.b16 %v6355
  %v6405 = vunpack.c.l.b16 %v6356
  %v6406 = vunpack.c.l.b16 %v6357
  %v6407 = vunpack.c.l.b16 %v6358
  %v6408 = vrot.slane %v6401, 7
  %v6409 = vsel %vm3084, %v6408, %v6400
  %v6410 = vrot.slane %v6402, 6
  %v6411 = vsel %vm3087, %v6410, %v6409
  %v6412 = vrot.slane %v6403, 5
  %v6413 = vsel %vm3090, %v6412, %v6411
  %v6414 = vrot.slane %v6404, 4
  %v6415 = vsel %vm3093, %v6414, %v6413
  %v6416 = vrot.slane %v6405, 3
  %v6417 = vsel %vm3096, %v6416, %v6415
  %v6418 = vrot.slane %v6406, 2
  %v6419 = vsel %vm3099, %v6418, %v6417
  %v6420 = vrot.slane %v6407, 1
  %v6421 = vsel %vm3102, %v6420, %v6419
  %v6422 = vpack.c.b16 %v6421, %v6421
  %v6440 = vunpack.c.l.b16 %v6376
  %v6441 = vunpack.c.l.b16 %v6377
  %v6442 = vunpack.c.l.b16 %v6378
  %v6443 = vunpack.c.l.b16 %v6379
  %v6444 = vunpack.c.l.b16 %v6380
  %v6445 = vunpack.c.l.b16 %v6381
  %v6446 = vunpack.c.l.b16 %v6382
  %v6447 = vunpack.c.l.b16 %v6383
  %v6448 = vunpack.c.l.b16 %v6384
  %v6449 = vunpack.c.l.b16 %v6385
  %v6450 = vunpack.c.l.b16 %v6386
  %v6451 = vunpack.c.l.b16 %v6387
  %v6452 = vunpack.c.l.b16 %v6388
  %v6453 = vunpack.c.l.b16 %v6389
  %v6454 = vunpack.c.l.b16 %v6390
  %v6455 = vunpack.c.l.b16 %v6391
  %v6456 = vpack.c.b16 %v6441, %v6440
  %v6457 = vpack.c.b16 %v6443, %v6442
  %v6458 = vpack.c.b16 %v6445, %v6444
  %v6459 = vpack.c.b16 %v6447, %v6446
  %v6460 = vpack.c.b16 %v6449, %v6448
  %v6461 = vpack.c.b16 %v6451, %v6450
  %v6462 = vpack.c.b16 %v6453, %v6452
  %v6463 = vpack.c.b16 %v6455, %v6454
  %6472 = vmatprep.subr.bf16.mxu0 0
  %6473 = vmatpush1.bf16.msra.mxu0 %v6456
  %6474 = vmatprep.subr.bf16.mxu0 0
  %6475 = vmatpush1.bf16.msra.mxu0 %v6457
  %6476 = vmatprep.subr.bf16.mxu0 0
  %6477 = vmatpush1.bf16.msra.mxu0 %v6458
  %6478 = vmatprep.subr.bf16.mxu0 0
  %6479 = vmatpush1.bf16.msra.mxu0 %v6459
  %6480 = vmatprep.subr.bf16.mxu0 0
  %6481 = vmatpush1.bf16.msra.mxu0 %v6460
  %6482 = vmatprep.subr.bf16.mxu0 0
  %6483 = vmatpush1.bf16.msra.mxu0 %v6461
  %6484 = vmatprep.subr.bf16.mxu0 0
  %6485 = vmatpush1.bf16.msra.mxu0 %v6462
  %6486 = vmatprep.subr.bf16.mxu0 0
  %6487 = vmatpush1.bf16.msra.mxu0 %v6463
  %6488 = vmatprep.subr.bf16.mxu0 0
  %6489 = vmatpush1.bf16.msra.mxu0 0
  %6490 = vmatprep.subr.bf16.mxu0 0
  %6491 = vmatpush1.bf16.msra.mxu0 0
  %6492 = vmatprep.subr.bf16.mxu0 0
  %6493 = vmatpush1.bf16.msra.mxu0 0
  %6494 = vmatprep.subr.bf16.mxu0 0
  %6495 = vmatpush1.bf16.msra.mxu0 0
  %6496 = vmatprep.subr.bf16.mxu0 0
  %6497 = vmatpush1.bf16.msra.mxu0 0
  %6498 = vmatprep.subr.bf16.mxu0 0
  %6499 = vmatpush1.bf16.msra.mxu0 0
  %6500 = vmatprep.subr.bf16.mxu0 0
  %6501 = vmatpush1.bf16.msra.mxu0 0
  %6502 = vmatprep.subr.bf16.mxu0 0
  %6503 = vmatpush1.bf16.msra.mxu0 0
  %6504 = vmatprep.mubr.bf16.mxu0 0
  %6505 = vmatmul.mubr.bf16.gmra.mrb[0].mxu0 %v6422
  %v6506 = vpop.f32.mrb[0].mxu0
  %v6507 = vadd.f32 0.0, %v6506
  %v6508 = vpop.f32.mrb[0].mxu0
  %v6509 = vpop.f32.mrb[0].mxu0
  %v6510 = vpop.f32.mrb[0].mxu0
  %6511 = vdwg.mxu0
  %v6512 = vadd.f32 %v6204, %v6507
  %s6513 = scalar_lea.vmem %s10, 704
  %v6514 = vld [vmem:[%s6513] sm:$0xf]
  %v6515 = vld [vmem:[%s6513 + $0x4] sm:$0xf]
  %v6516 = vld [vmem:[%s6513 + $0x8] sm:$0xf]
  %v6517 = vld [vmem:[%s6513 + $0xc] sm:$0xf]
  %v6518 = vld [vmem:[%s6513 + $0x10] sm:$0xf]
  %v6519 = vld [vmem:[%s6513 + $0x14] sm:$0xf]
  %v6520 = vld [vmem:[%s6513 + $0x18] sm:$0xf]
  %v6521 = vld [vmem:[%s6513 + $0x1c] sm:$0xf]
  %v6522 = vld [vmem:[%s6513 + $0x20] sm:$0xf]
  %v6523 = vld [vmem:[%s6513 + $0x24] sm:$0xf]
  %v6524 = vld [vmem:[%s6513 + $0x28] sm:$0xf]
  %v6525 = vld [vmem:[%s6513 + $0x2c] sm:$0xf]
  %v6526 = vld [vmem:[%s6513 + $0x30] sm:$0xf]
  %v6527 = vld [vmem:[%s6513 + $0x34] sm:$0xf]
  %v6528 = vld [vmem:[%s6513 + $0x38] sm:$0xf]
  %v6529 = vld [vmem:[%s6513 + $0x3c] sm:$0xf]
  %v6538 = vunpack.c.l.b16 %v6367
  %v6539 = vunpack.c.l.b16 %v6368
  %v6540 = vunpack.c.l.b16 %v6369
  %v6541 = vunpack.c.l.b16 %v6370
  %v6542 = vunpack.c.l.b16 %v6371
  %v6543 = vunpack.c.l.b16 %v6372
  %v6544 = vunpack.c.l.b16 %v6373
  %v6545 = vunpack.c.l.b16 %v6374
  %v6546 = vrot.slane %v6539, 7
  %v6547 = vsel %vm3084, %v6546, %v6538
  %v6548 = vrot.slane %v6540, 6
  %v6549 = vsel %vm3087, %v6548, %v6547
  %v6550 = vrot.slane %v6541, 5
  %v6551 = vsel %vm3090, %v6550, %v6549
  %v6552 = vrot.slane %v6542, 4
  %v6553 = vsel %vm3093, %v6552, %v6551
  %v6554 = vrot.slane %v6543, 3
  %v6555 = vsel %vm3096, %v6554, %v6553
  %v6556 = vrot.slane %v6544, 2
  %v6557 = vsel %vm3099, %v6556, %v6555
  %v6558 = vrot.slane %v6545, 1
  %v6559 = vsel %vm3102, %v6558, %v6557
  %v6560 = vpack.c.b16 %v6559, %v6559
  %v6578 = vunpack.c.l.b16 %v6514
  %v6579 = vunpack.c.l.b16 %v6515
  %v6580 = vunpack.c.l.b16 %v6516
  %v6581 = vunpack.c.l.b16 %v6517
  %v6582 = vunpack.c.l.b16 %v6518
  %v6583 = vunpack.c.l.b16 %v6519
  %v6584 = vunpack.c.l.b16 %v6520
  %v6585 = vunpack.c.l.b16 %v6521
  %v6586 = vunpack.c.l.b16 %v6522
  %v6587 = vunpack.c.l.b16 %v6523
  %v6588 = vunpack.c.l.b16 %v6524
  %v6589 = vunpack.c.l.b16 %v6525
  %v6590 = vunpack.c.l.b16 %v6526
  %v6591 = vunpack.c.l.b16 %v6527
  %v6592 = vunpack.c.l.b16 %v6528
  %v6593 = vunpack.c.l.b16 %v6529
  %v6594 = vpack.c.b16 %v6579, %v6578
  %v6595 = vpack.c.b16 %v6581, %v6580
  %v6596 = vpack.c.b16 %v6583, %v6582
  %v6597 = vpack.c.b16 %v6585, %v6584
  %v6598 = vpack.c.b16 %v6587, %v6586
  %v6599 = vpack.c.b16 %v6589, %v6588
  %v6600 = vpack.c.b16 %v6591, %v6590
  %v6601 = vpack.c.b16 %v6593, %v6592
  %6610 = vmatprep.subr.bf16.mxu0 0
  %6611 = vmatpush1.bf16.msra.mxu0 %v6594
  %6612 = vmatprep.subr.bf16.mxu0 0
  %6613 = vmatpush1.bf16.msra.mxu0 %v6595
  %6614 = vmatprep.subr.bf16.mxu0 0
  %6615 = vmatpush1.bf16.msra.mxu0 %v6596
  %6616 = vmatprep.subr.bf16.mxu0 0
  %6617 = vmatpush1.bf16.msra.mxu0 %v6597
  %6618 = vmatprep.subr.bf16.mxu0 0
  %6619 = vmatpush1.bf16.msra.mxu0 %v6598
  %6620 = vmatprep.subr.bf16.mxu0 0
  %6621 = vmatpush1.bf16.msra.mxu0 %v6599
  %6622 = vmatprep.subr.bf16.mxu0 0
  %6623 = vmatpush1.bf16.msra.mxu0 %v6600
  %6624 = vmatprep.subr.bf16.mxu0 0
  %6625 = vmatpush1.bf16.msra.mxu0 %v6601
  %6626 = vmatprep.subr.bf16.mxu0 0
  %6627 = vmatpush1.bf16.msra.mxu0 0
  %6628 = vmatprep.subr.bf16.mxu0 0
  %6629 = vmatpush1.bf16.msra.mxu0 0
  %6630 = vmatprep.subr.bf16.mxu0 0
  %6631 = vmatpush1.bf16.msra.mxu0 0
  %6632 = vmatprep.subr.bf16.mxu0 0
  %6633 = vmatpush1.bf16.msra.mxu0 0
  %6634 = vmatprep.subr.bf16.mxu0 0
  %6635 = vmatpush1.bf16.msra.mxu0 0
  %6636 = vmatprep.subr.bf16.mxu0 0
  %6637 = vmatpush1.bf16.msra.mxu0 0
  %6638 = vmatprep.subr.bf16.mxu0 0
  %6639 = vmatpush1.bf16.msra.mxu0 0
  %6640 = vmatprep.subr.bf16.mxu0 0
  %6641 = vmatpush1.bf16.msra.mxu0 0
  %6642 = vmatprep.mubr.bf16.mxu0 0
  %6643 = vmatmul.mubr.bf16.gmra.mrb[0].mxu0 %v6560
  %v6644 = vpop.f32.mrb[0].mxu0
  %v6645 = vadd.f32 0.0, %v6644
  %v6646 = vpop.f32.mrb[0].mxu0
  %v6647 = vpop.f32.mrb[0].mxu0
  %v6648 = vpop.f32.mrb[0].mxu0
  %6649 = vdwg.mxu0
  %v6650 = vadd.f32 %v6342, %v6645
  %v6651 = vld [vmem:[#allocation4 + $0xc] sm:$0x1]
  %v6652 = vld [vmem:[#allocation4 + $0x1c] sm:$0x1]
  %v6653 = vld [vmem:[#allocation4 + $0x2c] sm:$0x1]
  %v6654 = vld [vmem:[#allocation4 + $0x3c] sm:$0x1]
  %v6655 = vld [vmem:[#allocation4 + $0x4c] sm:$0x1]
  %v6656 = vld [vmem:[#allocation4 + $0x5c] sm:$0x1]
  %v6657 = vld [vmem:[#allocation4 + $0x6c] sm:$0x1]
  %v6658 = vld [vmem:[#allocation4 + $0x7c] sm:$0x1]
  %v6659 = vpack.c.bf16 %v6651, %v6651
  %v6660 = vpack.c.bf16 %v6652, %v6652
  %v6661 = vpack.c.bf16 %v6653, %v6653
  %v6662 = vpack.c.bf16 %v6654, %v6654
  %v6663 = vpack.c.bf16 %v6655, %v6655
  %v6664 = vpack.c.bf16 %v6656, %v6656
  %v6665 = vpack.c.bf16 %v6657, %v6657
  %v6666 = vpack.c.bf16 %v6658, %v6658
  %v6667 = vld [vmem:[#allocation3 + $0xc] sm:$0x1]
  %v6668 = vld [vmem:[#allocation3 + $0x1c] sm:$0x1]
  %v6669 = vld [vmem:[#allocation3 + $0x2c] sm:$0x1]
  %v6670 = vld [vmem:[#allocation3 + $0x3c] sm:$0x1]
  %v6671 = vld [vmem:[#allocation3 + $0x4c] sm:$0x1]
  %v6672 = vld [vmem:[#allocation3 + $0x5c] sm:$0x1]
  %v6673 = vld [vmem:[#allocation3 + $0x6c] sm:$0x1]
  %v6674 = vld [vmem:[#allocation3 + $0x7c] sm:$0x1]
  %v6675 = vpack.c.bf16 %v6667, %v6667
  %v6676 = vpack.c.bf16 %v6668, %v6668
  %v6677 = vpack.c.bf16 %v6669, %v6669
  %v6678 = vpack.c.bf16 %v6670, %v6670
  %v6679 = vpack.c.bf16 %v6671, %v6671
  %v6680 = vpack.c.bf16 %v6672, %v6672
  %v6681 = vpack.c.bf16 %v6673, %v6673
  %v6682 = vpack.c.bf16 %v6674, %v6674
  %s6683 = scalar_lea.vmem %s9, 768
  %v6684 = vld [vmem:[%s6683] sm:$0xf]
  %v6685 = vld [vmem:[%s6683 + $0x4] sm:$0xf]
  %v6686 = vld [vmem:[%s6683 + $0x8] sm:$0xf]
  %v6687 = vld [vmem:[%s6683 + $0xc] sm:$0xf]
  %v6688 = vld [vmem:[%s6683 + $0x10] sm:$0xf]
  %v6689 = vld [vmem:[%s6683 + $0x14] sm:$0xf]
  %v6690 = vld [vmem:[%s6683 + $0x18] sm:$0xf]
  %v6691 = vld [vmem:[%s6683 + $0x1c] sm:$0xf]
  %v6692 = vld [vmem:[%s6683 + $0x20] sm:$0xf]
  %v6693 = vld [vmem:[%s6683 + $0x24] sm:$0xf]
  %v6694 = vld [vmem:[%s6683 + $0x28] sm:$0xf]
  %v6695 = vld [vmem:[%s6683 + $0x2c] sm:$0xf]
  %v6696 = vld [vmem:[%s6683 + $0x30] sm:$0xf]
  %v6697 = vld [vmem:[%s6683 + $0x34] sm:$0xf]
  %v6698 = vld [vmem:[%s6683 + $0x38] sm:$0xf]
  %v6699 = vld [vmem:[%s6683 + $0x3c] sm:$0xf]
  %v6708 = vunpack.c.l.b16 %v6659
  %v6709 = vunpack.c.l.b16 %v6660
  %v6710 = vunpack.c.l.b16 %v6661
  %v6711 = vunpack.c.l.b16 %v6662
  %v6712 = vunpack.c.l.b16 %v6663
  %v6713 = vunpack.c.l.b16 %v6664
  %v6714 = vunpack.c.l.b16 %v6665
  %v6715 = vunpack.c.l.b16 %v6666
  %v6716 = vrot.slane %v6709, 7
  %v6717 = vsel %vm3084, %v6716, %v6708
  %v6718 = vrot.slane %v6710, 6
  %v6719 = vsel %vm3087, %v6718, %v6717
  %v6720 = vrot.slane %v6711, 5
  %v6721 = vsel %vm3090, %v6720, %v6719
  %v6722 = vrot.slane %v6712, 4
  %v6723 = vsel %vm3093, %v6722, %v6721
  %v6724 = vrot.slane %v6713, 3
  %v6725 = vsel %vm3096, %v6724, %v6723
  %v6726 = vrot.slane %v6714, 2
  %v6727 = vsel %vm3099, %v6726, %v6725
  %v6728 = vrot.slane %v6715, 1
  %v6729 = vsel %vm3102, %v6728, %v6727
  %v6730 = vpack.c.b16 %v6729, %v6729
  %v6748 = vunpack.c.l.b16 %v6684
  %v6749 = vunpack.c.l.b16 %v6685
  %v6750 = vunpack.c.l.b16 %v6686
  %v6751 = vunpack.c.l.b16 %v6687
  %v6752 = vunpack.c.l.b16 %v6688
  %v6753 = vunpack.c.l.b16 %v6689
  %v6754 = vunpack.c.l.b16 %v6690
  %v6755 = vunpack.c.l.b16 %v6691
  %v6756 = vunpack.c.l.b16 %v6692
  %v6757 = vunpack.c.l.b16 %v6693
  %v6758 = vunpack.c.l.b16 %v6694
  %v6759 = vunpack.c.l.b16 %v6695
  %v6760 = vunpack.c.l.b16 %v6696
  %v6761 = vunpack.c.l.b16 %v6697
  %v6762 = vunpack.c.l.b16 %v6698
  %v6763 = vunpack.c.l.b16 %v6699
  %v6764 = vpack.c.b16 %v6749, %v6748
  %v6765 = vpack.c.b16 %v6751, %v6750
  %v6766 = vpack.c.b16 %v6753, %v6752
  %v6767 = vpack.c.b16 %v6755, %v6754
  %v6768 = vpack.c.b16 %v6757, %v6756
  %v6769 = vpack.c.b16 %v6759, %v6758
  %v6770 = vpack.c.b16 %v6761, %v6760
  %v6771 = vpack.c.b16 %v6763, %v6762
  %6780 = vmatprep.subr.bf16.mxu0 0
  %6781 = vmatpush1.bf16.msra.mxu0 %v6764
  %6782 = vmatprep.subr.bf16.mxu0 0
  %6783 = vmatpush1.bf16.msra.mxu0 %v6765
  %6784 = vmatprep.subr.bf16.mxu0 0
  %6785 = vmatpush1.bf16.msra.mxu0 %v6766
  %6786 = vmatprep.subr.bf16.mxu0 0
  %6787 = vmatpush1.bf16.msra.mxu0 %v6767
  %6788 = vmatprep.subr.bf16.mxu0 0
  %6789 = vmatpush1.bf16.msra.mxu0 %v6768
  %6790 = vmatprep.subr.bf16.mxu0 0
  %6791 = vmatpush1.bf16.msra.mxu0 %v6769
  %6792 = vmatprep.subr.bf16.mxu0 0
  %6793 = vmatpush1.bf16.msra.mxu0 %v6770
  %6794 = vmatprep.subr.bf16.mxu0 0
  %6795 = vmatpush1.bf16.msra.mxu0 %v6771
  %6796 = vmatprep.subr.bf16.mxu0 0
  %6797 = vmatpush1.bf16.msra.mxu0 0
  %6798 = vmatprep.subr.bf16.mxu0 0
  %6799 = vmatpush1.bf16.msra.mxu0 0
  %6800 = vmatprep.subr.bf16.mxu0 0
  %6801 = vmatpush1.bf16.msra.mxu0 0
  %6802 = vmatprep.subr.bf16.mxu0 0
  %6803 = vmatpush1.bf16.msra.mxu0 0
  %6804 = vmatprep.subr.bf16.mxu0 0
  %6805 = vmatpush1.bf16.msra.mxu0 0
  %6806 = vmatprep.subr.bf16.mxu0 0
  %6807 = vmatpush1.bf16.msra.mxu0 0
  %6808 = vmatprep.subr.bf16.mxu0 0
  %6809 = vmatpush1.bf16.msra.mxu0 0
  %6810 = vmatprep.subr.bf16.mxu0 0
  %6811 = vmatpush1.bf16.msra.mxu0 0
  %6812 = vmatprep.mubr.bf16.mxu0 0
  %6813 = vmatmul.mubr.bf16.gmra.mrb[0].mxu0 %v6730
  %v6814 = vpop.f32.mrb[0].mxu0
  %v6815 = vadd.f32 0.0, %v6814
  %v6816 = vpop.f32.mrb[0].mxu0
  %v6817 = vpop.f32.mrb[0].mxu0
  %v6818 = vpop.f32.mrb[0].mxu0
  %6819 = vdwg.mxu0
  %v6820 = vadd.f32 %v6512, %v6815
  %s6821 = scalar_lea.vmem %s10, 768
  %v6822 = vld [vmem:[%s6821] sm:$0xf]
  %v6823 = vld [vmem:[%s6821 + $0x4] sm:$0xf]
  %v6824 = vld [vmem:[%s6821 + $0x8] sm:$0xf]
  %v6825 = vld [vmem:[%s6821 + $0xc] sm:$0xf]
  %v6826 = vld [vmem:[%s6821 + $0x10] sm:$0xf]
  %v6827 = vld [vmem:[%s6821 + $0x14] sm:$0xf]
  %v6828 = vld [vmem:[%s6821 + $0x18] sm:$0xf]
  %v6829 = vld [vmem:[%s6821 + $0x1c] sm:$0xf]
  %v6830 = vld [vmem:[%s6821 + $0x20] sm:$0xf]
  %v6831 = vld [vmem:[%s6821 + $0x24] sm:$0xf]
  %v6832 = vld [vmem:[%s6821 + $0x28] sm:$0xf]
  %v6833 = vld [vmem:[%s6821 + $0x2c] sm:$0xf]
  %v6834 = vld [vmem:[%s6821 + $0x30] sm:$0xf]
  %v6835 = vld [vmem:[%s6821 + $0x34] sm:$0xf]
  %v6836 = vld [vmem:[%s6821 + $0x38] sm:$0xf]
  %v6837 = vld [vmem:[%s6821 + $0x3c] sm:$0xf]
  %v6846 = vunpack.c.l.b16 %v6675
  %v6847 = vunpack.c.l.b16 %v6676
  %v6848 = vunpack.c.l.b16 %v6677
  %v6849 = vunpack.c.l.b16 %v6678
  %v6850 = vunpack.c.l.b16 %v6679
  %v6851 = vunpack.c.l.b16 %v6680
  %v6852 = vunpack.c.l.b16 %v6681
  %v6853 = vunpack.c.l.b16 %v6682
  %v6854 = vrot.slane %v6847, 7
  %v6855 = vsel %vm3084, %v6854, %v6846
  %v6856 = vrot.slane %v6848, 6
  %v6857 = vsel %vm3087, %v6856, %v6855
  %v6858 = vrot.slane %v6849, 5
  %v6859 = vsel %vm3090, %v6858, %v6857
  %v6860 = vrot.slane %v6850, 4
  %v6861 = vsel %vm3093, %v6860, %v6859
  %v6862 = vrot.slane %v6851, 3
  %v6863 = vsel %vm3096, %v6862, %v6861
  %v6864 = vrot.slane %v6852, 2
  %v6865 = vsel %vm3099, %v6864, %v6863
  %v6866 = vrot.slane %v6853, 1
  %v6867 = vsel %vm3102, %v6866, %v6865
  %v6868 = vpack.c.b16 %v6867, %v6867
  %v6886 = vunpack.c.l.b16 %v6822
  %v6887 = vunpack.c.l.b16 %v6823
  %v6888 = vunpack.c.l.b16 %v6824
  %v6889 = vunpack.c.l.b16 %v6825
  %v6890 = vunpack.c.l.b16 %v6826
  %v6891 = vunpack.c.l.b16 %v6827
  %v6892 = vunpack.c.l.b16 %v6828
  %v6893 = vunpack.c.l.b16 %v6829
  %v6894 = vunpack.c.l.b16 %v6830
  %v6895 = vunpack.c.l.b16 %v6831
  %v6896 = vunpack.c.l.b16 %v6832
  %v6897 = vunpack.c.l.b16 %v6833
  %v6898 = vunpack.c.l.b16 %v6834
  %v6899 = vunpack.c.l.b16 %v6835
  %v6900 = vunpack.c.l.b16 %v6836
  %v6901 = vunpack.c.l.b16 %v6837
  %v6902 = vpack.c.b16 %v6887, %v6886
  %v6903 = vpack.c.b16 %v6889, %v6888
  %v6904 = vpack.c.b16 %v6891, %v6890
  %v6905 = vpack.c.b16 %v6893, %v6892
  %v6906 = vpack.c.b16 %v6895, %v6894
  %v6907 = vpack.c.b16 %v6897, %v6896
  %v6908 = vpack.c.b16 %v6899, %v6898
  %v6909 = vpack.c.b16 %v6901, %v6900
  %6918 = vmatprep.subr.bf16.mxu0 0
  %6919 = vmatpush1.bf16.msra.mxu0 %v6902
  %6920 = vmatprep.subr.bf16.mxu0 0
  %6921 = vmatpush1.bf16.msra.mxu0 %v6903
  %6922 = vmatprep.subr.bf16.mxu0 0
  %6923 = vmatpush1.bf16.msra.mxu0 %v6904
  %6924 = vmatprep.subr.bf16.mxu0 0
  %6925 = vmatpush1.bf16.msra.mxu0 %v6905
  %6926 = vmatprep.subr.bf16.mxu0 0
  %6927 = vmatpush1.bf16.msra.mxu0 %v6906
  %6928 = vmatprep.subr.bf16.mxu0 0
  %6929 = vmatpush1.bf16.msra.mxu0 %v6907
  %6930 = vmatprep.subr.bf16.mxu0 0
  %6931 = vmatpush1.bf16.msra.mxu0 %v6908
  %6932 = vmatprep.subr.bf16.mxu0 0
  %6933 = vmatpush1.bf16.msra.mxu0 %v6909
  %6934 = vmatprep.subr.bf16.mxu0 0
  %6935 = vmatpush1.bf16.msra.mxu0 0
  %6936 = vmatprep.subr.bf16.mxu0 0
  %6937 = vmatpush1.bf16.msra.mxu0 0
  %6938 = vmatprep.subr.bf16.mxu0 0
  %6939 = vmatpush1.bf16.msra.mxu0 0
  %6940 = vmatprep.subr.bf16.mxu0 0
  %6941 = vmatpush1.bf16.msra.mxu0 0
  %6942 = vmatprep.subr.bf16.mxu0 0
  %6943 = vmatpush1.bf16.msra.mxu0 0
  %6944 = vmatprep.subr.bf16.mxu0 0
  %6945 = vmatpush1.bf16.msra.mxu0 0
  %6946 = vmatprep.subr.bf16.mxu0 0
  %6947 = vmatpush1.bf16.msra.mxu0 0
  %6948 = vmatprep.subr.bf16.mxu0 0
  %6949 = vmatpush1.bf16.msra.mxu0 0
  %6950 = vmatprep.mubr.bf16.mxu0 0
  %6951 = vmatmul.mubr.bf16.gmra.mrb[0].mxu0 %v6868
  %v6952 = vpop.f32.mrb[0].mxu0
  %v6953 = vadd.f32 0.0, %v6952
  %v6954 = vpop.f32.mrb[0].mxu0
  %v6955 = vpop.f32.mrb[0].mxu0
  %v6956 = vpop.f32.mrb[0].mxu0
  %6957 = vdwg.mxu0
  %v6958 = vadd.f32 %v6650, %v6953
  %v6959 = vld [vmem:[#allocation4 + $0xd] sm:$0x1]
  %v6960 = vld [vmem:[#allocation4 + $0x1d] sm:$0x1]
  %v6961 = vld [vmem:[#allocation4 + $0x2d] sm:$0x1]
  %v6962 = vld [vmem:[#allocation4 + $0x3d] sm:$0x1]
  %v6963 = vld [vmem:[#allocation4 + $0x4d] sm:$0x1]
  %v6964 = vld [vmem:[#allocation4 + $0x5d] sm:$0x1]
  %v6965 = vld [vmem:[#allocation4 + $0x6d] sm:$0x1]
  %v6966 = vld [vmem:[#allocation4 + $0x7d] sm:$0x1]
  %v6967 = vpack.c.bf16 %v6959, %v6959
  %v6968 = vpack.c.bf16 %v6960, %v6960
  %v6969 = vpack.c.bf16 %v6961, %v6961
  %v6970 = vpack.c.bf16 %v6962, %v6962
  %v6971 = vpack.c.bf16 %v6963, %v6963
  %v6972 = vpack.c.bf16 %v6964, %v6964
  %v6973 = vpack.c.bf16 %v6965, %v6965
  %v6974 = vpack.c.bf16 %v6966, %v6966
  %v6975 = vld [vmem:[#allocation3 + $0xd] sm:$0x1]
  %v6976 = vld [vmem:[#allocation3 + $0x1d] sm:$0x1]
  %v6977 = vld [vmem:[#allocation3 + $0x2d] sm:$0x1]
  %v6978 = vld [vmem:[#allocation3 + $0x3d] sm:$0x1]
  %v6979 = vld [vmem:[#allocation3 + $0x4d] sm:$0x1]
  %v6980 = vld [vmem:[#allocation3 + $0x5d] sm:$0x1]
  %v6981 = vld [vmem:[#allocation3 + $0x6d] sm:$0x1]
  %v6982 = vld [vmem:[#allocation3 + $0x7d] sm:$0x1]
  %v6983 = vpack.c.bf16 %v6975, %v6975
  %v6984 = vpack.c.bf16 %v6976, %v6976
  %v6985 = vpack.c.bf16 %v6977, %v6977
  %v6986 = vpack.c.bf16 %v6978, %v6978
  %v6987 = vpack.c.bf16 %v6979, %v6979
  %v6988 = vpack.c.bf16 %v6980, %v6980
  %v6989 = vpack.c.bf16 %v6981, %v6981
  %v6990 = vpack.c.bf16 %v6982, %v6982
  %s6991 = scalar_lea.vmem %s9, 832
  %v6992 = vld [vmem:[%s6991] sm:$0xf]
  %v6993 = vld [vmem:[%s6991 + $0x4] sm:$0xf]
  %v6994 = vld [vmem:[%s6991 + $0x8] sm:$0xf]
  %v6995 = vld [vmem:[%s6991 + $0xc] sm:$0xf]
  %v6996 = vld [vmem:[%s6991 + $0x10] sm:$0xf]
  %v6997 = vld [vmem:[%s6991 + $0x14] sm:$0xf]
  %v6998 = vld [vmem:[%s6991 + $0x18] sm:$0xf]
  %v6999 = vld [vmem:[%s6991 + $0x1c] sm:$0xf]
  %v7000 = vld [vmem:[%s6991 + $0x20] sm:$0xf]
  %v7001 = vld [vmem:[%s6991 + $0x24] sm:$0xf]
  %v7002 = vld [vmem:[%s6991 + $0x28] sm:$0xf]
  %v7003 = vld [vmem:[%s6991 + $0x2c] sm:$0xf]
  %v7004 = vld [vmem:[%s6991 + $0x30] sm:$0xf]
  %v7005 = vld [vmem:[%s6991 + $0x34] sm:$0xf]
  %v7006 = vld [vmem:[%s6991 + $0x38] sm:$0xf]
  %v7007 = vld [vmem:[%s6991 + $0x3c] sm:$0xf]
  %v7016 = vunpack.c.l.b16 %v6967
  %v7017 = vunpack.c.l.b16 %v6968
  %v7018 = vunpack.c.l.b16 %v6969
  %v7019 = vunpack.c.l.b16 %v6970
  %v7020 = vunpack.c.l.b16 %v6971
  %v7021 = vunpack.c.l.b16 %v6972
  %v7022 = vunpack.c.l.b16 %v6973
  %v7023 = vunpack.c.l.b16 %v6974
  %v7024 = vrot.slane %v7017, 7
  %v7025 = vsel %vm3084, %v7024, %v7016
  %v7026 = vrot.slane %v7018, 6
  %v7027 = vsel %vm3087, %v7026, %v7025
  %v7028 = vrot.slane %v7019, 5
  %v7029 = vsel %vm3090, %v7028, %v7027
  %v7030 = vrot.slane %v7020, 4
  %v7031 = vsel %vm3093, %v7030, %v7029
  %v7032 = vrot.slane %v7021, 3
  %v7033 = vsel %vm3096, %v7032, %v7031
  %v7034 = vrot.slane %v7022, 2
  %v7035 = vsel %vm3099, %v7034, %v7033
  %v7036 = vrot.slane %v7023, 1
  %v7037 = vsel %vm3102, %v7036, %v7035
  %v7038 = vpack.c.b16 %v7037, %v7037
  %v7056 = vunpack.c.l.b16 %v6992
  %v7057 = vunpack.c.l.b16 %v6993
  %v7058 = vunpack.c.l.b16 %v6994
  %v7059 = vunpack.c.l.b16 %v6995
  %v7060 = vunpack.c.l.b16 %v6996
  %v7061 = vunpack.c.l.b16 %v6997
  %v7062 = vunpack.c.l.b16 %v6998
  %v7063 = vunpack.c.l.b16 %v6999
  %v7064 = vunpack.c.l.b16 %v7000
  %v7065 = vunpack.c.l.b16 %v7001
  %v7066 = vunpack.c.l.b16 %v7002
  %v7067 = vunpack.c.l.b16 %v7003
  %v7068 = vunpack.c.l.b16 %v7004
  %v7069 = vunpack.c.l.b16 %v7005
  %v7070 = vunpack.c.l.b16 %v7006
  %v7071 = vunpack.c.l.b16 %v7007
  %v7072 = vpack.c.b16 %v7057, %v7056
  %v7073 = vpack.c.b16 %v7059, %v7058
  %v7074 = vpack.c.b16 %v7061, %v7060
  %v7075 = vpack.c.b16 %v7063, %v7062
  %v7076 = vpack.c.b16 %v7065, %v7064
  %v7077 = vpack.c.b16 %v7067, %v7066
  %v7078 = vpack.c.b16 %v7069, %v7068
  %v7079 = vpack.c.b16 %v7071, %v7070
  %7088 = vmatprep.subr.bf16.mxu0 0
  %7089 = vmatpush1.bf16.msra.mxu0 %v7072
  %7090 = vmatprep.subr.bf16.mxu0 0
  %7091 = vmatpush1.bf16.msra.mxu0 %v7073
  %7092 = vmatprep.subr.bf16.mxu0 0
  %7093 = vmatpush1.bf16.msra.mxu0 %v7074
  %7094 = vmatprep.subr.bf16.mxu0 0
  %7095 = vmatpush1.bf16.msra.mxu0 %v7075
  %7096 = vmatprep.subr.bf16.mxu0 0
  %7097 = vmatpush1.bf16.msra.mxu0 %v7076
  %7098 = vmatprep.subr.bf16.mxu0 0
  %7099 = vmatpush1.bf16.msra.mxu0 %v7077
  %7100 = vmatprep.subr.bf16.mxu0 0
  %7101 = vmatpush1.bf16.msra.mxu0 %v7078
  %7102 = vmatprep.subr.bf16.mxu0 0
  %7103 = vmatpush1.bf16.msra.mxu0 %v7079
  %7104 = vmatprep.subr.bf16.mxu0 0
  %7105 = vmatpush1.bf16.msra.mxu0 0
  %7106 = vmatprep.subr.bf16.mxu0 0
  %7107 = vmatpush1.bf16.msra.mxu0 0
  %7108 = vmatprep.subr.bf16.mxu0 0
  %7109 = vmatpush1.bf16.msra.mxu0 0
  %7110 = vmatprep.subr.bf16.mxu0 0
  %7111 = vmatpush1.bf16.msra.mxu0 0
  %7112 = vmatprep.subr.bf16.mxu0 0
  %7113 = vmatpush1.bf16.msra.mxu0 0
  %7114 = vmatprep.subr.bf16.mxu0 0
  %7115 = vmatpush1.bf16.msra.mxu0 0
  %7116 = vmatprep.subr.bf16.mxu0 0
  %7117 = vmatpush1.bf16.msra.mxu0 0
  %7118 = vmatprep.subr.bf16.mxu0 0
  %7119 = vmatpush1.bf16.msra.mxu0 0
  %7120 = vmatprep.mubr.bf16.mxu0 0
  %7121 = vmatmul.mubr.bf16.gmra.mrb[0].mxu0 %v7038
  %v7122 = vpop.f32.mrb[0].mxu0
  %v7123 = vadd.f32 0.0, %v7122
  %v7124 = vpop.f32.mrb[0].mxu0
  %v7125 = vpop.f32.mrb[0].mxu0
  %v7126 = vpop.f32.mrb[0].mxu0
  %7127 = vdwg.mxu0
  %v7128 = vadd.f32 %v6820, %v7123
  %s7129 = scalar_lea.vmem %s10, 832
  %v7130 = vld [vmem:[%s7129] sm:$0xf]
  %v7131 = vld [vmem:[%s7129 + $0x4] sm:$0xf]
  %v7132 = vld [vmem:[%s7129 + $0x8] sm:$0xf]
  %v7133 = vld [vmem:[%s7129 + $0xc] sm:$0xf]
  %v7134 = vld [vmem:[%s7129 + $0x10] sm:$0xf]
  %v7135 = vld [vmem:[%s7129 + $0x14] sm:$0xf]
  %v7136 = vld [vmem:[%s7129 + $0x18] sm:$0xf]
  %v7137 = vld [vmem:[%s7129 + $0x1c] sm:$0xf]
  %v7138 = vld [vmem:[%s7129 + $0x20] sm:$0xf]
  %v7139 = vld [vmem:[%s7129 + $0x24] sm:$0xf]
  %v7140 = vld [vmem:[%s7129 + $0x28] sm:$0xf]
  %v7141 = vld [vmem:[%s7129 + $0x2c] sm:$0xf]
  %v7142 = vld [vmem:[%s7129 + $0x30] sm:$0xf]
  %v7143 = vld [vmem:[%s7129 + $0x34] sm:$0xf]
  %v7144 = vld [vmem:[%s7129 + $0x38] sm:$0xf]
  %v7145 = vld [vmem:[%s7129 + $0x3c] sm:$0xf]
  %v7154 = vunpack.c.l.b16 %v6983
  %v7155 = vunpack.c.l.b16 %v6984
  %v7156 = vunpack.c.l.b16 %v6985
  %v7157 = vunpack.c.l.b16 %v6986
  %v7158 = vunpack.c.l.b16 %v6987
  %v7159 = vunpack.c.l.b16 %v6988
  %v7160 = vunpack.c.l.b16 %v6989
  %v7161 = vunpack.c.l.b16 %v6990
  %v7162 = vrot.slane %v7155, 7
  %v7163 = vsel %vm3084, %v7162, %v7154
  %v7164 = vrot.slane %v7156, 6
  %v7165 = vsel %vm3087, %v7164, %v7163
  %v7166 = vrot.slane %v7157, 5
  %v7167 = vsel %vm3090, %v7166, %v7165
  %v7168 = vrot.slane %v7158, 4
  %v7169 = vsel %vm3093, %v7168, %v7167
  %v7170 = vrot.slane %v7159, 3
  %v7171 = vsel %vm3096, %v7170, %v7169
  %v7172 = vrot.slane %v7160, 2
  %v7173 = vsel %vm3099, %v7172, %v7171
  %v7174 = vrot.slane %v7161, 1
  %v7175 = vsel %vm3102, %v7174, %v7173
  %v7176 = vpack.c.b16 %v7175, %v7175
  %v7194 = vunpack.c.l.b16 %v7130
  %v7195 = vunpack.c.l.b16 %v7131
  %v7196 = vunpack.c.l.b16 %v7132
  %v7197 = vunpack.c.l.b16 %v7133
  %v7198 = vunpack.c.l.b16 %v7134
  %v7199 = vunpack.c.l.b16 %v7135
  %v7200 = vunpack.c.l.b16 %v7136
  %v7201 = vunpack.c.l.b16 %v7137
  %v7202 = vunpack.c.l.b16 %v7138
  %v7203 = vunpack.c.l.b16 %v7139
  %v7204 = vunpack.c.l.b16 %v7140
  %v7205 = vunpack.c.l.b16 %v7141
  %v7206 = vunpack.c.l.b16 %v7142
  %v7207 = vunpack.c.l.b16 %v7143
  %v7208 = vunpack.c.l.b16 %v7144
  %v7209 = vunpack.c.l.b16 %v7145
  %v7210 = vpack.c.b16 %v7195, %v7194
  %v7211 = vpack.c.b16 %v7197, %v7196
  %v7212 = vpack.c.b16 %v7199, %v7198
  %v7213 = vpack.c.b16 %v7201, %v7200
  %v7214 = vpack.c.b16 %v7203, %v7202
  %v7215 = vpack.c.b16 %v7205, %v7204
  %v7216 = vpack.c.b16 %v7207, %v7206
  %v7217 = vpack.c.b16 %v7209, %v7208
  %7226 = vmatprep.subr.bf16.mxu0 0
  %7227 = vmatpush1.bf16.msra.mxu0 %v7210
  %7228 = vmatprep.subr.bf16.mxu0 0
  %7229 = vmatpush1.bf16.msra.mxu0 %v7211
  %7230 = vmatprep.subr.bf16.mxu0 0
  %7231 = vmatpush1.bf16.msra.mxu0 %v7212
  %7232 = vmatprep.subr.bf16.mxu0 0
  %7233 = vmatpush1.bf16.msra.mxu0 %v7213
  %7234 = vmatprep.subr.bf16.mxu0 0
  %7235 = vmatpush1.bf16.msra.mxu0 %v7214
  %7236 = vmatprep.subr.bf16.mxu0 0
  %7237 = vmatpush1.bf16.msra.mxu0 %v7215
  %7238 = vmatprep.subr.bf16.mxu0 0
  %7239 = vmatpush1.bf16.msra.mxu0 %v7216
  %7240 = vmatprep.subr.bf16.mxu0 0
  %7241 = vmatpush1.bf16.msra.mxu0 %v7217
  %7242 = vmatprep.subr.bf16.mxu0 0
  %7243 = vmatpush1.bf16.msra.mxu0 0
  %7244 = vmatprep.subr.bf16.mxu0 0
  %7245 = vmatpush1.bf16.msra.mxu0 0
  %7246 = vmatprep.subr.bf16.mxu0 0
  %7247 = vmatpush1.bf16.msra.mxu0 0
  %7248 = vmatprep.subr.bf16.mxu0 0
  %7249 = vmatpush1.bf16.msra.mxu0 0
  %7250 = vmatprep.subr.bf16.mxu0 0
  %7251 = vmatpush1.bf16.msra.mxu0 0
  %7252 = vmatprep.subr.bf16.mxu0 0
  %7253 = vmatpush1.bf16.msra.mxu0 0
  %7254 = vmatprep.subr.bf16.mxu0 0
  %7255 = vmatpush1.bf16.msra.mxu0 0
  %7256 = vmatprep.subr.bf16.mxu0 0
  %7257 = vmatpush1.bf16.msra.mxu0 0
  %7258 = vmatprep.mubr.bf16.mxu0 0
  %7259 = vmatmul.mubr.bf16.gmra.mrb[0].mxu0 %v7176
  %v7260 = vpop.f32.mrb[0].mxu0
  %v7261 = vadd.f32 0.0, %v7260
  %v7262 = vpop.f32.mrb[0].mxu0
  %v7263 = vpop.f32.mrb[0].mxu0
  %v7264 = vpop.f32.mrb[0].mxu0
  %7265 = vdwg.mxu0
  %v7266 = vadd.f32 %v6958, %v7261
  %v7267 = vld [vmem:[#allocation4 + $0xe] sm:$0x1]
  %v7268 = vld [vmem:[#allocation4 + $0x1e] sm:$0x1]
  %v7269 = vld [vmem:[#allocation4 + $0x2e] sm:$0x1]
  %v7270 = vld [vmem:[#allocation4 + $0x3e] sm:$0x1]
  %v7271 = vld [vmem:[#allocation4 + $0x4e] sm:$0x1]
  %v7272 = vld [vmem:[#allocation4 + $0x5e] sm:$0x1]
  %v7273 = vld [vmem:[#allocation4 + $0x6e] sm:$0x1]
  %v7274 = vld [vmem:[#allocation4 + $0x7e] sm:$0x1]
  %v7275 = vpack.c.bf16 %v7267, %v7267
  %v7276 = vpack.c.bf16 %v7268, %v7268
  %v7277 = vpack.c.bf16 %v7269, %v7269
  %v7278 = vpack.c.bf16 %v7270, %v7270
  %v7279 = vpack.c.bf16 %v7271, %v7271
  %v7280 = vpack.c.bf16 %v7272, %v7272
  %v7281 = vpack.c.bf16 %v7273, %v7273
  %v7282 = vpack.c.bf16 %v7274, %v7274
  %v7283 = vld [vmem:[#allocation3 + $0xe] sm:$0x1]
  %v7284 = vld [vmem:[#allocation3 + $0x1e] sm:$0x1]
  %v7285 = vld [vmem:[#allocation3 + $0x2e] sm:$0x1]
  %v7286 = vld [vmem:[#allocation3 + $0x3e] sm:$0x1]
  %v7287 = vld [vmem:[#allocation3 + $0x4e] sm:$0x1]
  %v7288 = vld [vmem:[#allocation3 + $0x5e] sm:$0x1]
  %v7289 = vld [vmem:[#allocation3 + $0x6e] sm:$0x1]
  %v7290 = vld [vmem:[#allocation3 + $0x7e] sm:$0x1]
  %v7291 = vpack.c.bf16 %v7283, %v7283
  %v7292 = vpack.c.bf16 %v7284, %v7284
  %v7293 = vpack.c.bf16 %v7285, %v7285
  %v7294 = vpack.c.bf16 %v7286, %v7286
  %v7295 = vpack.c.bf16 %v7287, %v7287
  %v7296 = vpack.c.bf16 %v7288, %v7288
  %v7297 = vpack.c.bf16 %v7289, %v7289
  %v7298 = vpack.c.bf16 %v7290, %v7290
  %s7299 = scalar_lea.vmem %s9, 896
  %v7300 = vld [vmem:[%s7299] sm:$0xf]
  %v7301 = vld [vmem:[%s7299 + $0x4] sm:$0xf]
  %v7302 = vld [vmem:[%s7299 + $0x8] sm:$0xf]
  %v7303 = vld [vmem:[%s7299 + $0xc] sm:$0xf]
  %v7304 = vld [vmem:[%s7299 + $0x10] sm:$0xf]
  %v7305 = vld [vmem:[%s7299 + $0x14] sm:$0xf]
  %v7306 = vld [vmem:[%s7299 + $0x18] sm:$0xf]
  %v7307 = vld [vmem:[%s7299 + $0x1c] sm:$0xf]
  %v7308 = vld [vmem:[%s7299 + $0x20] sm:$0xf]
  %v7309 = vld [vmem:[%s7299 + $0x24] sm:$0xf]
  %v7310 = vld [vmem:[%s7299 + $0x28] sm:$0xf]
  %v7311 = vld [vmem:[%s7299 + $0x2c] sm:$0xf]
  %v7312 = vld [vmem:[%s7299 + $0x30] sm:$0xf]
  %v7313 = vld [vmem:[%s7299 + $0x34] sm:$0xf]
  %v7314 = vld [vmem:[%s7299 + $0x38] sm:$0xf]
  %v7315 = vld [vmem:[%s7299 + $0x3c] sm:$0xf]
  %v7324 = vunpack.c.l.b16 %v7275
  %v7325 = vunpack.c.l.b16 %v7276
  %v7326 = vunpack.c.l.b16 %v7277
  %v7327 = vunpack.c.l.b16 %v7278
  %v7328 = vunpack.c.l.b16 %v7279
  %v7329 = vunpack.c.l.b16 %v7280
  %v7330 = vunpack.c.l.b16 %v7281
  %v7331 = vunpack.c.l.b16 %v7282
  %v7332 = vrot.slane %v7325, 7
  %v7333 = vsel %vm3084, %v7332, %v7324
  %v7334 = vrot.slane %v7326, 6
  %v7335 = vsel %vm3087, %v7334, %v7333
  %v7336 = vrot.slane %v7327, 5
  %v7337 = vsel %vm3090, %v7336, %v7335
  %v7338 = vrot.slane %v7328, 4
  %v7339 = vsel %vm3093, %v7338, %v7337
  %v7340 = vrot.slane %v7329, 3
  %v7341 = vsel %vm3096, %v7340, %v7339
  %v7342 = vrot.slane %v7330, 2
  %v7343 = vsel %vm3099, %v7342, %v7341
  %v7344 = vrot.slane %v7331, 1
  %v7345 = vsel %vm3102, %v7344, %v7343
  %v7346 = vpack.c.b16 %v7345, %v7345
  %v7364 = vunpack.c.l.b16 %v7300
  %v7365 = vunpack.c.l.b16 %v7301
  %v7366 = vunpack.c.l.b16 %v7302
  %v7367 = vunpack.c.l.b16 %v7303
  %v7368 = vunpack.c.l.b16 %v7304
  %v7369 = vunpack.c.l.b16 %v7305
  %v7370 = vunpack.c.l.b16 %v7306
  %v7371 = vunpack.c.l.b16 %v7307
  %v7372 = vunpack.c.l.b16 %v7308
  %v7373 = vunpack.c.l.b16 %v7309
  %v7374 = vunpack.c.l.b16 %v7310
  %v7375 = vunpack.c.l.b16 %v7311
  %v7376 = vunpack.c.l.b16 %v7312
  %v7377 = vunpack.c.l.b16 %v7313
  %v7378 = vunpack.c.l.b16 %v7314
  %v7379 = vunpack.c.l.b16 %v7315
  %v7380 = vpack.c.b16 %v7365, %v7364
  %v7381 = vpack.c.b16 %v7367, %v7366
  %v7382 = vpack.c.b16 %v7369, %v7368
  %v7383 = vpack.c.b16 %v7371, %v7370
  %v7384 = vpack.c.b16 %v7373, %v7372
  %v7385 = vpack.c.b16 %v7375, %v7374
  %v7386 = vpack.c.b16 %v7377, %v7376
  %v7387 = vpack.c.b16 %v7379, %v7378
  %7396 = vmatprep.subr.bf16.mxu0 0
  %7397 = vmatpush1.bf16.msra.mxu0 %v7380
  %7398 = vmatprep.subr.bf16.mxu0 0
  %7399 = vmatpush1.bf16.msra.mxu0 %v7381
  %7400 = vmatprep.subr.bf16.mxu0 0
  %7401 = vmatpush1.bf16.msra.mxu0 %v7382
  %7402 = vmatprep.subr.bf16.mxu0 0
  %7403 = vmatpush1.bf16.msra.mxu0 %v7383
  %7404 = vmatprep.subr.bf16.mxu0 0
  %7405 = vmatpush1.bf16.msra.mxu0 %v7384
  %7406 = vmatprep.subr.bf16.mxu0 0
  %7407 = vmatpush1.bf16.msra.mxu0 %v7385
  %7408 = vmatprep.subr.bf16.mxu0 0
  %7409 = vmatpush1.bf16.msra.mxu0 %v7386
  %7410 = vmatprep.subr.bf16.mxu0 0
  %7411 = vmatpush1.bf16.msra.mxu0 %v7387
  %7412 = vmatprep.subr.bf16.mxu0 0
  %7413 = vmatpush1.bf16.msra.mxu0 0
  %7414 = vmatprep.subr.bf16.mxu0 0
  %7415 = vmatpush1.bf16.msra.mxu0 0
  %7416 = vmatprep.subr.bf16.mxu0 0
  %7417 = vmatpush1.bf16.msra.mxu0 0
  %7418 = vmatprep.subr.bf16.mxu0 0
  %7419 = vmatpush1.bf16.msra.mxu0 0
  %7420 = vmatprep.subr.bf16.mxu0 0
  %7421 = vmatpush1.bf16.msra.mxu0 0
  %7422 = vmatprep.subr.bf16.mxu0 0
  %7423 = vmatpush1.bf16.msra.mxu0 0
  %7424 = vmatprep.subr.bf16.mxu0 0
  %7425 = vmatpush1.bf16.msra.mxu0 0
  %7426 = vmatprep.subr.bf16.mxu0 0
  %7427 = vmatpush1.bf16.msra.mxu0 0
  %7428 = vmatprep.mubr.bf16.mxu0 0
  %7429 = vmatmul.mubr.bf16.gmra.mrb[0].mxu0 %v7346
  %v7430 = vpop.f32.mrb[0].mxu0
  %v7431 = vadd.f32 0.0, %v7430
  %v7432 = vpop.f32.mrb[0].mxu0
  %v7433 = vpop.f32.mrb[0].mxu0
  %v7434 = vpop.f32.mrb[0].mxu0
  %7435 = vdwg.mxu0
  %v7436 = vadd.f32 %v7128, %v7431
  %s7437 = scalar_lea.vmem %s10, 896
  %v7438 = vld [vmem:[%s7437] sm:$0xf]
  %v7439 = vld [vmem:[%s7437 + $0x4] sm:$0xf]
  %v7440 = vld [vmem:[%s7437 + $0x8] sm:$0xf]
  %v7441 = vld [vmem:[%s7437 + $0xc] sm:$0xf]
  %v7442 = vld [vmem:[%s7437 + $0x10] sm:$0xf]
  %v7443 = vld [vmem:[%s7437 + $0x14] sm:$0xf]
  %v7444 = vld [vmem:[%s7437 + $0x18] sm:$0xf]
  %v7445 = vld [vmem:[%s7437 + $0x1c] sm:$0xf]
  %v7446 = vld [vmem:[%s7437 + $0x20] sm:$0xf]
  %v7447 = vld [vmem:[%s7437 + $0x24] sm:$0xf]
  %v7448 = vld [vmem:[%s7437 + $0x28] sm:$0xf]
  %v7449 = vld [vmem:[%s7437 + $0x2c] sm:$0xf]
  %v7450 = vld [vmem:[%s7437 + $0x30] sm:$0xf]
  %v7451 = vld [vmem:[%s7437 + $0x34] sm:$0xf]
  %v7452 = vld [vmem:[%s7437 + $0x38] sm:$0xf]
  %v7453 = vld [vmem:[%s7437 + $0x3c] sm:$0xf]
  %v7462 = vunpack.c.l.b16 %v7291
  %v7463 = vunpack.c.l.b16 %v7292
  %v7464 = vunpack.c.l.b16 %v7293
  %v7465 = vunpack.c.l.b16 %v7294
  %v7466 = vunpack.c.l.b16 %v7295
  %v7467 = vunpack.c.l.b16 %v7296
  %v7468 = vunpack.c.l.b16 %v7297
  %v7469 = vunpack.c.l.b16 %v7298
  %v7470 = vrot.slane %v7463, 7
  %v7471 = vsel %vm3084, %v7470, %v7462
  %v7472 = vrot.slane %v7464, 6
  %v7473 = vsel %vm3087, %v7472, %v7471
  %v7474 = vrot.slane %v7465, 5
  %v7475 = vsel %vm3090, %v7474, %v7473
  %v7476 = vrot.slane %v7466, 4
  %v7477 = vsel %vm3093, %v7476, %v7475
  %v7478 = vrot.slane %v7467, 3
  %v7479 = vsel %vm3096, %v7478, %v7477
  %v7480 = vrot.slane %v7468, 2
  %v7481 = vsel %vm3099, %v7480, %v7479
  %v7482 = vrot.slane %v7469, 1
  %v7483 = vsel %vm3102, %v7482, %v7481
  %v7484 = vpack.c.b16 %v7483, %v7483
  %v7502 = vunpack.c.l.b16 %v7438
  %v7503 = vunpack.c.l.b16 %v7439
  %v7504 = vunpack.c.l.b16 %v7440
  %v7505 = vunpack.c.l.b16 %v7441
  %v7506 = vunpack.c.l.b16 %v7442
  %v7507 = vunpack.c.l.b16 %v7443
  %v7508 = vunpack.c.l.b16 %v7444
  %v7509 = vunpack.c.l.b16 %v7445
  %v7510 = vunpack.c.l.b16 %v7446
  %v7511 = vunpack.c.l.b16 %v7447
  %v7512 = vunpack.c.l.b16 %v7448
  %v7513 = vunpack.c.l.b16 %v7449
  %v7514 = vunpack.c.l.b16 %v7450
  %v7515 = vunpack.c.l.b16 %v7451
  %v7516 = vunpack.c.l.b16 %v7452
  %v7517 = vunpack.c.l.b16 %v7453
  %v7518 = vpack.c.b16 %v7503, %v7502
  %v7519 = vpack.c.b16 %v7505, %v7504
  %v7520 = vpack.c.b16 %v7507, %v7506
  %v7521 = vpack.c.b16 %v7509, %v7508
  %v7522 = vpack.c.b16 %v7511, %v7510
  %v7523 = vpack.c.b16 %v7513, %v7512
  %v7524 = vpack.c.b16 %v7515, %v7514
  %v7525 = vpack.c.b16 %v7517, %v7516
  %7534 = vmatprep.subr.bf16.mxu0 0
  %7535 = vmatpush1.bf16.msra.mxu0 %v7518
  %7536 = vmatprep.subr.bf16.mxu0 0
  %7537 = vmatpush1.bf16.msra.mxu0 %v7519
  %7538 = vmatprep.subr.bf16.mxu0 0
  %7539 = vmatpush1.bf16.msra.mxu0 %v7520
  %7540 = vmatprep.subr.bf16.mxu0 0
  %7541 = vmatpush1.bf16.msra.mxu0 %v7521
  %7542 = vmatprep.subr.bf16.mxu0 0
  %7543 = vmatpush1.bf16.msra.mxu0 %v7522
  %7544 = vmatprep.subr.bf16.mxu0 0
  %7545 = vmatpush1.bf16.msra.mxu0 %v7523
  %7546 = vmatprep.subr.bf16.mxu0 0
  %7547 = vmatpush1.bf16.msra.mxu0 %v7524
  %7548 = vmatprep.subr.bf16.mxu0 0
  %7549 = vmatpush1.bf16.msra.mxu0 %v7525
  %7550 = vmatprep.subr.bf16.mxu0 0
  %7551 = vmatpush1.bf16.msra.mxu0 0
  %7552 = vmatprep.subr.bf16.mxu0 0
  %7553 = vmatpush1.bf16.msra.mxu0 0
  %7554 = vmatprep.subr.bf16.mxu0 0
  %7555 = vmatpush1.bf16.msra.mxu0 0
  %7556 = vmatprep.subr.bf16.mxu0 0
  %7557 = vmatpush1.bf16.msra.mxu0 0
  %7558 = vmatprep.subr.bf16.mxu0 0
  %7559 = vmatpush1.bf16.msra.mxu0 0
  %7560 = vmatprep.subr.bf16.mxu0 0
  %7561 = vmatpush1.bf16.msra.mxu0 0
  %7562 = vmatprep.subr.bf16.mxu0 0
  %7563 = vmatpush1.bf16.msra.mxu0 0
  %7564 = vmatprep.subr.bf16.mxu0 0
  %7565 = vmatpush1.bf16.msra.mxu0 0
  %7566 = vmatprep.mubr.bf16.mxu0 0
  %7567 = vmatmul.mubr.bf16.gmra.mrb[0].mxu0 %v7484
  %v7568 = vpop.f32.mrb[0].mxu0
  %v7569 = vadd.f32 0.0, %v7568
  %v7570 = vpop.f32.mrb[0].mxu0
  %v7571 = vpop.f32.mrb[0].mxu0
  %v7572 = vpop.f32.mrb[0].mxu0
  %7573 = vdwg.mxu0
  %v7574 = vadd.f32 %v7266, %v7569
  %v7575 = vld [vmem:[#allocation4 + $0xf] sm:$0x1]
  %v7576 = vld [vmem:[#allocation4 + $0x1f] sm:$0x1]
  %v7577 = vld [vmem:[#allocation4 + $0x2f] sm:$0x1]
  %v7578 = vld [vmem:[#allocation4 + $0x3f] sm:$0x1]
  %v7579 = vld [vmem:[#allocation4 + $0x4f] sm:$0x1]
  %v7580 = vld [vmem:[#allocation4 + $0x5f] sm:$0x1]
  %v7581 = vld [vmem:[#allocation4 + $0x6f] sm:$0x1]
  %v7582 = vld [vmem:[#allocation4 + $0x7f] sm:$0x1]
  %v7583 = vpack.c.bf16 %v7575, %v7575
  %v7584 = vpack.c.bf16 %v7576, %v7576
  %v7585 = vpack.c.bf16 %v7577, %v7577
  %v7586 = vpack.c.bf16 %v7578, %v7578
  %v7587 = vpack.c.bf16 %v7579, %v7579
  %v7588 = vpack.c.bf16 %v7580, %v7580
  %v7589 = vpack.c.bf16 %v7581, %v7581
  %v7590 = vpack.c.bf16 %v7582, %v7582
  %v7591 = vld [vmem:[#allocation3 + $0xf] sm:$0x1]
  %v7592 = vld [vmem:[#allocation3 + $0x1f] sm:$0x1]
  %v7593 = vld [vmem:[#allocation3 + $0x2f] sm:$0x1]
  %v7594 = vld [vmem:[#allocation3 + $0x3f] sm:$0x1]
  %v7595 = vld [vmem:[#allocation3 + $0x4f] sm:$0x1]
  %v7596 = vld [vmem:[#allocation3 + $0x5f] sm:$0x1]
  %v7597 = vld [vmem:[#allocation3 + $0x6f] sm:$0x1]
  %v7598 = vld [vmem:[#allocation3 + $0x7f] sm:$0x1]
  %v7599 = vpack.c.bf16 %v7591, %v7591
  %v7600 = vpack.c.bf16 %v7592, %v7592
  %v7601 = vpack.c.bf16 %v7593, %v7593
  %v7602 = vpack.c.bf16 %v7594, %v7594
  %v7603 = vpack.c.bf16 %v7595, %v7595
  %v7604 = vpack.c.bf16 %v7596, %v7596
  %v7605 = vpack.c.bf16 %v7597, %v7597
  %v7606 = vpack.c.bf16 %v7598, %v7598
  %s7607 = scalar_lea.vmem %s9, 960
  %v7608 = vld [vmem:[%s7607] sm:$0xf]
  %v7609 = vld [vmem:[%s7607 + $0x4] sm:$0xf]
  %v7610 = vld [vmem:[%s7607 + $0x8] sm:$0xf]
  %v7611 = vld [vmem:[%s7607 + $0xc] sm:$0xf]
  %v7612 = vld [vmem:[%s7607 + $0x10] sm:$0xf]
  %v7613 = vld [vmem:[%s7607 + $0x14] sm:$0xf]
  %v7614 = vld [vmem:[%s7607 + $0x18] sm:$0xf]
  %v7615 = vld [vmem:[%s7607 + $0x1c] sm:$0xf]
  %v7616 = vld [vmem:[%s7607 + $0x20] sm:$0xf]
  %v7617 = vld [vmem:[%s7607 + $0x24] sm:$0xf]
  %v7618 = vld [vmem:[%s7607 + $0x28] sm:$0xf]
  %v7619 = vld [vmem:[%s7607 + $0x2c] sm:$0xf]
  %v7620 = vld [vmem:[%s7607 + $0x30] sm:$0xf]
  %v7621 = vld [vmem:[%s7607 + $0x34] sm:$0xf]
  %v7622 = vld [vmem:[%s7607 + $0x38] sm:$0xf]
  %v7623 = vld [vmem:[%s7607 + $0x3c] sm:$0xf]
  %v7632 = vunpack.c.l.b16 %v7583
  %v7633 = vunpack.c.l.b16 %v7584
  %v7634 = vunpack.c.l.b16 %v7585
  %v7635 = vunpack.c.l.b16 %v7586
  %v7636 = vunpack.c.l.b16 %v7587
  %v7637 = vunpack.c.l.b16 %v7588
  %v7638 = vunpack.c.l.b16 %v7589
  %v7639 = vunpack.c.l.b16 %v7590
  %v7640 = vrot.slane %v7633, 7
  %v7641 = vsel %vm3084, %v7640, %v7632
  %v7642 = vrot.slane %v7634, 6
  %v7643 = vsel %vm3087, %v7642, %v7641
  %v7644 = vrot.slane %v7635, 5
  %v7645 = vsel %vm3090, %v7644, %v7643
  %v7646 = vrot.slane %v7636, 4
  %v7647 = vsel %vm3093, %v7646, %v7645
  %v7648 = vrot.slane %v7637, 3
  %v7649 = vsel %vm3096, %v7648, %v7647
  %v7650 = vrot.slane %v7638, 2
  %v7651 = vsel %vm3099, %v7650, %v7649
  %v7652 = vrot.slane %v7639, 1
  %v7653 = vsel %vm3102, %v7652, %v7651
  %v7654 = vpack.c.b16 %v7653, %v7653
  %v7672 = vunpack.c.l.b16 %v7608
  %v7673 = vunpack.c.l.b16 %v7609
  %v7674 = vunpack.c.l.b16 %v7610
  %v7675 = vunpack.c.l.b16 %v7611
  %v7676 = vunpack.c.l.b16 %v7612
  %v7677 = vunpack.c.l.b16 %v7613
  %v7678 = vunpack.c.l.b16 %v7614
  %v7679 = vunpack.c.l.b16 %v7615
  %v7680 = vunpack.c.l.b16 %v7616
  %v7681 = vunpack.c.l.b16 %v7617
  %v7682 = vunpack.c.l.b16 %v7618
  %v7683 = vunpack.c.l.b16 %v7619
  %v7684 = vunpack.c.l.b16 %v7620
  %v7685 = vunpack.c.l.b16 %v7621
  %v7686 = vunpack.c.l.b16 %v7622
  %v7687 = vunpack.c.l.b16 %v7623
  %v7688 = vpack.c.b16 %v7673, %v7672
  %v7689 = vpack.c.b16 %v7675, %v7674
  %v7690 = vpack.c.b16 %v7677, %v7676
  %v7691 = vpack.c.b16 %v7679, %v7678
  %v7692 = vpack.c.b16 %v7681, %v7680
  %v7693 = vpack.c.b16 %v7683, %v7682
  %v7694 = vpack.c.b16 %v7685, %v7684
  %v7695 = vpack.c.b16 %v7687, %v7686
  %7704 = vmatprep.subr.bf16.mxu0 0
  %7705 = vmatpush1.bf16.msra.mxu0 %v7688
  %7706 = vmatprep.subr.bf16.mxu0 0
  %7707 = vmatpush1.bf16.msra.mxu0 %v7689
  %7708 = vmatprep.subr.bf16.mxu0 0
  %7709 = vmatpush1.bf16.msra.mxu0 %v7690
  %7710 = vmatprep.subr.bf16.mxu0 0
  %7711 = vmatpush1.bf16.msra.mxu0 %v7691
  %7712 = vmatprep.subr.bf16.mxu0 0
  %7713 = vmatpush1.bf16.msra.mxu0 %v7692
  %7714 = vmatprep.subr.bf16.mxu0 0
  %7715 = vmatpush1.bf16.msra.mxu0 %v7693
  %7716 = vmatprep.subr.bf16.mxu0 0
  %7717 = vmatpush1.bf16.msra.mxu0 %v7694
  %7718 = vmatprep.subr.bf16.mxu0 0
  %7719 = vmatpush1.bf16.msra.mxu0 %v7695
  %7720 = vmatprep.subr.bf16.mxu0 0
  %7721 = vmatpush1.bf16.msra.mxu0 0
  %7722 = vmatprep.subr.bf16.mxu0 0
  %7723 = vmatpush1.bf16.msra.mxu0 0
  %7724 = vmatprep.subr.bf16.mxu0 0
  %7725 = vmatpush1.bf16.msra.mxu0 0
  %7726 = vmatprep.subr.bf16.mxu0 0
  %7727 = vmatpush1.bf16.msra.mxu0 0
  %7728 = vmatprep.subr.bf16.mxu0 0
  %7729 = vmatpush1.bf16.msra.mxu0 0
  %7730 = vmatprep.subr.bf16.mxu0 0
  %7731 = vmatpush1.bf16.msra.mxu0 0
  %7732 = vmatprep.subr.bf16.mxu0 0
  %7733 = vmatpush1.bf16.msra.mxu0 0
  %7734 = vmatprep.subr.bf16.mxu0 0
  %7735 = vmatpush1.bf16.msra.mxu0 0
  %7736 = vmatprep.mubr.bf16.mxu0 0
  %7737 = vmatmul.mubr.bf16.gmra.mrb[0].mxu0 %v7654
  %v7738 = vpop.f32.mrb[0].mxu0
  %v7739 = vadd.f32 0.0, %v7738
  %v7740 = vpop.f32.mrb[0].mxu0
  %v7741 = vpop.f32.mrb[0].mxu0
  %v7742 = vpop.f32.mrb[0].mxu0
  %7743 = vdwg.mxu0
  %v7744 = vadd.f32 %v7436, %v7739
  %s7745 = scalar_lea.vmem %s10, 960
  %v7746 = vld [vmem:[%s7745] sm:$0xf]
  %v7747 = vld [vmem:[%s7745 + $0x4] sm:$0xf]
  %v7748 = vld [vmem:[%s7745 + $0x8] sm:$0xf]
  %v7749 = vld [vmem:[%s7745 + $0xc] sm:$0xf]
  %v7750 = vld [vmem:[%s7745 + $0x10] sm:$0xf]
  %v7751 = vld [vmem:[%s7745 + $0x14] sm:$0xf]
  %v7752 = vld [vmem:[%s7745 + $0x18] sm:$0xf]
  %v7753 = vld [vmem:[%s7745 + $0x1c] sm:$0xf]
  %v7754 = vld [vmem:[%s7745 + $0x20] sm:$0xf]
  %v7755 = vld [vmem:[%s7745 + $0x24] sm:$0xf]
  %v7756 = vld [vmem:[%s7745 + $0x28] sm:$0xf]
  %v7757 = vld [vmem:[%s7745 + $0x2c] sm:$0xf]
  %v7758 = vld [vmem:[%s7745 + $0x30] sm:$0xf]
  %v7759 = vld [vmem:[%s7745 + $0x34] sm:$0xf]
  %v7760 = vld [vmem:[%s7745 + $0x38] sm:$0xf]
  %v7761 = vld [vmem:[%s7745 + $0x3c] sm:$0xf]
  %v7770 = vunpack.c.l.b16 %v7599
  %v7771 = vunpack.c.l.b16 %v7600
  %v7772 = vunpack.c.l.b16 %v7601
  %v7773 = vunpack.c.l.b16 %v7602
  %v7774 = vunpack.c.l.b16 %v7603
  %v7775 = vunpack.c.l.b16 %v7604
  %v7776 = vunpack.c.l.b16 %v7605
  %v7777 = vunpack.c.l.b16 %v7606
  %v7778 = vrot.slane %v7771, 7
  %v7779 = vsel %vm3084, %v7778, %v7770
  %v7780 = vrot.slane %v7772, 6
  %v7781 = vsel %vm3087, %v7780, %v7779
  %v7782 = vrot.slane %v7773, 5
  %v7783 = vsel %vm3090, %v7782, %v7781
  %v7784 = vrot.slane %v7774, 4
  %v7785 = vsel %vm3093, %v7784, %v7783
  %v7786 = vrot.slane %v7775, 3
  %v7787 = vsel %vm3096, %v7786, %v7785
  %v7788 = vrot.slane %v7776, 2
  %v7789 = vsel %vm3099, %v7788, %v7787
  %v7790 = vrot.slane %v7777, 1
  %v7791 = vsel %vm3102, %v7790, %v7789
  %v7792 = vpack.c.b16 %v7791, %v7791
  %v7810 = vunpack.c.l.b16 %v7746
  %v7811 = vunpack.c.l.b16 %v7747
  %v7812 = vunpack.c.l.b16 %v7748
  %v7813 = vunpack.c.l.b16 %v7749
  %v7814 = vunpack.c.l.b16 %v7750
  %v7815 = vunpack.c.l.b16 %v7751
  %v7816 = vunpack.c.l.b16 %v7752
  %v7817 = vunpack.c.l.b16 %v7753
  %v7818 = vunpack.c.l.b16 %v7754
  %v7819 = vunpack.c.l.b16 %v7755
  %v7820 = vunpack.c.l.b16 %v7756
  %v7821 = vunpack.c.l.b16 %v7757
  %v7822 = vunpack.c.l.b16 %v7758
  %v7823 = vunpack.c.l.b16 %v7759
  %v7824 = vunpack.c.l.b16 %v7760
  %v7825 = vunpack.c.l.b16 %v7761
  %v7826 = vpack.c.b16 %v7811, %v7810
  %v7827 = vpack.c.b16 %v7813, %v7812
  %v7828 = vpack.c.b16 %v7815, %v7814
  %v7829 = vpack.c.b16 %v7817, %v7816
  %v7830 = vpack.c.b16 %v7819, %v7818
  %v7831 = vpack.c.b16 %v7821, %v7820
  %v7832 = vpack.c.b16 %v7823, %v7822
  %v7833 = vpack.c.b16 %v7825, %v7824
  %7842 = vmatprep.subr.bf16.mxu0 0
  %7843 = vmatpush1.bf16.msra.mxu0 %v7826
  %7844 = vmatprep.subr.bf16.mxu0 0
  %7845 = vmatpush1.bf16.msra.mxu0 %v7827
  %7846 = vmatprep.subr.bf16.mxu0 0
  %7847 = vmatpush1.bf16.msra.mxu0 %v7828
  %7848 = vmatprep.subr.bf16.mxu0 0
  %7849 = vmatpush1.bf16.msra.mxu0 %v7829
  %7850 = vmatprep.subr.bf16.mxu0 0
  %7851 = vmatpush1.bf16.msra.mxu0 %v7830
  %7852 = vmatprep.subr.bf16.mxu0 0
  %7853 = vmatpush1.bf16.msra.mxu0 %v7831
  %7854 = vmatprep.subr.bf16.mxu0 0
  %7855 = vmatpush1.bf16.msra.mxu0 %v7832
  %7856 = vmatprep.subr.bf16.mxu0 0
  %7857 = vmatpush1.bf16.msra.mxu0 %v7833
  %7858 = vmatprep.subr.bf16.mxu0 0
  %7859 = vmatpush1.bf16.msra.mxu0 0
  %7860 = vmatprep.subr.bf16.mxu0 0
  %7861 = vmatpush1.bf16.msra.mxu0 0
  %7862 = vmatprep.subr.bf16.mxu0 0
  %7863 = vmatpush1.bf16.msra.mxu0 0
  %7864 = vmatprep.subr.bf16.mxu0 0
  %7865 = vmatpush1.bf16.msra.mxu0 0
  %7866 = vmatprep.subr.bf16.mxu0 0
  %7867 = vmatpush1.bf16.msra.mxu0 0
  %7868 = vmatprep.subr.bf16.mxu0 0
  %7869 = vmatpush1.bf16.msra.mxu0 0
  %7870 = vmatprep.subr.bf16.mxu0 0
  %7871 = vmatpush1.bf16.msra.mxu0 0
  %7872 = vmatprep.subr.bf16.mxu0 0
  %7873 = vmatpush1.bf16.msra.mxu0 0
  %7874 = vmatprep.mubr.bf16.mxu0 0
  %7875 = vmatmul.mubr.bf16.gmra.mrb[0].mxu0 %v7792
  %v7876 = vpop.f32.mrb[0].mxu0
  %v7877 = vadd.f32 0.0, %v7876
  %v7878 = vpop.f32.mrb[0].mxu0
  %v7879 = vpop.f32.mrb[0].mxu0
  %v7880 = vpop.f32.mrb[0].mxu0
  %7881 = vdwg.mxu0
  %v7882 = vadd.f32 %v7574, %v7877
  %7884 = vrot.lane.b32.xlu0 %v7882, 64
  %v7885 = vpop.permute.xlu0 %7884
  %vm7887 = vcmask 523264
  %v7888 = vsel %vm7887, %v7744, %v7885
  %v7889 = vld [vmem:[%s11] sm:$0x1]
  %v7891 = vlaneseq
  %v7892 = vshrl.u32 %v7891, 7
  %v7893 = vsub.s32 0, %v7892
  %v7894 = vrot.slane %v7889, %v7893
  %v7896 = vadd.f32 %v7888, %v7894
  %7897 = vst [vmem:[%s12] sm:$0xff] %v7896
  // Predicated region
  $region50: #{revised_st_encoder.1} parent=0 // pred_check
    _
  $region51: #{revised_st_encoder.1} parent=0 // pred_check_branch
    %7899 = sbr.rel (0) target = $region53
  $region52: #{revised_st_encoder.1} parent=0 // pred_region
    _
  $region53: #{revised_st_encoder.1} parent=0 // pred_fallthru
    _
  // Predicated region
  $region54: #{revised_st_encoder.1} parent=0 // pred_check
    _
  $region55: #{revised_st_encoder.1} parent=0 // pred_check_branch
    %7901 = sbr.rel (0) target = $region57
  $region56: #{revised_st_encoder.1} parent=0 // pred_region
    _
  $region57: #{revised_st_encoder.1} parent=0 // pred_fallthru
    _

</llo_original>
